<compile_context>
chip_gen: v6e
topology: v6e:2x2x1
jax: 0.10.0
libtpu: 0.0.40
codegen_flags: <defaults>
</compile_context>

<pallas_src>
import jax
import jax.numpy as jnp
import numpy as np
from jax import lax
from jax.experimental import pallas as pl
from jax.experimental.pallas import tpu as pltpu

B_TILE = 16          # images per grid step (stacked along sublanes)


# ---------------------------------------------------------------------------
# Fused LeNet kernel (one grid step == B_TILE images)
# ---------------------------------------------------------------------------
def _lenet_kernel(x1_ref, w1_ref, w2_ref, w3_ref, w4_ref,
                  sc1_ref, sh1_ref, sc2_ref, sh2_ref, sc3_ref, sh3_ref, b4_ref,
                  o_ref):
    f32 = jnp.float32
    cdt = w1_ref.dtype                           # matmul operand dtype (bf16)
    bt = o_ref.shape[0]                          # B_TILE
    bt8 = 8 * bt

    # ---- conv1 (1->20, 5x5) as ONE fused K=256 matmul over the im2row'ed input.
    #      LHS rows (within the tile) are ordered (g=j%3, p=j//3, image).
    #      Output lanes: n1 = dj2*256 + jp*20 + co  (conv col = 3*jp + dj2).
    acc1 = jnp.dot(x1_ref[...], w1_ref[...], preferred_element_type=f32)   # (24*bt, 768)
    a1 = jnp.maximum(acc1 * sc1_ref[...] + sh1_ref[...], 0.0)              # BN1 + ReLU

    # ---- maxpool 3x3/stride 3: rows = max over the three g-blocks, cols = max over dj2 blocks.
    m = jnp.maximum(jnp.maximum(a1[0:bt8], a1[bt8:2 * bt8]), a1[2 * bt8:3 * bt8])
    y1 = jnp.maximum(jnp.maximum(m[:, 0:256], m[:, 256:512]), m[:, 512:768])
    y1c = y1.astype(cdt)                         # (8*bt, 256), rows=(p, image), lanes=jp*20+ci

    # ---- regroup: fold the 8 pooled rows of each image into lanes -> batch in sublanes.
    #      (contiguous, tile-aligned sublane slices + 256-lane-aligned concat; no strided ops)
    x2 = jnp.concatenate([y1c[p * bt:(p + 1) * bt, :] for p in range(8)], axis=1)  # (bt, 2048)

    # ---- conv2 (20->50, 5x5) as ONE (bt,2048)@(2048,1024) matmul over the 8x8x20 map.
    #      Output lanes: n2 = (a*2+b)*256 + (hp*2+wp)*64 + co, conv pos = (2hp+a, 2wp+b).
    acc2 = jnp.dot(x2, w2_ref[...], preferred_element_type=f32)            # (bt, 1024)
    a2 = jnp.maximum(acc2 * sc2_ref[...] + sh2_ref[...], 0.0)              # BN2 + ReLU

    # ---- maxpool 2x2/stride 2: max over the four 256-lane (a,b) blocks.
    y2 = jnp.maximum(jnp.maximum(a2[:, 0:256], a2[:, 256:512]),
                     jnp.maximum(a2[:, 512:768], a2[:, 768:1024]))         # (bt, 256)

    # ---- fc1 (200->500) + BN + ReLU: single K=256 matmul (weights pre-permuted) ----
    fc1 = jnp.dot(y2.astype(cdt), w3_ref[...], preferred_element_type=f32)  # (bt, 512)
    a3 = jnp.maximum(fc1 * sc3_ref[...] + sh3_ref[...], 0.0)

    # ---- fc2 (500->10); padded lanes stay 0 ----
    out = jnp.dot(a3.astype(cdt), w4_ref[...], preferred_element_type=f32) + b4_ref[...]
    o_ref[...] = out.astype(o_ref.dtype)                                   # (bt, 128)


# ---------------------------------------------------------------------------
# One-time weight packing (plain JAX, tiny arrays)
# ---------------------------------------------------------------------------
def fold_bn(bias, gamma, beta, mean, var, eps=1e-5):
    scale = gamma / jnp.sqrt(var + eps)
    shift = beta + scale * (bias - mean)
    return scale, shift


def prepare_params(params, compute_dtype=jnp.bfloat16):
    f32 = jnp.float32

    # conv1 -> fused banded weight (256, 768):
    #   K rows  k1 = di*32 + w (rows 160..255 zero); N lanes n1 = dj2*256 + jp*20 + co.
    w1 = params["w1"].astype(f32)[:, 0, :, :]                                  # (co, di, dj)
    band1 = (jnp.arange(32)[:, None, None] ==
             jnp.arange(24)[None, :, None] + jnp.arange(5)[None, None, :]).astype(f32)  # (w, j, dj)
    w1c = jnp.einsum("wjd,cid->iwjc", band1, w1)                               # (di, w, j, co)
    w1c = w1c.reshape(5, 32, 8, 3, 20).transpose(0, 1, 3, 2, 4)                # (di, w, dj2, jp, co)
    w1c = jnp.pad(w1c.reshape(5, 32, 3, 160), ((0, 0), (0, 0), (0, 0), (0, 96)))
    w1b = jnp.pad(w1c.reshape(160, 768), ((0, 96), (0, 0))).astype(compute_dtype)  # (256, 768)

    # conv2 -> "conv as FC" weight (2048, 1024) over the pooled 8x8x20 map:
    #   K rows  k2 = p*256 + jp*20 + ci ; N lanes n2 = (a*2+b)*256 + (hp*2+wp)*64 + co.
    w2 = params["w2"].astype(f32)                                              # (co, ci, di, dj)
    band2 = (jnp.arange(8)[:, None, None, None] ==
             2 * jnp.arange(2)[None, :, None, None] +
             jnp.arange(2)[None, None, :, None] +
             jnp.arange(5)[None, None, None, :]).astype(f32)                   # (p, hp, a, di)
    w2t = jnp.einsum("phad,jwbe,ocde->pjcabhwo", band2, band2, w2)             # (8,8,20,2,2,2,2,50)
    w2t = w2t.reshape(8, 160, 2, 2, 2, 2, 50)
    w2t = jnp.pad(w2t, ((0, 0), (0, 96), (0, 0), (0, 0), (0, 0), (0, 0), (0, 14)))
    w2b = w2t.reshape(2048, 1024).astype(compute_dtype)

    # fc1 (PyTorch flatten order (c, h, w)) -> (256, 512): K rows (hp*2+wp)*64 + co
    w3 = params["w3"].astype(f32).reshape(500, 50, 2, 2).transpose(2, 3, 1, 0)  # (hp, wp, co, o)
    w3 = jnp.pad(w3, ((0, 0), (0, 0), (0, 14), (0, 12)))                        # co->64, o->512
    w3p = w3.reshape(256, 512).astype(compute_dtype)

    # fc2 -> (512, 128)
    w4p = jnp.pad(params["w4"].astype(f32).T, ((0, 12), (0, 118))).astype(compute_dtype)

    # Folded BN affine, tiled to the padded lane layouts (f32 epilogue; pads are zero)
    sc1, sh1 = fold_bn(params["b1"], params["g1"], params["be1"], params["rm1"], params["rv1"])
    sc2, sh2 = fold_bn(params["b2"], params["g2"], params["be2"], params["rm2"], params["rv2"])
    sc3, sh3 = fold_bn(params["b3"], params["g3"], params["be3"], params["rm3"], params["rv3"])

    def tile_c1(v):  # (20,) -> (1, 768): lane = dj2*256 + jp*20 + co
        return jnp.tile(jnp.pad(jnp.tile(v.astype(jnp.float32), 8), (0, 96)), 3)[None, :]

    def tile_c2(v):  # (50,) -> (1, 1024): lane = (a*2+b)*256 + (hp*2+wp)*64 + co
        return jnp.tile(jnp.pad(v.astype(jnp.float32), (0, 14)), 16)[None, :]

    return dict(
        w1b=w1b, w2b=w2b, w3p=w3p, w4p=w4p,
        sc1=tile_c1(sc1), sh1=tile_c1(sh1),
        sc2=tile_c2(sc2), sh2=tile_c2(sh2),
        sc3=jnp.pad(sc3.astype(jnp.float32), (0, 12))[None, :],
        sh3=jnp.pad(sh3.astype(jnp.float32), (0, 12))[None, :],
        b4p=jnp.pad(params["b4"].astype(jnp.float32), (0, 118))[None, :],
    )


# ---------------------------------------------------------------------------
# Forward pass wrapper
# ---------------------------------------------------------------------------
def lenet_forward(x_nchw, prep, b_tile=B_TILE):
    """x_nchw: (B, 1, 28, 28) float32 (PyTorch layout). Returns (B, 10) float32 logits."""
    f32 = jnp.float32
    cdt = prep["w1b"].dtype
    B = x_nchw.shape[0]
    nt = (B + b_tile - 1) // b_tile
    Bp = nt * b_tile

    # width 28 -> 32 pad, batch padded to a multiple of b_tile
    x2d = jnp.pad(x_nchw[:, 0, :, :].astype(f32), ((0, Bp - B), (0, 0), (0, 4)))  # (Bp, 28, 32)

    # im2row for the fused conv1 matmul, rows ordered (tile, g, p, image):
    #   X1[t, g, p, bb, di*32 + w] = x[t*bt+bb, 3p + g + di, w]
    pat = jnp.stack([x2d[:, di:di + 24, :] for di in range(5)], axis=2)   # (Bp, 24, 5, 32)
    pat = pat.reshape(Bp, 8, 3, 160)                                      # (b, p, g, k)
    pat = pat.reshape(nt, b_tile, 8, 3, 160).transpose(0, 3, 2, 1, 4)     # (t, g, p, bb, k)
    x1 = jnp.pad(pat.reshape(nt * 24 * b_tile, 160), ((0, 0), (0, 96))).astype(cdt)

    n_flops = int(2 * Bp * (24 * 256 * 768 + 2048 * 1024 + 256 * 512 + 512 * 128))
    n_bytes = int(x1.size * x1.dtype.itemsize + Bp * 128 * 4 +
                  sum(int(v.size) * v.dtype.itemsize for v in prep.values()))

    out = pl.pallas_call(
        _lenet_kernel,
        out_shape=jax.ShapeDtypeStruct((Bp, 128), jnp.float32),
        grid=(nt,),
        in_specs=[
            pl.BlockSpec((24 * b_tile, 256), lambda t: (t, 0)),   # im2row'ed images (tile t)
            pl.BlockSpec((256, 768), lambda t: (0, 0)),           # conv1 fused weights (resident)
            pl.BlockSpec((2048, 1024), lambda t: (0, 0)),         # conv2-as-FC weights (resident)
            pl.BlockSpec((256, 512), lambda t: (0, 0)),           # fc1 weights (resident)
            pl.BlockSpec((512, 128), lambda t: (0, 0)),           # fc2 weights (resident)
            pl.BlockSpec((1, 768), lambda t: (0, 0)),             # bn1 scale
            pl.BlockSpec((1, 768), lambda t: (0, 0)),             # bn1 shift
            pl.BlockSpec((1, 1024), lambda t: (0, 0)),            # bn2 scale
            pl.BlockSpec((1, 1024), lambda t: (0, 0)),            # bn2 shift
            pl.BlockSpec((1, 512), lambda t: (0, 0)),             # bn3 scale
            pl.BlockSpec((1, 512), lambda t: (0, 0)),             # bn3 shift
            pl.BlockSpec((1, 128), lambda t: (0, 0)),             # fc2 bias
        ],
        out_specs=pl.BlockSpec((b_tile, 128), lambda t: (t, 0)),
        compiler_params=pltpu.CompilerParams(
            dimension_semantics=("parallel",),          # batch tiles shard across TCs (v7x)
            vmem_limit_bytes=32 * 1024 * 1024,
        ),
        cost_estimate=pl.CostEstimate(
            flops=n_flops, transcendentals=0, bytes_accessed=n_bytes),
    )(x1, prep["w1b"], prep["w2b"], prep["w3p"], prep["w4p"],
      prep["sc1"], prep["sh1"], prep["sc2"], prep["sh2"],
      prep["sc3"], prep["sh3"], prep["b4p"])

    return out[:B, :10]                                    # drop batch/lane padding -> (B, 10)


# ---------------------------------------------------------------------------
# Pure-JAX f32 reference (eval-mode PyTorch semantics) + demo params
# ---------------------------------------------------------------------------
def lenet_reference(x, params, eps=1e-5):
    hi = jax.lax.Precision.HIGHEST

    def convbn(h, w, b, g, be, rm, rv, psz):
        h = lax.conv_general_dilated(h, w, (1, 1), "VALID",
                                     dimension_numbers=("NCHW", "OIHW", "NCHW"),
                                     precision=hi)
        h = h + b[None, :, None, None]
        h = g[None, :, None, None] * (h - rm[None, :, None, None]) / \
            jnp.sqrt(rv[None, :, None, None] + eps) + be[None, :, None, None]
        h = jnp.maximum(h, 0.0)
        return lax.reduce_window(h, -jnp.inf, lax.max,
                                 (1, 1, psz, psz), (1, 1, psz, psz), "VALID")

    h = convbn(x, params["w1"], params["b1"], params["g1"], params["be1"],
               params["rm1"], params["rv1"], 3)
    h = convbn(h, params["w2"], params["b2"], params["g2"], params["be2"],
               params["rm2"], params["rv2"], 2)
    h = h.reshape(h.shape[0], -1)                          # (B, 200), (c, h, w) order
    h = jnp.dot(h, params["w3"].T, precision=hi) + params["b3"]
    h = params["g3"] * (h - params["rm3"]) / jnp.sqrt(params["rv3"] + eps) + params["be3"]
    h = jnp.maximum(h, 0.0)
    return jnp.dot(h, params["w4"].T, precision=hi) + params["b4"]


def init_params(key):
    ks = jax.random.split(key, 14)

    def n(k, shape, s=0.1):
        return (s * jax.random.normal(k, shape)).astype(jnp.float32)

    return dict(
        # convbn(1, 20, 5): Conv2d + BatchNorm2d(20)
        w1=n(ks[0], (20, 1, 5, 5)), b1=n(ks[1], (20,), 0.01),
        g1=1.0 + n(ks[2], (20,), 0.05), be1=n(ks[3], (20,), 0.05),
        rm1=jnp.zeros((20,), jnp.float32), rv1=jnp.ones((20,), jnp.float32),
        # convbn(20, 50, 5)
        w2=n(ks[4], (50, 20, 5, 5), 0.05), b2=n(ks[5], (50,), 0.01),
        g2=1.0 + n(ks[6], (50,), 0.05), be2=n(ks[7], (50,), 0.05),
        rm2=jnp.zeros((50,), jnp.float32), rv2=jnp.ones((50,), jnp.float32),
        # Linear(200, 500) + BatchNorm1d(500)
        w3=n(ks[8], (500, 200), 0.05), b3=n(ks[9], (500,), 0.01),
        g3=1.0 + n(ks[10], (500,), 0.05), be3=n(ks[11], (500,), 0.05),
        rm3=jnp.zeros((500,), jnp.float32), rv3=jnp.ones((500,), jnp.float32),
        # Linear(500, 10)
        w4=n(ks[12], (10, 500), 0.05), b4=n(ks[13], (10,), 0.01),
    )


if __name__ == "__main__":
    key = jax.random.PRNGKey(0)
    kx, kp = jax.random.split(key)
    # Spatial 28x28 is forced by the 50*2*2 flatten; batch 32 = 2 tiles -> even grid for v7x.
    x = jax.random.normal(kx, (32, 1, 28, 28), dtype=jnp.float32)
    params = init_params(kp)

    prep = prepare_params(params)                   # one-time weight packing + BN folding
    fwd = jax.jit(lambda xx: lenet_forward(xx, prep))
    out = jax.block_until_ready(fwd(x))
    assert out.shape == (32, 10) and out.dtype == jnp.float32

    ref = jax.block_until_ready(jax.jit(lenet_reference)(x, params))
    np.testing.assert_allclose(np.asarray(out), np.asarray(ref), atol=8e-2, rtol=8e-2)
    print("KERNEL_OK")
</pallas_src>

<mosaic_0001>
module attributes {stable_mosaic.version = 11 : i64} {
  func.func @_lenet_kernel(%arg0: i32, %arg1: memref<384x256xbf16, #tpu.memory_space<vmem>>, %arg2: memref<256x768xbf16, #tpu.memory_space<vmem>>, %arg3: memref<2048x1024xbf16, #tpu.memory_space<vmem>>, %arg4: memref<256x512xbf16, #tpu.memory_space<vmem>>, %arg5: memref<512x128xbf16, #tpu.memory_space<vmem>>, %arg6: memref<1x768xf32, #tpu.memory_space<vmem>>, %arg7: memref<1x768xf32, #tpu.memory_space<vmem>>, %arg8: memref<1x1024xf32, #tpu.memory_space<vmem>>, %arg9: memref<1x1024xf32, #tpu.memory_space<vmem>>, %arg10: memref<1x512xf32, #tpu.memory_space<vmem>>, %arg11: memref<1x512xf32, #tpu.memory_space<vmem>>, %arg12: memref<1x128xf32, #tpu.memory_space<vmem>>, %arg13: memref<16x128xf32, #tpu.memory_space<vmem>>) attributes {dimension_semantics = [#tpu.dimension_semantics<parallel>], iteration_bounds = array<i64: 2>, scalar_prefetch = 0 : i64, scratch_operands = 0 : i64, tpu.core_type = #tpu.core_type<tc>, window_params = [{transform_indices = @transform_0, window_bounds = array<i64: 384, 256>}, {pipeline_mode = #tpu.pipeline_mode<synchronous>, transform_indices = @transform_1, window_bounds = array<i64: 256, 768>}, {pipeline_mode = #tpu.pipeline_mode<synchronous>, transform_indices = @transform_2, window_bounds = array<i64: 2048, 1024>}, {pipeline_mode = #tpu.pipeline_mode<synchronous>, transform_indices = @transform_3, window_bounds = array<i64: 256, 512>}, {pipeline_mode = #tpu.pipeline_mode<synchronous>, transform_indices = @transform_4, window_bounds = array<i64: 512, 128>}, {pipeline_mode = #tpu.pipeline_mode<synchronous>, transform_indices = @transform_5, window_bounds = array<i64: 1, 768>}, {pipeline_mode = #tpu.pipeline_mode<synchronous>, transform_indices = @transform_6, window_bounds = array<i64: 1, 768>}, {pipeline_mode = #tpu.pipeline_mode<synchronous>, transform_indices = @transform_7, window_bounds = array<i64: 1, 1024>}, {pipeline_mode = #tpu.pipeline_mode<synchronous>, transform_indices = @transform_8, window_bounds = array<i64: 1, 1024>}, {pipeline_mode = #tpu.pipeline_mode<synchronous>, transform_indices = @transform_9, window_bounds = array<i64: 1, 512>}, {pipeline_mode = #tpu.pipeline_mode<synchronous>, transform_indices = @transform_10, window_bounds = array<i64: 1, 512>}, {pipeline_mode = #tpu.pipeline_mode<synchronous>, transform_indices = @transform_11, window_bounds = array<i64: 1, 128>}, {transform_indices = @transform_12, window_bounds = array<i64: 16, 128>}]} {
    %c0 = arith.constant 0 : index
    %c0_0 = arith.constant 0 : index
    %0 = vector.load %arg1[%c0, %c0_0] : memref<384x256xbf16, #tpu.memory_space<vmem>>, vector<384x256xbf16>
    %c0_1 = arith.constant 0 : index
    %c0_2 = arith.constant 0 : index
    %1 = vector.load %arg2[%c0_1, %c0_2] : memref<256x768xbf16, #tpu.memory_space<vmem>>, vector<256x768xbf16>
    %cst = arith.constant dense<0.000000e+00> : vector<384x768xf32>
    %2 = tpu.matmul %0, %1, %cst {dimension_numbers = #tpu.dot_dimension_numbers<[1], [0], [0], [1], [0, 0, 1, 1], [], []>} : vector<384x256xbf16>, vector<256x768xbf16>, vector<384x768xf32> -> vector<384x768xf32>
    %c0_3 = arith.constant 0 : index
    %c0_4 = arith.constant 0 : index
    %3 = vector.load %arg6[%c0_3, %c0_4] : memref<1x768xf32, #tpu.memory_space<vmem>>, vector<1x768xf32>
    %4 = vector.broadcast %3 : vector<1x768xf32> to vector<384x768xf32>
    %5 = arith.mulf %2, %4 : vector<384x768xf32>
    %c0_5 = arith.constant 0 : index
    %c0_6 = arith.constant 0 : index
    %6 = vector.load %arg7[%c0_5, %c0_6] : memref<1x768xf32, #tpu.memory_space<vmem>>, vector<1x768xf32>
    %7 = vector.broadcast %6 : vector<1x768xf32> to vector<384x768xf32>
    %8 = arith.addf %5, %7 : vector<384x768xf32>
    %cst_7 = arith.constant 0.000000e+00 : f32
    %9 = vector.broadcast %cst_7 : f32 to vector<384x768xf32>
    %10 = arith.maximumf %8, %9 : vector<384x768xf32>
    %11 = vector.extract_strided_slice %10 {offsets = [0, 0], sizes = [128, 768], strides = [1, 1]} : vector<384x768xf32> to vector<128x768xf32>
    %12 = vector.extract_strided_slice %10 {offsets = [128, 0], sizes = [128, 768], strides = [1, 1]} : vector<384x768xf32> to vector<128x768xf32>
    %13 = arith.maximumf %11, %12 : vector<128x768xf32>
    %14 = vector.extract_strided_slice %10 {offsets = [256, 0], sizes = [128, 768], strides = [1, 1]} : vector<384x768xf32> to vector<128x768xf32>
    %15 = arith.maximumf %13, %14 : vector<128x768xf32>
    %16 = vector.extract_strided_slice %15 {offsets = [0, 0], sizes = [128, 256], strides = [1, 1]} : vector<128x768xf32> to vector<128x256xf32>
    %17 = vector.extract_strided_slice %15 {offsets = [0, 256], sizes = [128, 256], strides = [1, 1]} : vector<128x768xf32> to vector<128x256xf32>
    %18 = arith.maximumf %16, %17 : vector<128x256xf32>
    %19 = vector.extract_strided_slice %15 {offsets = [0, 512], sizes = [128, 256], strides = [1, 1]} : vector<128x768xf32> to vector<128x256xf32>
    %20 = arith.maximumf %18, %19 : vector<128x256xf32>
    %21 = arith.truncf %20 : vector<128x256xf32> to vector<128x256xbf16>
    %22 = vector.extract_strided_slice %21 {offsets = [0, 0], sizes = [16, 256], strides = [1, 1]} : vector<128x256xbf16> to vector<16x256xbf16>
    %23 = vector.extract_strided_slice %21 {offsets = [16, 0], sizes = [16, 256], strides = [1, 1]} : vector<128x256xbf16> to vector<16x256xbf16>
    %24 = vector.extract_strided_slice %21 {offsets = [32, 0], sizes = [16, 256], strides = [1, 1]} : vector<128x256xbf16> to vector<16x256xbf16>
    %25 = vector.extract_strided_slice %21 {offsets = [48, 0], sizes = [16, 256], strides = [1, 1]} : vector<128x256xbf16> to vector<16x256xbf16>
    %26 = vector.extract_strided_slice %21 {offsets = [64, 0], sizes = [16, 256], strides = [1, 1]} : vector<128x256xbf16> to vector<16x256xbf16>
    %27 = vector.extract_strided_slice %21 {offsets = [80, 0], sizes = [16, 256], strides = [1, 1]} : vector<128x256xbf16> to vector<16x256xbf16>
    %28 = vector.extract_strided_slice %21 {offsets = [96, 0], sizes = [16, 256], strides = [1, 1]} : vector<128x256xbf16> to vector<16x256xbf16>
    %29 = vector.extract_strided_slice %21 {offsets = [112, 0], sizes = [16, 256], strides = [1, 1]} : vector<128x256xbf16> to vector<16x256xbf16>
    %30 = tpu.concatenate %22, %23, %24, %25, %26, %27, %28, %29 in 1 : vector<16x256xbf16>, vector<16x256xbf16>, vector<16x256xbf16>, vector<16x256xbf16>, vector<16x256xbf16>, vector<16x256xbf16>, vector<16x256xbf16>, vector<16x256xbf16> -> vector<16x2048xbf16>
    %c0_8 = arith.constant 0 : index
    %c0_9 = arith.constant 0 : index
    %31 = vector.load %arg3[%c0_8, %c0_9] : memref<2048x1024xbf16, #tpu.memory_space<vmem>>, vector<2048x1024xbf16>
    %cst_10 = arith.constant dense<0.000000e+00> : vector<16x1024xf32>
    %32 = tpu.matmul %30, %31, %cst_10 {dimension_numbers = #tpu.dot_dimension_numbers<[1], [0], [0], [1], [0, 0, 1, 1], [], []>} : vector<16x2048xbf16>, vector<2048x1024xbf16>, vector<16x1024xf32> -> vector<16x1024xf32>
    %c0_11 = arith.constant 0 : index
    %c0_12 = arith.constant 0 : index
    %33 = vector.load %arg8[%c0_11, %c0_12] : memref<1x1024xf32, #tpu.memory_space<vmem>>, vector<1x1024xf32>
    %34 = vector.broadcast %33 : vector<1x1024xf32> to vector<16x1024xf32>
    %35 = arith.mulf %32, %34 : vector<16x1024xf32>
    %c0_13 = arith.constant 0 : index
    %c0_14 = arith.constant 0 : index
    %36 = vector.load %arg9[%c0_13, %c0_14] : memref<1x1024xf32, #tpu.memory_space<vmem>>, vector<1x1024xf32>
    %37 = vector.broadcast %36 : vector<1x1024xf32> to vector<16x1024xf32>
    %38 = arith.addf %35, %37 : vector<16x1024xf32>
    %cst_15 = arith.constant 0.000000e+00 : f32
    %39 = vector.broadcast %cst_15 : f32 to vector<16x1024xf32>
    %40 = arith.maximumf %38, %39 : vector<16x1024xf32>
    %41 = vector.extract_strided_slice %40 {offsets = [0, 0], sizes = [16, 256], strides = [1, 1]} : vector<16x1024xf32> to vector<16x256xf32>
    %42 = vector.extract_strided_slice %40 {offsets = [0, 256], sizes = [16, 256], strides = [1, 1]} : vector<16x1024xf32> to vector<16x256xf32>
    %43 = arith.maximumf %41, %42 : vector<16x256xf32>
    %44 = vector.extract_strided_slice %40 {offsets = [0, 512], sizes = [16, 256], strides = [1, 1]} : vector<16x1024xf32> to vector<16x256xf32>
    %45 = vector.extract_strided_slice %40 {offsets = [0, 768], sizes = [16, 256], strides = [1, 1]} : vector<16x1024xf32> to vector<16x256xf32>
    %46 = arith.maximumf %44, %45 : vector<16x256xf32>
    %47 = arith.maximumf %43, %46 : vector<16x256xf32>
    %48 = arith.truncf %47 : vector<16x256xf32> to vector<16x256xbf16>
    %c0_16 = arith.constant 0 : index
    %c0_17 = arith.constant 0 : index
    %49 = vector.load %arg4[%c0_16, %c0_17] : memref<256x512xbf16, #tpu.memory_space<vmem>>, vector<256x512xbf16>
    %cst_18 = arith.constant dense<0.000000e+00> : vector<16x512xf32>
    %50 = tpu.matmul %48, %49, %cst_18 {dimension_numbers = #tpu.dot_dimension_numbers<[1], [0], [0], [1], [0, 0, 1, 1], [], []>} : vector<16x256xbf16>, vector<256x512xbf16>, vector<16x512xf32> -> vector<16x512xf32>
    %c0_19 = arith.constant 0 : index
    %c0_20 = arith.constant 0 : index
    %51 = vector.load %arg10[%c0_19, %c0_20] : memref<1x512xf32, #tpu.memory_space<vmem>>, vector<1x512xf32>
    %52 = vector.broadcast %51 : vector<1x512xf32> to vector<16x512xf32>
    %53 = arith.mulf %50, %52 : vector<16x512xf32>
    %c0_21 = arith.constant 0 : index
    %c0_22 = arith.constant 0 : index
    %54 = vector.load %arg11[%c0_21, %c0_22] : memref<1x512xf32, #tpu.memory_space<vmem>>, vector<1x512xf32>
    %55 = vector.broadcast %54 : vector<1x512xf32> to vector<16x512xf32>
    %56 = arith.addf %53, %55 : vector<16x512xf32>
    %cst_23 = arith.constant 0.000000e+00 : f32
    %57 = vector.broadcast %cst_23 : f32 to vector<16x512xf32>
    %58 = arith.maximumf %56, %57 : vector<16x512xf32>
    %59 = arith.truncf %58 : vector<16x512xf32> to vector<16x512xbf16>
    %c0_24 = arith.constant 0 : index
    %c0_25 = arith.constant 0 : index
    %60 = vector.load %arg5[%c0_24, %c0_25] : memref<512x128xbf16, #tpu.memory_space<vmem>>, vector<512x128xbf16>
    %cst_26 = arith.constant dense<0.000000e+00> : vector<16x128xf32>
    %61 = tpu.matmul %59, %60, %cst_26 {dimension_numbers = #tpu.dot_dimension_numbers<[1], [0], [0], [1], [0, 0, 1, 1], [], []>} : vector<16x512xbf16>, vector<512x128xbf16>, vector<16x128xf32> -> vector<16x128xf32>
    %c0_27 = arith.constant 0 : index
    %c0_28 = arith.constant 0 : index
    %62 = vector.load %arg12[%c0_27, %c0_28] : memref<1x128xf32, #tpu.memory_space<vmem>>, vector<1x128xf32>
    %63 = vector.broadcast %62 : vector<1x128xf32> to vector<16x128xf32>
    %64 = arith.addf %61, %63 : vector<16x128xf32>
    %c0_29 = arith.constant 0 : index
    %c0_30 = arith.constant 0 : index
    %65 = vector.load %arg13[%c0_29, %c0_30] : memref<16x128xf32, #tpu.memory_space<vmem>>, vector<16x128xf32>
    tpu.vector_store %arg13[%c0_29, %c0_30], %64 {strides = array<i32>} : memref<16x128xf32, #tpu.memory_space<vmem>>, vector<16x128xf32>,
    return
  }
  func.func @transform_0(%arg0: i32) -> (i32, i32) {
    %c0_i32 = arith.constant 0 : i32
    %c0_i32_0 = arith.constant 0 : i32
    return %arg0, %c0_i32 : i32, i32
  }
  func.func @transform_1(%arg0: i32) -> (i32, i32) {
    %c0_i32 = arith.constant 0 : i32
    %c0_i32_0 = arith.constant 0 : i32
    %c0_i32_1 = arith.constant 0 : i32
    return %c0_i32, %c0_i32_0 : i32, i32
  }
  func.func @transform_2(%arg0: i32) -> (i32, i32) {
    %c0_i32 = arith.constant 0 : i32
    %c0_i32_0 = arith.constant 0 : i32
    %c0_i32_1 = arith.constant 0 : i32
    return %c0_i32, %c0_i32_0 : i32, i32
  }
  func.func @transform_3(%arg0: i32) -> (i32, i32) {
    %c0_i32 = arith.constant 0 : i32
    %c0_i32_0 = arith.constant 0 : i32
    %c0_i32_1 = arith.constant 0 : i32
    return %c0_i32, %c0_i32_0 : i32, i32
  }
  func.func @transform_4(%arg0: i32) -> (i32, i32) {
    %c0_i32 = arith.constant 0 : i32
    %c0_i32_0 = arith.constant 0 : i32
    %c0_i32_1 = arith.constant 0 : i32
    return %c0_i32, %c0_i32_0 : i32, i32
  }
  func.func @transform_5(%arg0: i32) -> (i32, i32) {
    %c0_i32 = arith.constant 0 : i32
    %c0_i32_0 = arith.constant 0 : i32
    %c0_i32_1 = arith.constant 0 : i32
    return %c0_i32, %c0_i32_0 : i32, i32
  }
  func.func @transform_6(%arg0: i32) -> (i32, i32) {
    %c0_i32 = arith.constant 0 : i32
    %c0_i32_0 = arith.constant 0 : i32
    %c0_i32_1 = arith.constant 0 : i32
    return %c0_i32, %c0_i32_0 : i32, i32
  }
  func.func @transform_7(%arg0: i32) -> (i32, i32) {
    %c0_i32 = arith.constant 0 : i32
    %c0_i32_0 = arith.constant 0 : i32
    %c0_i32_1 = arith.constant 0 : i32
    return %c0_i32, %c0_i32_0 : i32, i32
  }
  func.func @transform_8(%arg0: i32) -> (i32, i32) {
    %c0_i32 = arith.constant 0 : i32
    %c0_i32_0 = arith.constant 0 : i32
    %c0_i32_1 = arith.constant 0 : i32
    return %c0_i32, %c0_i32_0 : i32, i32
  }
  func.func @transform_9(%arg0: i32) -> (i32, i32) {
    %c0_i32 = arith.constant 0 : i32
    %c0_i32_0 = arith.constant 0 : i32
    %c0_i32_1 = arith.constant 0 : i32
    return %c0_i32, %c0_i32_0 : i32, i32
  }
  func.func @transform_10(%arg0: i32) -> (i32, i32) {
    %c0_i32 = arith.constant 0 : i32
    %c0_i32_0 = arith.constant 0 : i32
    %c0_i32_1 = arith.constant 0 : i32
    return %c0_i32, %c0_i32_0 : i32, i32
  }
  func.func @transform_11(%arg0: i32) -> (i32, i32) {
    %c0_i32 = arith.constant 0 : i32
    %c0_i32_0 = arith.constant 0 : i32
    %c0_i32_1 = arith.constant 0 : i32
    return %c0_i32, %c0_i32_0 : i32, i32
  }
  func.func @transform_12(%arg0: i32) -> (i32, i32) {
    %c0_i32 = arith.constant 0 : i32
    %c0_i32_0 = arith.constant 0 : i32
    return %arg0, %c0_i32 : i32, i32
  }
}

</mosaic_0001>

<llo_original>
// kernel: _lambda_.1
$region0: #{_lambda_.1}
  #allocation0 [shape = 'u32[]', space=smem, size = 0x4, offset = 0x4, fixed_abs, tag = 'smem constant byte address 0x4 - core index']
  #allocation1 [shape = 'u32[144,128]{1,0:T(1,128)}', space=vmem, size = 0x12000, scoped, tag = 'internal scratch']
  %s0 = inlined_call_operand.vmem [shape: bf16[768,256], index: 0, kind: input, shape index: {}]
  %s1 = inlined_call_operand.vmem [shape: bf16[256,768], index: 1, kind: input, shape index: {}]
  %s2 = inlined_call_operand.vmem [shape: bf16[2048,1024], index: 2, kind: input, shape index: {}]
  %s3 = inlined_call_operand.vmem [shape: bf16[256,512], index: 3, kind: input, shape index: {}]
  %s4 = inlined_call_operand.vmem [shape: bf16[512,128], index: 4, kind: input, shape index: {}]
  %s5 = inlined_call_operand.vmem [shape: f32[1,768], index: 5, kind: input, shape index: {}]
  %s6 = inlined_call_operand.vmem [shape: f32[1,768], index: 6, kind: input, shape index: {}]
  %s7 = inlined_call_operand.vmem [shape: f32[1,1024], index: 7, kind: input, shape index: {}]
  %s8 = inlined_call_operand.vmem [shape: f32[1,1024], index: 8, kind: input, shape index: {}]
  %s9 = inlined_call_operand.vmem [shape: f32[1,512], index: 9, kind: input, shape index: {}]
  %s10 = inlined_call_operand.vmem [shape: f32[1,512], index: 10, kind: input, shape index: {}]
  %s11 = inlined_call_operand.vmem [shape: f32[1,128], index: 11, kind: input, shape index: {}]
  %s12 = inlined_call_operand.vmem [shape: f32[32,128], index: 12, kind: output, shape index: {}]
  %s13 = sld [smem:[#allocation0]]
  $region81: #{_lambda_.1} parent=0
    _
  %s15 = ssub.s32 1, %s13
  %s16 = scalar_select 0, %s15, %s13
  loop: start=0, step=1, limit=4
  $region2: #{_lambda_.1} parent=0 // loop_pre_header
    _
  $region3: #{_lambda_.1} parent=0 // loop_header
    %s18 = sphi 0, %s22
    %p19 = scmp.ge.s32.totalorder %s18, 4
    %s28 = sphi 0, %s30
    %s31 = sphi 0, %s28
    %s32 = sphi 0, %s31
    %s48 = sphi 0, %s32
    %s52 = sphi 0, %s52
    %s54 = sphi 0, %s52
    %s55 = sphi 0, %s54
    %s69 = sphi 0, %s55
    %s73 = sphi 0, %s73
    %s75 = sphi 0, %s73
    %s76 = sphi 0, %s75
    %s90 = sphi 0, %s76
    %s94 = sphi 0, %s94
    %s96 = sphi 0, %s94
    %s97 = sphi 0, %s96
    %s111 = sphi 0, %s97
    %s115 = sphi 0, %s115
    %s117 = sphi 0, %s115
    %s118 = sphi 0, %s117
    %s132 = sphi 0, %s118
    %s136 = sphi 0, %s136
    %s138 = sphi 0, %s136
    %s139 = sphi 0, %s138
    %s153 = sphi 0, %s139
    %s157 = sphi 0, %s157
    %s159 = sphi 0, %s157
    %s160 = sphi 0, %s159
    %s174 = sphi 0, %s160
    %s178 = sphi 0, %s178
    %s180 = sphi 0, %s178
    %s181 = sphi 0, %s180
    %s195 = sphi 0, %s181
    %s199 = sphi 0, %s199
    %s201 = sphi 0, %s199
    %s202 = sphi 0, %s201
    %s216 = sphi 0, %s202
    %s220 = sphi 0, %s220
    %s222 = sphi 0, %s220
    %s223 = sphi 0, %s222
    %s237 = sphi 0, %s223
    %s241 = sphi 0, %s241
    %s243 = sphi 0, %s241
    %s244 = sphi 0, %s243
    %s258 = sphi 0, %s244
    %s262 = sphi 0, %s262
    %s264 = sphi 0, %s262
    %s265 = sphi 0, %s264
    %s279 = sphi 0, %s265
    %s285 = sphi 0, %s287
    %s288 = sphi 0, %s285
    %s289 = sphi 0, %s288
    %s305 = sphi 0, %s289
  $region4: #{_lambda_.1} parent=0 // loop_header_branch
    %21 = sbr.rel (%p19) target = $region8
  $region5: #{_lambda_.1} parent=0 // loop_body
    %s23 = ssub.s32 %s18, 1
    %s24 = ssub.s32 %s18, 2
    %s25 = sadd.s32 %s18, 1
    %s26 = ssub.s32 %s18, %s25
    %p27 = scmp.eq.s32.totalorder %s26, 0
    %s29 = sadd.s32 %s28, 1
    %s30 = scalar_select %p27, %s28, %s29
    %p33 = pneg %p27
    %p34 = scmp.eq.s32.totalorder %s18, 1
    %p35 = por %p33, %p34
    %p36 = scmp.ne.s32.totalorder %s28, %s31
    %p37 = scmp.eq.s32.totalorder %s18, 0
    %p38 = por %p36, %p37
    %p39 = scmp.ne.s32.totalorder %s28, %s31
    %p40 = scmp.eq.s32.totalorder %s23, 1
    %p41 = por %p39, %p40
    %p42 = scmp.ne.s32.totalorder %s31, %s32
    %p43 = scmp.eq.s32.totalorder %s23, 0
    %p44 = por %p42, %p43
    %p45 = scmp.ne.s32.totalorder %s31, %s32
    %p46 = scmp.eq.s32.totalorder %s24, 1
    %p47 = por %p45, %p46
    %p49 = scmp.ne.s32.totalorder %s32, %s48
    %p50 = scmp.eq.s32.totalorder %s24, 0
    %p51 = por %p49, %p50
    %s53 = sadd.s32 %s52, 1
    %p56 = scmp.eq.s32.totalorder %s18, 1
    %p57 = scmp.ne.s32.totalorder %s52, %s54
    %p58 = scmp.eq.s32.totalorder %s18, 0
    %p59 = por %p57, %p58
    %p60 = scmp.ne.s32.totalorder %s52, %s54
    %p61 = scmp.eq.s32.totalorder %s23, 1
    %p62 = por %p60, %p61
    %p63 = scmp.ne.s32.totalorder %s54, %s55
    %p64 = scmp.eq.s32.totalorder %s23, 0
    %p65 = por %p63, %p64
    %p66 = scmp.ne.s32.totalorder %s54, %s55
    %p67 = scmp.eq.s32.totalorder %s24, 1
    %p68 = por %p66, %p67
    %p70 = scmp.ne.s32.totalorder %s55, %s69
    %p71 = scmp.eq.s32.totalorder %s24, 0
    %p72 = por %p70, %p71
    %s74 = sadd.s32 %s73, 1
    %p77 = scmp.eq.s32.totalorder %s18, 1
    %p78 = scmp.ne.s32.totalorder %s73, %s75
    %p79 = scmp.eq.s32.totalorder %s18, 0
    %p80 = por %p78, %p79
    %p81 = scmp.ne.s32.totalorder %s73, %s75
    %p82 = scmp.eq.s32.totalorder %s23, 1
    %p83 = por %p81, %p82
    %p84 = scmp.ne.s32.totalorder %s75, %s76
    %p85 = scmp.eq.s32.totalorder %s23, 0
    %p86 = por %p84, %p85
    %p87 = scmp.ne.s32.totalorder %s75, %s76
    %p88 = scmp.eq.s32.totalorder %s24, 1
    %p89 = por %p87, %p88
    %p91 = scmp.ne.s32.totalorder %s76, %s90
    %p92 = scmp.eq.s32.totalorder %s24, 0
    %p93 = por %p91, %p92
    %s95 = sadd.s32 %s94, 1
    %p98 = scmp.eq.s32.totalorder %s18, 1
    %p99 = scmp.ne.s32.totalorder %s94, %s96
    %p100 = scmp.eq.s32.totalorder %s18, 0
    %p101 = por %p99, %p100
    %p102 = scmp.ne.s32.totalorder %s94, %s96
    %p103 = scmp.eq.s32.totalorder %s23, 1
    %p104 = por %p102, %p103
    %p105 = scmp.ne.s32.totalorder %s96, %s97
    %p106 = scmp.eq.s32.totalorder %s23, 0
    %p107 = por %p105, %p106
    %p108 = scmp.ne.s32.totalorder %s96, %s97
    %p109 = scmp.eq.s32.totalorder %s24, 1
    %p110 = por %p108, %p109
    %p112 = scmp.ne.s32.totalorder %s97, %s111
    %p113 = scmp.eq.s32.totalorder %s24, 0
    %p114 = por %p112, %p113
    %s116 = sadd.s32 %s115, 1
    %p119 = scmp.eq.s32.totalorder %s18, 1
    %p120 = scmp.ne.s32.totalorder %s115, %s117
    %p121 = scmp.eq.s32.totalorder %s18, 0
    %p122 = por %p120, %p121
    %p123 = scmp.ne.s32.totalorder %s115, %s117
    %p124 = scmp.eq.s32.totalorder %s23, 1
    %p125 = por %p123, %p124
    %p126 = scmp.ne.s32.totalorder %s117, %s118
    %p127 = scmp.eq.s32.totalorder %s23, 0
    %p128 = por %p126, %p127
    %p129 = scmp.ne.s32.totalorder %s117, %s118
    %p130 = scmp.eq.s32.totalorder %s24, 1
    %p131 = por %p129, %p130
    %p133 = scmp.ne.s32.totalorder %s118, %s132
    %p134 = scmp.eq.s32.totalorder %s24, 0
    %p135 = por %p133, %p134
    %s137 = sadd.s32 %s136, 1
    %p140 = scmp.eq.s32.totalorder %s18, 1
    %p141 = scmp.ne.s32.totalorder %s136, %s138
    %p142 = scmp.eq.s32.totalorder %s18, 0
    %p143 = por %p141, %p142
    %p144 = scmp.ne.s32.totalorder %s136, %s138
    %p145 = scmp.eq.s32.totalorder %s23, 1
    %p146 = por %p144, %p145
    %p147 = scmp.ne.s32.totalorder %s138, %s139
    %p148 = scmp.eq.s32.totalorder %s23, 0
    %p149 = por %p147, %p148
    %p150 = scmp.ne.s32.totalorder %s138, %s139
    %p151 = scmp.eq.s32.totalorder %s24, 1
    %p152 = por %p150, %p151
    %p154 = scmp.ne.s32.totalorder %s139, %s153
    %p155 = scmp.eq.s32.totalorder %s24, 0
    %p156 = por %p154, %p155
    %s158 = sadd.s32 %s157, 1
    %p161 = scmp.eq.s32.totalorder %s18, 1
    %p162 = scmp.ne.s32.totalorder %s157, %s159
    %p163 = scmp.eq.s32.totalorder %s18, 0
    %p164 = por %p162, %p163
    %p165 = scmp.ne.s32.totalorder %s157, %s159
    %p166 = scmp.eq.s32.totalorder %s23, 1
    %p167 = por %p165, %p166
    %p168 = scmp.ne.s32.totalorder %s159, %s160
    %p169 = scmp.eq.s32.totalorder %s23, 0
    %p170 = por %p168, %p169
    %p171 = scmp.ne.s32.totalorder %s159, %s160
    %p172 = scmp.eq.s32.totalorder %s24, 1
    %p173 = por %p171, %p172
    %p175 = scmp.ne.s32.totalorder %s160, %s174
    %p176 = scmp.eq.s32.totalorder %s24, 0
    %p177 = por %p175, %p176
    %s179 = sadd.s32 %s178, 1
    %p182 = scmp.eq.s32.totalorder %s18, 1
    %p183 = scmp.ne.s32.totalorder %s178, %s180
    %p184 = scmp.eq.s32.totalorder %s18, 0
    %p185 = por %p183, %p184
    %p186 = scmp.ne.s32.totalorder %s178, %s180
    %p187 = scmp.eq.s32.totalorder %s23, 1
    %p188 = por %p186, %p187
    %p189 = scmp.ne.s32.totalorder %s180, %s181
    %p190 = scmp.eq.s32.totalorder %s23, 0
    %p191 = por %p189, %p190
    %p192 = scmp.ne.s32.totalorder %s180, %s181
    %p193 = scmp.eq.s32.totalorder %s24, 1
    %p194 = por %p192, %p193
    %p196 = scmp.ne.s32.totalorder %s181, %s195
    %p197 = scmp.eq.s32.totalorder %s24, 0
    %p198 = por %p196, %p197
    %s200 = sadd.s32 %s199, 1
    %p203 = scmp.eq.s32.totalorder %s18, 1
    %p204 = scmp.ne.s32.totalorder %s199, %s201
    %p205 = scmp.eq.s32.totalorder %s18, 0
    %p206 = por %p204, %p205
    %p207 = scmp.ne.s32.totalorder %s199, %s201
    %p208 = scmp.eq.s32.totalorder %s23, 1
    %p209 = por %p207, %p208
    %p210 = scmp.ne.s32.totalorder %s201, %s202
    %p211 = scmp.eq.s32.totalorder %s23, 0
    %p212 = por %p210, %p211
    %p213 = scmp.ne.s32.totalorder %s201, %s202
    %p214 = scmp.eq.s32.totalorder %s24, 1
    %p215 = por %p213, %p214
    %p217 = scmp.ne.s32.totalorder %s202, %s216
    %p218 = scmp.eq.s32.totalorder %s24, 0
    %p219 = por %p217, %p218
    %s221 = sadd.s32 %s220, 1
    %p224 = scmp.eq.s32.totalorder %s18, 1
    %p225 = scmp.ne.s32.totalorder %s220, %s222
    %p226 = scmp.eq.s32.totalorder %s18, 0
    %p227 = por %p225, %p226
    %p228 = scmp.ne.s32.totalorder %s220, %s222
    %p229 = scmp.eq.s32.totalorder %s23, 1
    %p230 = por %p228, %p229
    %p231 = scmp.ne.s32.totalorder %s222, %s223
    %p232 = scmp.eq.s32.totalorder %s23, 0
    %p233 = por %p231, %p232
    %p234 = scmp.ne.s32.totalorder %s222, %s223
    %p235 = scmp.eq.s32.totalorder %s24, 1
    %p236 = por %p234, %p235
    %p238 = scmp.ne.s32.totalorder %s223, %s237
    %p239 = scmp.eq.s32.totalorder %s24, 0
    %p240 = por %p238, %p239
    %s242 = sadd.s32 %s241, 1
    %p245 = scmp.eq.s32.totalorder %s18, 1
    %p246 = scmp.ne.s32.totalorder %s241, %s243
    %p247 = scmp.eq.s32.totalorder %s18, 0
    %p248 = por %p246, %p247
    %p249 = scmp.ne.s32.totalorder %s241, %s243
    %p250 = scmp.eq.s32.totalorder %s23, 1
    %p251 = por %p249, %p250
    %p252 = scmp.ne.s32.totalorder %s243, %s244
    %p253 = scmp.eq.s32.totalorder %s23, 0
    %p254 = por %p252, %p253
    %p255 = scmp.ne.s32.totalorder %s243, %s244
    %p256 = scmp.eq.s32.totalorder %s24, 1
    %p257 = por %p255, %p256
    %p259 = scmp.ne.s32.totalorder %s244, %s258
    %p260 = scmp.eq.s32.totalorder %s24, 0
    %p261 = por %p259, %p260
    %s263 = sadd.s32 %s262, 1
    %p266 = scmp.eq.s32.totalorder %s18, 1
    %p267 = scmp.ne.s32.totalorder %s262, %s264
    %p268 = scmp.eq.s32.totalorder %s18, 0
    %p269 = por %p267, %p268
    %p270 = scmp.ne.s32.totalorder %s262, %s264
    %p271 = scmp.eq.s32.totalorder %s23, 1
    %p272 = por %p270, %p271
    %p273 = scmp.ne.s32.totalorder %s264, %s265
    %p274 = scmp.eq.s32.totalorder %s23, 0
    %p275 = por %p273, %p274
    %p276 = scmp.ne.s32.totalorder %s264, %s265
    %p277 = scmp.eq.s32.totalorder %s24, 1
    %p278 = por %p276, %p277
    %p280 = scmp.ne.s32.totalorder %s265, %s279
    %p281 = scmp.eq.s32.totalorder %s24, 0
    %p282 = por %p280, %p281
    %s283 = ssub.s32 %s18, %s25
    %p284 = scmp.eq.s32.totalorder %s283, 0
    %s286 = sadd.s32 %s285, 1
    %s287 = scalar_select %p284, %s285, %s286
    %p290 = pneg %p284
    %p291 = scmp.eq.s32.totalorder %s18, 1
    %p292 = por %p290, %p291
    %p293 = scmp.ne.s32.totalorder %s285, %s288
    %p294 = scmp.eq.s32.totalorder %s18, 0
    %p295 = por %p293, %p294
    %p296 = scmp.ne.s32.totalorder %s285, %s288
    %p297 = scmp.eq.s32.totalorder %s23, 1
    %p298 = por %p296, %p297
    %p299 = scmp.ne.s32.totalorder %s288, %s289
    %p300 = scmp.eq.s32.totalorder %s23, 0
    %p301 = por %p299, %p300
    %p302 = scmp.ne.s32.totalorder %s288, %s289
    %p303 = scmp.eq.s32.totalorder %s24, 1
    %p304 = por %p302, %p303
    %p306 = scmp.ne.s32.totalorder %s289, %s305
    %p307 = scmp.eq.s32.totalorder %s24, 0
    %p308 = por %p306, %p307
    %p309 = scmp.le.s32.totalorder 1, %s18
    %p310 = scmp.lt.s32.totalorder %s18, 3
    %p311 = pnand %p309, %p310
    %p312 = pneg %p311
    // Predicated region
    $region9: #{_lambda_.1} parent=5 // pred_check
      _
    $region10: #{_lambda_.1} parent=5 // pred_check_branch
      %314 = sbr.rel (%p311) target = $region12
    $region11: #{_lambda_.1} parent=5 // pred_region
      %s315 = ssub.s32 %s18, 1
      // Predicated region
      $region13: #{_lambda_.1} parent=11 // pred_check
        %p316 = pneg %p65
      $region14: #{_lambda_.1} parent=11 // pred_check_branch
        %318 = sbr.rel (%p316) target = $region16
      $region15: #{_lambda_.1} parent=11 // pred_region
        _
      $region16: #{_lambda_.1} parent=11 // pred_fallthru
        _
      // Predicated region
      $region17: #{_lambda_.1} parent=11 // pred_check
        %p319 = pneg %p86
      $region18: #{_lambda_.1} parent=11 // pred_check_branch
        %321 = sbr.rel (%p319) target = $region20
      $region19: #{_lambda_.1} parent=11 // pred_region
        _
      $region20: #{_lambda_.1} parent=11 // pred_fallthru
        _
      // Predicated region
      $region21: #{_lambda_.1} parent=11 // pred_check
        %p322 = pneg %p107
      $region22: #{_lambda_.1} parent=11 // pred_check_branch
        %324 = sbr.rel (%p322) target = $region24
      $region23: #{_lambda_.1} parent=11 // pred_region
        _
      $region24: #{_lambda_.1} parent=11 // pred_fallthru
        _
      // Predicated region
      $region25: #{_lambda_.1} parent=11 // pred_check
        %p325 = pneg %p128
      $region26: #{_lambda_.1} parent=11 // pred_check_branch
        %327 = sbr.rel (%p325) target = $region28
      $region27: #{_lambda_.1} parent=11 // pred_region
        _
      $region28: #{_lambda_.1} parent=11 // pred_fallthru
        _
      // Predicated region
      $region29: #{_lambda_.1} parent=11 // pred_check
        %p328 = pneg %p149
      $region30: #{_lambda_.1} parent=11 // pred_check_branch
        %330 = sbr.rel (%p328) target = $region32
      $region31: #{_lambda_.1} parent=11 // pred_region
        _
      $region32: #{_lambda_.1} parent=11 // pred_fallthru
        _
      // Predicated region
      $region33: #{_lambda_.1} parent=11 // pred_check
        %p331 = pneg %p170
      $region34: #{_lambda_.1} parent=11 // pred_check_branch
        %333 = sbr.rel (%p331) target = $region36
      $region35: #{_lambda_.1} parent=11 // pred_region
        _
      $region36: #{_lambda_.1} parent=11 // pred_fallthru
        _
      // Predicated region
      $region37: #{_lambda_.1} parent=11 // pred_check
        %p334 = pneg %p191
      $region38: #{_lambda_.1} parent=11 // pred_check_branch
        %336 = sbr.rel (%p334) target = $region40
      $region39: #{_lambda_.1} parent=11 // pred_region
        _
      $region40: #{_lambda_.1} parent=11 // pred_fallthru
        _
      // Predicated region
      $region41: #{_lambda_.1} parent=11 // pred_check
        %p337 = pneg %p212
      $region42: #{_lambda_.1} parent=11 // pred_check_branch
        %339 = sbr.rel (%p337) target = $region44
      $region43: #{_lambda_.1} parent=11 // pred_region
        _
      $region44: #{_lambda_.1} parent=11 // pred_fallthru
        _
      // Predicated region
      $region45: #{_lambda_.1} parent=11 // pred_check
        %p340 = pneg %p233
      $region46: #{_lambda_.1} parent=11 // pred_check_branch
        %342 = sbr.rel (%p340) target = $region48
      $region47: #{_lambda_.1} parent=11 // pred_region
        _
      $region48: #{_lambda_.1} parent=11 // pred_fallthru
        _
      // Predicated region
      $region49: #{_lambda_.1} parent=11 // pred_check
        %p343 = pneg %p254
      $region50: #{_lambda_.1} parent=11 // pred_check_branch
        %345 = sbr.rel (%p343) target = $region52
      $region51: #{_lambda_.1} parent=11 // pred_region
        _
      $region52: #{_lambda_.1} parent=11 // pred_fallthru
        _
      // Predicated region
      $region53: #{_lambda_.1} parent=11 // pred_check
        %p346 = pneg %p275
      $region54: #{_lambda_.1} parent=11 // pred_check_branch
        %348 = sbr.rel (%p346) target = $region56
      $region55: #{_lambda_.1} parent=11 // pred_region
        _
      $region56: #{_lambda_.1} parent=11 // pred_fallthru
        _
    $region12: #{_lambda_.1} parent=5 // pred_fallthru
      _
    %p349 = scmp.lt.s32.totalorder %s18, 2
    // Predicated region
    $region57: #{_lambda_.1} parent=5 // pred_check
      %p350 = pneg %p349
    $region58: #{_lambda_.1} parent=5 // pred_check_branch
      %352 = sbr.rel (%p350) target = $region60
    $region59: #{_lambda_.1} parent=5 // pred_region
      // Predicated region
      $region61: #{_lambda_.1} parent=59 // pred_check
        %p353 = pneg %p38
      $region62: #{_lambda_.1} parent=59 // pred_check_branch
        %355 = sbr.rel (%p353) target = $region64
      $region63: #{_lambda_.1} parent=59 // pred_region
        %s356 = smul.u32 48, %s18
        %p357 = scmp.lt.s32.totalorder %s356, 95
        %s358 = scalar_select %p357, %s356, 95
        %s359 = smul.addr %s358, 2
        %s360 = smul.addr %s359, 4
        %s361 = scalar_lea.vmem %s0, %s360
        %s362 = smul.u32 48, %s18
      $region64: #{_lambda_.1} parent=59 // pred_fallthru
        _
    $region60: #{_lambda_.1} parent=5 // pred_fallthru
      _
    %p363 = scmp.le.s32.totalorder 1, %s18
    %p364 = scmp.lt.s32.totalorder %s18, 3
    %p365 = pnand %p363, %p364
    %p366 = pneg %p365
    // Predicated region
    $region65: #{_lambda_.1} parent=5 // pred_check
      _
    $region66: #{_lambda_.1} parent=5 // pred_check_branch
      %368 = sbr.rel (%p365) target = $region68
    $region67: #{_lambda_.1} parent=5 // pred_region
      %s369 = ssub.s32 %s18, 1
      %s370 = smul.u32 48, %s23
      %p371 = scmp.lt.s32.totalorder %s370, 95
      %s372 = scalar_select %p371, %s370, 95
      %s373 = smul.addr %s372, 2
      %s374 = smul.addr %s373, 4
      %s375 = scalar_lea.vmem %s0, %s374
      %p376 = pneg %p44
      %p377 = pneg %p41
      %p378 = pneg %p65
      %p379 = pneg %p62
      %p380 = pneg %p86
      %p381 = pneg %p83
      %p382 = pneg %p107
      %p383 = pneg %p104
      %p384 = pneg %p128
      %p385 = pneg %p125
      %p386 = pneg %p149
      %p387 = pneg %p146
      %p388 = pneg %p170
      %p389 = pneg %p167
      %p390 = pneg %p191
      %p391 = pneg %p188
      %p392 = pneg %p212
      %p393 = pneg %p209
      %p394 = pneg %p233
      %p395 = pneg %p230
      %p396 = pneg %p254
      %p397 = pneg %p251
      %p398 = pneg %p275
      %p399 = pneg %p272
      %p400 = pneg %p301
      %p401 = pneg %p298
      %s402 = smul.u32 2, %s23
      %p403 = scmp.lt.s32.totalorder %s402, 3
      %s404 = scalar_select %p403, %s402, 3
      %s405 = smul.addr %s404, 8
      %s406 = scalar_lea.vmem %s12, %s405
      %s407 = smul.u32 48, %s23
      %p408 = scmp.lt.s32.totalorder %s407, 95
      %s409 = scalar_select %p408, %s407, 95
      %s410 = smul.addr %s409, 2
      %s411 = smul.addr %s410, 4
      %s412 = scalar_lea.vmem %s0, %s411
      %s413 = smul.u32 48, %s23
      %s414 = smul.u32 2, %s23
      %p415 = scmp.lt.s32.totalorder %s414, 3
      %s416 = scalar_select %p415, %s414, 3
      %s417 = smul.addr %s416, 8
      %s418 = scalar_lea.vmem %s12, %s417
      %s419 = smul.u32 2, %s23
      %v421 = vld [vmem:[%s412] sm:$0xff]
      %v422 = vld [vmem:[%s412 + $0x8] sm:$0xff]
      %v423 = vld [vmem:[%s412 + $0x10] sm:$0xff]
      %v424 = vld [vmem:[%s412 + $0x18] sm:$0xff]
      %v425 = vld [vmem:[%s412 + $0x20] sm:$0xff]
      %v426 = vld [vmem:[%s412 + $0x28] sm:$0xff]
      %v427 = vld [vmem:[%s412 + $0x30] sm:$0xff]
      %v428 = vld [vmem:[%s412 + $0x38] sm:$0xff]
      %v429 = vld [vmem:[%s412 + $0x40] sm:$0xff]
      %v430 = vld [vmem:[%s412 + $0x48] sm:$0xff]
      %v431 = vld [vmem:[%s412 + $0x50] sm:$0xff]
      %v432 = vld [vmem:[%s412 + $0x58] sm:$0xff]
      %v433 = vld [vmem:[%s412 + $0x60] sm:$0xff]
      %v434 = vld [vmem:[%s412 + $0x68] sm:$0xff]
      %v435 = vld [vmem:[%s412 + $0x70] sm:$0xff]
      %v436 = vld [vmem:[%s412 + $0x78] sm:$0xff]
      %v437 = vld [vmem:[%s412 + $0x80] sm:$0xff]
      %v438 = vld [vmem:[%s412 + $0x88] sm:$0xff]
      %v439 = vld [vmem:[%s412 + $0x90] sm:$0xff]
      %v440 = vld [vmem:[%s412 + $0x98] sm:$0xff]
      %v441 = vld [vmem:[%s412 + $0xa0] sm:$0xff]
      %v442 = vld [vmem:[%s412 + $0xa8] sm:$0xff]
      %v443 = vld [vmem:[%s412 + $0xb0] sm:$0xff]
      %v444 = vld [vmem:[%s412 + $0xb8] sm:$0xff]
      %v445 = vld [vmem:[%s412 + $0xc0] sm:$0xff]
      %v446 = vld [vmem:[%s412 + $0xc8] sm:$0xff]
      %v447 = vld [vmem:[%s412 + $0xd0] sm:$0xff]
      %v448 = vld [vmem:[%s412 + $0xd8] sm:$0xff]
      %v449 = vld [vmem:[%s412 + $0xe0] sm:$0xff]
      %v450 = vld [vmem:[%s412 + $0xe8] sm:$0xff]
      %v451 = vld [vmem:[%s412 + $0xf0] sm:$0xff]
      %v452 = vld [vmem:[%s412 + $0xf8] sm:$0xff]
      %v453 = vld [vmem:[%s412 + $0x100] sm:$0xff]
      %v454 = vld [vmem:[%s412 + $0x108] sm:$0xff]
      %v455 = vld [vmem:[%s412 + $0x110] sm:$0xff]
      %v456 = vld [vmem:[%s412 + $0x118] sm:$0xff]
      %v457 = vld [vmem:[%s412 + $0x120] sm:$0xff]
      %v458 = vld [vmem:[%s412 + $0x128] sm:$0xff]
      %v459 = vld [vmem:[%s412 + $0x130] sm:$0xff]
      %v460 = vld [vmem:[%s412 + $0x138] sm:$0xff]
      %v461 = vld [vmem:[%s412 + $0x140] sm:$0xff]
      %v462 = vld [vmem:[%s412 + $0x148] sm:$0xff]
      %v463 = vld [vmem:[%s412 + $0x150] sm:$0xff]
      %v464 = vld [vmem:[%s412 + $0x158] sm:$0xff]
      %v465 = vld [vmem:[%s412 + $0x160] sm:$0xff]
      %v466 = vld [vmem:[%s412 + $0x168] sm:$0xff]
      %v467 = vld [vmem:[%s412 + $0x170] sm:$0xff]
      %v468 = vld [vmem:[%s412 + $0x178] sm:$0xff]
      %v469 = vld [vmem:[%s1] sm:$0xff]
      %v470 = vld [vmem:[%s1 + $0x8] sm:$0xff]
      %v471 = vld [vmem:[%s1 + $0x10] sm:$0xff]
      %v472 = vld [vmem:[%s1 + $0x18] sm:$0xff]
      %v473 = vld [vmem:[%s1 + $0x20] sm:$0xff]
      %v474 = vld [vmem:[%s1 + $0x28] sm:$0xff]
      %v475 = vld [vmem:[%s1 + $0x30] sm:$0xff]
      %v476 = vld [vmem:[%s1 + $0x38] sm:$0xff]
      %v477 = vld [vmem:[%s1 + $0x40] sm:$0xff]
      %v478 = vld [vmem:[%s1 + $0x48] sm:$0xff]
      %v479 = vld [vmem:[%s1 + $0x50] sm:$0xff]
      %v480 = vld [vmem:[%s1 + $0x58] sm:$0xff]
      %v481 = vld [vmem:[%s1 + $0x60] sm:$0xff]
      %v482 = vld [vmem:[%s1 + $0x68] sm:$0xff]
      %v483 = vld [vmem:[%s1 + $0x70] sm:$0xff]
      %v484 = vld [vmem:[%s1 + $0x78] sm:$0xff]
      %v485 = vld [vmem:[%s1 + $0x80] sm:$0xff]
      %v486 = vld [vmem:[%s1 + $0x88] sm:$0xff]
      %v487 = vld [vmem:[%s1 + $0x90] sm:$0xff]
      %v488 = vld [vmem:[%s1 + $0x98] sm:$0xff]
      %v489 = vld [vmem:[%s1 + $0xa0] sm:$0xff]
      %v490 = vld [vmem:[%s1 + $0xa8] sm:$0xff]
      %v491 = vld [vmem:[%s1 + $0xb0] sm:$0xff]
      %v492 = vld [vmem:[%s1 + $0xb8] sm:$0xff]
      %v493 = vld [vmem:[%s1 + $0xc0] sm:$0xff]
      %v494 = vld [vmem:[%s1 + $0xc8] sm:$0xff]
      %v495 = vld [vmem:[%s1 + $0xd0] sm:$0xff]
      %v496 = vld [vmem:[%s1 + $0xd8] sm:$0xff]
      %v497 = vld [vmem:[%s1 + $0xe0] sm:$0xff]
      %v498 = vld [vmem:[%s1 + $0xe8] sm:$0xff]
      %v499 = vld [vmem:[%s1 + $0xf0] sm:$0xff]
      %v500 = vld [vmem:[%s1 + $0xf8] sm:$0xff]
      %v501 = vld [vmem:[%s1 + $0x100] sm:$0xff]
      %v502 = vld [vmem:[%s1 + $0x108] sm:$0xff]
      %v503 = vld [vmem:[%s1 + $0x110] sm:$0xff]
      %v504 = vld [vmem:[%s1 + $0x118] sm:$0xff]
      %v505 = vld [vmem:[%s1 + $0x120] sm:$0xff]
      %v506 = vld [vmem:[%s1 + $0x128] sm:$0xff]
      %v507 = vld [vmem:[%s1 + $0x130] sm:$0xff]
      %v508 = vld [vmem:[%s1 + $0x138] sm:$0xff]
      %v509 = vld [vmem:[%s1 + $0x140] sm:$0xff]
      %v510 = vld [vmem:[%s1 + $0x148] sm:$0xff]
      %v511 = vld [vmem:[%s1 + $0x150] sm:$0xff]
      %v512 = vld [vmem:[%s1 + $0x158] sm:$0xff]
      %v513 = vld [vmem:[%s1 + $0x160] sm:$0xff]
      %v514 = vld [vmem:[%s1 + $0x168] sm:$0xff]
      %v515 = vld [vmem:[%s1 + $0x170] sm:$0xff]
      %v516 = vld [vmem:[%s1 + $0x178] sm:$0xff]
      %v517 = vld [vmem:[%s1 + $0x180] sm:$0xff]
      %v518 = vld [vmem:[%s1 + $0x188] sm:$0xff]
      %v519 = vld [vmem:[%s1 + $0x190] sm:$0xff]
      %v520 = vld [vmem:[%s1 + $0x198] sm:$0xff]
      %v521 = vld [vmem:[%s1 + $0x1a0] sm:$0xff]
      %v522 = vld [vmem:[%s1 + $0x1a8] sm:$0xff]
      %v523 = vld [vmem:[%s1 + $0x1b0] sm:$0xff]
      %v524 = vld [vmem:[%s1 + $0x1b8] sm:$0xff]
      %v525 = vld [vmem:[%s1 + $0x1c0] sm:$0xff]
      %v526 = vld [vmem:[%s1 + $0x1c8] sm:$0xff]
      %v527 = vld [vmem:[%s1 + $0x1d0] sm:$0xff]
      %v528 = vld [vmem:[%s1 + $0x1d8] sm:$0xff]
      %v529 = vld [vmem:[%s1 + $0x1e0] sm:$0xff]
      %v530 = vld [vmem:[%s1 + $0x1e8] sm:$0xff]
      %v531 = vld [vmem:[%s1 + $0x1f0] sm:$0xff]
      %v532 = vld [vmem:[%s1 + $0x1f8] sm:$0xff]
      %v533 = vld [vmem:[%s1 + $0x200] sm:$0xff]
      %v534 = vld [vmem:[%s1 + $0x208] sm:$0xff]
      %v535 = vld [vmem:[%s1 + $0x210] sm:$0xff]
      %v536 = vld [vmem:[%s1 + $0x218] sm:$0xff]
      %v537 = vld [vmem:[%s1 + $0x220] sm:$0xff]
      %v538 = vld [vmem:[%s1 + $0x228] sm:$0xff]
      %v539 = vld [vmem:[%s1 + $0x230] sm:$0xff]
      %v540 = vld [vmem:[%s1 + $0x238] sm:$0xff]
      %v541 = vld [vmem:[%s1 + $0x240] sm:$0xff]
      %v542 = vld [vmem:[%s1 + $0x248] sm:$0xff]
      %v543 = vld [vmem:[%s1 + $0x250] sm:$0xff]
      %v544 = vld [vmem:[%s1 + $0x258] sm:$0xff]
      %v545 = vld [vmem:[%s1 + $0x260] sm:$0xff]
      %v546 = vld [vmem:[%s1 + $0x268] sm:$0xff]
      %v547 = vld [vmem:[%s1 + $0x270] sm:$0xff]
      %v548 = vld [vmem:[%s1 + $0x278] sm:$0xff]
      %v549 = vld [vmem:[%s1 + $0x280] sm:$0xff]
      %v550 = vld [vmem:[%s1 + $0x288] sm:$0xff]
      %v551 = vld [vmem:[%s1 + $0x290] sm:$0xff]
      %v552 = vld [vmem:[%s1 + $0x298] sm:$0xff]
      %v553 = vld [vmem:[%s1 + $0x2a0] sm:$0xff]
      %v554 = vld [vmem:[%s1 + $0x2a8] sm:$0xff]
      %v555 = vld [vmem:[%s1 + $0x2b0] sm:$0xff]
      %v556 = vld [vmem:[%s1 + $0x2b8] sm:$0xff]
      %v557 = vld [vmem:[%s1 + $0x2c0] sm:$0xff]
      %v558 = vld [vmem:[%s1 + $0x2c8] sm:$0xff]
      %v559 = vld [vmem:[%s1 + $0x2d0] sm:$0xff]
      %v560 = vld [vmem:[%s1 + $0x2d8] sm:$0xff]
      %v561 = vld [vmem:[%s1 + $0x2e0] sm:$0xff]
      %v562 = vld [vmem:[%s1 + $0x2e8] sm:$0xff]
      %v563 = vld [vmem:[%s1 + $0x2f0] sm:$0xff]
      %v564 = vld [vmem:[%s1 + $0x2f8] sm:$0xff]
      %v613 = vunpack.c.l.b16 %v421
      %v614 = vunpack.c.h.b16 %v421
      %v615 = vunpack.c.l.b16 %v422
      %v616 = vunpack.c.h.b16 %v422
      %v617 = vunpack.c.l.b16 %v423
      %v618 = vunpack.c.h.b16 %v423
      %v619 = vunpack.c.l.b16 %v424
      %v620 = vunpack.c.h.b16 %v424
      %v621 = vunpack.c.l.b16 %v425
      %v622 = vunpack.c.h.b16 %v425
      %v623 = vunpack.c.l.b16 %v426
      %v624 = vunpack.c.h.b16 %v426
      %v625 = vunpack.c.l.b16 %v427
      %v626 = vunpack.c.h.b16 %v427
      %v627 = vunpack.c.l.b16 %v428
      %v628 = vunpack.c.h.b16 %v428
      %v629 = vunpack.c.l.b16 %v429
      %v630 = vunpack.c.h.b16 %v429
      %v631 = vunpack.c.l.b16 %v430
      %v632 = vunpack.c.h.b16 %v430
      %v633 = vunpack.c.l.b16 %v431
      %v634 = vunpack.c.h.b16 %v431
      %v635 = vunpack.c.l.b16 %v432
      %v636 = vunpack.c.h.b16 %v432
      %v637 = vunpack.c.l.b16 %v433
      %v638 = vunpack.c.h.b16 %v433
      %v639 = vunpack.c.l.b16 %v434
      %v640 = vunpack.c.h.b16 %v434
      %v641 = vunpack.c.l.b16 %v435
      %v642 = vunpack.c.h.b16 %v435
      %v643 = vunpack.c.l.b16 %v436
      %v644 = vunpack.c.h.b16 %v436
      %v645 = vunpack.c.l.b16 %v437
      %v646 = vunpack.c.h.b16 %v437
      %v647 = vunpack.c.l.b16 %v438
      %v648 = vunpack.c.h.b16 %v438
      %v649 = vunpack.c.l.b16 %v439
      %v650 = vunpack.c.h.b16 %v439
      %v651 = vunpack.c.l.b16 %v440
      %v652 = vunpack.c.h.b16 %v440
      %v653 = vunpack.c.l.b16 %v441
      %v654 = vunpack.c.h.b16 %v441
      %v655 = vunpack.c.l.b16 %v442
      %v656 = vunpack.c.h.b16 %v442
      %v657 = vunpack.c.l.b16 %v443
      %v658 = vunpack.c.h.b16 %v443
      %v659 = vunpack.c.l.b16 %v444
      %v660 = vunpack.c.h.b16 %v444
      %v661 = vunpack.c.l.b16 %v445
      %v662 = vunpack.c.h.b16 %v445
      %v663 = vunpack.c.l.b16 %v446
      %v664 = vunpack.c.h.b16 %v446
      %v665 = vunpack.c.l.b16 %v447
      %v666 = vunpack.c.h.b16 %v447
      %v667 = vunpack.c.l.b16 %v448
      %v668 = vunpack.c.h.b16 %v448
      %v669 = vunpack.c.l.b16 %v449
      %v670 = vunpack.c.h.b16 %v449
      %v671 = vunpack.c.l.b16 %v450
      %v672 = vunpack.c.h.b16 %v450
      %v673 = vunpack.c.l.b16 %v451
      %v674 = vunpack.c.h.b16 %v451
      %v675 = vunpack.c.l.b16 %v452
      %v676 = vunpack.c.h.b16 %v452
      %v677 = vunpack.c.l.b16 %v453
      %v678 = vunpack.c.h.b16 %v453
      %v679 = vunpack.c.l.b16 %v454
      %v680 = vunpack.c.h.b16 %v454
      %v681 = vunpack.c.l.b16 %v455
      %v682 = vunpack.c.h.b16 %v455
      %v683 = vunpack.c.l.b16 %v456
      %v684 = vunpack.c.h.b16 %v456
      %v685 = vunpack.c.l.b16 %v457
      %v686 = vunpack.c.h.b16 %v457
      %v687 = vunpack.c.l.b16 %v458
      %v688 = vunpack.c.h.b16 %v458
      %v689 = vunpack.c.l.b16 %v459
      %v690 = vunpack.c.h.b16 %v459
      %v691 = vunpack.c.l.b16 %v460
      %v692 = vunpack.c.h.b16 %v460
      %v693 = vunpack.c.l.b16 %v461
      %v694 = vunpack.c.h.b16 %v461
      %v695 = vunpack.c.l.b16 %v462
      %v696 = vunpack.c.h.b16 %v462
      %v697 = vunpack.c.l.b16 %v463
      %v698 = vunpack.c.h.b16 %v463
      %v699 = vunpack.c.l.b16 %v464
      %v700 = vunpack.c.h.b16 %v464
      %v701 = vunpack.c.l.b16 %v465
      %v702 = vunpack.c.h.b16 %v465
      %v703 = vunpack.c.l.b16 %v466
      %v704 = vunpack.c.h.b16 %v466
      %v705 = vunpack.c.l.b16 %v467
      %v706 = vunpack.c.h.b16 %v467
      %v707 = vunpack.c.l.b16 %v468
      %v708 = vunpack.c.h.b16 %v468
      %v709 = vpack.c.b16 %v615, %v613
      %v710 = vpack.c.b16 %v616, %v614
      %v711 = vpack.c.b16 %v619, %v617
      %v712 = vpack.c.b16 %v620, %v618
      %v713 = vpack.c.b16 %v623, %v621
      %v714 = vpack.c.b16 %v624, %v622
      %v715 = vpack.c.b16 %v627, %v625
      %v716 = vpack.c.b16 %v628, %v626
      %v717 = vpack.c.b16 %v631, %v629
      %v718 = vpack.c.b16 %v632, %v630
      %v719 = vpack.c.b16 %v635, %v633
      %v720 = vpack.c.b16 %v636, %v634
      %v721 = vpack.c.b16 %v639, %v637
      %v722 = vpack.c.b16 %v640, %v638
      %v723 = vpack.c.b16 %v643, %v641
      %v724 = vpack.c.b16 %v644, %v642
      %v725 = vpack.c.b16 %v647, %v645
      %v726 = vpack.c.b16 %v648, %v646
      %v727 = vpack.c.b16 %v651, %v649
      %v728 = vpack.c.b16 %v652, %v650
      %v729 = vpack.c.b16 %v655, %v653
      %v730 = vpack.c.b16 %v656, %v654
      %v731 = vpack.c.b16 %v659, %v657
      %v732 = vpack.c.b16 %v660, %v658
      %v733 = vpack.c.b16 %v663, %v661
      %v734 = vpack.c.b16 %v664, %v662
      %v735 = vpack.c.b16 %v667, %v665
      %v736 = vpack.c.b16 %v668, %v666
      %v737 = vpack.c.b16 %v671, %v669
      %v738 = vpack.c.b16 %v672, %v670
      %v739 = vpack.c.b16 %v675, %v673
      %v740 = vpack.c.b16 %v676, %v674
      %v741 = vpack.c.b16 %v679, %v677
      %v742 = vpack.c.b16 %v680, %v678
      %v743 = vpack.c.b16 %v683, %v681
      %v744 = vpack.c.b16 %v684, %v682
      %v745 = vpack.c.b16 %v687, %v685
      %v746 = vpack.c.b16 %v688, %v686
      %v747 = vpack.c.b16 %v691, %v689
      %v748 = vpack.c.b16 %v692, %v690
      %v749 = vpack.c.b16 %v695, %v693
      %v750 = vpack.c.b16 %v696, %v694
      %v751 = vpack.c.b16 %v699, %v697
      %v752 = vpack.c.b16 %v700, %v698
      %v753 = vpack.c.b16 %v703, %v701
      %v754 = vpack.c.b16 %v704, %v702
      %v755 = vpack.c.b16 %v707, %v705
      %v756 = vpack.c.b16 %v708, %v706
      %v901 = vunpack.c.l.b16 %v469
      %v902 = vunpack.c.h.b16 %v469
      %v903 = vunpack.c.l.b16 %v470
      %v904 = vunpack.c.h.b16 %v470
      %v905 = vunpack.c.l.b16 %v471
      %v906 = vunpack.c.h.b16 %v471
      %v907 = vunpack.c.l.b16 %v472
      %v908 = vunpack.c.h.b16 %v472
      %v909 = vunpack.c.l.b16 %v473
      %v910 = vunpack.c.h.b16 %v473
      %v911 = vunpack.c.l.b16 %v474
      %v912 = vunpack.c.h.b16 %v474
      %v913 = vunpack.c.l.b16 %v475
      %v914 = vunpack.c.h.b16 %v475
      %v915 = vunpack.c.l.b16 %v476
      %v916 = vunpack.c.h.b16 %v476
      %v917 = vunpack.c.l.b16 %v477
      %v918 = vunpack.c.h.b16 %v477
      %v919 = vunpack.c.l.b16 %v478
      %v920 = vunpack.c.h.b16 %v478
      %v921 = vunpack.c.l.b16 %v479
      %v922 = vunpack.c.h.b16 %v479
      %v923 = vunpack.c.l.b16 %v480
      %v924 = vunpack.c.h.b16 %v480
      %v925 = vunpack.c.l.b16 %v481
      %v926 = vunpack.c.h.b16 %v481
      %v927 = vunpack.c.l.b16 %v482
      %v928 = vunpack.c.h.b16 %v482
      %v929 = vunpack.c.l.b16 %v483
      %v930 = vunpack.c.h.b16 %v483
      %v931 = vunpack.c.l.b16 %v484
      %v932 = vunpack.c.h.b16 %v484
      %v933 = vunpack.c.l.b16 %v485
      %v934 = vunpack.c.h.b16 %v485
      %v935 = vunpack.c.l.b16 %v486
      %v936 = vunpack.c.h.b16 %v486
      %v937 = vunpack.c.l.b16 %v487
      %v938 = vunpack.c.h.b16 %v487
      %v939 = vunpack.c.l.b16 %v488
      %v940 = vunpack.c.h.b16 %v488
      %v941 = vunpack.c.l.b16 %v489
      %v942 = vunpack.c.h.b16 %v489
      %v943 = vunpack.c.l.b16 %v490
      %v944 = vunpack.c.h.b16 %v490
      %v945 = vunpack.c.l.b16 %v491
      %v946 = vunpack.c.h.b16 %v491
      %v947 = vunpack.c.l.b16 %v492
      %v948 = vunpack.c.h.b16 %v492
      %v949 = vunpack.c.l.b16 %v493
      %v950 = vunpack.c.h.b16 %v493
      %v951 = vunpack.c.l.b16 %v494
      %v952 = vunpack.c.h.b16 %v494
      %v953 = vunpack.c.l.b16 %v495
      %v954 = vunpack.c.h.b16 %v495
      %v955 = vunpack.c.l.b16 %v496
      %v956 = vunpack.c.h.b16 %v496
      %v957 = vunpack.c.l.b16 %v497
      %v958 = vunpack.c.h.b16 %v497
      %v959 = vunpack.c.l.b16 %v498
      %v960 = vunpack.c.h.b16 %v498
      %v961 = vunpack.c.l.b16 %v499
      %v962 = vunpack.c.h.b16 %v499
      %v963 = vunpack.c.l.b16 %v500
      %v964 = vunpack.c.h.b16 %v500
      %v965 = vunpack.c.l.b16 %v501
      %v966 = vunpack.c.h.b16 %v501
      %v967 = vunpack.c.l.b16 %v502
      %v968 = vunpack.c.h.b16 %v502
      %v969 = vunpack.c.l.b16 %v503
      %v970 = vunpack.c.h.b16 %v503
      %v971 = vunpack.c.l.b16 %v504
      %v972 = vunpack.c.h.b16 %v504
      %v973 = vunpack.c.l.b16 %v505
      %v974 = vunpack.c.h.b16 %v505
      %v975 = vunpack.c.l.b16 %v506
      %v976 = vunpack.c.h.b16 %v506
      %v977 = vunpack.c.l.b16 %v507
      %v978 = vunpack.c.h.b16 %v507
      %v979 = vunpack.c.l.b16 %v508
      %v980 = vunpack.c.h.b16 %v508
      %v981 = vunpack.c.l.b16 %v509
      %v982 = vunpack.c.h.b16 %v509
      %v983 = vunpack.c.l.b16 %v510
      %v984 = vunpack.c.h.b16 %v510
      %v985 = vunpack.c.l.b16 %v511
      %v986 = vunpack.c.h.b16 %v511
      %v987 = vunpack.c.l.b16 %v512
      %v988 = vunpack.c.h.b16 %v512
      %v989 = vunpack.c.l.b16 %v513
      %v990 = vunpack.c.h.b16 %v513
      %v991 = vunpack.c.l.b16 %v514
      %v992 = vunpack.c.h.b16 %v514
      %v993 = vunpack.c.l.b16 %v515
      %v994 = vunpack.c.h.b16 %v515
      %v995 = vunpack.c.l.b16 %v516
      %v996 = vunpack.c.h.b16 %v516
      %v997 = vunpack.c.l.b16 %v517
      %v998 = vunpack.c.h.b16 %v517
      %v999 = vunpack.c.l.b16 %v518
      %v1000 = vunpack.c.h.b16 %v518
      %v1001 = vunpack.c.l.b16 %v519
      %v1002 = vunpack.c.h.b16 %v519
      %v1003 = vunpack.c.l.b16 %v520
      %v1004 = vunpack.c.h.b16 %v520
      %v1005 = vunpack.c.l.b16 %v521
      %v1006 = vunpack.c.h.b16 %v521
      %v1007 = vunpack.c.l.b16 %v522
      %v1008 = vunpack.c.h.b16 %v522
      %v1009 = vunpack.c.l.b16 %v523
      %v1010 = vunpack.c.h.b16 %v523
      %v1011 = vunpack.c.l.b16 %v524
      %v1012 = vunpack.c.h.b16 %v524
      %v1013 = vunpack.c.l.b16 %v525
      %v1014 = vunpack.c.h.b16 %v525
      %v1015 = vunpack.c.l.b16 %v526
      %v1016 = vunpack.c.h.b16 %v526
      %v1017 = vunpack.c.l.b16 %v527
      %v1018 = vunpack.c.h.b16 %v527
      %v1019 = vunpack.c.l.b16 %v528
      %v1020 = vunpack.c.h.b16 %v528
      %v1021 = vunpack.c.l.b16 %v529
      %v1022 = vunpack.c.h.b16 %v529
      %v1023 = vunpack.c.l.b16 %v530
      %v1024 = vunpack.c.h.b16 %v530
      %v1025 = vunpack.c.l.b16 %v531
      %v1026 = vunpack.c.h.b16 %v531
      %v1027 = vunpack.c.l.b16 %v532
      %v1028 = vunpack.c.h.b16 %v532
      %v1029 = vunpack.c.l.b16 %v533
      %v1030 = vunpack.c.h.b16 %v533
      %v1031 = vunpack.c.l.b16 %v534
      %v1032 = vunpack.c.h.b16 %v534
      %v1033 = vunpack.c.l.b16 %v535
      %v1034 = vunpack.c.h.b16 %v535
      %v1035 = vunpack.c.l.b16 %v536
      %v1036 = vunpack.c.h.b16 %v536
      %v1037 = vunpack.c.l.b16 %v537
      %v1038 = vunpack.c.h.b16 %v537
      %v1039 = vunpack.c.l.b16 %v538
      %v1040 = vunpack.c.h.b16 %v538
      %v1041 = vunpack.c.l.b16 %v539
      %v1042 = vunpack.c.h.b16 %v539
      %v1043 = vunpack.c.l.b16 %v540
      %v1044 = vunpack.c.h.b16 %v540
      %v1045 = vunpack.c.l.b16 %v541
      %v1046 = vunpack.c.h.b16 %v541
      %v1047 = vunpack.c.l.b16 %v542
      %v1048 = vunpack.c.h.b16 %v542
      %v1049 = vunpack.c.l.b16 %v543
      %v1050 = vunpack.c.h.b16 %v543
      %v1051 = vunpack.c.l.b16 %v544
      %v1052 = vunpack.c.h.b16 %v544
      %v1053 = vunpack.c.l.b16 %v545
      %v1054 = vunpack.c.h.b16 %v545
      %v1055 = vunpack.c.l.b16 %v546
      %v1056 = vunpack.c.h.b16 %v546
      %v1057 = vunpack.c.l.b16 %v547
      %v1058 = vunpack.c.h.b16 %v547
      %v1059 = vunpack.c.l.b16 %v548
      %v1060 = vunpack.c.h.b16 %v548
      %v1061 = vunpack.c.l.b16 %v549
      %v1062 = vunpack.c.h.b16 %v549
      %v1063 = vunpack.c.l.b16 %v550
      %v1064 = vunpack.c.h.b16 %v550
      %v1065 = vunpack.c.l.b16 %v551
      %v1066 = vunpack.c.h.b16 %v551
      %v1067 = vunpack.c.l.b16 %v552
      %v1068 = vunpack.c.h.b16 %v552
      %v1069 = vunpack.c.l.b16 %v553
      %v1070 = vunpack.c.h.b16 %v553
      %v1071 = vunpack.c.l.b16 %v554
      %v1072 = vunpack.c.h.b16 %v554
      %v1073 = vunpack.c.l.b16 %v555
      %v1074 = vunpack.c.h.b16 %v555
      %v1075 = vunpack.c.l.b16 %v556
      %v1076 = vunpack.c.h.b16 %v556
      %v1077 = vunpack.c.l.b16 %v557
      %v1078 = vunpack.c.h.b16 %v557
      %v1079 = vunpack.c.l.b16 %v558
      %v1080 = vunpack.c.h.b16 %v558
      %v1081 = vunpack.c.l.b16 %v559
      %v1082 = vunpack.c.h.b16 %v559
      %v1083 = vunpack.c.l.b16 %v560
      %v1084 = vunpack.c.h.b16 %v560
      %v1085 = vunpack.c.l.b16 %v561
      %v1086 = vunpack.c.h.b16 %v561
      %v1087 = vunpack.c.l.b16 %v562
      %v1088 = vunpack.c.h.b16 %v562
      %v1089 = vunpack.c.l.b16 %v563
      %v1090 = vunpack.c.h.b16 %v563
      %v1091 = vunpack.c.l.b16 %v564
      %v1092 = vunpack.c.h.b16 %v564
      %v1093 = vpack.c.b16 %v907, %v901
      %v1094 = vpack.c.b16 %v908, %v902
      %v1095 = vpack.c.b16 %v909, %v903
      %v1096 = vpack.c.b16 %v910, %v904
      %v1097 = vpack.c.b16 %v911, %v905
      %v1098 = vpack.c.b16 %v912, %v906
      %v1099 = vpack.c.b16 %v919, %v913
      %v1100 = vpack.c.b16 %v920, %v914
      %v1101 = vpack.c.b16 %v921, %v915
      %v1102 = vpack.c.b16 %v922, %v916
      %v1103 = vpack.c.b16 %v923, %v917
      %v1104 = vpack.c.b16 %v924, %v918
      %v1105 = vpack.c.b16 %v931, %v925
      %v1106 = vpack.c.b16 %v932, %v926
      %v1107 = vpack.c.b16 %v933, %v927
      %v1108 = vpack.c.b16 %v934, %v928
      %v1109 = vpack.c.b16 %v935, %v929
      %v1110 = vpack.c.b16 %v936, %v930
      %v1111 = vpack.c.b16 %v943, %v937
      %v1112 = vpack.c.b16 %v944, %v938
      %v1113 = vpack.c.b16 %v945, %v939
      %v1114 = vpack.c.b16 %v946, %v940
      %v1115 = vpack.c.b16 %v947, %v941
      %v1116 = vpack.c.b16 %v948, %v942
      %v1117 = vpack.c.b16 %v955, %v949
      %v1118 = vpack.c.b16 %v956, %v950
      %v1119 = vpack.c.b16 %v957, %v951
      %v1120 = vpack.c.b16 %v958, %v952
      %v1121 = vpack.c.b16 %v959, %v953
      %v1122 = vpack.c.b16 %v960, %v954
      %v1123 = vpack.c.b16 %v967, %v961
      %v1124 = vpack.c.b16 %v968, %v962
      %v1125 = vpack.c.b16 %v969, %v963
      %v1126 = vpack.c.b16 %v970, %v964
      %v1127 = vpack.c.b16 %v971, %v965
      %v1128 = vpack.c.b16 %v972, %v966
      %v1129 = vpack.c.b16 %v979, %v973
      %v1130 = vpack.c.b16 %v980, %v974
      %v1131 = vpack.c.b16 %v981, %v975
      %v1132 = vpack.c.b16 %v982, %v976
      %v1133 = vpack.c.b16 %v983, %v977
      %v1134 = vpack.c.b16 %v984, %v978
      %v1135 = vpack.c.b16 %v991, %v985
      %v1136 = vpack.c.b16 %v992, %v986
      %v1137 = vpack.c.b16 %v993, %v987
      %v1138 = vpack.c.b16 %v994, %v988
      %v1139 = vpack.c.b16 %v995, %v989
      %v1140 = vpack.c.b16 %v996, %v990
      %v1141 = vpack.c.b16 %v1003, %v997
      %v1142 = vpack.c.b16 %v1004, %v998
      %v1143 = vpack.c.b16 %v1005, %v999
      %v1144 = vpack.c.b16 %v1006, %v1000
      %v1145 = vpack.c.b16 %v1007, %v1001
      %v1146 = vpack.c.b16 %v1008, %v1002
      %v1147 = vpack.c.b16 %v1015, %v1009
      %v1148 = vpack.c.b16 %v1016, %v1010
      %v1149 = vpack.c.b16 %v1017, %v1011
      %v1150 = vpack.c.b16 %v1018, %v1012
      %v1151 = vpack.c.b16 %v1019, %v1013
      %v1152 = vpack.c.b16 %v1020, %v1014
      %v1153 = vpack.c.b16 %v1027, %v1021
      %v1154 = vpack.c.b16 %v1028, %v1022
      %v1155 = vpack.c.b16 %v1029, %v1023
      %v1156 = vpack.c.b16 %v1030, %v1024
      %v1157 = vpack.c.b16 %v1031, %v1025
      %v1158 = vpack.c.b16 %v1032, %v1026
      %v1159 = vpack.c.b16 %v1039, %v1033
      %v1160 = vpack.c.b16 %v1040, %v1034
      %v1161 = vpack.c.b16 %v1041, %v1035
      %v1162 = vpack.c.b16 %v1042, %v1036
      %v1163 = vpack.c.b16 %v1043, %v1037
      %v1164 = vpack.c.b16 %v1044, %v1038
      %v1165 = vpack.c.b16 %v1051, %v1045
      %v1166 = vpack.c.b16 %v1052, %v1046
      %v1167 = vpack.c.b16 %v1053, %v1047
      %v1168 = vpack.c.b16 %v1054, %v1048
      %v1169 = vpack.c.b16 %v1055, %v1049
      %v1170 = vpack.c.b16 %v1056, %v1050
      %v1171 = vpack.c.b16 %v1063, %v1057
      %v1172 = vpack.c.b16 %v1064, %v1058
      %v1173 = vpack.c.b16 %v1065, %v1059
      %v1174 = vpack.c.b16 %v1066, %v1060
      %v1175 = vpack.c.b16 %v1067, %v1061
      %v1176 = vpack.c.b16 %v1068, %v1062
      %v1177 = vpack.c.b16 %v1075, %v1069
      %v1178 = vpack.c.b16 %v1076, %v1070
      %v1179 = vpack.c.b16 %v1077, %v1071
      %v1180 = vpack.c.b16 %v1078, %v1072
      %v1181 = vpack.c.b16 %v1079, %v1073
      %v1182 = vpack.c.b16 %v1080, %v1074
      %v1183 = vpack.c.b16 %v1087, %v1081
      %v1184 = vpack.c.b16 %v1088, %v1082
      %v1185 = vpack.c.b16 %v1089, %v1083
      %v1186 = vpack.c.b16 %v1090, %v1084
      %v1187 = vpack.c.b16 %v1091, %v1085
      %v1188 = vpack.c.b16 %v1092, %v1086
      %1285 = vmatprep.subr.bf16.mxu0 %v1136
      %1286 = vmatpush1.bf16.msra.mxu0 %v1135
      %1287 = vmatprep.subr.bf16.mxu0 %v1130
      %1288 = vmatpush1.bf16.msra.mxu0 %v1129
      %1289 = vmatprep.subr.bf16.mxu0 %v1124
      %1290 = vmatpush1.bf16.msra.mxu0 %v1123
      %1291 = vmatprep.subr.bf16.mxu0 %v1118
      %1292 = vmatpush1.bf16.msra.mxu0 %v1117
      %1293 = vmatprep.subr.bf16.mxu0 %v1112
      %1294 = vmatpush1.bf16.msra.mxu0 %v1111
      %1295 = vmatprep.subr.bf16.mxu0 %v1106
      %1296 = vmatpush1.bf16.msra.mxu0 %v1105
      %1297 = vmatprep.subr.bf16.mxu0 %v1100
      %1298 = vmatpush1.bf16.msra.mxu0 %v1099
      %1299 = vmatprep.subr.bf16.mxu0 %v1094
      %1300 = vmatpush1.bf16.msra.mxu0 %v1093
      %1301 = vmatprep.subr.bf16.mxu0 %v1184
      %1302 = vmatpush2.bf16.msra.mxu0 %v1183
      %1303 = vmatprep.subr.bf16.mxu0 %v1178
      %1304 = vmatpush2.bf16.msra.mxu0 %v1177
      %1305 = vmatprep.subr.bf16.mxu0 %v1172
      %1306 = vmatpush2.bf16.msra.mxu0 %v1171
      %1307 = vmatprep.subr.bf16.mxu0 %v1166
      %1308 = vmatpush2.bf16.msra.mxu0 %v1165
      %1309 = vmatprep.subr.bf16.mxu0 %v1160
      %1310 = vmatpush2.bf16.msra.mxu0 %v1159
      %1311 = vmatprep.subr.bf16.mxu0 %v1154
      %1312 = vmatpush2.bf16.msra.mxu0 %v1153
      %1313 = vmatprep.subr.bf16.mxu0 %v1148
      %1314 = vmatpush2.bf16.msra.mxu0 %v1147
      %1315 = vmatprep.subr.bf16.mxu0 %v1142
      %1316 = vmatpush2.bf16.msra.mxu0 %v1141
      %1317 = vmatprep.mubr.bf16.mxu0 %v710
      %1318 = vmatmul.mubr.bf16.gmra.mxu0 %v709
      %v1319 = vpop.f32.mrf.mxu0
      %v1320 = vadd.f32 0.0, %v1319
      %v1321 = vpop.f32.mrf.mxu0
      %v1322 = vadd.f32 0.0, %v1321
      %v1323 = vpop.f32.mrf.mxu0
      %v1324 = vadd.f32 0.0, %v1323
      %v1325 = vpop.f32.mrf.mxu0
      %v1326 = vadd.f32 0.0, %v1325
      %1327 = vmatprep.mubr.bf16.mxu0 %v712
      %1328 = vmatmul.mubr.bf16.gmra.mxu0 %v711
      %v1329 = vpop.f32.mrf.mxu0
      %v1330 = vadd.f32 0.0, %v1329
      %v1331 = vpop.f32.mrf.mxu0
      %v1332 = vadd.f32 0.0, %v1331
      %v1333 = vpop.f32.mrf.mxu0
      %v1334 = vadd.f32 0.0, %v1333
      %v1335 = vpop.f32.mrf.mxu0
      %v1336 = vadd.f32 0.0, %v1335
      %1337 = vmatprep.mubr.bf16.mxu0 %v714
      %1338 = vmatmul.mubr.bf16.gmra.mxu0 %v713
      %v1339 = vpop.f32.mrf.mxu0
      %v1340 = vadd.f32 0.0, %v1339
      %v1341 = vpop.f32.mrf.mxu0
      %v1342 = vadd.f32 0.0, %v1341
      %v1343 = vpop.f32.mrf.mxu0
      %v1344 = vadd.f32 0.0, %v1343
      %v1345 = vpop.f32.mrf.mxu0
      %v1346 = vadd.f32 0.0, %v1345
      %1347 = vmatprep.mubr.bf16.mxu0 %v716
      %1348 = vmatmul.mubr.bf16.gmra.mxu0 %v715
      %v1349 = vpop.f32.mrf.mxu0
      %v1350 = vadd.f32 0.0, %v1349
      %v1351 = vpop.f32.mrf.mxu0
      %v1352 = vadd.f32 0.0, %v1351
      %v1353 = vpop.f32.mrf.mxu0
      %v1354 = vadd.f32 0.0, %v1353
      %v1355 = vpop.f32.mrf.mxu0
      %v1356 = vadd.f32 0.0, %v1355
      %1357 = vmatprep.mubr.bf16.mxu0 %v718
      %1358 = vmatmul.mubr.bf16.gmra.mxu0 %v717
      %v1359 = vpop.f32.mrf.mxu0
      %v1360 = vadd.f32 0.0, %v1359
      %v1361 = vpop.f32.mrf.mxu0
      %v1362 = vadd.f32 0.0, %v1361
      %v1363 = vpop.f32.mrf.mxu0
      %v1364 = vadd.f32 0.0, %v1363
      %v1365 = vpop.f32.mrf.mxu0
      %v1366 = vadd.f32 0.0, %v1365
      %1367 = vmatprep.mubr.bf16.mxu0 %v720
      %1368 = vmatmul.mubr.bf16.gmra.mxu0 %v719
      %v1369 = vpop.f32.mrf.mxu0
      %v1370 = vadd.f32 0.0, %v1369
      %v1371 = vpop.f32.mrf.mxu0
      %v1372 = vadd.f32 0.0, %v1371
      %v1373 = vpop.f32.mrf.mxu0
      %v1374 = vadd.f32 0.0, %v1373
      %v1375 = vpop.f32.mrf.mxu0
      %v1376 = vadd.f32 0.0, %v1375
      %1377 = vmatprep.mubr.bf16.mxu0 %v722
      %1378 = vmatmul.mubr.bf16.gmra.mxu0 %v721
      %v1379 = vpop.f32.mrf.mxu0
      %v1380 = vadd.f32 0.0, %v1379
      %v1381 = vpop.f32.mrf.mxu0
      %v1382 = vadd.f32 0.0, %v1381
      %v1383 = vpop.f32.mrf.mxu0
      %v1384 = vadd.f32 0.0, %v1383
      %v1385 = vpop.f32.mrf.mxu0
      %v1386 = vadd.f32 0.0, %v1385
      %1387 = vmatprep.mubr.bf16.mxu0 %v724
      %1388 = vmatmul.mubr.bf16.gmra.mxu0 %v723
      %v1389 = vpop.f32.mrf.mxu0
      %v1390 = vadd.f32 0.0, %v1389
      %v1391 = vpop.f32.mrf.mxu0
      %v1392 = vadd.f32 0.0, %v1391
      %v1393 = vpop.f32.mrf.mxu0
      %v1394 = vadd.f32 0.0, %v1393
      %v1395 = vpop.f32.mrf.mxu0
      %v1396 = vadd.f32 0.0, %v1395
      %1397 = vmatprep.mubr.bf16.mxu0 %v726
      %1398 = vmatmul.mubr.bf16.gmra.mxu0 %v725
      %v1399 = vpop.f32.mrf.mxu0
      %v1400 = vadd.f32 0.0, %v1399
      %v1401 = vpop.f32.mrf.mxu0
      %v1402 = vadd.f32 0.0, %v1401
      %v1403 = vpop.f32.mrf.mxu0
      %v1404 = vadd.f32 0.0, %v1403
      %v1405 = vpop.f32.mrf.mxu0
      %v1406 = vadd.f32 0.0, %v1405
      %1407 = vmatprep.mubr.bf16.mxu0 %v728
      %1408 = vmatmul.mubr.bf16.gmra.mxu0 %v727
      %v1409 = vpop.f32.mrf.mxu0
      %v1410 = vadd.f32 0.0, %v1409
      %v1411 = vpop.f32.mrf.mxu0
      %v1412 = vadd.f32 0.0, %v1411
      %v1413 = vpop.f32.mrf.mxu0
      %v1414 = vadd.f32 0.0, %v1413
      %v1415 = vpop.f32.mrf.mxu0
      %v1416 = vadd.f32 0.0, %v1415
      %1417 = vmatprep.mubr.bf16.mxu0 %v730
      %1418 = vmatmul.mubr.bf16.gmra.mxu0 %v729
      %v1419 = vpop.f32.mrf.mxu0
      %v1420 = vadd.f32 0.0, %v1419
      %v1421 = vpop.f32.mrf.mxu0
      %v1422 = vadd.f32 0.0, %v1421
      %v1423 = vpop.f32.mrf.mxu0
      %v1424 = vadd.f32 0.0, %v1423
      %v1425 = vpop.f32.mrf.mxu0
      %v1426 = vadd.f32 0.0, %v1425
      %1427 = vmatprep.mubr.bf16.mxu0 %v732
      %1428 = vmatmul.mubr.bf16.gmra.mxu0 %v731
      %v1429 = vpop.f32.mrf.mxu0
      %v1430 = vadd.f32 0.0, %v1429
      %v1431 = vpop.f32.mrf.mxu0
      %v1432 = vadd.f32 0.0, %v1431
      %v1433 = vpop.f32.mrf.mxu0
      %v1434 = vadd.f32 0.0, %v1433
      %v1435 = vpop.f32.mrf.mxu0
      %v1436 = vadd.f32 0.0, %v1435
      %1437 = vmatprep.mubr.bf16.mxu0 %v734
      %1438 = vmatmul.mubr.bf16.gmra.mxu0 %v733
      %v1439 = vpop.f32.mrf.mxu0
      %v1440 = vadd.f32 0.0, %v1439
      %v1441 = vpop.f32.mrf.mxu0
      %v1442 = vadd.f32 0.0, %v1441
      %v1443 = vpop.f32.mrf.mxu0
      %v1444 = vadd.f32 0.0, %v1443
      %v1445 = vpop.f32.mrf.mxu0
      %v1446 = vadd.f32 0.0, %v1445
      %1447 = vmatprep.mubr.bf16.mxu0 %v736
      %1448 = vmatmul.mubr.bf16.gmra.mxu0 %v735
      %v1449 = vpop.f32.mrf.mxu0
      %v1450 = vadd.f32 0.0, %v1449
      %v1451 = vpop.f32.mrf.mxu0
      %v1452 = vadd.f32 0.0, %v1451
      %v1453 = vpop.f32.mrf.mxu0
      %v1454 = vadd.f32 0.0, %v1453
      %v1455 = vpop.f32.mrf.mxu0
      %v1456 = vadd.f32 0.0, %v1455
      %1457 = vmatprep.mubr.bf16.mxu0 %v738
      %1458 = vmatmul.mubr.bf16.gmra.mxu0 %v737
      %v1459 = vpop.f32.mrf.mxu0
      %v1460 = vadd.f32 0.0, %v1459
      %v1461 = vpop.f32.mrf.mxu0
      %v1462 = vadd.f32 0.0, %v1461
      %v1463 = vpop.f32.mrf.mxu0
      %v1464 = vadd.f32 0.0, %v1463
      %v1465 = vpop.f32.mrf.mxu0
      %v1466 = vadd.f32 0.0, %v1465
      %1467 = vmatprep.mubr.bf16.mxu0 %v740
      %1468 = vmatmul.mubr.bf16.gmra.mxu0 %v739
      %v1469 = vpop.f32.mrf.mxu0
      %v1470 = vadd.f32 0.0, %v1469
      %v1471 = vpop.f32.mrf.mxu0
      %v1472 = vadd.f32 0.0, %v1471
      %v1473 = vpop.f32.mrf.mxu0
      %v1474 = vadd.f32 0.0, %v1473
      %v1475 = vpop.f32.mrf.mxu0
      %v1476 = vadd.f32 0.0, %v1475
      %1477 = vmatprep.mubr.bf16.mxu0 %v742
      %1478 = vmatmul.mubr.bf16.gmra.mxu0 %v741
      %v1479 = vpop.f32.mrf.mxu0
      %v1480 = vadd.f32 0.0, %v1479
      %v1481 = vpop.f32.mrf.mxu0
      %v1482 = vadd.f32 0.0, %v1481
      %v1483 = vpop.f32.mrf.mxu0
      %v1484 = vadd.f32 0.0, %v1483
      %v1485 = vpop.f32.mrf.mxu0
      %v1486 = vadd.f32 0.0, %v1485
      %1487 = vmatprep.mubr.bf16.mxu0 %v744
      %1488 = vmatmul.mubr.bf16.gmra.mxu0 %v743
      %v1489 = vpop.f32.mrf.mxu0
      %v1490 = vadd.f32 0.0, %v1489
      %v1491 = vpop.f32.mrf.mxu0
      %v1492 = vadd.f32 0.0, %v1491
      %v1493 = vpop.f32.mrf.mxu0
      %v1494 = vadd.f32 0.0, %v1493
      %v1495 = vpop.f32.mrf.mxu0
      %v1496 = vadd.f32 0.0, %v1495
      %1497 = vmatprep.mubr.bf16.mxu0 %v746
      %1498 = vmatmul.mubr.bf16.gmra.mxu0 %v745
      %v1499 = vpop.f32.mrf.mxu0
      %v1500 = vadd.f32 0.0, %v1499
      %v1501 = vpop.f32.mrf.mxu0
      %v1502 = vadd.f32 0.0, %v1501
      %v1503 = vpop.f32.mrf.mxu0
      %v1504 = vadd.f32 0.0, %v1503
      %v1505 = vpop.f32.mrf.mxu0
      %v1506 = vadd.f32 0.0, %v1505
      %1507 = vmatprep.mubr.bf16.mxu0 %v748
      %1508 = vmatmul.mubr.bf16.gmra.mxu0 %v747
      %v1509 = vpop.f32.mrf.mxu0
      %v1510 = vadd.f32 0.0, %v1509
      %v1511 = vpop.f32.mrf.mxu0
      %v1512 = vadd.f32 0.0, %v1511
      %v1513 = vpop.f32.mrf.mxu0
      %v1514 = vadd.f32 0.0, %v1513
      %v1515 = vpop.f32.mrf.mxu0
      %v1516 = vadd.f32 0.0, %v1515
      %1517 = vmatprep.mubr.bf16.mxu0 %v750
      %1518 = vmatmul.mubr.bf16.gmra.mxu0 %v749
      %v1519 = vpop.f32.mrf.mxu0
      %v1520 = vadd.f32 0.0, %v1519
      %v1521 = vpop.f32.mrf.mxu0
      %v1522 = vadd.f32 0.0, %v1521
      %v1523 = vpop.f32.mrf.mxu0
      %v1524 = vadd.f32 0.0, %v1523
      %v1525 = vpop.f32.mrf.mxu0
      %v1526 = vadd.f32 0.0, %v1525
      %1527 = vmatprep.mubr.bf16.mxu0 %v752
      %1528 = vmatmul.mubr.bf16.gmra.mxu0 %v751
      %v1529 = vpop.f32.mrf.mxu0
      %v1530 = vadd.f32 0.0, %v1529
      %v1531 = vpop.f32.mrf.mxu0
      %v1532 = vadd.f32 0.0, %v1531
      %v1533 = vpop.f32.mrf.mxu0
      %v1534 = vadd.f32 0.0, %v1533
      %v1535 = vpop.f32.mrf.mxu0
      %v1536 = vadd.f32 0.0, %v1535
      %1537 = vmatprep.mubr.bf16.mxu0 %v754
      %1538 = vmatmul.mubr.bf16.gmra.mxu0 %v753
      %v1539 = vpop.f32.mrf.mxu0
      %v1540 = vadd.f32 0.0, %v1539
      %v1541 = vpop.f32.mrf.mxu0
      %v1542 = vadd.f32 0.0, %v1541
      %v1543 = vpop.f32.mrf.mxu0
      %v1544 = vadd.f32 0.0, %v1543
      %v1545 = vpop.f32.mrf.mxu0
      %v1546 = vadd.f32 0.0, %v1545
      %1547 = vmatprep.mubr.bf16.mxu0 %v756
      %1548 = vmatmul.mubr.bf16.gmra.mxu0 %v755
      %v1549 = vpop.f32.mrf.mxu0
      %v1550 = vadd.f32 0.0, %v1549
      %v1551 = vpop.f32.mrf.mxu0
      %v1552 = vadd.f32 0.0, %v1551
      %v1553 = vpop.f32.mrf.mxu0
      %v1554 = vadd.f32 0.0, %v1553
      %v1555 = vpop.f32.mrf.mxu0
      %v1556 = vadd.f32 0.0, %v1555
      %1557 = vdwg.mxu0
      %1558 = vmatprep.subr.bf16.mxu0 %v1138
      %1559 = vmatpush1.bf16.msra.mxu0 %v1137
      %1560 = vmatprep.subr.bf16.mxu0 %v1132
      %1561 = vmatpush1.bf16.msra.mxu0 %v1131
      %1562 = vmatprep.subr.bf16.mxu0 %v1126
      %1563 = vmatpush1.bf16.msra.mxu0 %v1125
      %1564 = vmatprep.subr.bf16.mxu0 %v1120
      %1565 = vmatpush1.bf16.msra.mxu0 %v1119
      %1566 = vmatprep.subr.bf16.mxu0 %v1114
      %1567 = vmatpush1.bf16.msra.mxu0 %v1113
      %1568 = vmatprep.subr.bf16.mxu0 %v1108
      %1569 = vmatpush1.bf16.msra.mxu0 %v1107
      %1570 = vmatprep.subr.bf16.mxu0 %v1102
      %1571 = vmatpush1.bf16.msra.mxu0 %v1101
      %1572 = vmatprep.subr.bf16.mxu0 %v1096
      %1573 = vmatpush1.bf16.msra.mxu0 %v1095
      %1574 = vmatprep.subr.bf16.mxu0 %v1186
      %1575 = vmatpush2.bf16.msra.mxu0 %v1185
      %1576 = vmatprep.subr.bf16.mxu0 %v1180
      %1577 = vmatpush2.bf16.msra.mxu0 %v1179
      %1578 = vmatprep.subr.bf16.mxu0 %v1174
      %1579 = vmatpush2.bf16.msra.mxu0 %v1173
      %1580 = vmatprep.subr.bf16.mxu0 %v1168
      %1581 = vmatpush2.bf16.msra.mxu0 %v1167
      %1582 = vmatprep.subr.bf16.mxu0 %v1162
      %1583 = vmatpush2.bf16.msra.mxu0 %v1161
      %1584 = vmatprep.subr.bf16.mxu0 %v1156
      %1585 = vmatpush2.bf16.msra.mxu0 %v1155
      %1586 = vmatprep.subr.bf16.mxu0 %v1150
      %1587 = vmatpush2.bf16.msra.mxu0 %v1149
      %1588 = vmatprep.subr.bf16.mxu0 %v1144
      %1589 = vmatpush2.bf16.msra.mxu0 %v1143
      %1590 = vmatprep.mubr.bf16.mxu0 %v710
      %1591 = vmatmul.mubr.bf16.gmra.mxu0 %v709
      %v1592 = vpop.f32.mrf.mxu0
      %v1593 = vadd.f32 0.0, %v1592
      %v1594 = vpop.f32.mrf.mxu0
      %v1595 = vadd.f32 0.0, %v1594
      %v1596 = vpop.f32.mrf.mxu0
      %v1597 = vadd.f32 0.0, %v1596
      %v1598 = vpop.f32.mrf.mxu0
      %v1599 = vadd.f32 0.0, %v1598
      %1600 = vmatprep.mubr.bf16.mxu0 %v712
      %1601 = vmatmul.mubr.bf16.gmra.mxu0 %v711
      %v1602 = vpop.f32.mrf.mxu0
      %v1603 = vadd.f32 0.0, %v1602
      %v1604 = vpop.f32.mrf.mxu0
      %v1605 = vadd.f32 0.0, %v1604
      %v1606 = vpop.f32.mrf.mxu0
      %v1607 = vadd.f32 0.0, %v1606
      %v1608 = vpop.f32.mrf.mxu0
      %v1609 = vadd.f32 0.0, %v1608
      %1610 = vmatprep.mubr.bf16.mxu0 %v714
      %1611 = vmatmul.mubr.bf16.gmra.mxu0 %v713
      %v1612 = vpop.f32.mrf.mxu0
      %v1613 = vadd.f32 0.0, %v1612
      %v1614 = vpop.f32.mrf.mxu0
      %v1615 = vadd.f32 0.0, %v1614
      %v1616 = vpop.f32.mrf.mxu0
      %v1617 = vadd.f32 0.0, %v1616
      %v1618 = vpop.f32.mrf.mxu0
      %v1619 = vadd.f32 0.0, %v1618
      %1620 = vmatprep.mubr.bf16.mxu0 %v716
      %1621 = vmatmul.mubr.bf16.gmra.mxu0 %v715
      %v1622 = vpop.f32.mrf.mxu0
      %v1623 = vadd.f32 0.0, %v1622
      %v1624 = vpop.f32.mrf.mxu0
      %v1625 = vadd.f32 0.0, %v1624
      %v1626 = vpop.f32.mrf.mxu0
      %v1627 = vadd.f32 0.0, %v1626
      %v1628 = vpop.f32.mrf.mxu0
      %v1629 = vadd.f32 0.0, %v1628
      %1630 = vmatprep.mubr.bf16.mxu0 %v718
      %1631 = vmatmul.mubr.bf16.gmra.mxu0 %v717
      %v1632 = vpop.f32.mrf.mxu0
      %v1633 = vadd.f32 0.0, %v1632
      %v1634 = vpop.f32.mrf.mxu0
      %v1635 = vadd.f32 0.0, %v1634
      %v1636 = vpop.f32.mrf.mxu0
      %v1637 = vadd.f32 0.0, %v1636
      %v1638 = vpop.f32.mrf.mxu0
      %v1639 = vadd.f32 0.0, %v1638
      %1640 = vmatprep.mubr.bf16.mxu0 %v720
      %1641 = vmatmul.mubr.bf16.gmra.mxu0 %v719
      %v1642 = vpop.f32.mrf.mxu0
      %v1643 = vadd.f32 0.0, %v1642
      %v1644 = vpop.f32.mrf.mxu0
      %v1645 = vadd.f32 0.0, %v1644
      %v1646 = vpop.f32.mrf.mxu0
      %v1647 = vadd.f32 0.0, %v1646
      %v1648 = vpop.f32.mrf.mxu0
      %v1649 = vadd.f32 0.0, %v1648
      %1650 = vmatprep.mubr.bf16.mxu0 %v722
      %1651 = vmatmul.mubr.bf16.gmra.mxu0 %v721
      %v1652 = vpop.f32.mrf.mxu0
      %v1653 = vadd.f32 0.0, %v1652
      %v1654 = vpop.f32.mrf.mxu0
      %v1655 = vadd.f32 0.0, %v1654
      %v1656 = vpop.f32.mrf.mxu0
      %v1657 = vadd.f32 0.0, %v1656
      %v1658 = vpop.f32.mrf.mxu0
      %v1659 = vadd.f32 0.0, %v1658
      %1660 = vmatprep.mubr.bf16.mxu0 %v724
      %1661 = vmatmul.mubr.bf16.gmra.mxu0 %v723
      %v1662 = vpop.f32.mrf.mxu0
      %v1663 = vadd.f32 0.0, %v1662
      %v1664 = vpop.f32.mrf.mxu0
      %v1665 = vadd.f32 0.0, %v1664
      %v1666 = vpop.f32.mrf.mxu0
      %v1667 = vadd.f32 0.0, %v1666
      %v1668 = vpop.f32.mrf.mxu0
      %v1669 = vadd.f32 0.0, %v1668
      %1670 = vmatprep.mubr.bf16.mxu0 %v726
      %1671 = vmatmul.mubr.bf16.gmra.mxu0 %v725
      %v1672 = vpop.f32.mrf.mxu0
      %v1673 = vadd.f32 0.0, %v1672
      %v1674 = vpop.f32.mrf.mxu0
      %v1675 = vadd.f32 0.0, %v1674
      %v1676 = vpop.f32.mrf.mxu0
      %v1677 = vadd.f32 0.0, %v1676
      %v1678 = vpop.f32.mrf.mxu0
      %v1679 = vadd.f32 0.0, %v1678
      %1680 = vmatprep.mubr.bf16.mxu0 %v728
      %1681 = vmatmul.mubr.bf16.gmra.mxu0 %v727
      %v1682 = vpop.f32.mrf.mxu0
      %v1683 = vadd.f32 0.0, %v1682
      %v1684 = vpop.f32.mrf.mxu0
      %v1685 = vadd.f32 0.0, %v1684
      %v1686 = vpop.f32.mrf.mxu0
      %v1687 = vadd.f32 0.0, %v1686
      %v1688 = vpop.f32.mrf.mxu0
      %v1689 = vadd.f32 0.0, %v1688
      %1690 = vmatprep.mubr.bf16.mxu0 %v730
      %1691 = vmatmul.mubr.bf16.gmra.mxu0 %v729
      %v1692 = vpop.f32.mrf.mxu0
      %v1693 = vadd.f32 0.0, %v1692
      %v1694 = vpop.f32.mrf.mxu0
      %v1695 = vadd.f32 0.0, %v1694
      %v1696 = vpop.f32.mrf.mxu0
      %v1697 = vadd.f32 0.0, %v1696
      %v1698 = vpop.f32.mrf.mxu0
      %v1699 = vadd.f32 0.0, %v1698
      %1700 = vmatprep.mubr.bf16.mxu0 %v732
      %1701 = vmatmul.mubr.bf16.gmra.mxu0 %v731
      %v1702 = vpop.f32.mrf.mxu0
      %v1703 = vadd.f32 0.0, %v1702
      %v1704 = vpop.f32.mrf.mxu0
      %v1705 = vadd.f32 0.0, %v1704
      %v1706 = vpop.f32.mrf.mxu0
      %v1707 = vadd.f32 0.0, %v1706
      %v1708 = vpop.f32.mrf.mxu0
      %v1709 = vadd.f32 0.0, %v1708
      %1710 = vmatprep.mubr.bf16.mxu0 %v734
      %1711 = vmatmul.mubr.bf16.gmra.mxu0 %v733
      %v1712 = vpop.f32.mrf.mxu0
      %v1713 = vadd.f32 0.0, %v1712
      %v1714 = vpop.f32.mrf.mxu0
      %v1715 = vadd.f32 0.0, %v1714
      %v1716 = vpop.f32.mrf.mxu0
      %v1717 = vadd.f32 0.0, %v1716
      %v1718 = vpop.f32.mrf.mxu0
      %v1719 = vadd.f32 0.0, %v1718
      %1720 = vmatprep.mubr.bf16.mxu0 %v736
      %1721 = vmatmul.mubr.bf16.gmra.mxu0 %v735
      %v1722 = vpop.f32.mrf.mxu0
      %v1723 = vadd.f32 0.0, %v1722
      %v1724 = vpop.f32.mrf.mxu0
      %v1725 = vadd.f32 0.0, %v1724
      %v1726 = vpop.f32.mrf.mxu0
      %v1727 = vadd.f32 0.0, %v1726
      %v1728 = vpop.f32.mrf.mxu0
      %v1729 = vadd.f32 0.0, %v1728
      %1730 = vmatprep.mubr.bf16.mxu0 %v738
      %1731 = vmatmul.mubr.bf16.gmra.mxu0 %v737
      %v1732 = vpop.f32.mrf.mxu0
      %v1733 = vadd.f32 0.0, %v1732
      %v1734 = vpop.f32.mrf.mxu0
      %v1735 = vadd.f32 0.0, %v1734
      %v1736 = vpop.f32.mrf.mxu0
      %v1737 = vadd.f32 0.0, %v1736
      %v1738 = vpop.f32.mrf.mxu0
      %v1739 = vadd.f32 0.0, %v1738
      %1740 = vmatprep.mubr.bf16.mxu0 %v740
      %1741 = vmatmul.mubr.bf16.gmra.mxu0 %v739
      %v1742 = vpop.f32.mrf.mxu0
      %v1743 = vadd.f32 0.0, %v1742
      %v1744 = vpop.f32.mrf.mxu0
      %v1745 = vadd.f32 0.0, %v1744
      %v1746 = vpop.f32.mrf.mxu0
      %v1747 = vadd.f32 0.0, %v1746
      %v1748 = vpop.f32.mrf.mxu0
      %v1749 = vadd.f32 0.0, %v1748
      %1750 = vmatprep.mubr.bf16.mxu0 %v742
      %1751 = vmatmul.mubr.bf16.gmra.mxu0 %v741
      %v1752 = vpop.f32.mrf.mxu0
      %v1753 = vadd.f32 0.0, %v1752
      %v1754 = vpop.f32.mrf.mxu0
      %v1755 = vadd.f32 0.0, %v1754
      %v1756 = vpop.f32.mrf.mxu0
      %v1757 = vadd.f32 0.0, %v1756
      %v1758 = vpop.f32.mrf.mxu0
      %v1759 = vadd.f32 0.0, %v1758
      %1760 = vmatprep.mubr.bf16.mxu0 %v744
      %1761 = vmatmul.mubr.bf16.gmra.mxu0 %v743
      %v1762 = vpop.f32.mrf.mxu0
      %v1763 = vadd.f32 0.0, %v1762
      %v1764 = vpop.f32.mrf.mxu0
      %v1765 = vadd.f32 0.0, %v1764
      %v1766 = vpop.f32.mrf.mxu0
      %v1767 = vadd.f32 0.0, %v1766
      %v1768 = vpop.f32.mrf.mxu0
      %v1769 = vadd.f32 0.0, %v1768
      %1770 = vmatprep.mubr.bf16.mxu0 %v746
      %1771 = vmatmul.mubr.bf16.gmra.mxu0 %v745
      %v1772 = vpop.f32.mrf.mxu0
      %v1773 = vadd.f32 0.0, %v1772
      %v1774 = vpop.f32.mrf.mxu0
      %v1775 = vadd.f32 0.0, %v1774
      %v1776 = vpop.f32.mrf.mxu0
      %v1777 = vadd.f32 0.0, %v1776
      %v1778 = vpop.f32.mrf.mxu0
      %v1779 = vadd.f32 0.0, %v1778
      %1780 = vmatprep.mubr.bf16.mxu0 %v748
      %1781 = vmatmul.mubr.bf16.gmra.mxu0 %v747
      %v1782 = vpop.f32.mrf.mxu0
      %v1783 = vadd.f32 0.0, %v1782
      %v1784 = vpop.f32.mrf.mxu0
      %v1785 = vadd.f32 0.0, %v1784
      %v1786 = vpop.f32.mrf.mxu0
      %v1787 = vadd.f32 0.0, %v1786
      %v1788 = vpop.f32.mrf.mxu0
      %v1789 = vadd.f32 0.0, %v1788
      %1790 = vmatprep.mubr.bf16.mxu0 %v750
      %1791 = vmatmul.mubr.bf16.gmra.mxu0 %v749
      %v1792 = vpop.f32.mrf.mxu0
      %v1793 = vadd.f32 0.0, %v1792
      %v1794 = vpop.f32.mrf.mxu0
      %v1795 = vadd.f32 0.0, %v1794
      %v1796 = vpop.f32.mrf.mxu0
      %v1797 = vadd.f32 0.0, %v1796
      %v1798 = vpop.f32.mrf.mxu0
      %v1799 = vadd.f32 0.0, %v1798
      %1800 = vmatprep.mubr.bf16.mxu0 %v752
      %1801 = vmatmul.mubr.bf16.gmra.mxu0 %v751
      %v1802 = vpop.f32.mrf.mxu0
      %v1803 = vadd.f32 0.0, %v1802
      %v1804 = vpop.f32.mrf.mxu0
      %v1805 = vadd.f32 0.0, %v1804
      %v1806 = vpop.f32.mrf.mxu0
      %v1807 = vadd.f32 0.0, %v1806
      %v1808 = vpop.f32.mrf.mxu0
      %v1809 = vadd.f32 0.0, %v1808
      %1810 = vmatprep.mubr.bf16.mxu0 %v754
      %1811 = vmatmul.mubr.bf16.gmra.mxu0 %v753
      %v1812 = vpop.f32.mrf.mxu0
      %v1813 = vadd.f32 0.0, %v1812
      %v1814 = vpop.f32.mrf.mxu0
      %v1815 = vadd.f32 0.0, %v1814
      %v1816 = vpop.f32.mrf.mxu0
      %v1817 = vadd.f32 0.0, %v1816
      %v1818 = vpop.f32.mrf.mxu0
      %v1819 = vadd.f32 0.0, %v1818
      %1820 = vmatprep.mubr.bf16.mxu0 %v756
      %1821 = vmatmul.mubr.bf16.gmra.mxu0 %v755
      %v1822 = vpop.f32.mrf.mxu0
      %v1823 = vadd.f32 0.0, %v1822
      %v1824 = vpop.f32.mrf.mxu0
      %v1825 = vadd.f32 0.0, %v1824
      %v1826 = vpop.f32.mrf.mxu0
      %v1827 = vadd.f32 0.0, %v1826
      %v1828 = vpop.f32.mrf.mxu0
      %v1829 = vadd.f32 0.0, %v1828
      %1830 = vdwg.mxu0
      %1831 = vmatprep.subr.bf16.mxu0 %v1140
      %1832 = vmatpush1.bf16.msra.mxu0 %v1139
      %1833 = vmatprep.subr.bf16.mxu0 %v1134
      %1834 = vmatpush1.bf16.msra.mxu0 %v1133
      %1835 = vmatprep.subr.bf16.mxu0 %v1128
      %1836 = vmatpush1.bf16.msra.mxu0 %v1127
      %1837 = vmatprep.subr.bf16.mxu0 %v1122
      %1838 = vmatpush1.bf16.msra.mxu0 %v1121
      %1839 = vmatprep.subr.bf16.mxu0 %v1116
      %1840 = vmatpush1.bf16.msra.mxu0 %v1115
      %1841 = vmatprep.subr.bf16.mxu0 %v1110
      %1842 = vmatpush1.bf16.msra.mxu0 %v1109
      %1843 = vmatprep.subr.bf16.mxu0 %v1104
      %1844 = vmatpush1.bf16.msra.mxu0 %v1103
      %1845 = vmatprep.subr.bf16.mxu0 %v1098
      %1846 = vmatpush1.bf16.msra.mxu0 %v1097
      %1847 = vmatprep.subr.bf16.mxu0 %v1188
      %1848 = vmatpush2.bf16.msra.mxu0 %v1187
      %1849 = vmatprep.subr.bf16.mxu0 %v1182
      %1850 = vmatpush2.bf16.msra.mxu0 %v1181
      %1851 = vmatprep.subr.bf16.mxu0 %v1176
      %1852 = vmatpush2.bf16.msra.mxu0 %v1175
      %1853 = vmatprep.subr.bf16.mxu0 %v1170
      %1854 = vmatpush2.bf16.msra.mxu0 %v1169
      %1855 = vmatprep.subr.bf16.mxu0 %v1164
      %1856 = vmatpush2.bf16.msra.mxu0 %v1163
      %1857 = vmatprep.subr.bf16.mxu0 %v1158
      %1858 = vmatpush2.bf16.msra.mxu0 %v1157
      %1859 = vmatprep.subr.bf16.mxu0 %v1152
      %1860 = vmatpush2.bf16.msra.mxu0 %v1151
      %1861 = vmatprep.subr.bf16.mxu0 %v1146
      %1862 = vmatpush2.bf16.msra.mxu0 %v1145
      %1863 = vmatprep.mubr.bf16.mxu0 %v710
      %1864 = vmatmul.mubr.bf16.gmra.mxu0 %v709
      %v1865 = vpop.f32.mrf.mxu0
      %v1866 = vadd.f32 0.0, %v1865
      %v1867 = vpop.f32.mrf.mxu0
      %v1868 = vadd.f32 0.0, %v1867
      %v1869 = vpop.f32.mrf.mxu0
      %v1870 = vadd.f32 0.0, %v1869
      %v1871 = vpop.f32.mrf.mxu0
      %v1872 = vadd.f32 0.0, %v1871
      %1873 = vmatprep.mubr.bf16.mxu0 %v712
      %1874 = vmatmul.mubr.bf16.gmra.mxu0 %v711
      %v1875 = vpop.f32.mrf.mxu0
      %v1876 = vadd.f32 0.0, %v1875
      %v1877 = vpop.f32.mrf.mxu0
      %v1878 = vadd.f32 0.0, %v1877
      %v1879 = vpop.f32.mrf.mxu0
      %v1880 = vadd.f32 0.0, %v1879
      %v1881 = vpop.f32.mrf.mxu0
      %v1882 = vadd.f32 0.0, %v1881
      %1883 = vmatprep.mubr.bf16.mxu0 %v714
      %1884 = vmatmul.mubr.bf16.gmra.mxu0 %v713
      %v1885 = vpop.f32.mrf.mxu0
      %v1886 = vadd.f32 0.0, %v1885
      %v1887 = vpop.f32.mrf.mxu0
      %v1888 = vadd.f32 0.0, %v1887
      %v1889 = vpop.f32.mrf.mxu0
      %v1890 = vadd.f32 0.0, %v1889
      %v1891 = vpop.f32.mrf.mxu0
      %v1892 = vadd.f32 0.0, %v1891
      %1893 = vmatprep.mubr.bf16.mxu0 %v716
      %1894 = vmatmul.mubr.bf16.gmra.mxu0 %v715
      %v1895 = vpop.f32.mrf.mxu0
      %v1896 = vadd.f32 0.0, %v1895
      %v1897 = vpop.f32.mrf.mxu0
      %v1898 = vadd.f32 0.0, %v1897
      %v1899 = vpop.f32.mrf.mxu0
      %v1900 = vadd.f32 0.0, %v1899
      %v1901 = vpop.f32.mrf.mxu0
      %v1902 = vadd.f32 0.0, %v1901
      %1903 = vmatprep.mubr.bf16.mxu0 %v718
      %1904 = vmatmul.mubr.bf16.gmra.mxu0 %v717
      %v1905 = vpop.f32.mrf.mxu0
      %v1906 = vadd.f32 0.0, %v1905
      %v1907 = vpop.f32.mrf.mxu0
      %v1908 = vadd.f32 0.0, %v1907
      %v1909 = vpop.f32.mrf.mxu0
      %v1910 = vadd.f32 0.0, %v1909
      %v1911 = vpop.f32.mrf.mxu0
      %v1912 = vadd.f32 0.0, %v1911
      %1913 = vmatprep.mubr.bf16.mxu0 %v720
      %1914 = vmatmul.mubr.bf16.gmra.mxu0 %v719
      %v1915 = vpop.f32.mrf.mxu0
      %v1916 = vadd.f32 0.0, %v1915
      %v1917 = vpop.f32.mrf.mxu0
      %v1918 = vadd.f32 0.0, %v1917
      %v1919 = vpop.f32.mrf.mxu0
      %v1920 = vadd.f32 0.0, %v1919
      %v1921 = vpop.f32.mrf.mxu0
      %v1922 = vadd.f32 0.0, %v1921
      %1923 = vmatprep.mubr.bf16.mxu0 %v722
      %1924 = vmatmul.mubr.bf16.gmra.mxu0 %v721
      %v1925 = vpop.f32.mrf.mxu0
      %v1926 = vadd.f32 0.0, %v1925
      %v1927 = vpop.f32.mrf.mxu0
      %v1928 = vadd.f32 0.0, %v1927
      %v1929 = vpop.f32.mrf.mxu0
      %v1930 = vadd.f32 0.0, %v1929
      %v1931 = vpop.f32.mrf.mxu0
      %v1932 = vadd.f32 0.0, %v1931
      %1933 = vmatprep.mubr.bf16.mxu0 %v724
      %1934 = vmatmul.mubr.bf16.gmra.mxu0 %v723
      %v1935 = vpop.f32.mrf.mxu0
      %v1936 = vadd.f32 0.0, %v1935
      %v1937 = vpop.f32.mrf.mxu0
      %v1938 = vadd.f32 0.0, %v1937
      %v1939 = vpop.f32.mrf.mxu0
      %v1940 = vadd.f32 0.0, %v1939
      %v1941 = vpop.f32.mrf.mxu0
      %v1942 = vadd.f32 0.0, %v1941
      %1943 = vmatprep.mubr.bf16.mxu0 %v726
      %1944 = vmatmul.mubr.bf16.gmra.mxu0 %v725
      %v1945 = vpop.f32.mrf.mxu0
      %v1946 = vadd.f32 0.0, %v1945
      %v1947 = vpop.f32.mrf.mxu0
      %v1948 = vadd.f32 0.0, %v1947
      %v1949 = vpop.f32.mrf.mxu0
      %v1950 = vadd.f32 0.0, %v1949
      %v1951 = vpop.f32.mrf.mxu0
      %v1952 = vadd.f32 0.0, %v1951
      %1953 = vmatprep.mubr.bf16.mxu0 %v728
      %1954 = vmatmul.mubr.bf16.gmra.mxu0 %v727
      %v1955 = vpop.f32.mrf.mxu0
      %v1956 = vadd.f32 0.0, %v1955
      %v1957 = vpop.f32.mrf.mxu0
      %v1958 = vadd.f32 0.0, %v1957
      %v1959 = vpop.f32.mrf.mxu0
      %v1960 = vadd.f32 0.0, %v1959
      %v1961 = vpop.f32.mrf.mxu0
      %v1962 = vadd.f32 0.0, %v1961
      %1963 = vmatprep.mubr.bf16.mxu0 %v730
      %1964 = vmatmul.mubr.bf16.gmra.mxu0 %v729
      %v1965 = vpop.f32.mrf.mxu0
      %v1966 = vadd.f32 0.0, %v1965
      %v1967 = vpop.f32.mrf.mxu0
      %v1968 = vadd.f32 0.0, %v1967
      %v1969 = vpop.f32.mrf.mxu0
      %v1970 = vadd.f32 0.0, %v1969
      %v1971 = vpop.f32.mrf.mxu0
      %v1972 = vadd.f32 0.0, %v1971
      %1973 = vmatprep.mubr.bf16.mxu0 %v732
      %1974 = vmatmul.mubr.bf16.gmra.mxu0 %v731
      %v1975 = vpop.f32.mrf.mxu0
      %v1976 = vadd.f32 0.0, %v1975
      %v1977 = vpop.f32.mrf.mxu0
      %v1978 = vadd.f32 0.0, %v1977
      %v1979 = vpop.f32.mrf.mxu0
      %v1980 = vadd.f32 0.0, %v1979
      %v1981 = vpop.f32.mrf.mxu0
      %v1982 = vadd.f32 0.0, %v1981
      %1983 = vmatprep.mubr.bf16.mxu0 %v734
      %1984 = vmatmul.mubr.bf16.gmra.mxu0 %v733
      %v1985 = vpop.f32.mrf.mxu0
      %v1986 = vadd.f32 0.0, %v1985
      %v1987 = vpop.f32.mrf.mxu0
      %v1988 = vadd.f32 0.0, %v1987
      %v1989 = vpop.f32.mrf.mxu0
      %v1990 = vadd.f32 0.0, %v1989
      %v1991 = vpop.f32.mrf.mxu0
      %v1992 = vadd.f32 0.0, %v1991
      %1993 = vmatprep.mubr.bf16.mxu0 %v736
      %1994 = vmatmul.mubr.bf16.gmra.mxu0 %v735
      %v1995 = vpop.f32.mrf.mxu0
      %v1996 = vadd.f32 0.0, %v1995
      %v1997 = vpop.f32.mrf.mxu0
      %v1998 = vadd.f32 0.0, %v1997
      %v1999 = vpop.f32.mrf.mxu0
      %v2000 = vadd.f32 0.0, %v1999
      %v2001 = vpop.f32.mrf.mxu0
      %v2002 = vadd.f32 0.0, %v2001
      %2003 = vmatprep.mubr.bf16.mxu0 %v738
      %2004 = vmatmul.mubr.bf16.gmra.mxu0 %v737
      %v2005 = vpop.f32.mrf.mxu0
      %v2006 = vadd.f32 0.0, %v2005
      %v2007 = vpop.f32.mrf.mxu0
      %v2008 = vadd.f32 0.0, %v2007
      %v2009 = vpop.f32.mrf.mxu0
      %v2010 = vadd.f32 0.0, %v2009
      %v2011 = vpop.f32.mrf.mxu0
      %v2012 = vadd.f32 0.0, %v2011
      %2013 = vmatprep.mubr.bf16.mxu0 %v740
      %2014 = vmatmul.mubr.bf16.gmra.mxu0 %v739
      %v2015 = vpop.f32.mrf.mxu0
      %v2016 = vadd.f32 0.0, %v2015
      %v2017 = vpop.f32.mrf.mxu0
      %v2018 = vadd.f32 0.0, %v2017
      %v2019 = vpop.f32.mrf.mxu0
      %v2020 = vadd.f32 0.0, %v2019
      %v2021 = vpop.f32.mrf.mxu0
      %v2022 = vadd.f32 0.0, %v2021
      %2023 = vmatprep.mubr.bf16.mxu0 %v742
      %2024 = vmatmul.mubr.bf16.gmra.mxu0 %v741
      %v2025 = vpop.f32.mrf.mxu0
      %v2026 = vadd.f32 0.0, %v2025
      %v2027 = vpop.f32.mrf.mxu0
      %v2028 = vadd.f32 0.0, %v2027
      %v2029 = vpop.f32.mrf.mxu0
      %v2030 = vadd.f32 0.0, %v2029
      %v2031 = vpop.f32.mrf.mxu0
      %v2032 = vadd.f32 0.0, %v2031
      %2033 = vmatprep.mubr.bf16.mxu0 %v744
      %2034 = vmatmul.mubr.bf16.gmra.mxu0 %v743
      %v2035 = vpop.f32.mrf.mxu0
      %v2036 = vadd.f32 0.0, %v2035
      %v2037 = vpop.f32.mrf.mxu0
      %v2038 = vadd.f32 0.0, %v2037
      %v2039 = vpop.f32.mrf.mxu0
      %v2040 = vadd.f32 0.0, %v2039
      %v2041 = vpop.f32.mrf.mxu0
      %v2042 = vadd.f32 0.0, %v2041
      %2043 = vmatprep.mubr.bf16.mxu0 %v746
      %2044 = vmatmul.mubr.bf16.gmra.mxu0 %v745
      %v2045 = vpop.f32.mrf.mxu0
      %v2046 = vadd.f32 0.0, %v2045
      %v2047 = vpop.f32.mrf.mxu0
      %v2048 = vadd.f32 0.0, %v2047
      %v2049 = vpop.f32.mrf.mxu0
      %v2050 = vadd.f32 0.0, %v2049
      %v2051 = vpop.f32.mrf.mxu0
      %v2052 = vadd.f32 0.0, %v2051
      %2053 = vmatprep.mubr.bf16.mxu0 %v748
      %2054 = vmatmul.mubr.bf16.gmra.mxu0 %v747
      %v2055 = vpop.f32.mrf.mxu0
      %v2056 = vadd.f32 0.0, %v2055
      %v2057 = vpop.f32.mrf.mxu0
      %v2058 = vadd.f32 0.0, %v2057
      %v2059 = vpop.f32.mrf.mxu0
      %v2060 = vadd.f32 0.0, %v2059
      %v2061 = vpop.f32.mrf.mxu0
      %v2062 = vadd.f32 0.0, %v2061
      %2063 = vmatprep.mubr.bf16.mxu0 %v750
      %2064 = vmatmul.mubr.bf16.gmra.mxu0 %v749
      %v2065 = vpop.f32.mrf.mxu0
      %v2066 = vadd.f32 0.0, %v2065
      %v2067 = vpop.f32.mrf.mxu0
      %v2068 = vadd.f32 0.0, %v2067
      %v2069 = vpop.f32.mrf.mxu0
      %v2070 = vadd.f32 0.0, %v2069
      %v2071 = vpop.f32.mrf.mxu0
      %v2072 = vadd.f32 0.0, %v2071
      %2073 = vmatprep.mubr.bf16.mxu0 %v752
      %2074 = vmatmul.mubr.bf16.gmra.mxu0 %v751
      %v2075 = vpop.f32.mrf.mxu0
      %v2076 = vadd.f32 0.0, %v2075
      %v2077 = vpop.f32.mrf.mxu0
      %v2078 = vadd.f32 0.0, %v2077
      %v2079 = vpop.f32.mrf.mxu0
      %v2080 = vadd.f32 0.0, %v2079
      %v2081 = vpop.f32.mrf.mxu0
      %v2082 = vadd.f32 0.0, %v2081
      %2083 = vmatprep.mubr.bf16.mxu0 %v754
      %2084 = vmatmul.mubr.bf16.gmra.mxu0 %v753
      %v2085 = vpop.f32.mrf.mxu0
      %v2086 = vadd.f32 0.0, %v2085
      %v2087 = vpop.f32.mrf.mxu0
      %v2088 = vadd.f32 0.0, %v2087
      %v2089 = vpop.f32.mrf.mxu0
      %v2090 = vadd.f32 0.0, %v2089
      %v2091 = vpop.f32.mrf.mxu0
      %v2092 = vadd.f32 0.0, %v2091
      %2093 = vmatprep.mubr.bf16.mxu0 %v756
      %2094 = vmatmul.mubr.bf16.gmra.mxu0 %v755
      %v2095 = vpop.f32.mrf.mxu0
      %v2096 = vadd.f32 0.0, %v2095
      %v2097 = vpop.f32.mrf.mxu0
      %v2098 = vadd.f32 0.0, %v2097
      %v2099 = vpop.f32.mrf.mxu0
      %v2100 = vadd.f32 0.0, %v2099
      %v2101 = vpop.f32.mrf.mxu0
      %v2102 = vadd.f32 0.0, %v2101
      %2103 = vdwg.mxu0
      %v2104 = vld [vmem:[%s5] sm:$0x3f]
      %v2106 = vlaneseq
      %v2107 = vshrl.u32 %v2106, 7
      %v2108 = vsub.s32 0, %v2107
      %v2109 = vrot.slane %v2104, %v2108
      %v2110 = vlaneseq
      %v2111 = vshrl.u32 %v2110, 7
      %v2112 = vsub.s32 1, %v2111
      %v2113 = vrot.slane %v2104, %v2112
      %v2114 = vlaneseq
      %v2115 = vshrl.u32 %v2114, 7
      %v2116 = vsub.s32 2, %v2115
      %v2117 = vrot.slane %v2104, %v2116
      %v2118 = vlaneseq
      %v2119 = vshrl.u32 %v2118, 7
      %v2120 = vsub.s32 3, %v2119
      %v2121 = vrot.slane %v2104, %v2120
      %v2122 = vlaneseq
      %v2123 = vshrl.u32 %v2122, 7
      %v2124 = vsub.s32 4, %v2123
      %v2125 = vrot.slane %v2104, %v2124
      %v2126 = vlaneseq
      %v2127 = vshrl.u32 %v2126, 7
      %v2128 = vsub.s32 5, %v2127
      %v2129 = vrot.slane %v2104, %v2128
      %v2136 = vmul.f32 %v1320, %v2109
      %v2137 = vmul.f32 %v1322, %v2113
      %v2138 = vmul.f32 %v1593, %v2117
      %v2139 = vmul.f32 %v1595, %v2121
      %v2140 = vmul.f32 %v1866, %v2125
      %v2141 = vmul.f32 %v1868, %v2129
      %v2142 = vmul.f32 %v1324, %v2109
      %v2143 = vmul.f32 %v1326, %v2113
      %v2144 = vmul.f32 %v1597, %v2117
      %v2145 = vmul.f32 %v1599, %v2121
      %v2146 = vmul.f32 %v1870, %v2125
      %v2147 = vmul.f32 %v1872, %v2129
      %v2148 = vmul.f32 %v1330, %v2109
      %v2149 = vmul.f32 %v1332, %v2113
      %v2150 = vmul.f32 %v1603, %v2117
      %v2151 = vmul.f32 %v1605, %v2121
      %v2152 = vmul.f32 %v1876, %v2125
      %v2153 = vmul.f32 %v1878, %v2129
      %v2154 = vmul.f32 %v1334, %v2109
      %v2155 = vmul.f32 %v1336, %v2113
      %v2156 = vmul.f32 %v1607, %v2117
      %v2157 = vmul.f32 %v1609, %v2121
      %v2158 = vmul.f32 %v1880, %v2125
      %v2159 = vmul.f32 %v1882, %v2129
      %v2160 = vmul.f32 %v1340, %v2109
      %v2161 = vmul.f32 %v1342, %v2113
      %v2162 = vmul.f32 %v1613, %v2117
      %v2163 = vmul.f32 %v1615, %v2121
      %v2164 = vmul.f32 %v1886, %v2125
      %v2165 = vmul.f32 %v1888, %v2129
      %v2166 = vmul.f32 %v1344, %v2109
      %v2167 = vmul.f32 %v1346, %v2113
      %v2168 = vmul.f32 %v1617, %v2117
      %v2169 = vmul.f32 %v1619, %v2121
      %v2170 = vmul.f32 %v1890, %v2125
      %v2171 = vmul.f32 %v1892, %v2129
      %v2172 = vmul.f32 %v1350, %v2109
      %v2173 = vmul.f32 %v1352, %v2113
      %v2174 = vmul.f32 %v1623, %v2117
      %v2175 = vmul.f32 %v1625, %v2121
      %v2176 = vmul.f32 %v1896, %v2125
      %v2177 = vmul.f32 %v1898, %v2129
      %v2178 = vmul.f32 %v1354, %v2109
      %v2179 = vmul.f32 %v1356, %v2113
      %v2180 = vmul.f32 %v1627, %v2117
      %v2181 = vmul.f32 %v1629, %v2121
      %v2182 = vmul.f32 %v1900, %v2125
      %v2183 = vmul.f32 %v1902, %v2129
      %v2184 = vmul.f32 %v1360, %v2109
      %v2185 = vmul.f32 %v1362, %v2113
      %v2186 = vmul.f32 %v1633, %v2117
      %v2187 = vmul.f32 %v1635, %v2121
      %v2188 = vmul.f32 %v1906, %v2125
      %v2189 = vmul.f32 %v1908, %v2129
      %v2190 = vmul.f32 %v1364, %v2109
      %v2191 = vmul.f32 %v1366, %v2113
      %v2192 = vmul.f32 %v1637, %v2117
      %v2193 = vmul.f32 %v1639, %v2121
      %v2194 = vmul.f32 %v1910, %v2125
      %v2195 = vmul.f32 %v1912, %v2129
      %v2196 = vmul.f32 %v1370, %v2109
      %v2197 = vmul.f32 %v1372, %v2113
      %v2198 = vmul.f32 %v1643, %v2117
      %v2199 = vmul.f32 %v1645, %v2121
      %v2200 = vmul.f32 %v1916, %v2125
      %v2201 = vmul.f32 %v1918, %v2129
      %v2202 = vmul.f32 %v1374, %v2109
      %v2203 = vmul.f32 %v1376, %v2113
      %v2204 = vmul.f32 %v1647, %v2117
      %v2205 = vmul.f32 %v1649, %v2121
      %v2206 = vmul.f32 %v1920, %v2125
      %v2207 = vmul.f32 %v1922, %v2129
      %v2208 = vmul.f32 %v1380, %v2109
      %v2209 = vmul.f32 %v1382, %v2113
      %v2210 = vmul.f32 %v1653, %v2117
      %v2211 = vmul.f32 %v1655, %v2121
      %v2212 = vmul.f32 %v1926, %v2125
      %v2213 = vmul.f32 %v1928, %v2129
      %v2214 = vmul.f32 %v1384, %v2109
      %v2215 = vmul.f32 %v1386, %v2113
      %v2216 = vmul.f32 %v1657, %v2117
      %v2217 = vmul.f32 %v1659, %v2121
      %v2218 = vmul.f32 %v1930, %v2125
      %v2219 = vmul.f32 %v1932, %v2129
      %v2220 = vmul.f32 %v1390, %v2109
      %v2221 = vmul.f32 %v1392, %v2113
      %v2222 = vmul.f32 %v1663, %v2117
      %v2223 = vmul.f32 %v1665, %v2121
      %v2224 = vmul.f32 %v1936, %v2125
      %v2225 = vmul.f32 %v1938, %v2129
      %v2226 = vmul.f32 %v1394, %v2109
      %v2227 = vmul.f32 %v1396, %v2113
      %v2228 = vmul.f32 %v1667, %v2117
      %v2229 = vmul.f32 %v1669, %v2121
      %v2230 = vmul.f32 %v1940, %v2125
      %v2231 = vmul.f32 %v1942, %v2129
      %v2232 = vmul.f32 %v1400, %v2109
      %v2233 = vmul.f32 %v1402, %v2113
      %v2234 = vmul.f32 %v1673, %v2117
      %v2235 = vmul.f32 %v1675, %v2121
      %v2236 = vmul.f32 %v1946, %v2125
      %v2237 = vmul.f32 %v1948, %v2129
      %v2238 = vmul.f32 %v1404, %v2109
      %v2239 = vmul.f32 %v1406, %v2113
      %v2240 = vmul.f32 %v1677, %v2117
      %v2241 = vmul.f32 %v1679, %v2121
      %v2242 = vmul.f32 %v1950, %v2125
      %v2243 = vmul.f32 %v1952, %v2129
      %v2244 = vmul.f32 %v1410, %v2109
      %v2245 = vmul.f32 %v1412, %v2113
      %v2246 = vmul.f32 %v1683, %v2117
      %v2247 = vmul.f32 %v1685, %v2121
      %v2248 = vmul.f32 %v1956, %v2125
      %v2249 = vmul.f32 %v1958, %v2129
      %v2250 = vmul.f32 %v1414, %v2109
      %v2251 = vmul.f32 %v1416, %v2113
      %v2252 = vmul.f32 %v1687, %v2117
      %v2253 = vmul.f32 %v1689, %v2121
      %v2254 = vmul.f32 %v1960, %v2125
      %v2255 = vmul.f32 %v1962, %v2129
      %v2256 = vmul.f32 %v1420, %v2109
      %v2257 = vmul.f32 %v1422, %v2113
      %v2258 = vmul.f32 %v1693, %v2117
      %v2259 = vmul.f32 %v1695, %v2121
      %v2260 = vmul.f32 %v1966, %v2125
      %v2261 = vmul.f32 %v1968, %v2129
      %v2262 = vmul.f32 %v1424, %v2109
      %v2263 = vmul.f32 %v1426, %v2113
      %v2264 = vmul.f32 %v1697, %v2117
      %v2265 = vmul.f32 %v1699, %v2121
      %v2266 = vmul.f32 %v1970, %v2125
      %v2267 = vmul.f32 %v1972, %v2129
      %v2268 = vmul.f32 %v1430, %v2109
      %v2269 = vmul.f32 %v1432, %v2113
      %v2270 = vmul.f32 %v1703, %v2117
      %v2271 = vmul.f32 %v1705, %v2121
      %v2272 = vmul.f32 %v1976, %v2125
      %v2273 = vmul.f32 %v1978, %v2129
      %v2274 = vmul.f32 %v1434, %v2109
      %v2275 = vmul.f32 %v1436, %v2113
      %v2276 = vmul.f32 %v1707, %v2117
      %v2277 = vmul.f32 %v1709, %v2121
      %v2278 = vmul.f32 %v1980, %v2125
      %v2279 = vmul.f32 %v1982, %v2129
      %v2280 = vmul.f32 %v1440, %v2109
      %v2281 = vmul.f32 %v1442, %v2113
      %v2282 = vmul.f32 %v1713, %v2117
      %v2283 = vmul.f32 %v1715, %v2121
      %v2284 = vmul.f32 %v1986, %v2125
      %v2285 = vmul.f32 %v1988, %v2129
      %v2286 = vmul.f32 %v1444, %v2109
      %v2287 = vmul.f32 %v1446, %v2113
      %v2288 = vmul.f32 %v1717, %v2117
      %v2289 = vmul.f32 %v1719, %v2121
      %v2290 = vmul.f32 %v1990, %v2125
      %v2291 = vmul.f32 %v1992, %v2129
      %v2292 = vmul.f32 %v1450, %v2109
      %v2293 = vmul.f32 %v1452, %v2113
      %v2294 = vmul.f32 %v1723, %v2117
      %v2295 = vmul.f32 %v1725, %v2121
      %v2296 = vmul.f32 %v1996, %v2125
      %v2297 = vmul.f32 %v1998, %v2129
      %v2298 = vmul.f32 %v1454, %v2109
      %v2299 = vmul.f32 %v1456, %v2113
      %v2300 = vmul.f32 %v1727, %v2117
      %v2301 = vmul.f32 %v1729, %v2121
      %v2302 = vmul.f32 %v2000, %v2125
      %v2303 = vmul.f32 %v2002, %v2129
      %v2304 = vmul.f32 %v1460, %v2109
      %v2305 = vmul.f32 %v1462, %v2113
      %v2306 = vmul.f32 %v1733, %v2117
      %v2307 = vmul.f32 %v1735, %v2121
      %v2308 = vmul.f32 %v2006, %v2125
      %v2309 = vmul.f32 %v2008, %v2129
      %v2310 = vmul.f32 %v1464, %v2109
      %v2311 = vmul.f32 %v1466, %v2113
      %v2312 = vmul.f32 %v1737, %v2117
      %v2313 = vmul.f32 %v1739, %v2121
      %v2314 = vmul.f32 %v2010, %v2125
      %v2315 = vmul.f32 %v2012, %v2129
      %v2316 = vmul.f32 %v1470, %v2109
      %v2317 = vmul.f32 %v1472, %v2113
      %v2318 = vmul.f32 %v1743, %v2117
      %v2319 = vmul.f32 %v1745, %v2121
      %v2320 = vmul.f32 %v2016, %v2125
      %v2321 = vmul.f32 %v2018, %v2129
      %v2322 = vmul.f32 %v1474, %v2109
      %v2323 = vmul.f32 %v1476, %v2113
      %v2324 = vmul.f32 %v1747, %v2117
      %v2325 = vmul.f32 %v1749, %v2121
      %v2326 = vmul.f32 %v2020, %v2125
      %v2327 = vmul.f32 %v2022, %v2129
      %v2328 = vmul.f32 %v1480, %v2109
      %v2329 = vmul.f32 %v1482, %v2113
      %v2330 = vmul.f32 %v1753, %v2117
      %v2331 = vmul.f32 %v1755, %v2121
      %v2332 = vmul.f32 %v2026, %v2125
      %v2333 = vmul.f32 %v2028, %v2129
      %v2334 = vmul.f32 %v1484, %v2109
      %v2335 = vmul.f32 %v1486, %v2113
      %v2336 = vmul.f32 %v1757, %v2117
      %v2337 = vmul.f32 %v1759, %v2121
      %v2338 = vmul.f32 %v2030, %v2125
      %v2339 = vmul.f32 %v2032, %v2129
      %v2340 = vmul.f32 %v1490, %v2109
      %v2341 = vmul.f32 %v1492, %v2113
      %v2342 = vmul.f32 %v1763, %v2117
      %v2343 = vmul.f32 %v1765, %v2121
      %v2344 = vmul.f32 %v2036, %v2125
      %v2345 = vmul.f32 %v2038, %v2129
      %v2346 = vmul.f32 %v1494, %v2109
      %v2347 = vmul.f32 %v1496, %v2113
      %v2348 = vmul.f32 %v1767, %v2117
      %v2349 = vmul.f32 %v1769, %v2121
      %v2350 = vmul.f32 %v2040, %v2125
      %v2351 = vmul.f32 %v2042, %v2129
      %v2352 = vmul.f32 %v1500, %v2109
      %v2353 = vmul.f32 %v1502, %v2113
      %v2354 = vmul.f32 %v1773, %v2117
      %v2355 = vmul.f32 %v1775, %v2121
      %v2356 = vmul.f32 %v2046, %v2125
      %v2357 = vmul.f32 %v2048, %v2129
      %v2358 = vmul.f32 %v1504, %v2109
      %v2359 = vmul.f32 %v1506, %v2113
      %v2360 = vmul.f32 %v1777, %v2117
      %v2361 = vmul.f32 %v1779, %v2121
      %v2362 = vmul.f32 %v2050, %v2125
      %v2363 = vmul.f32 %v2052, %v2129
      %v2364 = vmul.f32 %v1510, %v2109
      %v2365 = vmul.f32 %v1512, %v2113
      %v2366 = vmul.f32 %v1783, %v2117
      %v2367 = vmul.f32 %v1785, %v2121
      %v2368 = vmul.f32 %v2056, %v2125
      %v2369 = vmul.f32 %v2058, %v2129
      %v2370 = vmul.f32 %v1514, %v2109
      %v2371 = vmul.f32 %v1516, %v2113
      %v2372 = vmul.f32 %v1787, %v2117
      %v2373 = vmul.f32 %v1789, %v2121
      %v2374 = vmul.f32 %v2060, %v2125
      %v2375 = vmul.f32 %v2062, %v2129
      %v2376 = vmul.f32 %v1520, %v2109
      %v2377 = vmul.f32 %v1522, %v2113
      %v2378 = vmul.f32 %v1793, %v2117
      %v2379 = vmul.f32 %v1795, %v2121
      %v2380 = vmul.f32 %v2066, %v2125
      %v2381 = vmul.f32 %v2068, %v2129
      %v2382 = vmul.f32 %v1524, %v2109
      %v2383 = vmul.f32 %v1526, %v2113
      %v2384 = vmul.f32 %v1797, %v2117
      %v2385 = vmul.f32 %v1799, %v2121
      %v2386 = vmul.f32 %v2070, %v2125
      %v2387 = vmul.f32 %v2072, %v2129
      %v2388 = vmul.f32 %v1530, %v2109
      %v2389 = vmul.f32 %v1532, %v2113
      %v2390 = vmul.f32 %v1803, %v2117
      %v2391 = vmul.f32 %v1805, %v2121
      %v2392 = vmul.f32 %v2076, %v2125
      %v2393 = vmul.f32 %v2078, %v2129
      %v2394 = vmul.f32 %v1534, %v2109
      %v2395 = vmul.f32 %v1536, %v2113
      %v2396 = vmul.f32 %v1807, %v2117
      %v2397 = vmul.f32 %v1809, %v2121
      %v2398 = vmul.f32 %v2080, %v2125
      %v2399 = vmul.f32 %v2082, %v2129
      %v2400 = vmul.f32 %v1540, %v2109
      %v2401 = vmul.f32 %v1542, %v2113
      %v2402 = vmul.f32 %v1813, %v2117
      %v2403 = vmul.f32 %v1815, %v2121
      %v2404 = vmul.f32 %v2086, %v2125
      %v2405 = vmul.f32 %v2088, %v2129
      %v2406 = vmul.f32 %v1544, %v2109
      %v2407 = vmul.f32 %v1546, %v2113
      %v2408 = vmul.f32 %v1817, %v2117
      %v2409 = vmul.f32 %v1819, %v2121
      %v2410 = vmul.f32 %v2090, %v2125
      %v2411 = vmul.f32 %v2092, %v2129
      %v2412 = vmul.f32 %v1550, %v2109
      %v2413 = vmul.f32 %v1552, %v2113
      %v2414 = vmul.f32 %v1823, %v2117
      %v2415 = vmul.f32 %v1825, %v2121
      %v2416 = vmul.f32 %v2096, %v2125
      %v2417 = vmul.f32 %v2098, %v2129
      %v2418 = vmul.f32 %v1554, %v2109
      %v2419 = vmul.f32 %v1556, %v2113
      %v2420 = vmul.f32 %v1827, %v2117
      %v2421 = vmul.f32 %v1829, %v2121
      %v2422 = vmul.f32 %v2100, %v2125
      %v2423 = vmul.f32 %v2102, %v2129
      %v2424 = vld [vmem:[%s6] sm:$0x3f]
      %v2426 = vlaneseq
      %v2427 = vshrl.u32 %v2426, 7
      %v2428 = vsub.s32 0, %v2427
      %v2429 = vrot.slane %v2424, %v2428
      %v2430 = vlaneseq
      %v2431 = vshrl.u32 %v2430, 7
      %v2432 = vsub.s32 1, %v2431
      %v2433 = vrot.slane %v2424, %v2432
      %v2434 = vlaneseq
      %v2435 = vshrl.u32 %v2434, 7
      %v2436 = vsub.s32 2, %v2435
      %v2437 = vrot.slane %v2424, %v2436
      %v2438 = vlaneseq
      %v2439 = vshrl.u32 %v2438, 7
      %v2440 = vsub.s32 3, %v2439
      %v2441 = vrot.slane %v2424, %v2440
      %v2442 = vlaneseq
      %v2443 = vshrl.u32 %v2442, 7
      %v2444 = vsub.s32 4, %v2443
      %v2445 = vrot.slane %v2424, %v2444
      %v2446 = vlaneseq
      %v2447 = vshrl.u32 %v2446, 7
      %v2448 = vsub.s32 5, %v2447
      %v2449 = vrot.slane %v2424, %v2448
      %v2456 = vadd.f32 %v2136, %v2429
      %v2457 = vadd.f32 %v2137, %v2433
      %v2458 = vadd.f32 %v2138, %v2437
      %v2459 = vadd.f32 %v2139, %v2441
      %v2460 = vadd.f32 %v2140, %v2445
      %v2461 = vadd.f32 %v2141, %v2449
      %v2462 = vadd.f32 %v2142, %v2429
      %v2463 = vadd.f32 %v2143, %v2433
      %v2464 = vadd.f32 %v2144, %v2437
      %v2465 = vadd.f32 %v2145, %v2441
      %v2466 = vadd.f32 %v2146, %v2445
      %v2467 = vadd.f32 %v2147, %v2449
      %v2468 = vadd.f32 %v2148, %v2429
      %v2469 = vadd.f32 %v2149, %v2433
      %v2470 = vadd.f32 %v2150, %v2437
      %v2471 = vadd.f32 %v2151, %v2441
      %v2472 = vadd.f32 %v2152, %v2445
      %v2473 = vadd.f32 %v2153, %v2449
      %v2474 = vadd.f32 %v2154, %v2429
      %v2475 = vadd.f32 %v2155, %v2433
      %v2476 = vadd.f32 %v2156, %v2437
      %v2477 = vadd.f32 %v2157, %v2441
      %v2478 = vadd.f32 %v2158, %v2445
      %v2479 = vadd.f32 %v2159, %v2449
      %v2480 = vadd.f32 %v2160, %v2429
      %v2481 = vadd.f32 %v2161, %v2433
      %v2482 = vadd.f32 %v2162, %v2437
      %v2483 = vadd.f32 %v2163, %v2441
      %v2484 = vadd.f32 %v2164, %v2445
      %v2485 = vadd.f32 %v2165, %v2449
      %v2486 = vadd.f32 %v2166, %v2429
      %v2487 = vadd.f32 %v2167, %v2433
      %v2488 = vadd.f32 %v2168, %v2437
      %v2489 = vadd.f32 %v2169, %v2441
      %v2490 = vadd.f32 %v2170, %v2445
      %v2491 = vadd.f32 %v2171, %v2449
      %v2492 = vadd.f32 %v2172, %v2429
      %v2493 = vadd.f32 %v2173, %v2433
      %v2494 = vadd.f32 %v2174, %v2437
      %v2495 = vadd.f32 %v2175, %v2441
      %v2496 = vadd.f32 %v2176, %v2445
      %v2497 = vadd.f32 %v2177, %v2449
      %v2498 = vadd.f32 %v2178, %v2429
      %v2499 = vadd.f32 %v2179, %v2433
      %v2500 = vadd.f32 %v2180, %v2437
      %v2501 = vadd.f32 %v2181, %v2441
      %v2502 = vadd.f32 %v2182, %v2445
      %v2503 = vadd.f32 %v2183, %v2449
      %v2504 = vadd.f32 %v2184, %v2429
      %v2505 = vadd.f32 %v2185, %v2433
      %v2506 = vadd.f32 %v2186, %v2437
      %v2507 = vadd.f32 %v2187, %v2441
      %v2508 = vadd.f32 %v2188, %v2445
      %v2509 = vadd.f32 %v2189, %v2449
      %v2510 = vadd.f32 %v2190, %v2429
      %v2511 = vadd.f32 %v2191, %v2433
      %v2512 = vadd.f32 %v2192, %v2437
      %v2513 = vadd.f32 %v2193, %v2441
      %v2514 = vadd.f32 %v2194, %v2445
      %v2515 = vadd.f32 %v2195, %v2449
      %v2516 = vadd.f32 %v2196, %v2429
      %v2517 = vadd.f32 %v2197, %v2433
      %v2518 = vadd.f32 %v2198, %v2437
      %v2519 = vadd.f32 %v2199, %v2441
      %v2520 = vadd.f32 %v2200, %v2445
      %v2521 = vadd.f32 %v2201, %v2449
      %v2522 = vadd.f32 %v2202, %v2429
      %v2523 = vadd.f32 %v2203, %v2433
      %v2524 = vadd.f32 %v2204, %v2437
      %v2525 = vadd.f32 %v2205, %v2441
      %v2526 = vadd.f32 %v2206, %v2445
      %v2527 = vadd.f32 %v2207, %v2449
      %v2528 = vadd.f32 %v2208, %v2429
      %v2529 = vadd.f32 %v2209, %v2433
      %v2530 = vadd.f32 %v2210, %v2437
      %v2531 = vadd.f32 %v2211, %v2441
      %v2532 = vadd.f32 %v2212, %v2445
      %v2533 = vadd.f32 %v2213, %v2449
      %v2534 = vadd.f32 %v2214, %v2429
      %v2535 = vadd.f32 %v2215, %v2433
      %v2536 = vadd.f32 %v2216, %v2437
      %v2537 = vadd.f32 %v2217, %v2441
      %v2538 = vadd.f32 %v2218, %v2445
      %v2539 = vadd.f32 %v2219, %v2449
      %v2540 = vadd.f32 %v2220, %v2429
      %v2541 = vadd.f32 %v2221, %v2433
      %v2542 = vadd.f32 %v2222, %v2437
      %v2543 = vadd.f32 %v2223, %v2441
      %v2544 = vadd.f32 %v2224, %v2445
      %v2545 = vadd.f32 %v2225, %v2449
      %v2546 = vadd.f32 %v2226, %v2429
      %v2547 = vadd.f32 %v2227, %v2433
      %v2548 = vadd.f32 %v2228, %v2437
      %v2549 = vadd.f32 %v2229, %v2441
      %v2550 = vadd.f32 %v2230, %v2445
      %v2551 = vadd.f32 %v2231, %v2449
      %v2552 = vadd.f32 %v2232, %v2429
      %v2553 = vadd.f32 %v2233, %v2433
      %v2554 = vadd.f32 %v2234, %v2437
      %v2555 = vadd.f32 %v2235, %v2441
      %v2556 = vadd.f32 %v2236, %v2445
      %v2557 = vadd.f32 %v2237, %v2449
      %v2558 = vadd.f32 %v2238, %v2429
      %v2559 = vadd.f32 %v2239, %v2433
      %v2560 = vadd.f32 %v2240, %v2437
      %v2561 = vadd.f32 %v2241, %v2441
      %v2562 = vadd.f32 %v2242, %v2445
      %v2563 = vadd.f32 %v2243, %v2449
      %v2564 = vadd.f32 %v2244, %v2429
      %v2565 = vadd.f32 %v2245, %v2433
      %v2566 = vadd.f32 %v2246, %v2437
      %v2567 = vadd.f32 %v2247, %v2441
      %v2568 = vadd.f32 %v2248, %v2445
      %v2569 = vadd.f32 %v2249, %v2449
      %v2570 = vadd.f32 %v2250, %v2429
      %v2571 = vadd.f32 %v2251, %v2433
      %v2572 = vadd.f32 %v2252, %v2437
      %v2573 = vadd.f32 %v2253, %v2441
      %v2574 = vadd.f32 %v2254, %v2445
      %v2575 = vadd.f32 %v2255, %v2449
      %v2576 = vadd.f32 %v2256, %v2429
      %v2577 = vadd.f32 %v2257, %v2433
      %v2578 = vadd.f32 %v2258, %v2437
      %v2579 = vadd.f32 %v2259, %v2441
      %v2580 = vadd.f32 %v2260, %v2445
      %v2581 = vadd.f32 %v2261, %v2449
      %v2582 = vadd.f32 %v2262, %v2429
      %v2583 = vadd.f32 %v2263, %v2433
      %v2584 = vadd.f32 %v2264, %v2437
      %v2585 = vadd.f32 %v2265, %v2441
      %v2586 = vadd.f32 %v2266, %v2445
      %v2587 = vadd.f32 %v2267, %v2449
      %v2588 = vadd.f32 %v2268, %v2429
      %v2589 = vadd.f32 %v2269, %v2433
      %v2590 = vadd.f32 %v2270, %v2437
      %v2591 = vadd.f32 %v2271, %v2441
      %v2592 = vadd.f32 %v2272, %v2445
      %v2593 = vadd.f32 %v2273, %v2449
      %v2594 = vadd.f32 %v2274, %v2429
      %v2595 = vadd.f32 %v2275, %v2433
      %v2596 = vadd.f32 %v2276, %v2437
      %v2597 = vadd.f32 %v2277, %v2441
      %v2598 = vadd.f32 %v2278, %v2445
      %v2599 = vadd.f32 %v2279, %v2449
      %v2600 = vadd.f32 %v2280, %v2429
      %v2601 = vadd.f32 %v2281, %v2433
      %v2602 = vadd.f32 %v2282, %v2437
      %v2603 = vadd.f32 %v2283, %v2441
      %v2604 = vadd.f32 %v2284, %v2445
      %v2605 = vadd.f32 %v2285, %v2449
      %v2606 = vadd.f32 %v2286, %v2429
      %v2607 = vadd.f32 %v2287, %v2433
      %v2608 = vadd.f32 %v2288, %v2437
      %v2609 = vadd.f32 %v2289, %v2441
      %v2610 = vadd.f32 %v2290, %v2445
      %v2611 = vadd.f32 %v2291, %v2449
      %v2612 = vadd.f32 %v2292, %v2429
      %v2613 = vadd.f32 %v2293, %v2433
      %v2614 = vadd.f32 %v2294, %v2437
      %v2615 = vadd.f32 %v2295, %v2441
      %v2616 = vadd.f32 %v2296, %v2445
      %v2617 = vadd.f32 %v2297, %v2449
      %v2618 = vadd.f32 %v2298, %v2429
      %v2619 = vadd.f32 %v2299, %v2433
      %v2620 = vadd.f32 %v2300, %v2437
      %v2621 = vadd.f32 %v2301, %v2441
      %v2622 = vadd.f32 %v2302, %v2445
      %v2623 = vadd.f32 %v2303, %v2449
      %v2624 = vadd.f32 %v2304, %v2429
      %v2625 = vadd.f32 %v2305, %v2433
      %v2626 = vadd.f32 %v2306, %v2437
      %v2627 = vadd.f32 %v2307, %v2441
      %v2628 = vadd.f32 %v2308, %v2445
      %v2629 = vadd.f32 %v2309, %v2449
      %v2630 = vadd.f32 %v2310, %v2429
      %v2631 = vadd.f32 %v2311, %v2433
      %v2632 = vadd.f32 %v2312, %v2437
      %v2633 = vadd.f32 %v2313, %v2441
      %v2634 = vadd.f32 %v2314, %v2445
      %v2635 = vadd.f32 %v2315, %v2449
      %v2636 = vadd.f32 %v2316, %v2429
      %v2637 = vadd.f32 %v2317, %v2433
      %v2638 = vadd.f32 %v2318, %v2437
      %v2639 = vadd.f32 %v2319, %v2441
      %v2640 = vadd.f32 %v2320, %v2445
      %v2641 = vadd.f32 %v2321, %v2449
      %v2642 = vadd.f32 %v2322, %v2429
      %v2643 = vadd.f32 %v2323, %v2433
      %v2644 = vadd.f32 %v2324, %v2437
      %v2645 = vadd.f32 %v2325, %v2441
      %v2646 = vadd.f32 %v2326, %v2445
      %v2647 = vadd.f32 %v2327, %v2449
      %v2648 = vadd.f32 %v2328, %v2429
      %v2649 = vadd.f32 %v2329, %v2433
      %v2650 = vadd.f32 %v2330, %v2437
      %v2651 = vadd.f32 %v2331, %v2441
      %v2652 = vadd.f32 %v2332, %v2445
      %v2653 = vadd.f32 %v2333, %v2449
      %v2654 = vadd.f32 %v2334, %v2429
      %v2655 = vadd.f32 %v2335, %v2433
      %v2656 = vadd.f32 %v2336, %v2437
      %v2657 = vadd.f32 %v2337, %v2441
      %v2658 = vadd.f32 %v2338, %v2445
      %v2659 = vadd.f32 %v2339, %v2449
      %v2660 = vadd.f32 %v2340, %v2429
      %v2661 = vadd.f32 %v2341, %v2433
      %v2662 = vadd.f32 %v2342, %v2437
      %v2663 = vadd.f32 %v2343, %v2441
      %v2664 = vadd.f32 %v2344, %v2445
      %v2665 = vadd.f32 %v2345, %v2449
      %v2666 = vadd.f32 %v2346, %v2429
      %v2667 = vadd.f32 %v2347, %v2433
      %v2668 = vadd.f32 %v2348, %v2437
      %v2669 = vadd.f32 %v2349, %v2441
      %v2670 = vadd.f32 %v2350, %v2445
      %v2671 = vadd.f32 %v2351, %v2449
      %v2672 = vadd.f32 %v2352, %v2429
      %v2673 = vadd.f32 %v2353, %v2433
      %v2674 = vadd.f32 %v2354, %v2437
      %v2675 = vadd.f32 %v2355, %v2441
      %v2676 = vadd.f32 %v2356, %v2445
      %v2677 = vadd.f32 %v2357, %v2449
      %v2678 = vadd.f32 %v2358, %v2429
      %v2679 = vadd.f32 %v2359, %v2433
      %v2680 = vadd.f32 %v2360, %v2437
      %v2681 = vadd.f32 %v2361, %v2441
      %v2682 = vadd.f32 %v2362, %v2445
      %v2683 = vadd.f32 %v2363, %v2449
      %v2684 = vadd.f32 %v2364, %v2429
      %v2685 = vadd.f32 %v2365, %v2433
      %v2686 = vadd.f32 %v2366, %v2437
      %v2687 = vadd.f32 %v2367, %v2441
      %v2688 = vadd.f32 %v2368, %v2445
      %v2689 = vadd.f32 %v2369, %v2449
      %v2690 = vadd.f32 %v2370, %v2429
      %v2691 = vadd.f32 %v2371, %v2433
      %v2692 = vadd.f32 %v2372, %v2437
      %v2693 = vadd.f32 %v2373, %v2441
      %v2694 = vadd.f32 %v2374, %v2445
      %v2695 = vadd.f32 %v2375, %v2449
      %v2696 = vadd.f32 %v2376, %v2429
      %v2697 = vadd.f32 %v2377, %v2433
      %v2698 = vadd.f32 %v2378, %v2437
      %v2699 = vadd.f32 %v2379, %v2441
      %v2700 = vadd.f32 %v2380, %v2445
      %v2701 = vadd.f32 %v2381, %v2449
      %v2702 = vadd.f32 %v2382, %v2429
      %v2703 = vadd.f32 %v2383, %v2433
      %v2704 = vadd.f32 %v2384, %v2437
      %v2705 = vadd.f32 %v2385, %v2441
      %v2706 = vadd.f32 %v2386, %v2445
      %v2707 = vadd.f32 %v2387, %v2449
      %v2708 = vadd.f32 %v2388, %v2429
      %v2709 = vadd.f32 %v2389, %v2433
      %v2710 = vadd.f32 %v2390, %v2437
      %v2711 = vadd.f32 %v2391, %v2441
      %v2712 = vadd.f32 %v2392, %v2445
      %v2713 = vadd.f32 %v2393, %v2449
      %v2714 = vadd.f32 %v2394, %v2429
      %v2715 = vadd.f32 %v2395, %v2433
      %v2716 = vadd.f32 %v2396, %v2437
      %v2717 = vadd.f32 %v2397, %v2441
      %v2718 = vadd.f32 %v2398, %v2445
      %v2719 = vadd.f32 %v2399, %v2449
      %v2720 = vadd.f32 %v2400, %v2429
      %v2721 = vadd.f32 %v2401, %v2433
      %v2722 = vadd.f32 %v2402, %v2437
      %v2723 = vadd.f32 %v2403, %v2441
      %v2724 = vadd.f32 %v2404, %v2445
      %v2725 = vadd.f32 %v2405, %v2449
      %v2726 = vadd.f32 %v2406, %v2429
      %v2727 = vadd.f32 %v2407, %v2433
      %v2728 = vadd.f32 %v2408, %v2437
      %v2729 = vadd.f32 %v2409, %v2441
      %v2730 = vadd.f32 %v2410, %v2445
      %v2731 = vadd.f32 %v2411, %v2449
      %v2732 = vadd.f32 %v2412, %v2429
      %v2733 = vadd.f32 %v2413, %v2433
      %v2734 = vadd.f32 %v2414, %v2437
      %v2735 = vadd.f32 %v2415, %v2441
      %v2736 = vadd.f32 %v2416, %v2445
      %v2737 = vadd.f32 %v2417, %v2449
      %v2738 = vadd.f32 %v2418, %v2429
      %v2739 = vadd.f32 %v2419, %v2433
      %v2740 = vadd.f32 %v2420, %v2437
      %v2741 = vadd.f32 %v2421, %v2441
      %v2742 = vadd.f32 %v2422, %v2445
      %v2743 = vadd.f32 %v2423, %v2449
      %v2744 = vmax.f32 %v2456, 0.0
      %v2745 = vmax.f32 %v2457, 0.0
      %v2746 = vmax.f32 %v2458, 0.0
      %v2747 = vmax.f32 %v2459, 0.0
      %v2748 = vmax.f32 %v2460, 0.0
      %v2749 = vmax.f32 %v2461, 0.0
      %v2750 = vmax.f32 %v2462, 0.0
      %v2751 = vmax.f32 %v2463, 0.0
      %v2752 = vmax.f32 %v2464, 0.0
      %v2753 = vmax.f32 %v2465, 0.0
      %v2754 = vmax.f32 %v2466, 0.0
      %v2755 = vmax.f32 %v2467, 0.0
      %v2756 = vmax.f32 %v2468, 0.0
      %v2757 = vmax.f32 %v2469, 0.0
      %v2758 = vmax.f32 %v2470, 0.0
      %v2759 = vmax.f32 %v2471, 0.0
      %v2760 = vmax.f32 %v2472, 0.0
      %v2761 = vmax.f32 %v2473, 0.0
      %v2762 = vmax.f32 %v2474, 0.0
      %v2763 = vmax.f32 %v2475, 0.0
      %v2764 = vmax.f32 %v2476, 0.0
      %v2765 = vmax.f32 %v2477, 0.0
      %v2766 = vmax.f32 %v2478, 0.0
      %v2767 = vmax.f32 %v2479, 0.0
      %v2768 = vmax.f32 %v2480, 0.0
      %v2769 = vmax.f32 %v2481, 0.0
      %v2770 = vmax.f32 %v2482, 0.0
      %v2771 = vmax.f32 %v2483, 0.0
      %v2772 = vmax.f32 %v2484, 0.0
      %v2773 = vmax.f32 %v2485, 0.0
      %v2774 = vmax.f32 %v2486, 0.0
      %v2775 = vmax.f32 %v2487, 0.0
      %v2776 = vmax.f32 %v2488, 0.0
      %v2777 = vmax.f32 %v2489, 0.0
      %v2778 = vmax.f32 %v2490, 0.0
      %v2779 = vmax.f32 %v2491, 0.0
      %v2780 = vmax.f32 %v2492, 0.0
      %v2781 = vmax.f32 %v2493, 0.0
      %v2782 = vmax.f32 %v2494, 0.0
      %v2783 = vmax.f32 %v2495, 0.0
      %v2784 = vmax.f32 %v2496, 0.0
      %v2785 = vmax.f32 %v2497, 0.0
      %v2786 = vmax.f32 %v2498, 0.0
      %v2787 = vmax.f32 %v2499, 0.0
      %v2788 = vmax.f32 %v2500, 0.0
      %v2789 = vmax.f32 %v2501, 0.0
      %v2790 = vmax.f32 %v2502, 0.0
      %v2791 = vmax.f32 %v2503, 0.0
      %v2792 = vmax.f32 %v2504, 0.0
      %v2793 = vmax.f32 %v2505, 0.0
      %v2794 = vmax.f32 %v2506, 0.0
      %v2795 = vmax.f32 %v2507, 0.0
      %v2796 = vmax.f32 %v2508, 0.0
      %v2797 = vmax.f32 %v2509, 0.0
      %v2798 = vmax.f32 %v2510, 0.0
      %v2799 = vmax.f32 %v2511, 0.0
      %v2800 = vmax.f32 %v2512, 0.0
      %v2801 = vmax.f32 %v2513, 0.0
      %v2802 = vmax.f32 %v2514, 0.0
      %v2803 = vmax.f32 %v2515, 0.0
      %v2804 = vmax.f32 %v2516, 0.0
      %v2805 = vmax.f32 %v2517, 0.0
      %v2806 = vmax.f32 %v2518, 0.0
      %v2807 = vmax.f32 %v2519, 0.0
      %v2808 = vmax.f32 %v2520, 0.0
      %v2809 = vmax.f32 %v2521, 0.0
      %v2810 = vmax.f32 %v2522, 0.0
      %v2811 = vmax.f32 %v2523, 0.0
      %v2812 = vmax.f32 %v2524, 0.0
      %v2813 = vmax.f32 %v2525, 0.0
      %v2814 = vmax.f32 %v2526, 0.0
      %v2815 = vmax.f32 %v2527, 0.0
      %v2816 = vmax.f32 %v2528, 0.0
      %v2817 = vmax.f32 %v2529, 0.0
      %v2818 = vmax.f32 %v2530, 0.0
      %v2819 = vmax.f32 %v2531, 0.0
      %v2820 = vmax.f32 %v2532, 0.0
      %v2821 = vmax.f32 %v2533, 0.0
      %v2822 = vmax.f32 %v2534, 0.0
      %v2823 = vmax.f32 %v2535, 0.0
      %v2824 = vmax.f32 %v2536, 0.0
      %v2825 = vmax.f32 %v2537, 0.0
      %v2826 = vmax.f32 %v2538, 0.0
      %v2827 = vmax.f32 %v2539, 0.0
      %v2828 = vmax.f32 %v2540, 0.0
      %v2829 = vmax.f32 %v2541, 0.0
      %v2830 = vmax.f32 %v2542, 0.0
      %v2831 = vmax.f32 %v2543, 0.0
      %v2832 = vmax.f32 %v2544, 0.0
      %v2833 = vmax.f32 %v2545, 0.0
      %v2834 = vmax.f32 %v2546, 0.0
      %v2835 = vmax.f32 %v2547, 0.0
      %v2836 = vmax.f32 %v2548, 0.0
      %v2837 = vmax.f32 %v2549, 0.0
      %v2838 = vmax.f32 %v2550, 0.0
      %v2839 = vmax.f32 %v2551, 0.0
      %v2840 = vmax.f32 %v2552, 0.0
      %v2841 = vmax.f32 %v2553, 0.0
      %v2842 = vmax.f32 %v2554, 0.0
      %v2843 = vmax.f32 %v2555, 0.0
      %v2844 = vmax.f32 %v2556, 0.0
      %v2845 = vmax.f32 %v2557, 0.0
      %v2846 = vmax.f32 %v2558, 0.0
      %v2847 = vmax.f32 %v2559, 0.0
      %v2848 = vmax.f32 %v2560, 0.0
      %v2849 = vmax.f32 %v2561, 0.0
      %v2850 = vmax.f32 %v2562, 0.0
      %v2851 = vmax.f32 %v2563, 0.0
      %v2852 = vmax.f32 %v2564, 0.0
      %v2853 = vmax.f32 %v2565, 0.0
      %v2854 = vmax.f32 %v2566, 0.0
      %v2855 = vmax.f32 %v2567, 0.0
      %v2856 = vmax.f32 %v2568, 0.0
      %v2857 = vmax.f32 %v2569, 0.0
      %v2858 = vmax.f32 %v2570, 0.0
      %v2859 = vmax.f32 %v2571, 0.0
      %v2860 = vmax.f32 %v2572, 0.0
      %v2861 = vmax.f32 %v2573, 0.0
      %v2862 = vmax.f32 %v2574, 0.0
      %v2863 = vmax.f32 %v2575, 0.0
      %v2864 = vmax.f32 %v2576, 0.0
      %v2865 = vmax.f32 %v2577, 0.0
      %v2866 = vmax.f32 %v2578, 0.0
      %v2867 = vmax.f32 %v2579, 0.0
      %v2868 = vmax.f32 %v2580, 0.0
      %v2869 = vmax.f32 %v2581, 0.0
      %v2870 = vmax.f32 %v2582, 0.0
      %v2871 = vmax.f32 %v2583, 0.0
      %v2872 = vmax.f32 %v2584, 0.0
      %v2873 = vmax.f32 %v2585, 0.0
      %v2874 = vmax.f32 %v2586, 0.0
      %v2875 = vmax.f32 %v2587, 0.0
      %v2876 = vmax.f32 %v2588, 0.0
      %v2877 = vmax.f32 %v2589, 0.0
      %v2878 = vmax.f32 %v2590, 0.0
      %v2879 = vmax.f32 %v2591, 0.0
      %v2880 = vmax.f32 %v2592, 0.0
      %v2881 = vmax.f32 %v2593, 0.0
      %v2882 = vmax.f32 %v2594, 0.0
      %v2883 = vmax.f32 %v2595, 0.0
      %v2884 = vmax.f32 %v2596, 0.0
      %v2885 = vmax.f32 %v2597, 0.0
      %v2886 = vmax.f32 %v2598, 0.0
      %v2887 = vmax.f32 %v2599, 0.0
      %v2888 = vmax.f32 %v2600, 0.0
      %v2889 = vmax.f32 %v2601, 0.0
      %v2890 = vmax.f32 %v2602, 0.0
      %v2891 = vmax.f32 %v2603, 0.0
      %v2892 = vmax.f32 %v2604, 0.0
      %v2893 = vmax.f32 %v2605, 0.0
      %v2894 = vmax.f32 %v2606, 0.0
      %v2895 = vmax.f32 %v2607, 0.0
      %v2896 = vmax.f32 %v2608, 0.0
      %v2897 = vmax.f32 %v2609, 0.0
      %v2898 = vmax.f32 %v2610, 0.0
      %v2899 = vmax.f32 %v2611, 0.0
      %v2900 = vmax.f32 %v2612, 0.0
      %v2901 = vmax.f32 %v2613, 0.0
      %v2902 = vmax.f32 %v2614, 0.0
      %v2903 = vmax.f32 %v2615, 0.0
      %v2904 = vmax.f32 %v2616, 0.0
      %v2905 = vmax.f32 %v2617, 0.0
      %v2906 = vmax.f32 %v2618, 0.0
      %v2907 = vmax.f32 %v2619, 0.0
      %v2908 = vmax.f32 %v2620, 0.0
      %v2909 = vmax.f32 %v2621, 0.0
      %v2910 = vmax.f32 %v2622, 0.0
      %v2911 = vmax.f32 %v2623, 0.0
      %v2912 = vmax.f32 %v2624, 0.0
      %v2913 = vmax.f32 %v2625, 0.0
      %v2914 = vmax.f32 %v2626, 0.0
      %v2915 = vmax.f32 %v2627, 0.0
      %v2916 = vmax.f32 %v2628, 0.0
      %v2917 = vmax.f32 %v2629, 0.0
      %v2918 = vmax.f32 %v2630, 0.0
      %v2919 = vmax.f32 %v2631, 0.0
      %v2920 = vmax.f32 %v2632, 0.0
      %v2921 = vmax.f32 %v2633, 0.0
      %v2922 = vmax.f32 %v2634, 0.0
      %v2923 = vmax.f32 %v2635, 0.0
      %v2924 = vmax.f32 %v2636, 0.0
      %v2925 = vmax.f32 %v2637, 0.0
      %v2926 = vmax.f32 %v2638, 0.0
      %v2927 = vmax.f32 %v2639, 0.0
      %v2928 = vmax.f32 %v2640, 0.0
      %v2929 = vmax.f32 %v2641, 0.0
      %v2930 = vmax.f32 %v2642, 0.0
      %v2931 = vmax.f32 %v2643, 0.0
      %v2932 = vmax.f32 %v2644, 0.0
      %v2933 = vmax.f32 %v2645, 0.0
      %v2934 = vmax.f32 %v2646, 0.0
      %v2935 = vmax.f32 %v2647, 0.0
      %v2936 = vmax.f32 %v2648, 0.0
      %v2937 = vmax.f32 %v2649, 0.0
      %v2938 = vmax.f32 %v2650, 0.0
      %v2939 = vmax.f32 %v2651, 0.0
      %v2940 = vmax.f32 %v2652, 0.0
      %v2941 = vmax.f32 %v2653, 0.0
      %v2942 = vmax.f32 %v2654, 0.0
      %v2943 = vmax.f32 %v2655, 0.0
      %v2944 = vmax.f32 %v2656, 0.0
      %v2945 = vmax.f32 %v2657, 0.0
      %v2946 = vmax.f32 %v2658, 0.0
      %v2947 = vmax.f32 %v2659, 0.0
      %v2948 = vmax.f32 %v2660, 0.0
      %v2949 = vmax.f32 %v2661, 0.0
      %v2950 = vmax.f32 %v2662, 0.0
      %v2951 = vmax.f32 %v2663, 0.0
      %v2952 = vmax.f32 %v2664, 0.0
      %v2953 = vmax.f32 %v2665, 0.0
      %v2954 = vmax.f32 %v2666, 0.0
      %v2955 = vmax.f32 %v2667, 0.0
      %v2956 = vmax.f32 %v2668, 0.0
      %v2957 = vmax.f32 %v2669, 0.0
      %v2958 = vmax.f32 %v2670, 0.0
      %v2959 = vmax.f32 %v2671, 0.0
      %v2960 = vmax.f32 %v2672, 0.0
      %v2961 = vmax.f32 %v2673, 0.0
      %v2962 = vmax.f32 %v2674, 0.0
      %v2963 = vmax.f32 %v2675, 0.0
      %v2964 = vmax.f32 %v2676, 0.0
      %v2965 = vmax.f32 %v2677, 0.0
      %v2966 = vmax.f32 %v2678, 0.0
      %v2967 = vmax.f32 %v2679, 0.0
      %v2968 = vmax.f32 %v2680, 0.0
      %v2969 = vmax.f32 %v2681, 0.0
      %v2970 = vmax.f32 %v2682, 0.0
      %v2971 = vmax.f32 %v2683, 0.0
      %v2972 = vmax.f32 %v2684, 0.0
      %v2973 = vmax.f32 %v2685, 0.0
      %v2974 = vmax.f32 %v2686, 0.0
      %v2975 = vmax.f32 %v2687, 0.0
      %v2976 = vmax.f32 %v2688, 0.0
      %v2977 = vmax.f32 %v2689, 0.0
      %v2978 = vmax.f32 %v2690, 0.0
      %v2979 = vmax.f32 %v2691, 0.0
      %v2980 = vmax.f32 %v2692, 0.0
      %v2981 = vmax.f32 %v2693, 0.0
      %v2982 = vmax.f32 %v2694, 0.0
      %v2983 = vmax.f32 %v2695, 0.0
      %v2984 = vmax.f32 %v2696, 0.0
      %v2985 = vmax.f32 %v2697, 0.0
      %v2986 = vmax.f32 %v2698, 0.0
      %v2987 = vmax.f32 %v2699, 0.0
      %v2988 = vmax.f32 %v2700, 0.0
      %v2989 = vmax.f32 %v2701, 0.0
      %v2990 = vmax.f32 %v2702, 0.0
      %v2991 = vmax.f32 %v2703, 0.0
      %v2992 = vmax.f32 %v2704, 0.0
      %v2993 = vmax.f32 %v2705, 0.0
      %v2994 = vmax.f32 %v2706, 0.0
      %v2995 = vmax.f32 %v2707, 0.0
      %v2996 = vmax.f32 %v2708, 0.0
      %v2997 = vmax.f32 %v2709, 0.0
      %v2998 = vmax.f32 %v2710, 0.0
      %v2999 = vmax.f32 %v2711, 0.0
      %v3000 = vmax.f32 %v2712, 0.0
      %v3001 = vmax.f32 %v2713, 0.0
      %v3002 = vmax.f32 %v2714, 0.0
      %v3003 = vmax.f32 %v2715, 0.0
      %v3004 = vmax.f32 %v2716, 0.0
      %v3005 = vmax.f32 %v2717, 0.0
      %v3006 = vmax.f32 %v2718, 0.0
      %v3007 = vmax.f32 %v2719, 0.0
      %v3008 = vmax.f32 %v2720, 0.0
      %v3009 = vmax.f32 %v2721, 0.0
      %v3010 = vmax.f32 %v2722, 0.0
      %v3011 = vmax.f32 %v2723, 0.0
      %v3012 = vmax.f32 %v2724, 0.0
      %v3013 = vmax.f32 %v2725, 0.0
      %v3014 = vmax.f32 %v2726, 0.0
      %v3015 = vmax.f32 %v2727, 0.0
      %v3016 = vmax.f32 %v2728, 0.0
      %v3017 = vmax.f32 %v2729, 0.0
      %v3018 = vmax.f32 %v2730, 0.0
      %v3019 = vmax.f32 %v2731, 0.0
      %v3020 = vmax.f32 %v2732, 0.0
      %v3021 = vmax.f32 %v2733, 0.0
      %v3022 = vmax.f32 %v2734, 0.0
      %v3023 = vmax.f32 %v2735, 0.0
      %v3024 = vmax.f32 %v2736, 0.0
      %v3025 = vmax.f32 %v2737, 0.0
      %v3026 = vmax.f32 %v2738, 0.0
      %v3027 = vmax.f32 %v2739, 0.0
      %v3028 = vmax.f32 %v2740, 0.0
      %v3029 = vmax.f32 %v2741, 0.0
      %v3030 = vmax.f32 %v2742, 0.0
      %v3031 = vmax.f32 %v2743, 0.0
      %v3032 = vmax.f32 %v2744, %v2840
      %v3033 = vmax.f32 %v2745, %v2841
      %v3034 = vmax.f32 %v2746, %v2842
      %v3035 = vmax.f32 %v2747, %v2843
      %v3036 = vmax.f32 %v2748, %v2844
      %v3037 = vmax.f32 %v2749, %v2845
      %v3038 = vmax.f32 %v2750, %v2846
      %v3039 = vmax.f32 %v2751, %v2847
      %v3040 = vmax.f32 %v2752, %v2848
      %v3041 = vmax.f32 %v2753, %v2849
      %v3042 = vmax.f32 %v2754, %v2850
      %v3043 = vmax.f32 %v2755, %v2851
      %v3044 = vmax.f32 %v2756, %v2852
      %v3045 = vmax.f32 %v2757, %v2853
      %v3046 = vmax.f32 %v2758, %v2854
      %v3047 = vmax.f32 %v2759, %v2855
      %v3048 = vmax.f32 %v2760, %v2856
      %v3049 = vmax.f32 %v2761, %v2857
      %v3050 = vmax.f32 %v2762, %v2858
      %v3051 = vmax.f32 %v2763, %v2859
      %v3052 = vmax.f32 %v2764, %v2860
      %v3053 = vmax.f32 %v2765, %v2861
      %v3054 = vmax.f32 %v2766, %v2862
      %v3055 = vmax.f32 %v2767, %v2863
      %v3056 = vmax.f32 %v2768, %v2864
      %v3057 = vmax.f32 %v2769, %v2865
      %v3058 = vmax.f32 %v2770, %v2866
      %v3059 = vmax.f32 %v2771, %v2867
      %v3060 = vmax.f32 %v2772, %v2868
      %v3061 = vmax.f32 %v2773, %v2869
      %v3062 = vmax.f32 %v2774, %v2870
      %v3063 = vmax.f32 %v2775, %v2871
      %v3064 = vmax.f32 %v2776, %v2872
      %v3065 = vmax.f32 %v2777, %v2873
      %v3066 = vmax.f32 %v2778, %v2874
      %v3067 = vmax.f32 %v2779, %v2875
      %v3068 = vmax.f32 %v2780, %v2876
      %v3069 = vmax.f32 %v2781, %v2877
      %v3070 = vmax.f32 %v2782, %v2878
      %v3071 = vmax.f32 %v2783, %v2879
      %v3072 = vmax.f32 %v2784, %v2880
      %v3073 = vmax.f32 %v2785, %v2881
      %v3074 = vmax.f32 %v2786, %v2882
      %v3075 = vmax.f32 %v2787, %v2883
      %v3076 = vmax.f32 %v2788, %v2884
      %v3077 = vmax.f32 %v2789, %v2885
      %v3078 = vmax.f32 %v2790, %v2886
      %v3079 = vmax.f32 %v2791, %v2887
      %v3080 = vmax.f32 %v2792, %v2888
      %v3081 = vmax.f32 %v2793, %v2889
      %v3082 = vmax.f32 %v2794, %v2890
      %v3083 = vmax.f32 %v2795, %v2891
      %v3084 = vmax.f32 %v2796, %v2892
      %v3085 = vmax.f32 %v2797, %v2893
      %v3086 = vmax.f32 %v2798, %v2894
      %v3087 = vmax.f32 %v2799, %v2895
      %v3088 = vmax.f32 %v2800, %v2896
      %v3089 = vmax.f32 %v2801, %v2897
      %v3090 = vmax.f32 %v2802, %v2898
      %v3091 = vmax.f32 %v2803, %v2899
      %v3092 = vmax.f32 %v2804, %v2900
      %v3093 = vmax.f32 %v2805, %v2901
      %v3094 = vmax.f32 %v2806, %v2902
      %v3095 = vmax.f32 %v2807, %v2903
      %v3096 = vmax.f32 %v2808, %v2904
      %v3097 = vmax.f32 %v2809, %v2905
      %v3098 = vmax.f32 %v2810, %v2906
      %v3099 = vmax.f32 %v2811, %v2907
      %v3100 = vmax.f32 %v2812, %v2908
      %v3101 = vmax.f32 %v2813, %v2909
      %v3102 = vmax.f32 %v2814, %v2910
      %v3103 = vmax.f32 %v2815, %v2911
      %v3104 = vmax.f32 %v2816, %v2912
      %v3105 = vmax.f32 %v2817, %v2913
      %v3106 = vmax.f32 %v2818, %v2914
      %v3107 = vmax.f32 %v2819, %v2915
      %v3108 = vmax.f32 %v2820, %v2916
      %v3109 = vmax.f32 %v2821, %v2917
      %v3110 = vmax.f32 %v2822, %v2918
      %v3111 = vmax.f32 %v2823, %v2919
      %v3112 = vmax.f32 %v2824, %v2920
      %v3113 = vmax.f32 %v2825, %v2921
      %v3114 = vmax.f32 %v2826, %v2922
      %v3115 = vmax.f32 %v2827, %v2923
      %v3116 = vmax.f32 %v2828, %v2924
      %v3117 = vmax.f32 %v2829, %v2925
      %v3118 = vmax.f32 %v2830, %v2926
      %v3119 = vmax.f32 %v2831, %v2927
      %v3120 = vmax.f32 %v2832, %v2928
      %v3121 = vmax.f32 %v2833, %v2929
      %v3122 = vmax.f32 %v2834, %v2930
      %v3123 = vmax.f32 %v2835, %v2931
      %v3124 = vmax.f32 %v2836, %v2932
      %v3125 = vmax.f32 %v2837, %v2933
      %v3126 = vmax.f32 %v2838, %v2934
      %v3127 = vmax.f32 %v2839, %v2935
      %v3128 = vmax.f32 %v3032, %v2936
      %v3129 = vmax.f32 %v3033, %v2937
      %v3130 = vmax.f32 %v3034, %v2938
      %v3131 = vmax.f32 %v3035, %v2939
      %v3132 = vmax.f32 %v3036, %v2940
      %v3133 = vmax.f32 %v3037, %v2941
      %v3134 = vmax.f32 %v3038, %v2942
      %v3135 = vmax.f32 %v3039, %v2943
      %v3136 = vmax.f32 %v3040, %v2944
      %v3137 = vmax.f32 %v3041, %v2945
      %v3138 = vmax.f32 %v3042, %v2946
      %v3139 = vmax.f32 %v3043, %v2947
      %v3140 = vmax.f32 %v3044, %v2948
      %v3141 = vmax.f32 %v3045, %v2949
      %v3142 = vmax.f32 %v3046, %v2950
      %v3143 = vmax.f32 %v3047, %v2951
      %v3144 = vmax.f32 %v3048, %v2952
      %v3145 = vmax.f32 %v3049, %v2953
      %v3146 = vmax.f32 %v3050, %v2954
      %v3147 = vmax.f32 %v3051, %v2955
      %v3148 = vmax.f32 %v3052, %v2956
      %v3149 = vmax.f32 %v3053, %v2957
      %v3150 = vmax.f32 %v3054, %v2958
      %v3151 = vmax.f32 %v3055, %v2959
      %v3152 = vmax.f32 %v3056, %v2960
      %v3153 = vmax.f32 %v3057, %v2961
      %v3154 = vmax.f32 %v3058, %v2962
      %v3155 = vmax.f32 %v3059, %v2963
      %v3156 = vmax.f32 %v3060, %v2964
      %v3157 = vmax.f32 %v3061, %v2965
      %v3158 = vmax.f32 %v3062, %v2966
      %v3159 = vmax.f32 %v3063, %v2967
      %v3160 = vmax.f32 %v3064, %v2968
      %v3161 = vmax.f32 %v3065, %v2969
      %v3162 = vmax.f32 %v3066, %v2970
      %v3163 = vmax.f32 %v3067, %v2971
      %v3164 = vmax.f32 %v3068, %v2972
      %v3165 = vmax.f32 %v3069, %v2973
      %v3166 = vmax.f32 %v3070, %v2974
      %v3167 = vmax.f32 %v3071, %v2975
      %v3168 = vmax.f32 %v3072, %v2976
      %v3169 = vmax.f32 %v3073, %v2977
      %v3170 = vmax.f32 %v3074, %v2978
      %v3171 = vmax.f32 %v3075, %v2979
      %v3172 = vmax.f32 %v3076, %v2980
      %v3173 = vmax.f32 %v3077, %v2981
      %v3174 = vmax.f32 %v3078, %v2982
      %v3175 = vmax.f32 %v3079, %v2983
      %v3176 = vmax.f32 %v3080, %v2984
      %v3177 = vmax.f32 %v3081, %v2985
      %v3178 = vmax.f32 %v3082, %v2986
      %v3179 = vmax.f32 %v3083, %v2987
      %v3180 = vmax.f32 %v3084, %v2988
      %v3181 = vmax.f32 %v3085, %v2989
      %v3182 = vmax.f32 %v3086, %v2990
      %v3183 = vmax.f32 %v3087, %v2991
      %v3184 = vmax.f32 %v3088, %v2992
      %v3185 = vmax.f32 %v3089, %v2993
      %v3186 = vmax.f32 %v3090, %v2994
      %v3187 = vmax.f32 %v3091, %v2995
      %v3188 = vmax.f32 %v3092, %v2996
      %v3189 = vmax.f32 %v3093, %v2997
      %v3190 = vmax.f32 %v3094, %v2998
      %v3191 = vmax.f32 %v3095, %v2999
      %v3192 = vmax.f32 %v3096, %v3000
      %v3193 = vmax.f32 %v3097, %v3001
      %v3194 = vmax.f32 %v3098, %v3002
      %v3195 = vmax.f32 %v3099, %v3003
      %v3196 = vmax.f32 %v3100, %v3004
      %v3197 = vmax.f32 %v3101, %v3005
      %v3198 = vmax.f32 %v3102, %v3006
      %v3199 = vmax.f32 %v3103, %v3007
      %v3200 = vmax.f32 %v3104, %v3008
      %v3201 = vmax.f32 %v3105, %v3009
      %v3202 = vmax.f32 %v3106, %v3010
      %v3203 = vmax.f32 %v3107, %v3011
      %v3204 = vmax.f32 %v3108, %v3012
      %v3205 = vmax.f32 %v3109, %v3013
      %v3206 = vmax.f32 %v3110, %v3014
      %v3207 = vmax.f32 %v3111, %v3015
      %v3208 = vmax.f32 %v3112, %v3016
      %v3209 = vmax.f32 %v3113, %v3017
      %v3210 = vmax.f32 %v3114, %v3018
      %v3211 = vmax.f32 %v3115, %v3019
      %v3212 = vmax.f32 %v3116, %v3020
      %v3213 = vmax.f32 %v3117, %v3021
      %v3214 = vmax.f32 %v3118, %v3022
      %v3215 = vmax.f32 %v3119, %v3023
      %v3216 = vmax.f32 %v3120, %v3024
      %v3217 = vmax.f32 %v3121, %v3025
      %v3218 = vmax.f32 %v3122, %v3026
      %v3219 = vmax.f32 %v3123, %v3027
      %v3220 = vmax.f32 %v3124, %v3028
      %v3221 = vmax.f32 %v3125, %v3029
      %v3222 = vmax.f32 %v3126, %v3030
      %v3223 = vmax.f32 %v3127, %v3031
      %v3224 = vmax.f32 %v3128, %v3130
      %v3225 = vmax.f32 %v3129, %v3131
      %v3226 = vmax.f32 %v3134, %v3136
      %v3227 = vmax.f32 %v3135, %v3137
      %v3228 = vmax.f32 %v3140, %v3142
      %v3229 = vmax.f32 %v3141, %v3143
      %v3230 = vmax.f32 %v3146, %v3148
      %v3231 = vmax.f32 %v3147, %v3149
      %v3232 = vmax.f32 %v3152, %v3154
      %v3233 = vmax.f32 %v3153, %v3155
      %v3234 = vmax.f32 %v3158, %v3160
      %v3235 = vmax.f32 %v3159, %v3161
      %v3236 = vmax.f32 %v3164, %v3166
      %v3237 = vmax.f32 %v3165, %v3167
      %v3238 = vmax.f32 %v3170, %v3172
      %v3239 = vmax.f32 %v3171, %v3173
      %v3240 = vmax.f32 %v3176, %v3178
      %v3241 = vmax.f32 %v3177, %v3179
      %v3242 = vmax.f32 %v3182, %v3184
      %v3243 = vmax.f32 %v3183, %v3185
      %v3244 = vmax.f32 %v3188, %v3190
      %v3245 = vmax.f32 %v3189, %v3191
      %v3246 = vmax.f32 %v3194, %v3196
      %v3247 = vmax.f32 %v3195, %v3197
      %v3248 = vmax.f32 %v3200, %v3202
      %v3249 = vmax.f32 %v3201, %v3203
      %v3250 = vmax.f32 %v3206, %v3208
      %v3251 = vmax.f32 %v3207, %v3209
      %v3252 = vmax.f32 %v3212, %v3214
      %v3253 = vmax.f32 %v3213, %v3215
      %v3254 = vmax.f32 %v3218, %v3220
      %v3255 = vmax.f32 %v3219, %v3221
      %v3256 = vmax.f32 %v3224, %v3132
      %v3257 = vmax.f32 %v3225, %v3133
      %v3258 = vmax.f32 %v3226, %v3138
      %v3259 = vmax.f32 %v3227, %v3139
      %v3260 = vmax.f32 %v3228, %v3144
      %v3261 = vmax.f32 %v3229, %v3145
      %v3262 = vmax.f32 %v3230, %v3150
      %v3263 = vmax.f32 %v3231, %v3151
      %v3264 = vmax.f32 %v3232, %v3156
      %v3265 = vmax.f32 %v3233, %v3157
      %v3266 = vmax.f32 %v3234, %v3162
      %v3267 = vmax.f32 %v3235, %v3163
      %v3268 = vmax.f32 %v3236, %v3168
      %v3269 = vmax.f32 %v3237, %v3169
      %v3270 = vmax.f32 %v3238, %v3174
      %v3271 = vmax.f32 %v3239, %v3175
      %v3272 = vmax.f32 %v3240, %v3180
      %v3273 = vmax.f32 %v3241, %v3181
      %v3274 = vmax.f32 %v3242, %v3186
      %v3275 = vmax.f32 %v3243, %v3187
      %v3276 = vmax.f32 %v3244, %v3192
      %v3277 = vmax.f32 %v3245, %v3193
      %v3278 = vmax.f32 %v3246, %v3198
      %v3279 = vmax.f32 %v3247, %v3199
      %v3280 = vmax.f32 %v3248, %v3204
      %v3281 = vmax.f32 %v3249, %v3205
      %v3282 = vmax.f32 %v3250, %v3210
      %v3283 = vmax.f32 %v3251, %v3211
      %v3284 = vmax.f32 %v3252, %v3216
      %v3285 = vmax.f32 %v3253, %v3217
      %v3286 = vmax.f32 %v3254, %v3222
      %v3287 = vmax.f32 %v3255, %v3223
      %v3288 = vpack.c.bf16 %v3258, %v3256
      %v3289 = vpack.c.bf16 %v3259, %v3257
      %v3290 = vpack.c.bf16 %v3262, %v3260
      %v3291 = vpack.c.bf16 %v3263, %v3261
      %v3292 = vpack.c.bf16 %v3266, %v3264
      %v3293 = vpack.c.bf16 %v3267, %v3265
      %v3294 = vpack.c.bf16 %v3270, %v3268
      %v3295 = vpack.c.bf16 %v3271, %v3269
      %v3296 = vpack.c.bf16 %v3274, %v3272
      %v3297 = vpack.c.bf16 %v3275, %v3273
      %v3298 = vpack.c.bf16 %v3278, %v3276
      %v3299 = vpack.c.bf16 %v3279, %v3277
      %v3300 = vpack.c.bf16 %v3282, %v3280
      %v3301 = vpack.c.bf16 %v3283, %v3281
      %v3302 = vpack.c.bf16 %v3286, %v3284
      %v3303 = vpack.c.bf16 %v3287, %v3285
      %v3304 = vld [vmem:[%s2] sm:$0xff]
      %v3305 = vld [vmem:[%s2 + $0x8] sm:$0xff]
      %v3306 = vld [vmem:[%s2 + $0x10] sm:$0xff]
      %v3307 = vld [vmem:[%s2 + $0x18] sm:$0xff]
      %v3308 = vld [vmem:[%s2 + $0x20] sm:$0xff]
      %v3309 = vld [vmem:[%s2 + $0x28] sm:$0xff]
      %v3310 = vld [vmem:[%s2 + $0x30] sm:$0xff]
      %v3311 = vld [vmem:[%s2 + $0x38] sm:$0xff]
      %v3312 = vld [vmem:[%s2 + $0x40] sm:$0xff]
      %v3313 = vld [vmem:[%s2 + $0x48] sm:$0xff]
      %v3314 = vld [vmem:[%s2 + $0x50] sm:$0xff]
      %v3315 = vld [vmem:[%s2 + $0x58] sm:$0xff]
      %v3316 = vld [vmem:[%s2 + $0x60] sm:$0xff]
      %v3317 = vld [vmem:[%s2 + $0x68] sm:$0xff]
      %v3318 = vld [vmem:[%s2 + $0x70] sm:$0xff]
      %v3319 = vld [vmem:[%s2 + $0x78] sm:$0xff]
      %v3320 = vld [vmem:[%s2 + $0x80] sm:$0xff]
      %v3321 = vld [vmem:[%s2 + $0x88] sm:$0xff]
      %v3322 = vld [vmem:[%s2 + $0x90] sm:$0xff]
      %v3323 = vld [vmem:[%s2 + $0x98] sm:$0xff]
      %v3324 = vld [vmem:[%s2 + $0xa0] sm:$0xff]
      %v3325 = vld [vmem:[%s2 + $0xa8] sm:$0xff]
      %v3326 = vld [vmem:[%s2 + $0xb0] sm:$0xff]
      %v3327 = vld [vmem:[%s2 + $0xb8] sm:$0xff]
      %v3328 = vld [vmem:[%s2 + $0xc0] sm:$0xff]
      %v3329 = vld [vmem:[%s2 + $0xc8] sm:$0xff]
      %v3330 = vld [vmem:[%s2 + $0xd0] sm:$0xff]
      %v3331 = vld [vmem:[%s2 + $0xd8] sm:$0xff]
      %v3332 = vld [vmem:[%s2 + $0xe0] sm:$0xff]
      %v3333 = vld [vmem:[%s2 + $0xe8] sm:$0xff]
      %v3334 = vld [vmem:[%s2 + $0xf0] sm:$0xff]
      %v3335 = vld [vmem:[%s2 + $0xf8] sm:$0xff]
      %v3336 = vld [vmem:[%s2 + $0x100] sm:$0xff]
      %v3337 = vld [vmem:[%s2 + $0x108] sm:$0xff]
      %v3338 = vld [vmem:[%s2 + $0x110] sm:$0xff]
      %v3339 = vld [vmem:[%s2 + $0x118] sm:$0xff]
      %v3340 = vld [vmem:[%s2 + $0x120] sm:$0xff]
      %v3341 = vld [vmem:[%s2 + $0x128] sm:$0xff]
      %v3342 = vld [vmem:[%s2 + $0x130] sm:$0xff]
      %v3343 = vld [vmem:[%s2 + $0x138] sm:$0xff]
      %v3344 = vld [vmem:[%s2 + $0x140] sm:$0xff]
      %v3345 = vld [vmem:[%s2 + $0x148] sm:$0xff]
      %v3346 = vld [vmem:[%s2 + $0x150] sm:$0xff]
      %v3347 = vld [vmem:[%s2 + $0x158] sm:$0xff]
      %v3348 = vld [vmem:[%s2 + $0x160] sm:$0xff]
      %v3349 = vld [vmem:[%s2 + $0x168] sm:$0xff]
      %v3350 = vld [vmem:[%s2 + $0x170] sm:$0xff]
      %v3351 = vld [vmem:[%s2 + $0x178] sm:$0xff]
      %v3352 = vld [vmem:[%s2 + $0x180] sm:$0xff]
      %v3353 = vld [vmem:[%s2 + $0x188] sm:$0xff]
      %v3354 = vld [vmem:[%s2 + $0x190] sm:$0xff]
      %v3355 = vld [vmem:[%s2 + $0x198] sm:$0xff]
      %v3356 = vld [vmem:[%s2 + $0x1a0] sm:$0xff]
      %v3357 = vld [vmem:[%s2 + $0x1a8] sm:$0xff]
      %v3358 = vld [vmem:[%s2 + $0x1b0] sm:$0xff]
      %v3359 = vld [vmem:[%s2 + $0x1b8] sm:$0xff]
      %v3360 = vld [vmem:[%s2 + $0x1c0] sm:$0xff]
      %v3361 = vld [vmem:[%s2 + $0x1c8] sm:$0xff]
      %v3362 = vld [vmem:[%s2 + $0x1d0] sm:$0xff]
      %v3363 = vld [vmem:[%s2 + $0x1d8] sm:$0xff]
      %v3364 = vld [vmem:[%s2 + $0x1e0] sm:$0xff]
      %v3365 = vld [vmem:[%s2 + $0x1e8] sm:$0xff]
      %v3366 = vld [vmem:[%s2 + $0x1f0] sm:$0xff]
      %v3367 = vld [vmem:[%s2 + $0x1f8] sm:$0xff]
      %v3368 = vld [vmem:[%s2 + $0x200] sm:$0xff]
      %v3369 = vld [vmem:[%s2 + $0x208] sm:$0xff]
      %v3370 = vld [vmem:[%s2 + $0x210] sm:$0xff]
      %v3371 = vld [vmem:[%s2 + $0x218] sm:$0xff]
      %v3372 = vld [vmem:[%s2 + $0x220] sm:$0xff]
      %v3373 = vld [vmem:[%s2 + $0x228] sm:$0xff]
      %v3374 = vld [vmem:[%s2 + $0x230] sm:$0xff]
      %v3375 = vld [vmem:[%s2 + $0x238] sm:$0xff]
      %v3376 = vld [vmem:[%s2 + $0x240] sm:$0xff]
      %v3377 = vld [vmem:[%s2 + $0x248] sm:$0xff]
      %v3378 = vld [vmem:[%s2 + $0x250] sm:$0xff]
      %v3379 = vld [vmem:[%s2 + $0x258] sm:$0xff]
      %v3380 = vld [vmem:[%s2 + $0x260] sm:$0xff]
      %v3381 = vld [vmem:[%s2 + $0x268] sm:$0xff]
      %v3382 = vld [vmem:[%s2 + $0x270] sm:$0xff]
      %v3383 = vld [vmem:[%s2 + $0x278] sm:$0xff]
      %v3384 = vld [vmem:[%s2 + $0x280] sm:$0xff]
      %v3385 = vld [vmem:[%s2 + $0x288] sm:$0xff]
      %v3386 = vld [vmem:[%s2 + $0x290] sm:$0xff]
      %v3387 = vld [vmem:[%s2 + $0x298] sm:$0xff]
      %v3388 = vld [vmem:[%s2 + $0x2a0] sm:$0xff]
      %v3389 = vld [vmem:[%s2 + $0x2a8] sm:$0xff]
      %v3390 = vld [vmem:[%s2 + $0x2b0] sm:$0xff]
      %v3391 = vld [vmem:[%s2 + $0x2b8] sm:$0xff]
      %v3392 = vld [vmem:[%s2 + $0x2c0] sm:$0xff]
      %v3393 = vld [vmem:[%s2 + $0x2c8] sm:$0xff]
      %v3394 = vld [vmem:[%s2 + $0x2d0] sm:$0xff]
      %v3395 = vld [vmem:[%s2 + $0x2d8] sm:$0xff]
      %v3396 = vld [vmem:[%s2 + $0x2e0] sm:$0xff]
      %v3397 = vld [vmem:[%s2 + $0x2e8] sm:$0xff]
      %v3398 = vld [vmem:[%s2 + $0x2f0] sm:$0xff]
      %v3399 = vld [vmem:[%s2 + $0x2f8] sm:$0xff]
      %v3400 = vld [vmem:[%s2 + $0x300] sm:$0xff]
      %v3401 = vld [vmem:[%s2 + $0x308] sm:$0xff]
      %v3402 = vld [vmem:[%s2 + $0x310] sm:$0xff]
      %v3403 = vld [vmem:[%s2 + $0x318] sm:$0xff]
      %v3404 = vld [vmem:[%s2 + $0x320] sm:$0xff]
      %v3405 = vld [vmem:[%s2 + $0x328] sm:$0xff]
      %v3406 = vld [vmem:[%s2 + $0x330] sm:$0xff]
      %v3407 = vld [vmem:[%s2 + $0x338] sm:$0xff]
      %v3408 = vld [vmem:[%s2 + $0x340] sm:$0xff]
      %v3409 = vld [vmem:[%s2 + $0x348] sm:$0xff]
      %v3410 = vld [vmem:[%s2 + $0x350] sm:$0xff]
      %v3411 = vld [vmem:[%s2 + $0x358] sm:$0xff]
      %v3412 = vld [vmem:[%s2 + $0x360] sm:$0xff]
      %v3413 = vld [vmem:[%s2 + $0x368] sm:$0xff]
      %v3414 = vld [vmem:[%s2 + $0x370] sm:$0xff]
      %v3415 = vld [vmem:[%s2 + $0x378] sm:$0xff]
      %v3416 = vld [vmem:[%s2 + $0x380] sm:$0xff]
      %v3417 = vld [vmem:[%s2 + $0x388] sm:$0xff]
      %v3418 = vld [vmem:[%s2 + $0x390] sm:$0xff]
      %v3419 = vld [vmem:[%s2 + $0x398] sm:$0xff]
      %v3420 = vld [vmem:[%s2 + $0x3a0] sm:$0xff]
      %v3421 = vld [vmem:[%s2 + $0x3a8] sm:$0xff]
      %v3422 = vld [vmem:[%s2 + $0x3b0] sm:$0xff]
      %v3423 = vld [vmem:[%s2 + $0x3b8] sm:$0xff]
      %v3424 = vld [vmem:[%s2 + $0x3c0] sm:$0xff]
      %v3425 = vld [vmem:[%s2 + $0x3c8] sm:$0xff]
      %v3426 = vld [vmem:[%s2 + $0x3d0] sm:$0xff]
      %v3427 = vld [vmem:[%s2 + $0x3d8] sm:$0xff]
      %v3428 = vld [vmem:[%s2 + $0x3e0] sm:$0xff]
      %v3429 = vld [vmem:[%s2 + $0x3e8] sm:$0xff]
      %v3430 = vld [vmem:[%s2 + $0x3f0] sm:$0xff]
      %v3431 = vld [vmem:[%s2 + $0x3f8] sm:$0xff]
      %v3432 = vld [vmem:[%s2 + $0x400] sm:$0xff]
      %v3433 = vld [vmem:[%s2 + $0x408] sm:$0xff]
      %v3434 = vld [vmem:[%s2 + $0x410] sm:$0xff]
      %v3435 = vld [vmem:[%s2 + $0x418] sm:$0xff]
      %v3436 = vld [vmem:[%s2 + $0x420] sm:$0xff]
      %v3437 = vld [vmem:[%s2 + $0x428] sm:$0xff]
      %v3438 = vld [vmem:[%s2 + $0x430] sm:$0xff]
      %v3439 = vld [vmem:[%s2 + $0x438] sm:$0xff]
      %v3440 = vld [vmem:[%s2 + $0x440] sm:$0xff]
      %v3441 = vld [vmem:[%s2 + $0x448] sm:$0xff]
      %v3442 = vld [vmem:[%s2 + $0x450] sm:$0xff]
      %v3443 = vld [vmem:[%s2 + $0x458] sm:$0xff]
      %v3444 = vld [vmem:[%s2 + $0x460] sm:$0xff]
      %v3445 = vld [vmem:[%s2 + $0x468] sm:$0xff]
      %v3446 = vld [vmem:[%s2 + $0x470] sm:$0xff]
      %v3447 = vld [vmem:[%s2 + $0x478] sm:$0xff]
      %v3448 = vld [vmem:[%s2 + $0x480] sm:$0xff]
      %v3449 = vld [vmem:[%s2 + $0x488] sm:$0xff]
      %v3450 = vld [vmem:[%s2 + $0x490] sm:$0xff]
      %v3451 = vld [vmem:[%s2 + $0x498] sm:$0xff]
      %v3452 = vld [vmem:[%s2 + $0x4a0] sm:$0xff]
      %v3453 = vld [vmem:[%s2 + $0x4a8] sm:$0xff]
      %v3454 = vld [vmem:[%s2 + $0x4b0] sm:$0xff]
      %v3455 = vld [vmem:[%s2 + $0x4b8] sm:$0xff]
      %v3456 = vld [vmem:[%s2 + $0x4c0] sm:$0xff]
      %v3457 = vld [vmem:[%s2 + $0x4c8] sm:$0xff]
      %v3458 = vld [vmem:[%s2 + $0x4d0] sm:$0xff]
      %v3459 = vld [vmem:[%s2 + $0x4d8] sm:$0xff]
      %v3460 = vld [vmem:[%s2 + $0x4e0] sm:$0xff]
      %v3461 = vld [vmem:[%s2 + $0x4e8] sm:$0xff]
      %v3462 = vld [vmem:[%s2 + $0x4f0] sm:$0xff]
      %v3463 = vld [vmem:[%s2 + $0x4f8] sm:$0xff]
      %v3464 = vld [vmem:[%s2 + $0x500] sm:$0xff]
      %v3465 = vld [vmem:[%s2 + $0x508] sm:$0xff]
      %v3466 = vld [vmem:[%s2 + $0x510] sm:$0xff]
      %v3467 = vld [vmem:[%s2 + $0x518] sm:$0xff]
      %v3468 = vld [vmem:[%s2 + $0x520] sm:$0xff]
      %v3469 = vld [vmem:[%s2 + $0x528] sm:$0xff]
      %v3470 = vld [vmem:[%s2 + $0x530] sm:$0xff]
      %v3471 = vld [vmem:[%s2 + $0x538] sm:$0xff]
      %v3472 = vld [vmem:[%s2 + $0x540] sm:$0xff]
      %v3473 = vld [vmem:[%s2 + $0x548] sm:$0xff]
      %v3474 = vld [vmem:[%s2 + $0x550] sm:$0xff]
      %v3475 = vld [vmem:[%s2 + $0x558] sm:$0xff]
      %v3476 = vld [vmem:[%s2 + $0x560] sm:$0xff]
      %v3477 = vld [vmem:[%s2 + $0x568] sm:$0xff]
      %v3478 = vld [vmem:[%s2 + $0x570] sm:$0xff]
      %v3479 = vld [vmem:[%s2 + $0x578] sm:$0xff]
      %v3480 = vld [vmem:[%s2 + $0x580] sm:$0xff]
      %v3481 = vld [vmem:[%s2 + $0x588] sm:$0xff]
      %v3482 = vld [vmem:[%s2 + $0x590] sm:$0xff]
      %v3483 = vld [vmem:[%s2 + $0x598] sm:$0xff]
      %v3484 = vld [vmem:[%s2 + $0x5a0] sm:$0xff]
      %v3485 = vld [vmem:[%s2 + $0x5a8] sm:$0xff]
      %v3486 = vld [vmem:[%s2 + $0x5b0] sm:$0xff]
      %v3487 = vld [vmem:[%s2 + $0x5b8] sm:$0xff]
      %v3488 = vld [vmem:[%s2 + $0x5c0] sm:$0xff]
      %v3489 = vld [vmem:[%s2 + $0x5c8] sm:$0xff]
      %v3490 = vld [vmem:[%s2 + $0x5d0] sm:$0xff]
      %v3491 = vld [vmem:[%s2 + $0x5d8] sm:$0xff]
      %v3492 = vld [vmem:[%s2 + $0x5e0] sm:$0xff]
      %v3493 = vld [vmem:[%s2 + $0x5e8] sm:$0xff]
      %v3494 = vld [vmem:[%s2 + $0x5f0] sm:$0xff]
      %v3495 = vld [vmem:[%s2 + $0x5f8] sm:$0xff]
      %v3496 = vld [vmem:[%s2 + $0x600] sm:$0xff]
      %v3497 = vld [vmem:[%s2 + $0x608] sm:$0xff]
      %v3498 = vld [vmem:[%s2 + $0x610] sm:$0xff]
      %v3499 = vld [vmem:[%s2 + $0x618] sm:$0xff]
      %v3500 = vld [vmem:[%s2 + $0x620] sm:$0xff]
      %v3501 = vld [vmem:[%s2 + $0x628] sm:$0xff]
      %v3502 = vld [vmem:[%s2 + $0x630] sm:$0xff]
      %v3503 = vld [vmem:[%s2 + $0x638] sm:$0xff]
      %v3504 = vld [vmem:[%s2 + $0x640] sm:$0xff]
      %v3505 = vld [vmem:[%s2 + $0x648] sm:$0xff]
      %v3506 = vld [vmem:[%s2 + $0x650] sm:$0xff]
      %v3507 = vld [vmem:[%s2 + $0x658] sm:$0xff]
      %v3508 = vld [vmem:[%s2 + $0x660] sm:$0xff]
      %v3509 = vld [vmem:[%s2 + $0x668] sm:$0xff]
      %v3510 = vld [vmem:[%s2 + $0x670] sm:$0xff]
      %v3511 = vld [vmem:[%s2 + $0x678] sm:$0xff]
      %v3512 = vld [vmem:[%s2 + $0x680] sm:$0xff]
      %v3513 = vld [vmem:[%s2 + $0x688] sm:$0xff]
      %v3514 = vld [vmem:[%s2 + $0x690] sm:$0xff]
      %v3515 = vld [vmem:[%s2 + $0x698] sm:$0xff]
      %v3516 = vld [vmem:[%s2 + $0x6a0] sm:$0xff]
      %v3517 = vld [vmem:[%s2 + $0x6a8] sm:$0xff]
      %v3518 = vld [vmem:[%s2 + $0x6b0] sm:$0xff]
      %v3519 = vld [vmem:[%s2 + $0x6b8] sm:$0xff]
      %v3520 = vld [vmem:[%s2 + $0x6c0] sm:$0xff]
      %v3521 = vld [vmem:[%s2 + $0x6c8] sm:$0xff]
      %v3522 = vld [vmem:[%s2 + $0x6d0] sm:$0xff]
      %v3523 = vld [vmem:[%s2 + $0x6d8] sm:$0xff]
      %v3524 = vld [vmem:[%s2 + $0x6e0] sm:$0xff]
      %v3525 = vld [vmem:[%s2 + $0x6e8] sm:$0xff]
      %v3526 = vld [vmem:[%s2 + $0x6f0] sm:$0xff]
      %v3527 = vld [vmem:[%s2 + $0x6f8] sm:$0xff]
      %v3528 = vld [vmem:[%s2 + $0x700] sm:$0xff]
      %v3529 = vld [vmem:[%s2 + $0x708] sm:$0xff]
      %v3530 = vld [vmem:[%s2 + $0x710] sm:$0xff]
      %v3531 = vld [vmem:[%s2 + $0x718] sm:$0xff]
      %v3532 = vld [vmem:[%s2 + $0x720] sm:$0xff]
      %v3533 = vld [vmem:[%s2 + $0x728] sm:$0xff]
      %v3534 = vld [vmem:[%s2 + $0x730] sm:$0xff]
      %v3535 = vld [vmem:[%s2 + $0x738] sm:$0xff]
      %v3536 = vld [vmem:[%s2 + $0x740] sm:$0xff]
      %v3537 = vld [vmem:[%s2 + $0x748] sm:$0xff]
      %v3538 = vld [vmem:[%s2 + $0x750] sm:$0xff]
      %v3539 = vld [vmem:[%s2 + $0x758] sm:$0xff]
      %v3540 = vld [vmem:[%s2 + $0x760] sm:$0xff]
      %v3541 = vld [vmem:[%s2 + $0x768] sm:$0xff]
      %v3542 = vld [vmem:[%s2 + $0x770] sm:$0xff]
      %v3543 = vld [vmem:[%s2 + $0x778] sm:$0xff]
      %v3544 = vld [vmem:[%s2 + $0x780] sm:$0xff]
      %v3545 = vld [vmem:[%s2 + $0x788] sm:$0xff]
      %v3546 = vld [vmem:[%s2 + $0x790] sm:$0xff]
      %v3547 = vld [vmem:[%s2 + $0x798] sm:$0xff]
      %v3548 = vld [vmem:[%s2 + $0x7a0] sm:$0xff]
      %v3549 = vld [vmem:[%s2 + $0x7a8] sm:$0xff]
      %v3550 = vld [vmem:[%s2 + $0x7b0] sm:$0xff]
      %v3551 = vld [vmem:[%s2 + $0x7b8] sm:$0xff]
      %v3552 = vld [vmem:[%s2 + $0x7c0] sm:$0xff]
      %v3553 = vld [vmem:[%s2 + $0x7c8] sm:$0xff]
      %v3554 = vld [vmem:[%s2 + $0x7d0] sm:$0xff]
      %v3555 = vld [vmem:[%s2 + $0x7d8] sm:$0xff]
      %v3556 = vld [vmem:[%s2 + $0x7e0] sm:$0xff]
      %v3557 = vld [vmem:[%s2 + $0x7e8] sm:$0xff]
      %v3558 = vld [vmem:[%s2 + $0x7f0] sm:$0xff]
      %v3559 = vld [vmem:[%s2 + $0x7f8] sm:$0xff]
      %v3560 = vld [vmem:[%s2 + $0x800] sm:$0xff]
      %v3561 = vld [vmem:[%s2 + $0x808] sm:$0xff]
      %v3562 = vld [vmem:[%s2 + $0x810] sm:$0xff]
      %v3563 = vld [vmem:[%s2 + $0x818] sm:$0xff]
      %v3564 = vld [vmem:[%s2 + $0x820] sm:$0xff]
      %v3565 = vld [vmem:[%s2 + $0x828] sm:$0xff]
      %v3566 = vld [vmem:[%s2 + $0x830] sm:$0xff]
      %v3567 = vld [vmem:[%s2 + $0x838] sm:$0xff]
      %v3568 = vld [vmem:[%s2 + $0x840] sm:$0xff]
      %v3569 = vld [vmem:[%s2 + $0x848] sm:$0xff]
      %v3570 = vld [vmem:[%s2 + $0x850] sm:$0xff]
      %v3571 = vld [vmem:[%s2 + $0x858] sm:$0xff]
      %v3572 = vld [vmem:[%s2 + $0x860] sm:$0xff]
      %v3573 = vld [vmem:[%s2 + $0x868] sm:$0xff]
      %v3574 = vld [vmem:[%s2 + $0x870] sm:$0xff]
      %v3575 = vld [vmem:[%s2 + $0x878] sm:$0xff]
      %v3576 = vld [vmem:[%s2 + $0x880] sm:$0xff]
      %v3577 = vld [vmem:[%s2 + $0x888] sm:$0xff]
      %v3578 = vld [vmem:[%s2 + $0x890] sm:$0xff]
      %v3579 = vld [vmem:[%s2 + $0x898] sm:$0xff]
      %v3580 = vld [vmem:[%s2 + $0x8a0] sm:$0xff]
      %v3581 = vld [vmem:[%s2 + $0x8a8] sm:$0xff]
      %v3582 = vld [vmem:[%s2 + $0x8b0] sm:$0xff]
      %v3583 = vld [vmem:[%s2 + $0x8b8] sm:$0xff]
      %v3584 = vld [vmem:[%s2 + $0x8c0] sm:$0xff]
      %v3585 = vld [vmem:[%s2 + $0x8c8] sm:$0xff]
      %v3586 = vld [vmem:[%s2 + $0x8d0] sm:$0xff]
      %v3587 = vld [vmem:[%s2 + $0x8d8] sm:$0xff]
      %v3588 = vld [vmem:[%s2 + $0x8e0] sm:$0xff]
      %v3589 = vld [vmem:[%s2 + $0x8e8] sm:$0xff]
      %v3590 = vld [vmem:[%s2 + $0x8f0] sm:$0xff]
      %v3591 = vld [vmem:[%s2 + $0x8f8] sm:$0xff]
      %v3592 = vld [vmem:[%s2 + $0x900] sm:$0xff]
      %v3593 = vld [vmem:[%s2 + $0x908] sm:$0xff]
      %v3594 = vld [vmem:[%s2 + $0x910] sm:$0xff]
      %v3595 = vld [vmem:[%s2 + $0x918] sm:$0xff]
      %v3596 = vld [vmem:[%s2 + $0x920] sm:$0xff]
      %v3597 = vld [vmem:[%s2 + $0x928] sm:$0xff]
      %v3598 = vld [vmem:[%s2 + $0x930] sm:$0xff]
      %v3599 = vld [vmem:[%s2 + $0x938] sm:$0xff]
      %v3600 = vld [vmem:[%s2 + $0x940] sm:$0xff]
      %v3601 = vld [vmem:[%s2 + $0x948] sm:$0xff]
      %v3602 = vld [vmem:[%s2 + $0x950] sm:$0xff]
      %v3603 = vld [vmem:[%s2 + $0x958] sm:$0xff]
      %v3604 = vld [vmem:[%s2 + $0x960] sm:$0xff]
      %v3605 = vld [vmem:[%s2 + $0x968] sm:$0xff]
      %v3606 = vld [vmem:[%s2 + $0x970] sm:$0xff]
      %v3607 = vld [vmem:[%s2 + $0x978] sm:$0xff]
      %v3608 = vld [vmem:[%s2 + $0x980] sm:$0xff]
      %v3609 = vld [vmem:[%s2 + $0x988] sm:$0xff]
      %v3610 = vld [vmem:[%s2 + $0x990] sm:$0xff]
      %v3611 = vld [vmem:[%s2 + $0x998] sm:$0xff]
      %v3612 = vld [vmem:[%s2 + $0x9a0] sm:$0xff]
      %v3613 = vld [vmem:[%s2 + $0x9a8] sm:$0xff]
      %v3614 = vld [vmem:[%s2 + $0x9b0] sm:$0xff]
      %v3615 = vld [vmem:[%s2 + $0x9b8] sm:$0xff]
      %v3616 = vld [vmem:[%s2 + $0x9c0] sm:$0xff]
      %v3617 = vld [vmem:[%s2 + $0x9c8] sm:$0xff]
      %v3618 = vld [vmem:[%s2 + $0x9d0] sm:$0xff]
      %v3619 = vld [vmem:[%s2 + $0x9d8] sm:$0xff]
      %v3620 = vld [vmem:[%s2 + $0x9e0] sm:$0xff]
      %v3621 = vld [vmem:[%s2 + $0x9e8] sm:$0xff]
      %v3622 = vld [vmem:[%s2 + $0x9f0] sm:$0xff]
      %v3623 = vld [vmem:[%s2 + $0x9f8] sm:$0xff]
      %v3624 = vld [vmem:[%s2 + $0xa00] sm:$0xff]
      %v3625 = vld [vmem:[%s2 + $0xa08] sm:$0xff]
      %v3626 = vld [vmem:[%s2 + $0xa10] sm:$0xff]
      %v3627 = vld [vmem:[%s2 + $0xa18] sm:$0xff]
      %v3628 = vld [vmem:[%s2 + $0xa20] sm:$0xff]
      %v3629 = vld [vmem:[%s2 + $0xa28] sm:$0xff]
      %v3630 = vld [vmem:[%s2 + $0xa30] sm:$0xff]
      %v3631 = vld [vmem:[%s2 + $0xa38] sm:$0xff]
      %v3632 = vld [vmem:[%s2 + $0xa40] sm:$0xff]
      %v3633 = vld [vmem:[%s2 + $0xa48] sm:$0xff]
      %v3634 = vld [vmem:[%s2 + $0xa50] sm:$0xff]
      %v3635 = vld [vmem:[%s2 + $0xa58] sm:$0xff]
      %v3636 = vld [vmem:[%s2 + $0xa60] sm:$0xff]
      %v3637 = vld [vmem:[%s2 + $0xa68] sm:$0xff]
      %v3638 = vld [vmem:[%s2 + $0xa70] sm:$0xff]
      %v3639 = vld [vmem:[%s2 + $0xa78] sm:$0xff]
      %v3640 = vld [vmem:[%s2 + $0xa80] sm:$0xff]
      %v3641 = vld [vmem:[%s2 + $0xa88] sm:$0xff]
      %v3642 = vld [vmem:[%s2 + $0xa90] sm:$0xff]
      %v3643 = vld [vmem:[%s2 + $0xa98] sm:$0xff]
      %v3644 = vld [vmem:[%s2 + $0xaa0] sm:$0xff]
      %v3645 = vld [vmem:[%s2 + $0xaa8] sm:$0xff]
      %v3646 = vld [vmem:[%s2 + $0xab0] sm:$0xff]
      %v3647 = vld [vmem:[%s2 + $0xab8] sm:$0xff]
      %v3648 = vld [vmem:[%s2 + $0xac0] sm:$0xff]
      %v3649 = vld [vmem:[%s2 + $0xac8] sm:$0xff]
      %v3650 = vld [vmem:[%s2 + $0xad0] sm:$0xff]
      %v3651 = vld [vmem:[%s2 + $0xad8] sm:$0xff]
      %v3652 = vld [vmem:[%s2 + $0xae0] sm:$0xff]
      %v3653 = vld [vmem:[%s2 + $0xae8] sm:$0xff]
      %v3654 = vld [vmem:[%s2 + $0xaf0] sm:$0xff]
      %v3655 = vld [vmem:[%s2 + $0xaf8] sm:$0xff]
      %v3656 = vld [vmem:[%s2 + $0xb00] sm:$0xff]
      %v3657 = vld [vmem:[%s2 + $0xb08] sm:$0xff]
      %v3658 = vld [vmem:[%s2 + $0xb10] sm:$0xff]
      %v3659 = vld [vmem:[%s2 + $0xb18] sm:$0xff]
      %v3660 = vld [vmem:[%s2 + $0xb20] sm:$0xff]
      %v3661 = vld [vmem:[%s2 + $0xb28] sm:$0xff]
      %v3662 = vld [vmem:[%s2 + $0xb30] sm:$0xff]
      %v3663 = vld [vmem:[%s2 + $0xb38] sm:$0xff]
      %v3664 = vld [vmem:[%s2 + $0xb40] sm:$0xff]
      %v3665 = vld [vmem:[%s2 + $0xb48] sm:$0xff]
      %v3666 = vld [vmem:[%s2 + $0xb50] sm:$0xff]
      %v3667 = vld [vmem:[%s2 + $0xb58] sm:$0xff]
      %v3668 = vld [vmem:[%s2 + $0xb60] sm:$0xff]
      %v3669 = vld [vmem:[%s2 + $0xb68] sm:$0xff]
      %v3670 = vld [vmem:[%s2 + $0xb70] sm:$0xff]
      %v3671 = vld [vmem:[%s2 + $0xb78] sm:$0xff]
      %v3672 = vld [vmem:[%s2 + $0xb80] sm:$0xff]
      %v3673 = vld [vmem:[%s2 + $0xb88] sm:$0xff]
      %v3674 = vld [vmem:[%s2 + $0xb90] sm:$0xff]
      %v3675 = vld [vmem:[%s2 + $0xb98] sm:$0xff]
      %v3676 = vld [vmem:[%s2 + $0xba0] sm:$0xff]
      %v3677 = vld [vmem:[%s2 + $0xba8] sm:$0xff]
      %v3678 = vld [vmem:[%s2 + $0xbb0] sm:$0xff]
      %v3679 = vld [vmem:[%s2 + $0xbb8] sm:$0xff]
      %v3680 = vld [vmem:[%s2 + $0xbc0] sm:$0xff]
      %v3681 = vld [vmem:[%s2 + $0xbc8] sm:$0xff]
      %v3682 = vld [vmem:[%s2 + $0xbd0] sm:$0xff]
      %v3683 = vld [vmem:[%s2 + $0xbd8] sm:$0xff]
      %v3684 = vld [vmem:[%s2 + $0xbe0] sm:$0xff]
      %v3685 = vld [vmem:[%s2 + $0xbe8] sm:$0xff]
      %v3686 = vld [vmem:[%s2 + $0xbf0] sm:$0xff]
      %v3687 = vld [vmem:[%s2 + $0xbf8] sm:$0xff]
      %v3688 = vld [vmem:[%s2 + $0xc00] sm:$0xff]
      %v3689 = vld [vmem:[%s2 + $0xc08] sm:$0xff]
      %v3690 = vld [vmem:[%s2 + $0xc10] sm:$0xff]
      %v3691 = vld [vmem:[%s2 + $0xc18] sm:$0xff]
      %v3692 = vld [vmem:[%s2 + $0xc20] sm:$0xff]
      %v3693 = vld [vmem:[%s2 + $0xc28] sm:$0xff]
      %v3694 = vld [vmem:[%s2 + $0xc30] sm:$0xff]
      %v3695 = vld [vmem:[%s2 + $0xc38] sm:$0xff]
      %v3696 = vld [vmem:[%s2 + $0xc40] sm:$0xff]
      %v3697 = vld [vmem:[%s2 + $0xc48] sm:$0xff]
      %v3698 = vld [vmem:[%s2 + $0xc50] sm:$0xff]
      %v3699 = vld [vmem:[%s2 + $0xc58] sm:$0xff]
      %v3700 = vld [vmem:[%s2 + $0xc60] sm:$0xff]
      %v3701 = vld [vmem:[%s2 + $0xc68] sm:$0xff]
      %v3702 = vld [vmem:[%s2 + $0xc70] sm:$0xff]
      %v3703 = vld [vmem:[%s2 + $0xc78] sm:$0xff]
      %v3704 = vld [vmem:[%s2 + $0xc80] sm:$0xff]
      %v3705 = vld [vmem:[%s2 + $0xc88] sm:$0xff]
      %v3706 = vld [vmem:[%s2 + $0xc90] sm:$0xff]
      %v3707 = vld [vmem:[%s2 + $0xc98] sm:$0xff]
      %v3708 = vld [vmem:[%s2 + $0xca0] sm:$0xff]
      %v3709 = vld [vmem:[%s2 + $0xca8] sm:$0xff]
      %v3710 = vld [vmem:[%s2 + $0xcb0] sm:$0xff]
      %v3711 = vld [vmem:[%s2 + $0xcb8] sm:$0xff]
      %v3712 = vld [vmem:[%s2 + $0xcc0] sm:$0xff]
      %v3713 = vld [vmem:[%s2 + $0xcc8] sm:$0xff]
      %v3714 = vld [vmem:[%s2 + $0xcd0] sm:$0xff]
      %v3715 = vld [vmem:[%s2 + $0xcd8] sm:$0xff]
      %v3716 = vld [vmem:[%s2 + $0xce0] sm:$0xff]
      %v3717 = vld [vmem:[%s2 + $0xce8] sm:$0xff]
      %v3718 = vld [vmem:[%s2 + $0xcf0] sm:$0xff]
      %v3719 = vld [vmem:[%s2 + $0xcf8] sm:$0xff]
      %v3720 = vld [vmem:[%s2 + $0xd00] sm:$0xff]
      %v3721 = vld [vmem:[%s2 + $0xd08] sm:$0xff]
      %v3722 = vld [vmem:[%s2 + $0xd10] sm:$0xff]
      %v3723 = vld [vmem:[%s2 + $0xd18] sm:$0xff]
      %v3724 = vld [vmem:[%s2 + $0xd20] sm:$0xff]
      %v3725 = vld [vmem:[%s2 + $0xd28] sm:$0xff]
      %v3726 = vld [vmem:[%s2 + $0xd30] sm:$0xff]
      %v3727 = vld [vmem:[%s2 + $0xd38] sm:$0xff]
      %v3728 = vld [vmem:[%s2 + $0xd40] sm:$0xff]
      %v3729 = vld [vmem:[%s2 + $0xd48] sm:$0xff]
      %v3730 = vld [vmem:[%s2 + $0xd50] sm:$0xff]
      %v3731 = vld [vmem:[%s2 + $0xd58] sm:$0xff]
      %v3732 = vld [vmem:[%s2 + $0xd60] sm:$0xff]
      %v3733 = vld [vmem:[%s2 + $0xd68] sm:$0xff]
      %v3734 = vld [vmem:[%s2 + $0xd70] sm:$0xff]
      %v3735 = vld [vmem:[%s2 + $0xd78] sm:$0xff]
      %v3736 = vld [vmem:[%s2 + $0xd80] sm:$0xff]
      %v3737 = vld [vmem:[%s2 + $0xd88] sm:$0xff]
      %v3738 = vld [vmem:[%s2 + $0xd90] sm:$0xff]
      %v3739 = vld [vmem:[%s2 + $0xd98] sm:$0xff]
      %v3740 = vld [vmem:[%s2 + $0xda0] sm:$0xff]
      %v3741 = vld [vmem:[%s2 + $0xda8] sm:$0xff]
      %v3742 = vld [vmem:[%s2 + $0xdb0] sm:$0xff]
      %v3743 = vld [vmem:[%s2 + $0xdb8] sm:$0xff]
      %v3744 = vld [vmem:[%s2 + $0xdc0] sm:$0xff]
      %v3745 = vld [vmem:[%s2 + $0xdc8] sm:$0xff]
      %v3746 = vld [vmem:[%s2 + $0xdd0] sm:$0xff]
      %v3747 = vld [vmem:[%s2 + $0xdd8] sm:$0xff]
      %v3748 = vld [vmem:[%s2 + $0xde0] sm:$0xff]
      %v3749 = vld [vmem:[%s2 + $0xde8] sm:$0xff]
      %v3750 = vld [vmem:[%s2 + $0xdf0] sm:$0xff]
      %v3751 = vld [vmem:[%s2 + $0xdf8] sm:$0xff]
      %v3752 = vld [vmem:[%s2 + $0xe00] sm:$0xff]
      %v3753 = vld [vmem:[%s2 + $0xe08] sm:$0xff]
      %v3754 = vld [vmem:[%s2 + $0xe10] sm:$0xff]
      %v3755 = vld [vmem:[%s2 + $0xe18] sm:$0xff]
      %v3756 = vld [vmem:[%s2 + $0xe20] sm:$0xff]
      %v3757 = vld [vmem:[%s2 + $0xe28] sm:$0xff]
      %v3758 = vld [vmem:[%s2 + $0xe30] sm:$0xff]
      %v3759 = vld [vmem:[%s2 + $0xe38] sm:$0xff]
      %v3760 = vld [vmem:[%s2 + $0xe40] sm:$0xff]
      %v3761 = vld [vmem:[%s2 + $0xe48] sm:$0xff]
      %v3762 = vld [vmem:[%s2 + $0xe50] sm:$0xff]
      %v3763 = vld [vmem:[%s2 + $0xe58] sm:$0xff]
      %v3764 = vld [vmem:[%s2 + $0xe60] sm:$0xff]
      %v3765 = vld [vmem:[%s2 + $0xe68] sm:$0xff]
      %v3766 = vld [vmem:[%s2 + $0xe70] sm:$0xff]
      %v3767 = vld [vmem:[%s2 + $0xe78] sm:$0xff]
      %v3768 = vld [vmem:[%s2 + $0xe80] sm:$0xff]
      %v3769 = vld [vmem:[%s2 + $0xe88] sm:$0xff]
      %v3770 = vld [vmem:[%s2 + $0xe90] sm:$0xff]
      %v3771 = vld [vmem:[%s2 + $0xe98] sm:$0xff]
      %v3772 = vld [vmem:[%s2 + $0xea0] sm:$0xff]
      %v3773 = vld [vmem:[%s2 + $0xea8] sm:$0xff]
      %v3774 = vld [vmem:[%s2 + $0xeb0] sm:$0xff]
      %v3775 = vld [vmem:[%s2 + $0xeb8] sm:$0xff]
      %v3776 = vld [vmem:[%s2 + $0xec0] sm:$0xff]
      %v3777 = vld [vmem:[%s2 + $0xec8] sm:$0xff]
      %v3778 = vld [vmem:[%s2 + $0xed0] sm:$0xff]
      %v3779 = vld [vmem:[%s2 + $0xed8] sm:$0xff]
      %v3780 = vld [vmem:[%s2 + $0xee0] sm:$0xff]
      %v3781 = vld [vmem:[%s2 + $0xee8] sm:$0xff]
      %v3782 = vld [vmem:[%s2 + $0xef0] sm:$0xff]
      %v3783 = vld [vmem:[%s2 + $0xef8] sm:$0xff]
      %v3784 = vld [vmem:[%s2 + $0xf00] sm:$0xff]
      %v3785 = vld [vmem:[%s2 + $0xf08] sm:$0xff]
      %v3786 = vld [vmem:[%s2 + $0xf10] sm:$0xff]
      %v3787 = vld [vmem:[%s2 + $0xf18] sm:$0xff]
      %v3788 = vld [vmem:[%s2 + $0xf20] sm:$0xff]
      %v3789 = vld [vmem:[%s2 + $0xf28] sm:$0xff]
      %v3790 = vld [vmem:[%s2 + $0xf30] sm:$0xff]
      %v3791 = vld [vmem:[%s2 + $0xf38] sm:$0xff]
      %v3792 = vld [vmem:[%s2 + $0xf40] sm:$0xff]
      %v3793 = vld [vmem:[%s2 + $0xf48] sm:$0xff]
      %v3794 = vld [vmem:[%s2 + $0xf50] sm:$0xff]
      %v3795 = vld [vmem:[%s2 + $0xf58] sm:$0xff]
      %v3796 = vld [vmem:[%s2 + $0xf60] sm:$0xff]
      %v3797 = vld [vmem:[%s2 + $0xf68] sm:$0xff]
      %v3798 = vld [vmem:[%s2 + $0xf70] sm:$0xff]
      %v3799 = vld [vmem:[%s2 + $0xf78] sm:$0xff]
      %v3800 = vld [vmem:[%s2 + $0xf80] sm:$0xff]
      %v3801 = vld [vmem:[%s2 + $0xf88] sm:$0xff]
      %v3802 = vld [vmem:[%s2 + $0xf90] sm:$0xff]
      %v3803 = vld [vmem:[%s2 + $0xf98] sm:$0xff]
      %v3804 = vld [vmem:[%s2 + $0xfa0] sm:$0xff]
      %v3805 = vld [vmem:[%s2 + $0xfa8] sm:$0xff]
      %v3806 = vld [vmem:[%s2 + $0xfb0] sm:$0xff]
      %v3807 = vld [vmem:[%s2 + $0xfb8] sm:$0xff]
      %v3808 = vld [vmem:[%s2 + $0xfc0] sm:$0xff]
      %v3809 = vld [vmem:[%s2 + $0xfc8] sm:$0xff]
      %v3810 = vld [vmem:[%s2 + $0xfd0] sm:$0xff]
      %v3811 = vld [vmem:[%s2 + $0xfd8] sm:$0xff]
      %v3812 = vld [vmem:[%s2 + $0xfe0] sm:$0xff]
      %v3813 = vld [vmem:[%s2 + $0xfe8] sm:$0xff]
      %v3814 = vld [vmem:[%s2 + $0xff0] sm:$0xff]
      %v3815 = vld [vmem:[%s2 + $0xff8] sm:$0xff]
      %v3816 = vld [vmem:[%s2 + $0x1000] sm:$0xff]
      %v3817 = vld [vmem:[%s2 + $0x1008] sm:$0xff]
      %v3818 = vld [vmem:[%s2 + $0x1010] sm:$0xff]
      %v3819 = vld [vmem:[%s2 + $0x1018] sm:$0xff]
      %v3820 = vld [vmem:[%s2 + $0x1020] sm:$0xff]
      %v3821 = vld [vmem:[%s2 + $0x1028] sm:$0xff]
      %v3822 = vld [vmem:[%s2 + $0x1030] sm:$0xff]
      %v3823 = vld [vmem:[%s2 + $0x1038] sm:$0xff]
      %v3824 = vld [vmem:[%s2 + $0x1040] sm:$0xff]
      %v3825 = vld [vmem:[%s2 + $0x1048] sm:$0xff]
      %v3826 = vld [vmem:[%s2 + $0x1050] sm:$0xff]
      %v3827 = vld [vmem:[%s2 + $0x1058] sm:$0xff]
      %v3828 = vld [vmem:[%s2 + $0x1060] sm:$0xff]
      %v3829 = vld [vmem:[%s2 + $0x1068] sm:$0xff]
      %v3830 = vld [vmem:[%s2 + $0x1070] sm:$0xff]
      %v3831 = vld [vmem:[%s2 + $0x1078] sm:$0xff]
      %v3832 = vld [vmem:[%s2 + $0x1080] sm:$0xff]
      %v3833 = vld [vmem:[%s2 + $0x1088] sm:$0xff]
      %v3834 = vld [vmem:[%s2 + $0x1090] sm:$0xff]
      %v3835 = vld [vmem:[%s2 + $0x1098] sm:$0xff]
      %v3836 = vld [vmem:[%s2 + $0x10a0] sm:$0xff]
      %v3837 = vld [vmem:[%s2 + $0x10a8] sm:$0xff]
      %v3838 = vld [vmem:[%s2 + $0x10b0] sm:$0xff]
      %v3839 = vld [vmem:[%s2 + $0x10b8] sm:$0xff]
      %v3840 = vld [vmem:[%s2 + $0x10c0] sm:$0xff]
      %v3841 = vld [vmem:[%s2 + $0x10c8] sm:$0xff]
      %v3842 = vld [vmem:[%s2 + $0x10d0] sm:$0xff]
      %v3843 = vld [vmem:[%s2 + $0x10d8] sm:$0xff]
      %v3844 = vld [vmem:[%s2 + $0x10e0] sm:$0xff]
      %v3845 = vld [vmem:[%s2 + $0x10e8] sm:$0xff]
      %v3846 = vld [vmem:[%s2 + $0x10f0] sm:$0xff]
      %v3847 = vld [vmem:[%s2 + $0x10f8] sm:$0xff]
      %v3848 = vld [vmem:[%s2 + $0x1100] sm:$0xff]
      %v3849 = vld [vmem:[%s2 + $0x1108] sm:$0xff]
      %v3850 = vld [vmem:[%s2 + $0x1110] sm:$0xff]
      %v3851 = vld [vmem:[%s2 + $0x1118] sm:$0xff]
      %v3852 = vld [vmem:[%s2 + $0x1120] sm:$0xff]
      %v3853 = vld [vmem:[%s2 + $0x1128] sm:$0xff]
      %v3854 = vld [vmem:[%s2 + $0x1130] sm:$0xff]
      %v3855 = vld [vmem:[%s2 + $0x1138] sm:$0xff]
      %v3856 = vld [vmem:[%s2 + $0x1140] sm:$0xff]
      %v3857 = vld [vmem:[%s2 + $0x1148] sm:$0xff]
      %v3858 = vld [vmem:[%s2 + $0x1150] sm:$0xff]
      %v3859 = vld [vmem:[%s2 + $0x1158] sm:$0xff]
      %v3860 = vld [vmem:[%s2 + $0x1160] sm:$0xff]
      %v3861 = vld [vmem:[%s2 + $0x1168] sm:$0xff]
      %v3862 = vld [vmem:[%s2 + $0x1170] sm:$0xff]
      %v3863 = vld [vmem:[%s2 + $0x1178] sm:$0xff]
      %v3864 = vld [vmem:[%s2 + $0x1180] sm:$0xff]
      %v3865 = vld [vmem:[%s2 + $0x1188] sm:$0xff]
      %v3866 = vld [vmem:[%s2 + $0x1190] sm:$0xff]
      %v3867 = vld [vmem:[%s2 + $0x1198] sm:$0xff]
      %v3868 = vld [vmem:[%s2 + $0x11a0] sm:$0xff]
      %v3869 = vld [vmem:[%s2 + $0x11a8] sm:$0xff]
      %v3870 = vld [vmem:[%s2 + $0x11b0] sm:$0xff]
      %v3871 = vld [vmem:[%s2 + $0x11b8] sm:$0xff]
      %v3872 = vld [vmem:[%s2 + $0x11c0] sm:$0xff]
      %v3873 = vld [vmem:[%s2 + $0x11c8] sm:$0xff]
      %v3874 = vld [vmem:[%s2 + $0x11d0] sm:$0xff]
      %v3875 = vld [vmem:[%s2 + $0x11d8] sm:$0xff]
      %v3876 = vld [vmem:[%s2 + $0x11e0] sm:$0xff]
      %v3877 = vld [vmem:[%s2 + $0x11e8] sm:$0xff]
      %v3878 = vld [vmem:[%s2 + $0x11f0] sm:$0xff]
      %v3879 = vld [vmem:[%s2 + $0x11f8] sm:$0xff]
      %v3880 = vld [vmem:[%s2 + $0x1200] sm:$0xff]
      %v3881 = vld [vmem:[%s2 + $0x1208] sm:$0xff]
      %v3882 = vld [vmem:[%s2 + $0x1210] sm:$0xff]
      %v3883 = vld [vmem:[%s2 + $0x1218] sm:$0xff]
      %v3884 = vld [vmem:[%s2 + $0x1220] sm:$0xff]
      %v3885 = vld [vmem:[%s2 + $0x1228] sm:$0xff]
      %v3886 = vld [vmem:[%s2 + $0x1230] sm:$0xff]
      %v3887 = vld [vmem:[%s2 + $0x1238] sm:$0xff]
      %v3888 = vld [vmem:[%s2 + $0x1240] sm:$0xff]
      %v3889 = vld [vmem:[%s2 + $0x1248] sm:$0xff]
      %v3890 = vld [vmem:[%s2 + $0x1250] sm:$0xff]
      %v3891 = vld [vmem:[%s2 + $0x1258] sm:$0xff]
      %v3892 = vld [vmem:[%s2 + $0x1260] sm:$0xff]
      %v3893 = vld [vmem:[%s2 + $0x1268] sm:$0xff]
      %v3894 = vld [vmem:[%s2 + $0x1270] sm:$0xff]
      %v3895 = vld [vmem:[%s2 + $0x1278] sm:$0xff]
      %v3896 = vld [vmem:[%s2 + $0x1280] sm:$0xff]
      %v3897 = vld [vmem:[%s2 + $0x1288] sm:$0xff]
      %v3898 = vld [vmem:[%s2 + $0x1290] sm:$0xff]
      %v3899 = vld [vmem:[%s2 + $0x1298] sm:$0xff]
      %v3900 = vld [vmem:[%s2 + $0x12a0] sm:$0xff]
      %v3901 = vld [vmem:[%s2 + $0x12a8] sm:$0xff]
      %v3902 = vld [vmem:[%s2 + $0x12b0] sm:$0xff]
      %v3903 = vld [vmem:[%s2 + $0x12b8] sm:$0xff]
      %v3904 = vld [vmem:[%s2 + $0x12c0] sm:$0xff]
      %v3905 = vld [vmem:[%s2 + $0x12c8] sm:$0xff]
      %v3906 = vld [vmem:[%s2 + $0x12d0] sm:$0xff]
      %v3907 = vld [vmem:[%s2 + $0x12d8] sm:$0xff]
      %v3908 = vld [vmem:[%s2 + $0x12e0] sm:$0xff]
      %v3909 = vld [vmem:[%s2 + $0x12e8] sm:$0xff]
      %v3910 = vld [vmem:[%s2 + $0x12f0] sm:$0xff]
      %v3911 = vld [vmem:[%s2 + $0x12f8] sm:$0xff]
      %v3912 = vld [vmem:[%s2 + $0x1300] sm:$0xff]
      %v3913 = vld [vmem:[%s2 + $0x1308] sm:$0xff]
      %v3914 = vld [vmem:[%s2 + $0x1310] sm:$0xff]
      %v3915 = vld [vmem:[%s2 + $0x1318] sm:$0xff]
      %v3916 = vld [vmem:[%s2 + $0x1320] sm:$0xff]
      %v3917 = vld [vmem:[%s2 + $0x1328] sm:$0xff]
      %v3918 = vld [vmem:[%s2 + $0x1330] sm:$0xff]
      %v3919 = vld [vmem:[%s2 + $0x1338] sm:$0xff]
      %v3920 = vld [vmem:[%s2 + $0x1340] sm:$0xff]
      %v3921 = vld [vmem:[%s2 + $0x1348] sm:$0xff]
      %v3922 = vld [vmem:[%s2 + $0x1350] sm:$0xff]
      %v3923 = vld [vmem:[%s2 + $0x1358] sm:$0xff]
      %v3924 = vld [vmem:[%s2 + $0x1360] sm:$0xff]
      %v3925 = vld [vmem:[%s2 + $0x1368] sm:$0xff]
      %v3926 = vld [vmem:[%s2 + $0x1370] sm:$0xff]
      %v3927 = vld [vmem:[%s2 + $0x1378] sm:$0xff]
      %v3928 = vld [vmem:[%s2 + $0x1380] sm:$0xff]
      %v3929 = vld [vmem:[%s2 + $0x1388] sm:$0xff]
      %v3930 = vld [vmem:[%s2 + $0x1390] sm:$0xff]
      %v3931 = vld [vmem:[%s2 + $0x1398] sm:$0xff]
      %v3932 = vld [vmem:[%s2 + $0x13a0] sm:$0xff]
      %v3933 = vld [vmem:[%s2 + $0x13a8] sm:$0xff]
      %v3934 = vld [vmem:[%s2 + $0x13b0] sm:$0xff]
      %v3935 = vld [vmem:[%s2 + $0x13b8] sm:$0xff]
      %v3936 = vld [vmem:[%s2 + $0x13c0] sm:$0xff]
      %v3937 = vld [vmem:[%s2 + $0x13c8] sm:$0xff]
      %v3938 = vld [vmem:[%s2 + $0x13d0] sm:$0xff]
      %v3939 = vld [vmem:[%s2 + $0x13d8] sm:$0xff]
      %v3940 = vld [vmem:[%s2 + $0x13e0] sm:$0xff]
      %v3941 = vld [vmem:[%s2 + $0x13e8] sm:$0xff]
      %v3942 = vld [vmem:[%s2 + $0x13f0] sm:$0xff]
      %v3943 = vld [vmem:[%s2 + $0x13f8] sm:$0xff]
      %v3944 = vld [vmem:[%s2 + $0x1400] sm:$0xff]
      %v3945 = vld [vmem:[%s2 + $0x1408] sm:$0xff]
      %v3946 = vld [vmem:[%s2 + $0x1410] sm:$0xff]
      %v3947 = vld [vmem:[%s2 + $0x1418] sm:$0xff]
      %v3948 = vld [vmem:[%s2 + $0x1420] sm:$0xff]
      %v3949 = vld [vmem:[%s2 + $0x1428] sm:$0xff]
      %v3950 = vld [vmem:[%s2 + $0x1430] sm:$0xff]
      %v3951 = vld [vmem:[%s2 + $0x1438] sm:$0xff]
      %v3952 = vld [vmem:[%s2 + $0x1440] sm:$0xff]
      %v3953 = vld [vmem:[%s2 + $0x1448] sm:$0xff]
      %v3954 = vld [vmem:[%s2 + $0x1450] sm:$0xff]
      %v3955 = vld [vmem:[%s2 + $0x1458] sm:$0xff]
      %v3956 = vld [vmem:[%s2 + $0x1460] sm:$0xff]
      %v3957 = vld [vmem:[%s2 + $0x1468] sm:$0xff]
      %v3958 = vld [vmem:[%s2 + $0x1470] sm:$0xff]
      %v3959 = vld [vmem:[%s2 + $0x1478] sm:$0xff]
      %v3960 = vld [vmem:[%s2 + $0x1480] sm:$0xff]
      %v3961 = vld [vmem:[%s2 + $0x1488] sm:$0xff]
      %v3962 = vld [vmem:[%s2 + $0x1490] sm:$0xff]
      %v3963 = vld [vmem:[%s2 + $0x1498] sm:$0xff]
      %v3964 = vld [vmem:[%s2 + $0x14a0] sm:$0xff]
      %v3965 = vld [vmem:[%s2 + $0x14a8] sm:$0xff]
      %v3966 = vld [vmem:[%s2 + $0x14b0] sm:$0xff]
      %v3967 = vld [vmem:[%s2 + $0x14b8] sm:$0xff]
      %v3968 = vld [vmem:[%s2 + $0x14c0] sm:$0xff]
      %v3969 = vld [vmem:[%s2 + $0x14c8] sm:$0xff]
      %v3970 = vld [vmem:[%s2 + $0x14d0] sm:$0xff]
      %v3971 = vld [vmem:[%s2 + $0x14d8] sm:$0xff]
      %v3972 = vld [vmem:[%s2 + $0x14e0] sm:$0xff]
      %v3973 = vld [vmem:[%s2 + $0x14e8] sm:$0xff]
      %v3974 = vld [vmem:[%s2 + $0x14f0] sm:$0xff]
      %v3975 = vld [vmem:[%s2 + $0x14f8] sm:$0xff]
      %v3976 = vld [vmem:[%s2 + $0x1500] sm:$0xff]
      %v3977 = vld [vmem:[%s2 + $0x1508] sm:$0xff]
      %v3978 = vld [vmem:[%s2 + $0x1510] sm:$0xff]
      %v3979 = vld [vmem:[%s2 + $0x1518] sm:$0xff]
      %v3980 = vld [vmem:[%s2 + $0x1520] sm:$0xff]
      %v3981 = vld [vmem:[%s2 + $0x1528] sm:$0xff]
      %v3982 = vld [vmem:[%s2 + $0x1530] sm:$0xff]
      %v3983 = vld [vmem:[%s2 + $0x1538] sm:$0xff]
      %v3984 = vld [vmem:[%s2 + $0x1540] sm:$0xff]
      %v3985 = vld [vmem:[%s2 + $0x1548] sm:$0xff]
      %v3986 = vld [vmem:[%s2 + $0x1550] sm:$0xff]
      %v3987 = vld [vmem:[%s2 + $0x1558] sm:$0xff]
      %v3988 = vld [vmem:[%s2 + $0x1560] sm:$0xff]
      %v3989 = vld [vmem:[%s2 + $0x1568] sm:$0xff]
      %v3990 = vld [vmem:[%s2 + $0x1570] sm:$0xff]
      %v3991 = vld [vmem:[%s2 + $0x1578] sm:$0xff]
      %v3992 = vld [vmem:[%s2 + $0x1580] sm:$0xff]
      %v3993 = vld [vmem:[%s2 + $0x1588] sm:$0xff]
      %v3994 = vld [vmem:[%s2 + $0x1590] sm:$0xff]
      %v3995 = vld [vmem:[%s2 + $0x1598] sm:$0xff]
      %v3996 = vld [vmem:[%s2 + $0x15a0] sm:$0xff]
      %v3997 = vld [vmem:[%s2 + $0x15a8] sm:$0xff]
      %v3998 = vld [vmem:[%s2 + $0x15b0] sm:$0xff]
      %v3999 = vld [vmem:[%s2 + $0x15b8] sm:$0xff]
      %v4000 = vld [vmem:[%s2 + $0x15c0] sm:$0xff]
      %v4001 = vld [vmem:[%s2 + $0x15c8] sm:$0xff]
      %v4002 = vld [vmem:[%s2 + $0x15d0] sm:$0xff]
      %v4003 = vld [vmem:[%s2 + $0x15d8] sm:$0xff]
      %v4004 = vld [vmem:[%s2 + $0x15e0] sm:$0xff]
      %v4005 = vld [vmem:[%s2 + $0x15e8] sm:$0xff]
      %v4006 = vld [vmem:[%s2 + $0x15f0] sm:$0xff]
      %v4007 = vld [vmem:[%s2 + $0x15f8] sm:$0xff]
      %v4008 = vld [vmem:[%s2 + $0x1600] sm:$0xff]
      %v4009 = vld [vmem:[%s2 + $0x1608] sm:$0xff]
      %v4010 = vld [vmem:[%s2 + $0x1610] sm:$0xff]
      %v4011 = vld [vmem:[%s2 + $0x1618] sm:$0xff]
      %v4012 = vld [vmem:[%s2 + $0x1620] sm:$0xff]
      %v4013 = vld [vmem:[%s2 + $0x1628] sm:$0xff]
      %v4014 = vld [vmem:[%s2 + $0x1630] sm:$0xff]
      %v4015 = vld [vmem:[%s2 + $0x1638] sm:$0xff]
      %v4016 = vld [vmem:[%s2 + $0x1640] sm:$0xff]
      %v4017 = vld [vmem:[%s2 + $0x1648] sm:$0xff]
      %v4018 = vld [vmem:[%s2 + $0x1650] sm:$0xff]
      %v4019 = vld [vmem:[%s2 + $0x1658] sm:$0xff]
      %v4020 = vld [vmem:[%s2 + $0x1660] sm:$0xff]
      %v4021 = vld [vmem:[%s2 + $0x1668] sm:$0xff]
      %v4022 = vld [vmem:[%s2 + $0x1670] sm:$0xff]
      %v4023 = vld [vmem:[%s2 + $0x1678] sm:$0xff]
      %v4024 = vld [vmem:[%s2 + $0x1680] sm:$0xff]
      %v4025 = vld [vmem:[%s2 + $0x1688] sm:$0xff]
      %v4026 = vld [vmem:[%s2 + $0x1690] sm:$0xff]
      %v4027 = vld [vmem:[%s2 + $0x1698] sm:$0xff]
      %v4028 = vld [vmem:[%s2 + $0x16a0] sm:$0xff]
      %v4029 = vld [vmem:[%s2 + $0x16a8] sm:$0xff]
      %v4030 = vld [vmem:[%s2 + $0x16b0] sm:$0xff]
      %v4031 = vld [vmem:[%s2 + $0x16b8] sm:$0xff]
      %v4032 = vld [vmem:[%s2 + $0x16c0] sm:$0xff]
      %v4033 = vld [vmem:[%s2 + $0x16c8] sm:$0xff]
      %v4034 = vld [vmem:[%s2 + $0x16d0] sm:$0xff]
      %v4035 = vld [vmem:[%s2 + $0x16d8] sm:$0xff]
      %v4036 = vld [vmem:[%s2 + $0x16e0] sm:$0xff]
      %v4037 = vld [vmem:[%s2 + $0x16e8] sm:$0xff]
      %v4038 = vld [vmem:[%s2 + $0x16f0] sm:$0xff]
      %v4039 = vld [vmem:[%s2 + $0x16f8] sm:$0xff]
      %v4040 = vld [vmem:[%s2 + $0x1700] sm:$0xff]
      %v4041 = vld [vmem:[%s2 + $0x1708] sm:$0xff]
      %v4042 = vld [vmem:[%s2 + $0x1710] sm:$0xff]
      %v4043 = vld [vmem:[%s2 + $0x1718] sm:$0xff]
      %v4044 = vld [vmem:[%s2 + $0x1720] sm:$0xff]
      %v4045 = vld [vmem:[%s2 + $0x1728] sm:$0xff]
      %v4046 = vld [vmem:[%s2 + $0x1730] sm:$0xff]
      %v4047 = vld [vmem:[%s2 + $0x1738] sm:$0xff]
      %v4048 = vld [vmem:[%s2 + $0x1740] sm:$0xff]
      %v4049 = vld [vmem:[%s2 + $0x1748] sm:$0xff]
      %v4050 = vld [vmem:[%s2 + $0x1750] sm:$0xff]
      %v4051 = vld [vmem:[%s2 + $0x1758] sm:$0xff]
      %v4052 = vld [vmem:[%s2 + $0x1760] sm:$0xff]
      %v4053 = vld [vmem:[%s2 + $0x1768] sm:$0xff]
      %v4054 = vld [vmem:[%s2 + $0x1770] sm:$0xff]
      %v4055 = vld [vmem:[%s2 + $0x1778] sm:$0xff]
      %v4056 = vld [vmem:[%s2 + $0x1780] sm:$0xff]
      %v4057 = vld [vmem:[%s2 + $0x1788] sm:$0xff]
      %v4058 = vld [vmem:[%s2 + $0x1790] sm:$0xff]
      %v4059 = vld [vmem:[%s2 + $0x1798] sm:$0xff]
      %v4060 = vld [vmem:[%s2 + $0x17a0] sm:$0xff]
      %v4061 = vld [vmem:[%s2 + $0x17a8] sm:$0xff]
      %v4062 = vld [vmem:[%s2 + $0x17b0] sm:$0xff]
      %v4063 = vld [vmem:[%s2 + $0x17b8] sm:$0xff]
      %v4064 = vld [vmem:[%s2 + $0x17c0] sm:$0xff]
      %v4065 = vld [vmem:[%s2 + $0x17c8] sm:$0xff]
      %v4066 = vld [vmem:[%s2 + $0x17d0] sm:$0xff]
      %v4067 = vld [vmem:[%s2 + $0x17d8] sm:$0xff]
      %v4068 = vld [vmem:[%s2 + $0x17e0] sm:$0xff]
      %v4069 = vld [vmem:[%s2 + $0x17e8] sm:$0xff]
      %v4070 = vld [vmem:[%s2 + $0x17f0] sm:$0xff]
      %v4071 = vld [vmem:[%s2 + $0x17f8] sm:$0xff]
      %v4072 = vld [vmem:[%s2 + $0x1800] sm:$0xff]
      %v4073 = vld [vmem:[%s2 + $0x1808] sm:$0xff]
      %v4074 = vld [vmem:[%s2 + $0x1810] sm:$0xff]
      %v4075 = vld [vmem:[%s2 + $0x1818] sm:$0xff]
      %v4076 = vld [vmem:[%s2 + $0x1820] sm:$0xff]
      %v4077 = vld [vmem:[%s2 + $0x1828] sm:$0xff]
      %v4078 = vld [vmem:[%s2 + $0x1830] sm:$0xff]
      %v4079 = vld [vmem:[%s2 + $0x1838] sm:$0xff]
      %v4080 = vld [vmem:[%s2 + $0x1840] sm:$0xff]
      %v4081 = vld [vmem:[%s2 + $0x1848] sm:$0xff]
      %v4082 = vld [vmem:[%s2 + $0x1850] sm:$0xff]
      %v4083 = vld [vmem:[%s2 + $0x1858] sm:$0xff]
      %v4084 = vld [vmem:[%s2 + $0x1860] sm:$0xff]
      %v4085 = vld [vmem:[%s2 + $0x1868] sm:$0xff]
      %v4086 = vld [vmem:[%s2 + $0x1870] sm:$0xff]
      %v4087 = vld [vmem:[%s2 + $0x1878] sm:$0xff]
      %v4088 = vld [vmem:[%s2 + $0x1880] sm:$0xff]
      %v4089 = vld [vmem:[%s2 + $0x1888] sm:$0xff]
      %v4090 = vld [vmem:[%s2 + $0x1890] sm:$0xff]
      %v4091 = vld [vmem:[%s2 + $0x1898] sm:$0xff]
      %v4092 = vld [vmem:[%s2 + $0x18a0] sm:$0xff]
      %v4093 = vld [vmem:[%s2 + $0x18a8] sm:$0xff]
      %v4094 = vld [vmem:[%s2 + $0x18b0] sm:$0xff]
      %v4095 = vld [vmem:[%s2 + $0x18b8] sm:$0xff]
      %v4096 = vld [vmem:[%s2 + $0x18c0] sm:$0xff]
      %v4097 = vld [vmem:[%s2 + $0x18c8] sm:$0xff]
      %v4098 = vld [vmem:[%s2 + $0x18d0] sm:$0xff]
      %v4099 = vld [vmem:[%s2 + $0x18d8] sm:$0xff]
      %v4100 = vld [vmem:[%s2 + $0x18e0] sm:$0xff]
      %v4101 = vld [vmem:[%s2 + $0x18e8] sm:$0xff]
      %v4102 = vld [vmem:[%s2 + $0x18f0] sm:$0xff]
      %v4103 = vld [vmem:[%s2 + $0x18f8] sm:$0xff]
      %v4104 = vld [vmem:[%s2 + $0x1900] sm:$0xff]
      %v4105 = vld [vmem:[%s2 + $0x1908] sm:$0xff]
      %v4106 = vld [vmem:[%s2 + $0x1910] sm:$0xff]
      %v4107 = vld [vmem:[%s2 + $0x1918] sm:$0xff]
      %v4108 = vld [vmem:[%s2 + $0x1920] sm:$0xff]
      %v4109 = vld [vmem:[%s2 + $0x1928] sm:$0xff]
      %v4110 = vld [vmem:[%s2 + $0x1930] sm:$0xff]
      %v4111 = vld [vmem:[%s2 + $0x1938] sm:$0xff]
      %v4112 = vld [vmem:[%s2 + $0x1940] sm:$0xff]
      %v4113 = vld [vmem:[%s2 + $0x1948] sm:$0xff]
      %v4114 = vld [vmem:[%s2 + $0x1950] sm:$0xff]
      %v4115 = vld [vmem:[%s2 + $0x1958] sm:$0xff]
      %v4116 = vld [vmem:[%s2 + $0x1960] sm:$0xff]
      %v4117 = vld [vmem:[%s2 + $0x1968] sm:$0xff]
      %v4118 = vld [vmem:[%s2 + $0x1970] sm:$0xff]
      %v4119 = vld [vmem:[%s2 + $0x1978] sm:$0xff]
      %v4120 = vld [vmem:[%s2 + $0x1980] sm:$0xff]
      %v4121 = vld [vmem:[%s2 + $0x1988] sm:$0xff]
      %v4122 = vld [vmem:[%s2 + $0x1990] sm:$0xff]
      %v4123 = vld [vmem:[%s2 + $0x1998] sm:$0xff]
      %v4124 = vld [vmem:[%s2 + $0x19a0] sm:$0xff]
      %v4125 = vld [vmem:[%s2 + $0x19a8] sm:$0xff]
      %v4126 = vld [vmem:[%s2 + $0x19b0] sm:$0xff]
      %v4127 = vld [vmem:[%s2 + $0x19b8] sm:$0xff]
      %v4128 = vld [vmem:[%s2 + $0x19c0] sm:$0xff]
      %v4129 = vld [vmem:[%s2 + $0x19c8] sm:$0xff]
      %v4130 = vld [vmem:[%s2 + $0x19d0] sm:$0xff]
      %v4131 = vld [vmem:[%s2 + $0x19d8] sm:$0xff]
      %v4132 = vld [vmem:[%s2 + $0x19e0] sm:$0xff]
      %v4133 = vld [vmem:[%s2 + $0x19e8] sm:$0xff]
      %v4134 = vld [vmem:[%s2 + $0x19f0] sm:$0xff]
      %v4135 = vld [vmem:[%s2 + $0x19f8] sm:$0xff]
      %v4136 = vld [vmem:[%s2 + $0x1a00] sm:$0xff]
      %v4137 = vld [vmem:[%s2 + $0x1a08] sm:$0xff]
      %v4138 = vld [vmem:[%s2 + $0x1a10] sm:$0xff]
      %v4139 = vld [vmem:[%s2 + $0x1a18] sm:$0xff]
      %v4140 = vld [vmem:[%s2 + $0x1a20] sm:$0xff]
      %v4141 = vld [vmem:[%s2 + $0x1a28] sm:$0xff]
      %v4142 = vld [vmem:[%s2 + $0x1a30] sm:$0xff]
      %v4143 = vld [vmem:[%s2 + $0x1a38] sm:$0xff]
      %v4144 = vld [vmem:[%s2 + $0x1a40] sm:$0xff]
      %v4145 = vld [vmem:[%s2 + $0x1a48] sm:$0xff]
      %v4146 = vld [vmem:[%s2 + $0x1a50] sm:$0xff]
      %v4147 = vld [vmem:[%s2 + $0x1a58] sm:$0xff]
      %v4148 = vld [vmem:[%s2 + $0x1a60] sm:$0xff]
      %v4149 = vld [vmem:[%s2 + $0x1a68] sm:$0xff]
      %v4150 = vld [vmem:[%s2 + $0x1a70] sm:$0xff]
      %v4151 = vld [vmem:[%s2 + $0x1a78] sm:$0xff]
      %v4152 = vld [vmem:[%s2 + $0x1a80] sm:$0xff]
      %v4153 = vld [vmem:[%s2 + $0x1a88] sm:$0xff]
      %v4154 = vld [vmem:[%s2 + $0x1a90] sm:$0xff]
      %v4155 = vld [vmem:[%s2 + $0x1a98] sm:$0xff]
      %v4156 = vld [vmem:[%s2 + $0x1aa0] sm:$0xff]
      %v4157 = vld [vmem:[%s2 + $0x1aa8] sm:$0xff]
      %v4158 = vld [vmem:[%s2 + $0x1ab0] sm:$0xff]
      %v4159 = vld [vmem:[%s2 + $0x1ab8] sm:$0xff]
      %v4160 = vld [vmem:[%s2 + $0x1ac0] sm:$0xff]
      %v4161 = vld [vmem:[%s2 + $0x1ac8] sm:$0xff]
      %v4162 = vld [vmem:[%s2 + $0x1ad0] sm:$0xff]
      %v4163 = vld [vmem:[%s2 + $0x1ad8] sm:$0xff]
      %v4164 = vld [vmem:[%s2 + $0x1ae0] sm:$0xff]
      %v4165 = vld [vmem:[%s2 + $0x1ae8] sm:$0xff]
      %v4166 = vld [vmem:[%s2 + $0x1af0] sm:$0xff]
      %v4167 = vld [vmem:[%s2 + $0x1af8] sm:$0xff]
      %v4168 = vld [vmem:[%s2 + $0x1b00] sm:$0xff]
      %v4169 = vld [vmem:[%s2 + $0x1b08] sm:$0xff]
      %v4170 = vld [vmem:[%s2 + $0x1b10] sm:$0xff]
      %v4171 = vld [vmem:[%s2 + $0x1b18] sm:$0xff]
      %v4172 = vld [vmem:[%s2 + $0x1b20] sm:$0xff]
      %v4173 = vld [vmem:[%s2 + $0x1b28] sm:$0xff]
      %v4174 = vld [vmem:[%s2 + $0x1b30] sm:$0xff]
      %v4175 = vld [vmem:[%s2 + $0x1b38] sm:$0xff]
      %v4176 = vld [vmem:[%s2 + $0x1b40] sm:$0xff]
      %v4177 = vld [vmem:[%s2 + $0x1b48] sm:$0xff]
      %v4178 = vld [vmem:[%s2 + $0x1b50] sm:$0xff]
      %v4179 = vld [vmem:[%s2 + $0x1b58] sm:$0xff]
      %v4180 = vld [vmem:[%s2 + $0x1b60] sm:$0xff]
      %v4181 = vld [vmem:[%s2 + $0x1b68] sm:$0xff]
      %v4182 = vld [vmem:[%s2 + $0x1b70] sm:$0xff]
      %v4183 = vld [vmem:[%s2 + $0x1b78] sm:$0xff]
      %v4184 = vld [vmem:[%s2 + $0x1b80] sm:$0xff]
      %v4185 = vld [vmem:[%s2 + $0x1b88] sm:$0xff]
      %v4186 = vld [vmem:[%s2 + $0x1b90] sm:$0xff]
      %v4187 = vld [vmem:[%s2 + $0x1b98] sm:$0xff]
      %v4188 = vld [vmem:[%s2 + $0x1ba0] sm:$0xff]
      %v4189 = vld [vmem:[%s2 + $0x1ba8] sm:$0xff]
      %v4190 = vld [vmem:[%s2 + $0x1bb0] sm:$0xff]
      %v4191 = vld [vmem:[%s2 + $0x1bb8] sm:$0xff]
      %v4192 = vld [vmem:[%s2 + $0x1bc0] sm:$0xff]
      %v4193 = vld [vmem:[%s2 + $0x1bc8] sm:$0xff]
      %v4194 = vld [vmem:[%s2 + $0x1bd0] sm:$0xff]
      %v4195 = vld [vmem:[%s2 + $0x1bd8] sm:$0xff]
      %v4196 = vld [vmem:[%s2 + $0x1be0] sm:$0xff]
      %v4197 = vld [vmem:[%s2 + $0x1be8] sm:$0xff]
      %v4198 = vld [vmem:[%s2 + $0x1bf0] sm:$0xff]
      %v4199 = vld [vmem:[%s2 + $0x1bf8] sm:$0xff]
      %v4200 = vld [vmem:[%s2 + $0x1c00] sm:$0xff]
      %v4201 = vld [vmem:[%s2 + $0x1c08] sm:$0xff]
      %v4202 = vld [vmem:[%s2 + $0x1c10] sm:$0xff]
      %v4203 = vld [vmem:[%s2 + $0x1c18] sm:$0xff]
      %v4204 = vld [vmem:[%s2 + $0x1c20] sm:$0xff]
      %v4205 = vld [vmem:[%s2 + $0x1c28] sm:$0xff]
      %v4206 = vld [vmem:[%s2 + $0x1c30] sm:$0xff]
      %v4207 = vld [vmem:[%s2 + $0x1c38] sm:$0xff]
      %v4208 = vld [vmem:[%s2 + $0x1c40] sm:$0xff]
      %v4209 = vld [vmem:[%s2 + $0x1c48] sm:$0xff]
      %v4210 = vld [vmem:[%s2 + $0x1c50] sm:$0xff]
      %v4211 = vld [vmem:[%s2 + $0x1c58] sm:$0xff]
      %v4212 = vld [vmem:[%s2 + $0x1c60] sm:$0xff]
      %v4213 = vld [vmem:[%s2 + $0x1c68] sm:$0xff]
      %v4214 = vld [vmem:[%s2 + $0x1c70] sm:$0xff]
      %v4215 = vld [vmem:[%s2 + $0x1c78] sm:$0xff]
      %v4216 = vld [vmem:[%s2 + $0x1c80] sm:$0xff]
      %v4217 = vld [vmem:[%s2 + $0x1c88] sm:$0xff]
      %v4218 = vld [vmem:[%s2 + $0x1c90] sm:$0xff]
      %v4219 = vld [vmem:[%s2 + $0x1c98] sm:$0xff]
      %v4220 = vld [vmem:[%s2 + $0x1ca0] sm:$0xff]
      %v4221 = vld [vmem:[%s2 + $0x1ca8] sm:$0xff]
      %v4222 = vld [vmem:[%s2 + $0x1cb0] sm:$0xff]
      %v4223 = vld [vmem:[%s2 + $0x1cb8] sm:$0xff]
      %v4224 = vld [vmem:[%s2 + $0x1cc0] sm:$0xff]
      %v4225 = vld [vmem:[%s2 + $0x1cc8] sm:$0xff]
      %v4226 = vld [vmem:[%s2 + $0x1cd0] sm:$0xff]
      %v4227 = vld [vmem:[%s2 + $0x1cd8] sm:$0xff]
      %v4228 = vld [vmem:[%s2 + $0x1ce0] sm:$0xff]
      %v4229 = vld [vmem:[%s2 + $0x1ce8] sm:$0xff]
      %v4230 = vld [vmem:[%s2 + $0x1cf0] sm:$0xff]
      %v4231 = vld [vmem:[%s2 + $0x1cf8] sm:$0xff]
      %v4232 = vld [vmem:[%s2 + $0x1d00] sm:$0xff]
      %v4233 = vld [vmem:[%s2 + $0x1d08] sm:$0xff]
      %v4234 = vld [vmem:[%s2 + $0x1d10] sm:$0xff]
      %v4235 = vld [vmem:[%s2 + $0x1d18] sm:$0xff]
      %v4236 = vld [vmem:[%s2 + $0x1d20] sm:$0xff]
      %v4237 = vld [vmem:[%s2 + $0x1d28] sm:$0xff]
      %v4238 = vld [vmem:[%s2 + $0x1d30] sm:$0xff]
      %v4239 = vld [vmem:[%s2 + $0x1d38] sm:$0xff]
      %v4240 = vld [vmem:[%s2 + $0x1d40] sm:$0xff]
      %v4241 = vld [vmem:[%s2 + $0x1d48] sm:$0xff]
      %v4242 = vld [vmem:[%s2 + $0x1d50] sm:$0xff]
      %v4243 = vld [vmem:[%s2 + $0x1d58] sm:$0xff]
      %v4244 = vld [vmem:[%s2 + $0x1d60] sm:$0xff]
      %v4245 = vld [vmem:[%s2 + $0x1d68] sm:$0xff]
      %v4246 = vld [vmem:[%s2 + $0x1d70] sm:$0xff]
      %v4247 = vld [vmem:[%s2 + $0x1d78] sm:$0xff]
      %v4248 = vld [vmem:[%s2 + $0x1d80] sm:$0xff]
      %v4249 = vld [vmem:[%s2 + $0x1d88] sm:$0xff]
      %v4250 = vld [vmem:[%s2 + $0x1d90] sm:$0xff]
      %v4251 = vld [vmem:[%s2 + $0x1d98] sm:$0xff]
      %v4252 = vld [vmem:[%s2 + $0x1da0] sm:$0xff]
      %v4253 = vld [vmem:[%s2 + $0x1da8] sm:$0xff]
      %v4254 = vld [vmem:[%s2 + $0x1db0] sm:$0xff]
      %v4255 = vld [vmem:[%s2 + $0x1db8] sm:$0xff]
      %v4256 = vld [vmem:[%s2 + $0x1dc0] sm:$0xff]
      %v4257 = vld [vmem:[%s2 + $0x1dc8] sm:$0xff]
      %v4258 = vld [vmem:[%s2 + $0x1dd0] sm:$0xff]
      %v4259 = vld [vmem:[%s2 + $0x1dd8] sm:$0xff]
      %v4260 = vld [vmem:[%s2 + $0x1de0] sm:$0xff]
      %v4261 = vld [vmem:[%s2 + $0x1de8] sm:$0xff]
      %v4262 = vld [vmem:[%s2 + $0x1df0] sm:$0xff]
      %v4263 = vld [vmem:[%s2 + $0x1df8] sm:$0xff]
      %v4264 = vld [vmem:[%s2 + $0x1e00] sm:$0xff]
      %v4265 = vld [vmem:[%s2 + $0x1e08] sm:$0xff]
      %v4266 = vld [vmem:[%s2 + $0x1e10] sm:$0xff]
      %v4267 = vld [vmem:[%s2 + $0x1e18] sm:$0xff]
      %v4268 = vld [vmem:[%s2 + $0x1e20] sm:$0xff]
      %v4269 = vld [vmem:[%s2 + $0x1e28] sm:$0xff]
      %v4270 = vld [vmem:[%s2 + $0x1e30] sm:$0xff]
      %v4271 = vld [vmem:[%s2 + $0x1e38] sm:$0xff]
      %v4272 = vld [vmem:[%s2 + $0x1e40] sm:$0xff]
      %v4273 = vld [vmem:[%s2 + $0x1e48] sm:$0xff]
      %v4274 = vld [vmem:[%s2 + $0x1e50] sm:$0xff]
      %v4275 = vld [vmem:[%s2 + $0x1e58] sm:$0xff]
      %v4276 = vld [vmem:[%s2 + $0x1e60] sm:$0xff]
      %v4277 = vld [vmem:[%s2 + $0x1e68] sm:$0xff]
      %v4278 = vld [vmem:[%s2 + $0x1e70] sm:$0xff]
      %v4279 = vld [vmem:[%s2 + $0x1e78] sm:$0xff]
      %v4280 = vld [vmem:[%s2 + $0x1e80] sm:$0xff]
      %v4281 = vld [vmem:[%s2 + $0x1e88] sm:$0xff]
      %v4282 = vld [vmem:[%s2 + $0x1e90] sm:$0xff]
      %v4283 = vld [vmem:[%s2 + $0x1e98] sm:$0xff]
      %v4284 = vld [vmem:[%s2 + $0x1ea0] sm:$0xff]
      %v4285 = vld [vmem:[%s2 + $0x1ea8] sm:$0xff]
      %v4286 = vld [vmem:[%s2 + $0x1eb0] sm:$0xff]
      %v4287 = vld [vmem:[%s2 + $0x1eb8] sm:$0xff]
      %v4288 = vld [vmem:[%s2 + $0x1ec0] sm:$0xff]
      %v4289 = vld [vmem:[%s2 + $0x1ec8] sm:$0xff]
      %v4290 = vld [vmem:[%s2 + $0x1ed0] sm:$0xff]
      %v4291 = vld [vmem:[%s2 + $0x1ed8] sm:$0xff]
      %v4292 = vld [vmem:[%s2 + $0x1ee0] sm:$0xff]
      %v4293 = vld [vmem:[%s2 + $0x1ee8] sm:$0xff]
      %v4294 = vld [vmem:[%s2 + $0x1ef0] sm:$0xff]
      %v4295 = vld [vmem:[%s2 + $0x1ef8] sm:$0xff]
      %v4296 = vld [vmem:[%s2 + $0x1f00] sm:$0xff]
      %v4297 = vld [vmem:[%s2 + $0x1f08] sm:$0xff]
      %v4298 = vld [vmem:[%s2 + $0x1f10] sm:$0xff]
      %v4299 = vld [vmem:[%s2 + $0x1f18] sm:$0xff]
      %v4300 = vld [vmem:[%s2 + $0x1f20] sm:$0xff]
      %v4301 = vld [vmem:[%s2 + $0x1f28] sm:$0xff]
      %v4302 = vld [vmem:[%s2 + $0x1f30] sm:$0xff]
      %v4303 = vld [vmem:[%s2 + $0x1f38] sm:$0xff]
      %v4304 = vld [vmem:[%s2 + $0x1f40] sm:$0xff]
      %v4305 = vld [vmem:[%s2 + $0x1f48] sm:$0xff]
      %v4306 = vld [vmem:[%s2 + $0x1f50] sm:$0xff]
      %v4307 = vld [vmem:[%s2 + $0x1f58] sm:$0xff]
      %v4308 = vld [vmem:[%s2 + $0x1f60] sm:$0xff]
      %v4309 = vld [vmem:[%s2 + $0x1f68] sm:$0xff]
      %v4310 = vld [vmem:[%s2 + $0x1f70] sm:$0xff]
      %v4311 = vld [vmem:[%s2 + $0x1f78] sm:$0xff]
      %v4312 = vld [vmem:[%s2 + $0x1f80] sm:$0xff]
      %v4313 = vld [vmem:[%s2 + $0x1f88] sm:$0xff]
      %v4314 = vld [vmem:[%s2 + $0x1f90] sm:$0xff]
      %v4315 = vld [vmem:[%s2 + $0x1f98] sm:$0xff]
      %v4316 = vld [vmem:[%s2 + $0x1fa0] sm:$0xff]
      %v4317 = vld [vmem:[%s2 + $0x1fa8] sm:$0xff]
      %v4318 = vld [vmem:[%s2 + $0x1fb0] sm:$0xff]
      %v4319 = vld [vmem:[%s2 + $0x1fb8] sm:$0xff]
      %v4320 = vld [vmem:[%s2 + $0x1fc0] sm:$0xff]
      %v4321 = vld [vmem:[%s2 + $0x1fc8] sm:$0xff]
      %v4322 = vld [vmem:[%s2 + $0x1fd0] sm:$0xff]
      %v4323 = vld [vmem:[%s2 + $0x1fd8] sm:$0xff]
      %v4324 = vld [vmem:[%s2 + $0x1fe0] sm:$0xff]
      %v4325 = vld [vmem:[%s2 + $0x1fe8] sm:$0xff]
      %v4326 = vld [vmem:[%s2 + $0x1ff0] sm:$0xff]
      %v4327 = vld [vmem:[%s2 + $0x1ff8] sm:$0xff]
      %v5352 = vunpack.c.l.b16 %v3304
      %v5353 = vunpack.c.h.b16 %v3304
      %v5354 = vunpack.c.l.b16 %v3305
      %v5355 = vunpack.c.h.b16 %v3305
      %v5356 = vunpack.c.l.b16 %v3306
      %v5357 = vunpack.c.h.b16 %v3306
      %v5358 = vunpack.c.l.b16 %v3307
      %v5359 = vunpack.c.h.b16 %v3307
      %v5360 = vunpack.c.l.b16 %v3308
      %v5361 = vunpack.c.h.b16 %v3308
      %v5362 = vunpack.c.l.b16 %v3309
      %v5363 = vunpack.c.h.b16 %v3309
      %v5364 = vunpack.c.l.b16 %v3310
      %v5365 = vunpack.c.h.b16 %v3310
      %v5366 = vunpack.c.l.b16 %v3311
      %v5367 = vunpack.c.h.b16 %v3311
      %v5368 = vunpack.c.l.b16 %v3312
      %v5369 = vunpack.c.h.b16 %v3312
      %v5370 = vunpack.c.l.b16 %v3313
      %v5371 = vunpack.c.h.b16 %v3313
      %v5372 = vunpack.c.l.b16 %v3314
      %v5373 = vunpack.c.h.b16 %v3314
      %v5374 = vunpack.c.l.b16 %v3315
      %v5375 = vunpack.c.h.b16 %v3315
      %v5376 = vunpack.c.l.b16 %v3316
      %v5377 = vunpack.c.h.b16 %v3316
      %v5378 = vunpack.c.l.b16 %v3317
      %v5379 = vunpack.c.h.b16 %v3317
      %v5380 = vunpack.c.l.b16 %v3318
      %v5381 = vunpack.c.h.b16 %v3318
      %v5382 = vunpack.c.l.b16 %v3319
      %v5383 = vunpack.c.h.b16 %v3319
      %v5384 = vunpack.c.l.b16 %v3320
      %v5385 = vunpack.c.h.b16 %v3320
      %v5386 = vunpack.c.l.b16 %v3321
      %v5387 = vunpack.c.h.b16 %v3321
      %v5388 = vunpack.c.l.b16 %v3322
      %v5389 = vunpack.c.h.b16 %v3322
      %v5390 = vunpack.c.l.b16 %v3323
      %v5391 = vunpack.c.h.b16 %v3323
      %v5392 = vunpack.c.l.b16 %v3324
      %v5393 = vunpack.c.h.b16 %v3324
      %v5394 = vunpack.c.l.b16 %v3325
      %v5395 = vunpack.c.h.b16 %v3325
      %v5396 = vunpack.c.l.b16 %v3326
      %v5397 = vunpack.c.h.b16 %v3326
      %v5398 = vunpack.c.l.b16 %v3327
      %v5399 = vunpack.c.h.b16 %v3327
      %v5400 = vunpack.c.l.b16 %v3328
      %v5401 = vunpack.c.h.b16 %v3328
      %v5402 = vunpack.c.l.b16 %v3329
      %v5403 = vunpack.c.h.b16 %v3329
      %v5404 = vunpack.c.l.b16 %v3330
      %v5405 = vunpack.c.h.b16 %v3330
      %v5406 = vunpack.c.l.b16 %v3331
      %v5407 = vunpack.c.h.b16 %v3331
      %v5408 = vunpack.c.l.b16 %v3332
      %v5409 = vunpack.c.h.b16 %v3332
      %v5410 = vunpack.c.l.b16 %v3333
      %v5411 = vunpack.c.h.b16 %v3333
      %v5412 = vunpack.c.l.b16 %v3334
      %v5413 = vunpack.c.h.b16 %v3334
      %v5414 = vunpack.c.l.b16 %v3335
      %v5415 = vunpack.c.h.b16 %v3335
      %v5416 = vunpack.c.l.b16 %v3336
      %v5417 = vunpack.c.h.b16 %v3336
      %v5418 = vunpack.c.l.b16 %v3337
      %v5419 = vunpack.c.h.b16 %v3337
      %v5420 = vunpack.c.l.b16 %v3338
      %v5421 = vunpack.c.h.b16 %v3338
      %v5422 = vunpack.c.l.b16 %v3339
      %v5423 = vunpack.c.h.b16 %v3339
      %v5424 = vunpack.c.l.b16 %v3340
      %v5425 = vunpack.c.h.b16 %v3340
      %v5426 = vunpack.c.l.b16 %v3341
      %v5427 = vunpack.c.h.b16 %v3341
      %v5428 = vunpack.c.l.b16 %v3342
      %v5429 = vunpack.c.h.b16 %v3342
      %v5430 = vunpack.c.l.b16 %v3343
      %v5431 = vunpack.c.h.b16 %v3343
      %v5432 = vunpack.c.l.b16 %v3344
      %v5433 = vunpack.c.h.b16 %v3344
      %v5434 = vunpack.c.l.b16 %v3345
      %v5435 = vunpack.c.h.b16 %v3345
      %v5436 = vunpack.c.l.b16 %v3346
      %v5437 = vunpack.c.h.b16 %v3346
      %v5438 = vunpack.c.l.b16 %v3347
      %v5439 = vunpack.c.h.b16 %v3347
      %v5440 = vunpack.c.l.b16 %v3348
      %v5441 = vunpack.c.h.b16 %v3348
      %v5442 = vunpack.c.l.b16 %v3349
      %v5443 = vunpack.c.h.b16 %v3349
      %v5444 = vunpack.c.l.b16 %v3350
      %v5445 = vunpack.c.h.b16 %v3350
      %v5446 = vunpack.c.l.b16 %v3351
      %v5447 = vunpack.c.h.b16 %v3351
      %v5448 = vunpack.c.l.b16 %v3352
      %v5449 = vunpack.c.h.b16 %v3352
      %v5450 = vunpack.c.l.b16 %v3353
      %v5451 = vunpack.c.h.b16 %v3353
      %v5452 = vunpack.c.l.b16 %v3354
      %v5453 = vunpack.c.h.b16 %v3354
      %v5454 = vunpack.c.l.b16 %v3355
      %v5455 = vunpack.c.h.b16 %v3355
      %v5456 = vunpack.c.l.b16 %v3356
      %v5457 = vunpack.c.h.b16 %v3356
      %v5458 = vunpack.c.l.b16 %v3357
      %v5459 = vunpack.c.h.b16 %v3357
      %v5460 = vunpack.c.l.b16 %v3358
      %v5461 = vunpack.c.h.b16 %v3358
      %v5462 = vunpack.c.l.b16 %v3359
      %v5463 = vunpack.c.h.b16 %v3359
      %v5464 = vunpack.c.l.b16 %v3360
      %v5465 = vunpack.c.h.b16 %v3360
      %v5466 = vunpack.c.l.b16 %v3361
      %v5467 = vunpack.c.h.b16 %v3361
      %v5468 = vunpack.c.l.b16 %v3362
      %v5469 = vunpack.c.h.b16 %v3362
      %v5470 = vunpack.c.l.b16 %v3363
      %v5471 = vunpack.c.h.b16 %v3363
      %v5472 = vunpack.c.l.b16 %v3364
      %v5473 = vunpack.c.h.b16 %v3364
      %v5474 = vunpack.c.l.b16 %v3365
      %v5475 = vunpack.c.h.b16 %v3365
      %v5476 = vunpack.c.l.b16 %v3366
      %v5477 = vunpack.c.h.b16 %v3366
      %v5478 = vunpack.c.l.b16 %v3367
      %v5479 = vunpack.c.h.b16 %v3367
      %v5480 = vunpack.c.l.b16 %v3368
      %v5481 = vunpack.c.h.b16 %v3368
      %v5482 = vunpack.c.l.b16 %v3369
      %v5483 = vunpack.c.h.b16 %v3369
      %v5484 = vunpack.c.l.b16 %v3370
      %v5485 = vunpack.c.h.b16 %v3370
      %v5486 = vunpack.c.l.b16 %v3371
      %v5487 = vunpack.c.h.b16 %v3371
      %v5488 = vunpack.c.l.b16 %v3372
      %v5489 = vunpack.c.h.b16 %v3372
      %v5490 = vunpack.c.l.b16 %v3373
      %v5491 = vunpack.c.h.b16 %v3373
      %v5492 = vunpack.c.l.b16 %v3374
      %v5493 = vunpack.c.h.b16 %v3374
      %v5494 = vunpack.c.l.b16 %v3375
      %v5495 = vunpack.c.h.b16 %v3375
      %v5496 = vunpack.c.l.b16 %v3376
      %v5497 = vunpack.c.h.b16 %v3376
      %v5498 = vunpack.c.l.b16 %v3377
      %v5499 = vunpack.c.h.b16 %v3377
      %v5500 = vunpack.c.l.b16 %v3378
      %v5501 = vunpack.c.h.b16 %v3378
      %v5502 = vunpack.c.l.b16 %v3379
      %v5503 = vunpack.c.h.b16 %v3379
      %v5504 = vunpack.c.l.b16 %v3380
      %v5505 = vunpack.c.h.b16 %v3380
      %v5506 = vunpack.c.l.b16 %v3381
      %v5507 = vunpack.c.h.b16 %v3381
      %v5508 = vunpack.c.l.b16 %v3382
      %v5509 = vunpack.c.h.b16 %v3382
      %v5510 = vunpack.c.l.b16 %v3383
      %v5511 = vunpack.c.h.b16 %v3383
      %v5512 = vunpack.c.l.b16 %v3384
      %v5513 = vunpack.c.h.b16 %v3384
      %v5514 = vunpack.c.l.b16 %v3385
      %v5515 = vunpack.c.h.b16 %v3385
      %v5516 = vunpack.c.l.b16 %v3386
      %v5517 = vunpack.c.h.b16 %v3386
      %v5518 = vunpack.c.l.b16 %v3387
      %v5519 = vunpack.c.h.b16 %v3387
      %v5520 = vunpack.c.l.b16 %v3388
      %v5521 = vunpack.c.h.b16 %v3388
      %v5522 = vunpack.c.l.b16 %v3389
      %v5523 = vunpack.c.h.b16 %v3389
      %v5524 = vunpack.c.l.b16 %v3390
      %v5525 = vunpack.c.h.b16 %v3390
      %v5526 = vunpack.c.l.b16 %v3391
      %v5527 = vunpack.c.h.b16 %v3391
      %v5528 = vunpack.c.l.b16 %v3392
      %v5529 = vunpack.c.h.b16 %v3392
      %v5530 = vunpack.c.l.b16 %v3393
      %v5531 = vunpack.c.h.b16 %v3393
      %v5532 = vunpack.c.l.b16 %v3394
      %v5533 = vunpack.c.h.b16 %v3394
      %v5534 = vunpack.c.l.b16 %v3395
      %v5535 = vunpack.c.h.b16 %v3395
      %v5536 = vunpack.c.l.b16 %v3396
      %v5537 = vunpack.c.h.b16 %v3396
      %v5538 = vunpack.c.l.b16 %v3397
      %v5539 = vunpack.c.h.b16 %v3397
      %v5540 = vunpack.c.l.b16 %v3398
      %v5541 = vunpack.c.h.b16 %v3398
      %v5542 = vunpack.c.l.b16 %v3399
      %v5543 = vunpack.c.h.b16 %v3399
      %v5544 = vunpack.c.l.b16 %v3400
      %v5545 = vunpack.c.h.b16 %v3400
      %v5546 = vunpack.c.l.b16 %v3401
      %v5547 = vunpack.c.h.b16 %v3401
      %v5548 = vunpack.c.l.b16 %v3402
      %v5549 = vunpack.c.h.b16 %v3402
      %v5550 = vunpack.c.l.b16 %v3403
      %v5551 = vunpack.c.h.b16 %v3403
      %v5552 = vunpack.c.l.b16 %v3404
      %v5553 = vunpack.c.h.b16 %v3404
      %v5554 = vunpack.c.l.b16 %v3405
      %v5555 = vunpack.c.h.b16 %v3405
      %v5556 = vunpack.c.l.b16 %v3406
      %v5557 = vunpack.c.h.b16 %v3406
      %v5558 = vunpack.c.l.b16 %v3407
      %v5559 = vunpack.c.h.b16 %v3407
      %v5560 = vunpack.c.l.b16 %v3408
      %v5561 = vunpack.c.h.b16 %v3408
      %v5562 = vunpack.c.l.b16 %v3409
      %v5563 = vunpack.c.h.b16 %v3409
      %v5564 = vunpack.c.l.b16 %v3410
      %v5565 = vunpack.c.h.b16 %v3410
      %v5566 = vunpack.c.l.b16 %v3411
      %v5567 = vunpack.c.h.b16 %v3411
      %v5568 = vunpack.c.l.b16 %v3412
      %v5569 = vunpack.c.h.b16 %v3412
      %v5570 = vunpack.c.l.b16 %v3413
      %v5571 = vunpack.c.h.b16 %v3413
      %v5572 = vunpack.c.l.b16 %v3414
      %v5573 = vunpack.c.h.b16 %v3414
      %v5574 = vunpack.c.l.b16 %v3415
      %v5575 = vunpack.c.h.b16 %v3415
      %v5576 = vunpack.c.l.b16 %v3416
      %v5577 = vunpack.c.h.b16 %v3416
      %v5578 = vunpack.c.l.b16 %v3417
      %v5579 = vunpack.c.h.b16 %v3417
      %v5580 = vunpack.c.l.b16 %v3418
      %v5581 = vunpack.c.h.b16 %v3418
      %v5582 = vunpack.c.l.b16 %v3419
      %v5583 = vunpack.c.h.b16 %v3419
      %v5584 = vunpack.c.l.b16 %v3420
      %v5585 = vunpack.c.h.b16 %v3420
      %v5586 = vunpack.c.l.b16 %v3421
      %v5587 = vunpack.c.h.b16 %v3421
      %v5588 = vunpack.c.l.b16 %v3422
      %v5589 = vunpack.c.h.b16 %v3422
      %v5590 = vunpack.c.l.b16 %v3423
      %v5591 = vunpack.c.h.b16 %v3423
      %v5592 = vunpack.c.l.b16 %v3424
      %v5593 = vunpack.c.h.b16 %v3424
      %v5594 = vunpack.c.l.b16 %v3425
      %v5595 = vunpack.c.h.b16 %v3425
      %v5596 = vunpack.c.l.b16 %v3426
      %v5597 = vunpack.c.h.b16 %v3426
      %v5598 = vunpack.c.l.b16 %v3427
      %v5599 = vunpack.c.h.b16 %v3427
      %v5600 = vunpack.c.l.b16 %v3428
      %v5601 = vunpack.c.h.b16 %v3428
      %v5602 = vunpack.c.l.b16 %v3429
      %v5603 = vunpack.c.h.b16 %v3429
      %v5604 = vunpack.c.l.b16 %v3430
      %v5605 = vunpack.c.h.b16 %v3430
      %v5606 = vunpack.c.l.b16 %v3431
      %v5607 = vunpack.c.h.b16 %v3431
      %v5608 = vunpack.c.l.b16 %v3432
      %v5609 = vunpack.c.h.b16 %v3432
      %v5610 = vunpack.c.l.b16 %v3433
      %v5611 = vunpack.c.h.b16 %v3433
      %v5612 = vunpack.c.l.b16 %v3434
      %v5613 = vunpack.c.h.b16 %v3434
      %v5614 = vunpack.c.l.b16 %v3435
      %v5615 = vunpack.c.h.b16 %v3435
      %v5616 = vunpack.c.l.b16 %v3436
      %v5617 = vunpack.c.h.b16 %v3436
      %v5618 = vunpack.c.l.b16 %v3437
      %v5619 = vunpack.c.h.b16 %v3437
      %v5620 = vunpack.c.l.b16 %v3438
      %v5621 = vunpack.c.h.b16 %v3438
      %v5622 = vunpack.c.l.b16 %v3439
      %v5623 = vunpack.c.h.b16 %v3439
      %v5624 = vunpack.c.l.b16 %v3440
      %v5625 = vunpack.c.h.b16 %v3440
      %v5626 = vunpack.c.l.b16 %v3441
      %v5627 = vunpack.c.h.b16 %v3441
      %v5628 = vunpack.c.l.b16 %v3442
      %v5629 = vunpack.c.h.b16 %v3442
      %v5630 = vunpack.c.l.b16 %v3443
      %v5631 = vunpack.c.h.b16 %v3443
      %v5632 = vunpack.c.l.b16 %v3444
      %v5633 = vunpack.c.h.b16 %v3444
      %v5634 = vunpack.c.l.b16 %v3445
      %v5635 = vunpack.c.h.b16 %v3445
      %v5636 = vunpack.c.l.b16 %v3446
      %v5637 = vunpack.c.h.b16 %v3446
      %v5638 = vunpack.c.l.b16 %v3447
      %v5639 = vunpack.c.h.b16 %v3447
      %v5640 = vunpack.c.l.b16 %v3448
      %v5641 = vunpack.c.h.b16 %v3448
      %v5642 = vunpack.c.l.b16 %v3449
      %v5643 = vunpack.c.h.b16 %v3449
      %v5644 = vunpack.c.l.b16 %v3450
      %v5645 = vunpack.c.h.b16 %v3450
      %v5646 = vunpack.c.l.b16 %v3451
      %v5647 = vunpack.c.h.b16 %v3451
      %v5648 = vunpack.c.l.b16 %v3452
      %v5649 = vunpack.c.h.b16 %v3452
      %v5650 = vunpack.c.l.b16 %v3453
      %v5651 = vunpack.c.h.b16 %v3453
      %v5652 = vunpack.c.l.b16 %v3454
      %v5653 = vunpack.c.h.b16 %v3454
      %v5654 = vunpack.c.l.b16 %v3455
      %v5655 = vunpack.c.h.b16 %v3455
      %v5656 = vunpack.c.l.b16 %v3456
      %v5657 = vunpack.c.h.b16 %v3456
      %v5658 = vunpack.c.l.b16 %v3457
      %v5659 = vunpack.c.h.b16 %v3457
      %v5660 = vunpack.c.l.b16 %v3458
      %v5661 = vunpack.c.h.b16 %v3458
      %v5662 = vunpack.c.l.b16 %v3459
      %v5663 = vunpack.c.h.b16 %v3459
      %v5664 = vunpack.c.l.b16 %v3460
      %v5665 = vunpack.c.h.b16 %v3460
      %v5666 = vunpack.c.l.b16 %v3461
      %v5667 = vunpack.c.h.b16 %v3461
      %v5668 = vunpack.c.l.b16 %v3462
      %v5669 = vunpack.c.h.b16 %v3462
      %v5670 = vunpack.c.l.b16 %v3463
      %v5671 = vunpack.c.h.b16 %v3463
      %v5672 = vunpack.c.l.b16 %v3464
      %v5673 = vunpack.c.h.b16 %v3464
      %v5674 = vunpack.c.l.b16 %v3465
      %v5675 = vunpack.c.h.b16 %v3465
      %v5676 = vunpack.c.l.b16 %v3466
      %v5677 = vunpack.c.h.b16 %v3466
      %v5678 = vunpack.c.l.b16 %v3467
      %v5679 = vunpack.c.h.b16 %v3467
      %v5680 = vunpack.c.l.b16 %v3468
      %v5681 = vunpack.c.h.b16 %v3468
      %v5682 = vunpack.c.l.b16 %v3469
      %v5683 = vunpack.c.h.b16 %v3469
      %v5684 = vunpack.c.l.b16 %v3470
      %v5685 = vunpack.c.h.b16 %v3470
      %v5686 = vunpack.c.l.b16 %v3471
      %v5687 = vunpack.c.h.b16 %v3471
      %v5688 = vunpack.c.l.b16 %v3472
      %v5689 = vunpack.c.h.b16 %v3472
      %v5690 = vunpack.c.l.b16 %v3473
      %v5691 = vunpack.c.h.b16 %v3473
      %v5692 = vunpack.c.l.b16 %v3474
      %v5693 = vunpack.c.h.b16 %v3474
      %v5694 = vunpack.c.l.b16 %v3475
      %v5695 = vunpack.c.h.b16 %v3475
      %v5696 = vunpack.c.l.b16 %v3476
      %v5697 = vunpack.c.h.b16 %v3476
      %v5698 = vunpack.c.l.b16 %v3477
      %v5699 = vunpack.c.h.b16 %v3477
      %v5700 = vunpack.c.l.b16 %v3478
      %v5701 = vunpack.c.h.b16 %v3478
      %v5702 = vunpack.c.l.b16 %v3479
      %v5703 = vunpack.c.h.b16 %v3479
      %v5704 = vunpack.c.l.b16 %v3480
      %v5705 = vunpack.c.h.b16 %v3480
      %v5706 = vunpack.c.l.b16 %v3481
      %v5707 = vunpack.c.h.b16 %v3481
      %v5708 = vunpack.c.l.b16 %v3482
      %v5709 = vunpack.c.h.b16 %v3482
      %v5710 = vunpack.c.l.b16 %v3483
      %v5711 = vunpack.c.h.b16 %v3483
      %v5712 = vunpack.c.l.b16 %v3484
      %v5713 = vunpack.c.h.b16 %v3484
      %v5714 = vunpack.c.l.b16 %v3485
      %v5715 = vunpack.c.h.b16 %v3485
      %v5716 = vunpack.c.l.b16 %v3486
      %v5717 = vunpack.c.h.b16 %v3486
      %v5718 = vunpack.c.l.b16 %v3487
      %v5719 = vunpack.c.h.b16 %v3487
      %v5720 = vunpack.c.l.b16 %v3488
      %v5721 = vunpack.c.h.b16 %v3488
      %v5722 = vunpack.c.l.b16 %v3489
      %v5723 = vunpack.c.h.b16 %v3489
      %v5724 = vunpack.c.l.b16 %v3490
      %v5725 = vunpack.c.h.b16 %v3490
      %v5726 = vunpack.c.l.b16 %v3491
      %v5727 = vunpack.c.h.b16 %v3491
      %v5728 = vunpack.c.l.b16 %v3492
      %v5729 = vunpack.c.h.b16 %v3492
      %v5730 = vunpack.c.l.b16 %v3493
      %v5731 = vunpack.c.h.b16 %v3493
      %v5732 = vunpack.c.l.b16 %v3494
      %v5733 = vunpack.c.h.b16 %v3494
      %v5734 = vunpack.c.l.b16 %v3495
      %v5735 = vunpack.c.h.b16 %v3495
      %v5736 = vunpack.c.l.b16 %v3496
      %v5737 = vunpack.c.h.b16 %v3496
      %v5738 = vunpack.c.l.b16 %v3497
      %v5739 = vunpack.c.h.b16 %v3497
      %v5740 = vunpack.c.l.b16 %v3498
      %v5741 = vunpack.c.h.b16 %v3498
      %v5742 = vunpack.c.l.b16 %v3499
      %v5743 = vunpack.c.h.b16 %v3499
      %v5744 = vunpack.c.l.b16 %v3500
      %v5745 = vunpack.c.h.b16 %v3500
      %v5746 = vunpack.c.l.b16 %v3501
      %v5747 = vunpack.c.h.b16 %v3501
      %v5748 = vunpack.c.l.b16 %v3502
      %v5749 = vunpack.c.h.b16 %v3502
      %v5750 = vunpack.c.l.b16 %v3503
      %v5751 = vunpack.c.h.b16 %v3503
      %v5752 = vunpack.c.l.b16 %v3504
      %v5753 = vunpack.c.h.b16 %v3504
      %v5754 = vunpack.c.l.b16 %v3505
      %v5755 = vunpack.c.h.b16 %v3505
      %v5756 = vunpack.c.l.b16 %v3506
      %v5757 = vunpack.c.h.b16 %v3506
      %v5758 = vunpack.c.l.b16 %v3507
      %v5759 = vunpack.c.h.b16 %v3507
      %v5760 = vunpack.c.l.b16 %v3508
      %v5761 = vunpack.c.h.b16 %v3508
      %v5762 = vunpack.c.l.b16 %v3509
      %v5763 = vunpack.c.h.b16 %v3509
      %v5764 = vunpack.c.l.b16 %v3510
      %v5765 = vunpack.c.h.b16 %v3510
      %v5766 = vunpack.c.l.b16 %v3511
      %v5767 = vunpack.c.h.b16 %v3511
      %v5768 = vunpack.c.l.b16 %v3512
      %v5769 = vunpack.c.h.b16 %v3512
      %v5770 = vunpack.c.l.b16 %v3513
      %v5771 = vunpack.c.h.b16 %v3513
      %v5772 = vunpack.c.l.b16 %v3514
      %v5773 = vunpack.c.h.b16 %v3514
      %v5774 = vunpack.c.l.b16 %v3515
      %v5775 = vunpack.c.h.b16 %v3515
      %v5776 = vunpack.c.l.b16 %v3516
      %v5777 = vunpack.c.h.b16 %v3516
      %v5778 = vunpack.c.l.b16 %v3517
      %v5779 = vunpack.c.h.b16 %v3517
      %v5780 = vunpack.c.l.b16 %v3518
      %v5781 = vunpack.c.h.b16 %v3518
      %v5782 = vunpack.c.l.b16 %v3519
      %v5783 = vunpack.c.h.b16 %v3519
      %v5784 = vunpack.c.l.b16 %v3520
      %v5785 = vunpack.c.h.b16 %v3520
      %v5786 = vunpack.c.l.b16 %v3521
      %v5787 = vunpack.c.h.b16 %v3521
      %v5788 = vunpack.c.l.b16 %v3522
      %v5789 = vunpack.c.h.b16 %v3522
      %v5790 = vunpack.c.l.b16 %v3523
      %v5791 = vunpack.c.h.b16 %v3523
      %v5792 = vunpack.c.l.b16 %v3524
      %v5793 = vunpack.c.h.b16 %v3524
      %v5794 = vunpack.c.l.b16 %v3525
      %v5795 = vunpack.c.h.b16 %v3525
      %v5796 = vunpack.c.l.b16 %v3526
      %v5797 = vunpack.c.h.b16 %v3526
      %v5798 = vunpack.c.l.b16 %v3527
      %v5799 = vunpack.c.h.b16 %v3527
      %v5800 = vunpack.c.l.b16 %v3528
      %v5801 = vunpack.c.h.b16 %v3528
      %v5802 = vunpack.c.l.b16 %v3529
      %v5803 = vunpack.c.h.b16 %v3529
      %v5804 = vunpack.c.l.b16 %v3530
      %v5805 = vunpack.c.h.b16 %v3530
      %v5806 = vunpack.c.l.b16 %v3531
      %v5807 = vunpack.c.h.b16 %v3531
      %v5808 = vunpack.c.l.b16 %v3532
      %v5809 = vunpack.c.h.b16 %v3532
      %v5810 = vunpack.c.l.b16 %v3533
      %v5811 = vunpack.c.h.b16 %v3533
      %v5812 = vunpack.c.l.b16 %v3534
      %v5813 = vunpack.c.h.b16 %v3534
      %v5814 = vunpack.c.l.b16 %v3535
      %v5815 = vunpack.c.h.b16 %v3535
      %v5816 = vunpack.c.l.b16 %v3536
      %v5817 = vunpack.c.h.b16 %v3536
      %v5818 = vunpack.c.l.b16 %v3537
      %v5819 = vunpack.c.h.b16 %v3537
      %v5820 = vunpack.c.l.b16 %v3538
      %v5821 = vunpack.c.h.b16 %v3538
      %v5822 = vunpack.c.l.b16 %v3539
      %v5823 = vunpack.c.h.b16 %v3539
      %v5824 = vunpack.c.l.b16 %v3540
      %v5825 = vunpack.c.h.b16 %v3540
      %v5826 = vunpack.c.l.b16 %v3541
      %v5827 = vunpack.c.h.b16 %v3541
      %v5828 = vunpack.c.l.b16 %v3542
      %v5829 = vunpack.c.h.b16 %v3542
      %v5830 = vunpack.c.l.b16 %v3543
      %v5831 = vunpack.c.h.b16 %v3543
      %v5832 = vunpack.c.l.b16 %v3544
      %v5833 = vunpack.c.h.b16 %v3544
      %v5834 = vunpack.c.l.b16 %v3545
      %v5835 = vunpack.c.h.b16 %v3545
      %v5836 = vunpack.c.l.b16 %v3546
      %v5837 = vunpack.c.h.b16 %v3546
      %v5838 = vunpack.c.l.b16 %v3547
      %v5839 = vunpack.c.h.b16 %v3547
      %v5840 = vunpack.c.l.b16 %v3548
      %v5841 = vunpack.c.h.b16 %v3548
      %v5842 = vunpack.c.l.b16 %v3549
      %v5843 = vunpack.c.h.b16 %v3549
      %v5844 = vunpack.c.l.b16 %v3550
      %v5845 = vunpack.c.h.b16 %v3550
      %v5846 = vunpack.c.l.b16 %v3551
      %v5847 = vunpack.c.h.b16 %v3551
      %v5848 = vunpack.c.l.b16 %v3552
      %v5849 = vunpack.c.h.b16 %v3552
      %v5850 = vunpack.c.l.b16 %v3553
      %v5851 = vunpack.c.h.b16 %v3553
      %v5852 = vunpack.c.l.b16 %v3554
      %v5853 = vunpack.c.h.b16 %v3554
      %v5854 = vunpack.c.l.b16 %v3555
      %v5855 = vunpack.c.h.b16 %v3555
      %v5856 = vunpack.c.l.b16 %v3556
      %v5857 = vunpack.c.h.b16 %v3556
      %v5858 = vunpack.c.l.b16 %v3557
      %v5859 = vunpack.c.h.b16 %v3557
      %v5860 = vunpack.c.l.b16 %v3558
      %v5861 = vunpack.c.h.b16 %v3558
      %v5862 = vunpack.c.l.b16 %v3559
      %v5863 = vunpack.c.h.b16 %v3559
      %v5864 = vunpack.c.l.b16 %v3560
      %v5865 = vunpack.c.h.b16 %v3560
      %v5866 = vunpack.c.l.b16 %v3561
      %v5867 = vunpack.c.h.b16 %v3561
      %v5868 = vunpack.c.l.b16 %v3562
      %v5869 = vunpack.c.h.b16 %v3562
      %v5870 = vunpack.c.l.b16 %v3563
      %v5871 = vunpack.c.h.b16 %v3563
      %v5872 = vunpack.c.l.b16 %v3564
      %v5873 = vunpack.c.h.b16 %v3564
      %v5874 = vunpack.c.l.b16 %v3565
      %v5875 = vunpack.c.h.b16 %v3565
      %v5876 = vunpack.c.l.b16 %v3566
      %v5877 = vunpack.c.h.b16 %v3566
      %v5878 = vunpack.c.l.b16 %v3567
      %v5879 = vunpack.c.h.b16 %v3567
      %v5880 = vunpack.c.l.b16 %v3568
      %v5881 = vunpack.c.h.b16 %v3568
      %v5882 = vunpack.c.l.b16 %v3569
      %v5883 = vunpack.c.h.b16 %v3569
      %v5884 = vunpack.c.l.b16 %v3570
      %v5885 = vunpack.c.h.b16 %v3570
      %v5886 = vunpack.c.l.b16 %v3571
      %v5887 = vunpack.c.h.b16 %v3571
      %v5888 = vunpack.c.l.b16 %v3572
      %v5889 = vunpack.c.h.b16 %v3572
      %v5890 = vunpack.c.l.b16 %v3573
      %v5891 = vunpack.c.h.b16 %v3573
      %v5892 = vunpack.c.l.b16 %v3574
      %v5893 = vunpack.c.h.b16 %v3574
      %v5894 = vunpack.c.l.b16 %v3575
      %v5895 = vunpack.c.h.b16 %v3575
      %v5896 = vunpack.c.l.b16 %v3576
      %v5897 = vunpack.c.h.b16 %v3576
      %v5898 = vunpack.c.l.b16 %v3577
      %v5899 = vunpack.c.h.b16 %v3577
      %v5900 = vunpack.c.l.b16 %v3578
      %v5901 = vunpack.c.h.b16 %v3578
      %v5902 = vunpack.c.l.b16 %v3579
      %v5903 = vunpack.c.h.b16 %v3579
      %v5904 = vunpack.c.l.b16 %v3580
      %v5905 = vunpack.c.h.b16 %v3580
      %v5906 = vunpack.c.l.b16 %v3581
      %v5907 = vunpack.c.h.b16 %v3581
      %v5908 = vunpack.c.l.b16 %v3582
      %v5909 = vunpack.c.h.b16 %v3582
      %v5910 = vunpack.c.l.b16 %v3583
      %v5911 = vunpack.c.h.b16 %v3583
      %v5912 = vunpack.c.l.b16 %v3584
      %v5913 = vunpack.c.h.b16 %v3584
      %v5914 = vunpack.c.l.b16 %v3585
      %v5915 = vunpack.c.h.b16 %v3585
      %v5916 = vunpack.c.l.b16 %v3586
      %v5917 = vunpack.c.h.b16 %v3586
      %v5918 = vunpack.c.l.b16 %v3587
      %v5919 = vunpack.c.h.b16 %v3587
      %v5920 = vunpack.c.l.b16 %v3588
      %v5921 = vunpack.c.h.b16 %v3588
      %v5922 = vunpack.c.l.b16 %v3589
      %v5923 = vunpack.c.h.b16 %v3589
      %v5924 = vunpack.c.l.b16 %v3590
      %v5925 = vunpack.c.h.b16 %v3590
      %v5926 = vunpack.c.l.b16 %v3591
      %v5927 = vunpack.c.h.b16 %v3591
      %v5928 = vunpack.c.l.b16 %v3592
      %v5929 = vunpack.c.h.b16 %v3592
      %v5930 = vunpack.c.l.b16 %v3593
      %v5931 = vunpack.c.h.b16 %v3593
      %v5932 = vunpack.c.l.b16 %v3594
      %v5933 = vunpack.c.h.b16 %v3594
      %v5934 = vunpack.c.l.b16 %v3595
      %v5935 = vunpack.c.h.b16 %v3595
      %v5936 = vunpack.c.l.b16 %v3596
      %v5937 = vunpack.c.h.b16 %v3596
      %v5938 = vunpack.c.l.b16 %v3597
      %v5939 = vunpack.c.h.b16 %v3597
      %v5940 = vunpack.c.l.b16 %v3598
      %v5941 = vunpack.c.h.b16 %v3598
      %v5942 = vunpack.c.l.b16 %v3599
      %v5943 = vunpack.c.h.b16 %v3599
      %v5944 = vunpack.c.l.b16 %v3600
      %v5945 = vunpack.c.h.b16 %v3600
      %v5946 = vunpack.c.l.b16 %v3601
      %v5947 = vunpack.c.h.b16 %v3601
      %v5948 = vunpack.c.l.b16 %v3602
      %v5949 = vunpack.c.h.b16 %v3602
      %v5950 = vunpack.c.l.b16 %v3603
      %v5951 = vunpack.c.h.b16 %v3603
      %v5952 = vunpack.c.l.b16 %v3604
      %v5953 = vunpack.c.h.b16 %v3604
      %v5954 = vunpack.c.l.b16 %v3605
      %v5955 = vunpack.c.h.b16 %v3605
      %v5956 = vunpack.c.l.b16 %v3606
      %v5957 = vunpack.c.h.b16 %v3606
      %v5958 = vunpack.c.l.b16 %v3607
      %v5959 = vunpack.c.h.b16 %v3607
      %v5960 = vunpack.c.l.b16 %v3608
      %v5961 = vunpack.c.h.b16 %v3608
      %v5962 = vunpack.c.l.b16 %v3609
      %v5963 = vunpack.c.h.b16 %v3609
      %v5964 = vunpack.c.l.b16 %v3610
      %v5965 = vunpack.c.h.b16 %v3610
      %v5966 = vunpack.c.l.b16 %v3611
      %v5967 = vunpack.c.h.b16 %v3611
      %v5968 = vunpack.c.l.b16 %v3612
      %v5969 = vunpack.c.h.b16 %v3612
      %v5970 = vunpack.c.l.b16 %v3613
      %v5971 = vunpack.c.h.b16 %v3613
      %v5972 = vunpack.c.l.b16 %v3614
      %v5973 = vunpack.c.h.b16 %v3614
      %v5974 = vunpack.c.l.b16 %v3615
      %v5975 = vunpack.c.h.b16 %v3615
      %v5976 = vunpack.c.l.b16 %v3616
      %v5977 = vunpack.c.h.b16 %v3616
      %v5978 = vunpack.c.l.b16 %v3617
      %v5979 = vunpack.c.h.b16 %v3617
      %v5980 = vunpack.c.l.b16 %v3618
      %v5981 = vunpack.c.h.b16 %v3618
      %v5982 = vunpack.c.l.b16 %v3619
      %v5983 = vunpack.c.h.b16 %v3619
      %v5984 = vunpack.c.l.b16 %v3620
      %v5985 = vunpack.c.h.b16 %v3620
      %v5986 = vunpack.c.l.b16 %v3621
      %v5987 = vunpack.c.h.b16 %v3621
      %v5988 = vunpack.c.l.b16 %v3622
      %v5989 = vunpack.c.h.b16 %v3622
      %v5990 = vunpack.c.l.b16 %v3623
      %v5991 = vunpack.c.h.b16 %v3623
      %v5992 = vunpack.c.l.b16 %v3624
      %v5993 = vunpack.c.h.b16 %v3624
      %v5994 = vunpack.c.l.b16 %v3625
      %v5995 = vunpack.c.h.b16 %v3625
      %v5996 = vunpack.c.l.b16 %v3626
      %v5997 = vunpack.c.h.b16 %v3626
      %v5998 = vunpack.c.l.b16 %v3627
      %v5999 = vunpack.c.h.b16 %v3627
      %v6000 = vunpack.c.l.b16 %v3628
      %v6001 = vunpack.c.h.b16 %v3628
      %v6002 = vunpack.c.l.b16 %v3629
      %v6003 = vunpack.c.h.b16 %v3629
      %v6004 = vunpack.c.l.b16 %v3630
      %v6005 = vunpack.c.h.b16 %v3630
      %v6006 = vunpack.c.l.b16 %v3631
      %v6007 = vunpack.c.h.b16 %v3631
      %v6008 = vunpack.c.l.b16 %v3632
      %v6009 = vunpack.c.h.b16 %v3632
      %v6010 = vunpack.c.l.b16 %v3633
      %v6011 = vunpack.c.h.b16 %v3633
      %v6012 = vunpack.c.l.b16 %v3634
      %v6013 = vunpack.c.h.b16 %v3634
      %v6014 = vunpack.c.l.b16 %v3635
      %v6015 = vunpack.c.h.b16 %v3635
      %v6016 = vunpack.c.l.b16 %v3636
      %v6017 = vunpack.c.h.b16 %v3636
      %v6018 = vunpack.c.l.b16 %v3637
      %v6019 = vunpack.c.h.b16 %v3637
      %v6020 = vunpack.c.l.b16 %v3638
      %v6021 = vunpack.c.h.b16 %v3638
      %v6022 = vunpack.c.l.b16 %v3639
      %v6023 = vunpack.c.h.b16 %v3639
      %v6024 = vunpack.c.l.b16 %v3640
      %v6025 = vunpack.c.h.b16 %v3640
      %v6026 = vunpack.c.l.b16 %v3641
      %v6027 = vunpack.c.h.b16 %v3641
      %v6028 = vunpack.c.l.b16 %v3642
      %v6029 = vunpack.c.h.b16 %v3642
      %v6030 = vunpack.c.l.b16 %v3643
      %v6031 = vunpack.c.h.b16 %v3643
      %v6032 = vunpack.c.l.b16 %v3644
      %v6033 = vunpack.c.h.b16 %v3644
      %v6034 = vunpack.c.l.b16 %v3645
      %v6035 = vunpack.c.h.b16 %v3645
      %v6036 = vunpack.c.l.b16 %v3646
      %v6037 = vunpack.c.h.b16 %v3646
      %v6038 = vunpack.c.l.b16 %v3647
      %v6039 = vunpack.c.h.b16 %v3647
      %v6040 = vunpack.c.l.b16 %v3648
      %v6041 = vunpack.c.h.b16 %v3648
      %v6042 = vunpack.c.l.b16 %v3649
      %v6043 = vunpack.c.h.b16 %v3649
      %v6044 = vunpack.c.l.b16 %v3650
      %v6045 = vunpack.c.h.b16 %v3650
      %v6046 = vunpack.c.l.b16 %v3651
      %v6047 = vunpack.c.h.b16 %v3651
      %v6048 = vunpack.c.l.b16 %v3652
      %v6049 = vunpack.c.h.b16 %v3652
      %v6050 = vunpack.c.l.b16 %v3653
      %v6051 = vunpack.c.h.b16 %v3653
      %v6052 = vunpack.c.l.b16 %v3654
      %v6053 = vunpack.c.h.b16 %v3654
      %v6054 = vunpack.c.l.b16 %v3655
      %v6055 = vunpack.c.h.b16 %v3655
      %v6056 = vunpack.c.l.b16 %v3656
      %v6057 = vunpack.c.h.b16 %v3656
      %v6058 = vunpack.c.l.b16 %v3657
      %v6059 = vunpack.c.h.b16 %v3657
      %v6060 = vunpack.c.l.b16 %v3658
      %v6061 = vunpack.c.h.b16 %v3658
      %v6062 = vunpack.c.l.b16 %v3659
      %v6063 = vunpack.c.h.b16 %v3659
      %v6064 = vunpack.c.l.b16 %v3660
      %v6065 = vunpack.c.h.b16 %v3660
      %v6066 = vunpack.c.l.b16 %v3661
      %v6067 = vunpack.c.h.b16 %v3661
      %v6068 = vunpack.c.l.b16 %v3662
      %v6069 = vunpack.c.h.b16 %v3662
      %v6070 = vunpack.c.l.b16 %v3663
      %v6071 = vunpack.c.h.b16 %v3663
      %v6072 = vunpack.c.l.b16 %v3664
      %v6073 = vunpack.c.h.b16 %v3664
      %v6074 = vunpack.c.l.b16 %v3665
      %v6075 = vunpack.c.h.b16 %v3665
      %v6076 = vunpack.c.l.b16 %v3666
      %v6077 = vunpack.c.h.b16 %v3666
      %v6078 = vunpack.c.l.b16 %v3667
      %v6079 = vunpack.c.h.b16 %v3667
      %v6080 = vunpack.c.l.b16 %v3668
      %v6081 = vunpack.c.h.b16 %v3668
      %v6082 = vunpack.c.l.b16 %v3669
      %v6083 = vunpack.c.h.b16 %v3669
      %v6084 = vunpack.c.l.b16 %v3670
      %v6085 = vunpack.c.h.b16 %v3670
      %v6086 = vunpack.c.l.b16 %v3671
      %v6087 = vunpack.c.h.b16 %v3671
      %v6088 = vunpack.c.l.b16 %v3672
      %v6089 = vunpack.c.h.b16 %v3672
      %v6090 = vunpack.c.l.b16 %v3673
      %v6091 = vunpack.c.h.b16 %v3673
      %v6092 = vunpack.c.l.b16 %v3674
      %v6093 = vunpack.c.h.b16 %v3674
      %v6094 = vunpack.c.l.b16 %v3675
      %v6095 = vunpack.c.h.b16 %v3675
      %v6096 = vunpack.c.l.b16 %v3676
      %v6097 = vunpack.c.h.b16 %v3676
      %v6098 = vunpack.c.l.b16 %v3677
      %v6099 = vunpack.c.h.b16 %v3677
      %v6100 = vunpack.c.l.b16 %v3678
      %v6101 = vunpack.c.h.b16 %v3678
      %v6102 = vunpack.c.l.b16 %v3679
      %v6103 = vunpack.c.h.b16 %v3679
      %v6104 = vunpack.c.l.b16 %v3680
      %v6105 = vunpack.c.h.b16 %v3680
      %v6106 = vunpack.c.l.b16 %v3681
      %v6107 = vunpack.c.h.b16 %v3681
      %v6108 = vunpack.c.l.b16 %v3682
      %v6109 = vunpack.c.h.b16 %v3682
      %v6110 = vunpack.c.l.b16 %v3683
      %v6111 = vunpack.c.h.b16 %v3683
      %v6112 = vunpack.c.l.b16 %v3684
      %v6113 = vunpack.c.h.b16 %v3684
      %v6114 = vunpack.c.l.b16 %v3685
      %v6115 = vunpack.c.h.b16 %v3685
      %v6116 = vunpack.c.l.b16 %v3686
      %v6117 = vunpack.c.h.b16 %v3686
      %v6118 = vunpack.c.l.b16 %v3687
      %v6119 = vunpack.c.h.b16 %v3687
      %v6120 = vunpack.c.l.b16 %v3688
      %v6121 = vunpack.c.h.b16 %v3688
      %v6122 = vunpack.c.l.b16 %v3689
      %v6123 = vunpack.c.h.b16 %v3689
      %v6124 = vunpack.c.l.b16 %v3690
      %v6125 = vunpack.c.h.b16 %v3690
      %v6126 = vunpack.c.l.b16 %v3691
      %v6127 = vunpack.c.h.b16 %v3691
      %v6128 = vunpack.c.l.b16 %v3692
      %v6129 = vunpack.c.h.b16 %v3692
      %v6130 = vunpack.c.l.b16 %v3693
      %v6131 = vunpack.c.h.b16 %v3693
      %v6132 = vunpack.c.l.b16 %v3694
      %v6133 = vunpack.c.h.b16 %v3694
      %v6134 = vunpack.c.l.b16 %v3695
      %v6135 = vunpack.c.h.b16 %v3695
      %v6136 = vunpack.c.l.b16 %v3696
      %v6137 = vunpack.c.h.b16 %v3696
      %v6138 = vunpack.c.l.b16 %v3697
      %v6139 = vunpack.c.h.b16 %v3697
      %v6140 = vunpack.c.l.b16 %v3698
      %v6141 = vunpack.c.h.b16 %v3698
      %v6142 = vunpack.c.l.b16 %v3699
      %v6143 = vunpack.c.h.b16 %v3699
      %v6144 = vunpack.c.l.b16 %v3700
      %v6145 = vunpack.c.h.b16 %v3700
      %v6146 = vunpack.c.l.b16 %v3701
      %v6147 = vunpack.c.h.b16 %v3701
      %v6148 = vunpack.c.l.b16 %v3702
      %v6149 = vunpack.c.h.b16 %v3702
      %v6150 = vunpack.c.l.b16 %v3703
      %v6151 = vunpack.c.h.b16 %v3703
      %v6152 = vunpack.c.l.b16 %v3704
      %v6153 = vunpack.c.h.b16 %v3704
      %v6154 = vunpack.c.l.b16 %v3705
      %v6155 = vunpack.c.h.b16 %v3705
      %v6156 = vunpack.c.l.b16 %v3706
      %v6157 = vunpack.c.h.b16 %v3706
      %v6158 = vunpack.c.l.b16 %v3707
      %v6159 = vunpack.c.h.b16 %v3707
      %v6160 = vunpack.c.l.b16 %v3708
      %v6161 = vunpack.c.h.b16 %v3708
      %v6162 = vunpack.c.l.b16 %v3709
      %v6163 = vunpack.c.h.b16 %v3709
      %v6164 = vunpack.c.l.b16 %v3710
      %v6165 = vunpack.c.h.b16 %v3710
      %v6166 = vunpack.c.l.b16 %v3711
      %v6167 = vunpack.c.h.b16 %v3711
      %v6168 = vunpack.c.l.b16 %v3712
      %v6169 = vunpack.c.h.b16 %v3712
      %v6170 = vunpack.c.l.b16 %v3713
      %v6171 = vunpack.c.h.b16 %v3713
      %v6172 = vunpack.c.l.b16 %v3714
      %v6173 = vunpack.c.h.b16 %v3714
      %v6174 = vunpack.c.l.b16 %v3715
      %v6175 = vunpack.c.h.b16 %v3715
      %v6176 = vunpack.c.l.b16 %v3716
      %v6177 = vunpack.c.h.b16 %v3716
      %v6178 = vunpack.c.l.b16 %v3717
      %v6179 = vunpack.c.h.b16 %v3717
      %v6180 = vunpack.c.l.b16 %v3718
      %v6181 = vunpack.c.h.b16 %v3718
      %v6182 = vunpack.c.l.b16 %v3719
      %v6183 = vunpack.c.h.b16 %v3719
      %v6184 = vunpack.c.l.b16 %v3720
      %v6185 = vunpack.c.h.b16 %v3720
      %v6186 = vunpack.c.l.b16 %v3721
      %v6187 = vunpack.c.h.b16 %v3721
      %v6188 = vunpack.c.l.b16 %v3722
      %v6189 = vunpack.c.h.b16 %v3722
      %v6190 = vunpack.c.l.b16 %v3723
      %v6191 = vunpack.c.h.b16 %v3723
      %v6192 = vunpack.c.l.b16 %v3724
      %v6193 = vunpack.c.h.b16 %v3724
      %v6194 = vunpack.c.l.b16 %v3725
      %v6195 = vunpack.c.h.b16 %v3725
      %v6196 = vunpack.c.l.b16 %v3726
      %v6197 = vunpack.c.h.b16 %v3726
      %v6198 = vunpack.c.l.b16 %v3727
      %v6199 = vunpack.c.h.b16 %v3727
      %v6200 = vunpack.c.l.b16 %v3728
      %v6201 = vunpack.c.h.b16 %v3728
      %v6202 = vunpack.c.l.b16 %v3729
      %v6203 = vunpack.c.h.b16 %v3729
      %v6204 = vunpack.c.l.b16 %v3730
      %v6205 = vunpack.c.h.b16 %v3730
      %v6206 = vunpack.c.l.b16 %v3731
      %v6207 = vunpack.c.h.b16 %v3731
      %v6208 = vunpack.c.l.b16 %v3732
      %v6209 = vunpack.c.h.b16 %v3732
      %v6210 = vunpack.c.l.b16 %v3733
      %v6211 = vunpack.c.h.b16 %v3733
      %v6212 = vunpack.c.l.b16 %v3734
      %v6213 = vunpack.c.h.b16 %v3734
      %v6214 = vunpack.c.l.b16 %v3735
      %v6215 = vunpack.c.h.b16 %v3735
      %v6216 = vunpack.c.l.b16 %v3736
      %v6217 = vunpack.c.h.b16 %v3736
      %v6218 = vunpack.c.l.b16 %v3737
      %v6219 = vunpack.c.h.b16 %v3737
      %v6220 = vunpack.c.l.b16 %v3738
      %v6221 = vunpack.c.h.b16 %v3738
      %v6222 = vunpack.c.l.b16 %v3739
      %v6223 = vunpack.c.h.b16 %v3739
      %v6224 = vunpack.c.l.b16 %v3740
      %v6225 = vunpack.c.h.b16 %v3740
      %v6226 = vunpack.c.l.b16 %v3741
      %v6227 = vunpack.c.h.b16 %v3741
      %v6228 = vunpack.c.l.b16 %v3742
      %v6229 = vunpack.c.h.b16 %v3742
      %v6230 = vunpack.c.l.b16 %v3743
      %v6231 = vunpack.c.h.b16 %v3743
      %v6232 = vunpack.c.l.b16 %v3744
      %v6233 = vunpack.c.h.b16 %v3744
      %v6234 = vunpack.c.l.b16 %v3745
      %v6235 = vunpack.c.h.b16 %v3745
      %v6236 = vunpack.c.l.b16 %v3746
      %v6237 = vunpack.c.h.b16 %v3746
      %v6238 = vunpack.c.l.b16 %v3747
      %v6239 = vunpack.c.h.b16 %v3747
      %v6240 = vunpack.c.l.b16 %v3748
      %v6241 = vunpack.c.h.b16 %v3748
      %v6242 = vunpack.c.l.b16 %v3749
      %v6243 = vunpack.c.h.b16 %v3749
      %v6244 = vunpack.c.l.b16 %v3750
      %v6245 = vunpack.c.h.b16 %v3750
      %v6246 = vunpack.c.l.b16 %v3751
      %v6247 = vunpack.c.h.b16 %v3751
      %v6248 = vunpack.c.l.b16 %v3752
      %v6249 = vunpack.c.h.b16 %v3752
      %v6250 = vunpack.c.l.b16 %v3753
      %v6251 = vunpack.c.h.b16 %v3753
      %v6252 = vunpack.c.l.b16 %v3754
      %v6253 = vunpack.c.h.b16 %v3754
      %v6254 = vunpack.c.l.b16 %v3755
      %v6255 = vunpack.c.h.b16 %v3755
      %v6256 = vunpack.c.l.b16 %v3756
      %v6257 = vunpack.c.h.b16 %v3756
      %v6258 = vunpack.c.l.b16 %v3757
      %v6259 = vunpack.c.h.b16 %v3757
      %v6260 = vunpack.c.l.b16 %v3758
      %v6261 = vunpack.c.h.b16 %v3758
      %v6262 = vunpack.c.l.b16 %v3759
      %v6263 = vunpack.c.h.b16 %v3759
      %v6264 = vunpack.c.l.b16 %v3760
      %v6265 = vunpack.c.h.b16 %v3760
      %v6266 = vunpack.c.l.b16 %v3761
      %v6267 = vunpack.c.h.b16 %v3761
      %v6268 = vunpack.c.l.b16 %v3762
      %v6269 = vunpack.c.h.b16 %v3762
      %v6270 = vunpack.c.l.b16 %v3763
      %v6271 = vunpack.c.h.b16 %v3763
      %v6272 = vunpack.c.l.b16 %v3764
      %v6273 = vunpack.c.h.b16 %v3764
      %v6274 = vunpack.c.l.b16 %v3765
      %v6275 = vunpack.c.h.b16 %v3765
      %v6276 = vunpack.c.l.b16 %v3766
      %v6277 = vunpack.c.h.b16 %v3766
      %v6278 = vunpack.c.l.b16 %v3767
      %v6279 = vunpack.c.h.b16 %v3767
      %v6280 = vunpack.c.l.b16 %v3768
      %v6281 = vunpack.c.h.b16 %v3768
      %v6282 = vunpack.c.l.b16 %v3769
      %v6283 = vunpack.c.h.b16 %v3769
      %v6284 = vunpack.c.l.b16 %v3770
      %v6285 = vunpack.c.h.b16 %v3770
      %v6286 = vunpack.c.l.b16 %v3771
      %v6287 = vunpack.c.h.b16 %v3771
      %v6288 = vunpack.c.l.b16 %v3772
      %v6289 = vunpack.c.h.b16 %v3772
      %v6290 = vunpack.c.l.b16 %v3773
      %v6291 = vunpack.c.h.b16 %v3773
      %v6292 = vunpack.c.l.b16 %v3774
      %v6293 = vunpack.c.h.b16 %v3774
      %v6294 = vunpack.c.l.b16 %v3775
      %v6295 = vunpack.c.h.b16 %v3775
      %v6296 = vunpack.c.l.b16 %v3776
      %v6297 = vunpack.c.h.b16 %v3776
      %v6298 = vunpack.c.l.b16 %v3777
      %v6299 = vunpack.c.h.b16 %v3777
      %v6300 = vunpack.c.l.b16 %v3778
      %v6301 = vunpack.c.h.b16 %v3778
      %v6302 = vunpack.c.l.b16 %v3779
      %v6303 = vunpack.c.h.b16 %v3779
      %v6304 = vunpack.c.l.b16 %v3780
      %v6305 = vunpack.c.h.b16 %v3780
      %v6306 = vunpack.c.l.b16 %v3781
      %v6307 = vunpack.c.h.b16 %v3781
      %v6308 = vunpack.c.l.b16 %v3782
      %v6309 = vunpack.c.h.b16 %v3782
      %v6310 = vunpack.c.l.b16 %v3783
      %v6311 = vunpack.c.h.b16 %v3783
      %v6312 = vunpack.c.l.b16 %v3784
      %v6313 = vunpack.c.h.b16 %v3784
      %v6314 = vunpack.c.l.b16 %v3785
      %v6315 = vunpack.c.h.b16 %v3785
      %v6316 = vunpack.c.l.b16 %v3786
      %v6317 = vunpack.c.h.b16 %v3786
      %v6318 = vunpack.c.l.b16 %v3787
      %v6319 = vunpack.c.h.b16 %v3787
      %v6320 = vunpack.c.l.b16 %v3788
      %v6321 = vunpack.c.h.b16 %v3788
      %v6322 = vunpack.c.l.b16 %v3789
      %v6323 = vunpack.c.h.b16 %v3789
      %v6324 = vunpack.c.l.b16 %v3790
      %v6325 = vunpack.c.h.b16 %v3790
      %v6326 = vunpack.c.l.b16 %v3791
      %v6327 = vunpack.c.h.b16 %v3791
      %v6328 = vunpack.c.l.b16 %v3792
      %v6329 = vunpack.c.h.b16 %v3792
      %v6330 = vunpack.c.l.b16 %v3793
      %v6331 = vunpack.c.h.b16 %v3793
      %v6332 = vunpack.c.l.b16 %v3794
      %v6333 = vunpack.c.h.b16 %v3794
      %v6334 = vunpack.c.l.b16 %v3795
      %v6335 = vunpack.c.h.b16 %v3795
      %v6336 = vunpack.c.l.b16 %v3796
      %v6337 = vunpack.c.h.b16 %v3796
      %v6338 = vunpack.c.l.b16 %v3797
      %v6339 = vunpack.c.h.b16 %v3797
      %v6340 = vunpack.c.l.b16 %v3798
      %v6341 = vunpack.c.h.b16 %v3798
      %v6342 = vunpack.c.l.b16 %v3799
      %v6343 = vunpack.c.h.b16 %v3799
      %v6344 = vunpack.c.l.b16 %v3800
      %v6345 = vunpack.c.h.b16 %v3800
      %v6346 = vunpack.c.l.b16 %v3801
      %v6347 = vunpack.c.h.b16 %v3801
      %v6348 = vunpack.c.l.b16 %v3802
      %v6349 = vunpack.c.h.b16 %v3802
      %v6350 = vunpack.c.l.b16 %v3803
      %v6351 = vunpack.c.h.b16 %v3803
      %v6352 = vunpack.c.l.b16 %v3804
      %v6353 = vunpack.c.h.b16 %v3804
      %v6354 = vunpack.c.l.b16 %v3805
      %v6355 = vunpack.c.h.b16 %v3805
      %v6356 = vunpack.c.l.b16 %v3806
      %v6357 = vunpack.c.h.b16 %v3806
      %v6358 = vunpack.c.l.b16 %v3807
      %v6359 = vunpack.c.h.b16 %v3807
      %v6360 = vunpack.c.l.b16 %v3808
      %v6361 = vunpack.c.h.b16 %v3808
      %v6362 = vunpack.c.l.b16 %v3809
      %v6363 = vunpack.c.h.b16 %v3809
      %v6364 = vunpack.c.l.b16 %v3810
      %v6365 = vunpack.c.h.b16 %v3810
      %v6366 = vunpack.c.l.b16 %v3811
      %v6367 = vunpack.c.h.b16 %v3811
      %v6368 = vunpack.c.l.b16 %v3812
      %v6369 = vunpack.c.h.b16 %v3812
      %v6370 = vunpack.c.l.b16 %v3813
      %v6371 = vunpack.c.h.b16 %v3813
      %v6372 = vunpack.c.l.b16 %v3814
      %v6373 = vunpack.c.h.b16 %v3814
      %v6374 = vunpack.c.l.b16 %v3815
      %v6375 = vunpack.c.h.b16 %v3815
      %v6376 = vunpack.c.l.b16 %v3816
      %v6377 = vunpack.c.h.b16 %v3816
      %v6378 = vunpack.c.l.b16 %v3817
      %v6379 = vunpack.c.h.b16 %v3817
      %v6380 = vunpack.c.l.b16 %v3818
      %v6381 = vunpack.c.h.b16 %v3818
      %v6382 = vunpack.c.l.b16 %v3819
      %v6383 = vunpack.c.h.b16 %v3819
      %v6384 = vunpack.c.l.b16 %v3820
      %v6385 = vunpack.c.h.b16 %v3820
      %v6386 = vunpack.c.l.b16 %v3821
      %v6387 = vunpack.c.h.b16 %v3821
      %v6388 = vunpack.c.l.b16 %v3822
      %v6389 = vunpack.c.h.b16 %v3822
      %v6390 = vunpack.c.l.b16 %v3823
      %v6391 = vunpack.c.h.b16 %v3823
      %v6392 = vunpack.c.l.b16 %v3824
      %v6393 = vunpack.c.h.b16 %v3824
      %v6394 = vunpack.c.l.b16 %v3825
      %v6395 = vunpack.c.h.b16 %v3825
      %v6396 = vunpack.c.l.b16 %v3826
      %v6397 = vunpack.c.h.b16 %v3826
      %v6398 = vunpack.c.l.b16 %v3827
      %v6399 = vunpack.c.h.b16 %v3827
      %v6400 = vunpack.c.l.b16 %v3828
      %v6401 = vunpack.c.h.b16 %v3828
      %v6402 = vunpack.c.l.b16 %v3829
      %v6403 = vunpack.c.h.b16 %v3829
      %v6404 = vunpack.c.l.b16 %v3830
      %v6405 = vunpack.c.h.b16 %v3830
      %v6406 = vunpack.c.l.b16 %v3831
      %v6407 = vunpack.c.h.b16 %v3831
      %v6408 = vunpack.c.l.b16 %v3832
      %v6409 = vunpack.c.h.b16 %v3832
      %v6410 = vunpack.c.l.b16 %v3833
      %v6411 = vunpack.c.h.b16 %v3833
      %v6412 = vunpack.c.l.b16 %v3834
      %v6413 = vunpack.c.h.b16 %v3834
      %v6414 = vunpack.c.l.b16 %v3835
      %v6415 = vunpack.c.h.b16 %v3835
      %v6416 = vunpack.c.l.b16 %v3836
      %v6417 = vunpack.c.h.b16 %v3836
      %v6418 = vunpack.c.l.b16 %v3837
      %v6419 = vunpack.c.h.b16 %v3837
      %v6420 = vunpack.c.l.b16 %v3838
      %v6421 = vunpack.c.h.b16 %v3838
      %v6422 = vunpack.c.l.b16 %v3839
      %v6423 = vunpack.c.h.b16 %v3839
      %v6424 = vunpack.c.l.b16 %v3840
      %v6425 = vunpack.c.h.b16 %v3840
      %v6426 = vunpack.c.l.b16 %v3841
      %v6427 = vunpack.c.h.b16 %v3841
      %v6428 = vunpack.c.l.b16 %v3842
      %v6429 = vunpack.c.h.b16 %v3842
      %v6430 = vunpack.c.l.b16 %v3843
      %v6431 = vunpack.c.h.b16 %v3843
      %v6432 = vunpack.c.l.b16 %v3844
      %v6433 = vunpack.c.h.b16 %v3844
      %v6434 = vunpack.c.l.b16 %v3845
      %v6435 = vunpack.c.h.b16 %v3845
      %v6436 = vunpack.c.l.b16 %v3846
      %v6437 = vunpack.c.h.b16 %v3846
      %v6438 = vunpack.c.l.b16 %v3847
      %v6439 = vunpack.c.h.b16 %v3847
      %v6440 = vunpack.c.l.b16 %v3848
      %v6441 = vunpack.c.h.b16 %v3848
      %v6442 = vunpack.c.l.b16 %v3849
      %v6443 = vunpack.c.h.b16 %v3849
      %v6444 = vunpack.c.l.b16 %v3850
      %v6445 = vunpack.c.h.b16 %v3850
      %v6446 = vunpack.c.l.b16 %v3851
      %v6447 = vunpack.c.h.b16 %v3851
      %v6448 = vunpack.c.l.b16 %v3852
      %v6449 = vunpack.c.h.b16 %v3852
      %v6450 = vunpack.c.l.b16 %v3853
      %v6451 = vunpack.c.h.b16 %v3853
      %v6452 = vunpack.c.l.b16 %v3854
      %v6453 = vunpack.c.h.b16 %v3854
      %v6454 = vunpack.c.l.b16 %v3855
      %v6455 = vunpack.c.h.b16 %v3855
      %v6456 = vunpack.c.l.b16 %v3856
      %v6457 = vunpack.c.h.b16 %v3856
      %v6458 = vunpack.c.l.b16 %v3857
      %v6459 = vunpack.c.h.b16 %v3857
      %v6460 = vunpack.c.l.b16 %v3858
      %v6461 = vunpack.c.h.b16 %v3858
      %v6462 = vunpack.c.l.b16 %v3859
      %v6463 = vunpack.c.h.b16 %v3859
      %v6464 = vunpack.c.l.b16 %v3860
      %v6465 = vunpack.c.h.b16 %v3860
      %v6466 = vunpack.c.l.b16 %v3861
      %v6467 = vunpack.c.h.b16 %v3861
      %v6468 = vunpack.c.l.b16 %v3862
      %v6469 = vunpack.c.h.b16 %v3862
      %v6470 = vunpack.c.l.b16 %v3863
      %v6471 = vunpack.c.h.b16 %v3863
      %v6472 = vunpack.c.l.b16 %v3864
      %v6473 = vunpack.c.h.b16 %v3864
      %v6474 = vunpack.c.l.b16 %v3865
      %v6475 = vunpack.c.h.b16 %v3865
      %v6476 = vunpack.c.l.b16 %v3866
      %v6477 = vunpack.c.h.b16 %v3866
      %v6478 = vunpack.c.l.b16 %v3867
      %v6479 = vunpack.c.h.b16 %v3867
      %v6480 = vunpack.c.l.b16 %v3868
      %v6481 = vunpack.c.h.b16 %v3868
      %v6482 = vunpack.c.l.b16 %v3869
      %v6483 = vunpack.c.h.b16 %v3869
      %v6484 = vunpack.c.l.b16 %v3870
      %v6485 = vunpack.c.h.b16 %v3870
      %v6486 = vunpack.c.l.b16 %v3871
      %v6487 = vunpack.c.h.b16 %v3871
      %v6488 = vunpack.c.l.b16 %v3872
      %v6489 = vunpack.c.h.b16 %v3872
      %v6490 = vunpack.c.l.b16 %v3873
      %v6491 = vunpack.c.h.b16 %v3873
      %v6492 = vunpack.c.l.b16 %v3874
      %v6493 = vunpack.c.h.b16 %v3874
      %v6494 = vunpack.c.l.b16 %v3875
      %v6495 = vunpack.c.h.b16 %v3875
      %v6496 = vunpack.c.l.b16 %v3876
      %v6497 = vunpack.c.h.b16 %v3876
      %v6498 = vunpack.c.l.b16 %v3877
      %v6499 = vunpack.c.h.b16 %v3877
      %v6500 = vunpack.c.l.b16 %v3878
      %v6501 = vunpack.c.h.b16 %v3878
      %v6502 = vunpack.c.l.b16 %v3879
      %v6503 = vunpack.c.h.b16 %v3879
      %v6504 = vunpack.c.l.b16 %v3880
      %v6505 = vunpack.c.h.b16 %v3880
      %v6506 = vunpack.c.l.b16 %v3881
      %v6507 = vunpack.c.h.b16 %v3881
      %v6508 = vunpack.c.l.b16 %v3882
      %v6509 = vunpack.c.h.b16 %v3882
      %v6510 = vunpack.c.l.b16 %v3883
      %v6511 = vunpack.c.h.b16 %v3883
      %v6512 = vunpack.c.l.b16 %v3884
      %v6513 = vunpack.c.h.b16 %v3884
      %v6514 = vunpack.c.l.b16 %v3885
      %v6515 = vunpack.c.h.b16 %v3885
      %v6516 = vunpack.c.l.b16 %v3886
      %v6517 = vunpack.c.h.b16 %v3886
      %v6518 = vunpack.c.l.b16 %v3887
      %v6519 = vunpack.c.h.b16 %v3887
      %v6520 = vunpack.c.l.b16 %v3888
      %v6521 = vunpack.c.h.b16 %v3888
      %v6522 = vunpack.c.l.b16 %v3889
      %v6523 = vunpack.c.h.b16 %v3889
      %v6524 = vunpack.c.l.b16 %v3890
      %v6525 = vunpack.c.h.b16 %v3890
      %v6526 = vunpack.c.l.b16 %v3891
      %v6527 = vunpack.c.h.b16 %v3891
      %v6528 = vunpack.c.l.b16 %v3892
      %v6529 = vunpack.c.h.b16 %v3892
      %v6530 = vunpack.c.l.b16 %v3893
      %v6531 = vunpack.c.h.b16 %v3893
      %v6532 = vunpack.c.l.b16 %v3894
      %v6533 = vunpack.c.h.b16 %v3894
      %v6534 = vunpack.c.l.b16 %v3895
      %v6535 = vunpack.c.h.b16 %v3895
      %v6536 = vunpack.c.l.b16 %v3896
      %v6537 = vunpack.c.h.b16 %v3896
      %v6538 = vunpack.c.l.b16 %v3897
      %v6539 = vunpack.c.h.b16 %v3897
      %v6540 = vunpack.c.l.b16 %v3898
      %v6541 = vunpack.c.h.b16 %v3898
      %v6542 = vunpack.c.l.b16 %v3899
      %v6543 = vunpack.c.h.b16 %v3899
      %v6544 = vunpack.c.l.b16 %v3900
      %v6545 = vunpack.c.h.b16 %v3900
      %v6546 = vunpack.c.l.b16 %v3901
      %v6547 = vunpack.c.h.b16 %v3901
      %v6548 = vunpack.c.l.b16 %v3902
      %v6549 = vunpack.c.h.b16 %v3902
      %v6550 = vunpack.c.l.b16 %v3903
      %v6551 = vunpack.c.h.b16 %v3903
      %v6552 = vunpack.c.l.b16 %v3904
      %v6553 = vunpack.c.h.b16 %v3904
      %v6554 = vunpack.c.l.b16 %v3905
      %v6555 = vunpack.c.h.b16 %v3905
      %v6556 = vunpack.c.l.b16 %v3906
      %v6557 = vunpack.c.h.b16 %v3906
      %v6558 = vunpack.c.l.b16 %v3907
      %v6559 = vunpack.c.h.b16 %v3907
      %v6560 = vunpack.c.l.b16 %v3908
      %v6561 = vunpack.c.h.b16 %v3908
      %v6562 = vunpack.c.l.b16 %v3909
      %v6563 = vunpack.c.h.b16 %v3909
      %v6564 = vunpack.c.l.b16 %v3910
      %v6565 = vunpack.c.h.b16 %v3910
      %v6566 = vunpack.c.l.b16 %v3911
      %v6567 = vunpack.c.h.b16 %v3911
      %v6568 = vunpack.c.l.b16 %v3912
      %v6569 = vunpack.c.h.b16 %v3912
      %v6570 = vunpack.c.l.b16 %v3913
      %v6571 = vunpack.c.h.b16 %v3913
      %v6572 = vunpack.c.l.b16 %v3914
      %v6573 = vunpack.c.h.b16 %v3914
      %v6574 = vunpack.c.l.b16 %v3915
      %v6575 = vunpack.c.h.b16 %v3915
      %v6576 = vunpack.c.l.b16 %v3916
      %v6577 = vunpack.c.h.b16 %v3916
      %v6578 = vunpack.c.l.b16 %v3917
      %v6579 = vunpack.c.h.b16 %v3917
      %v6580 = vunpack.c.l.b16 %v3918
      %v6581 = vunpack.c.h.b16 %v3918
      %v6582 = vunpack.c.l.b16 %v3919
      %v6583 = vunpack.c.h.b16 %v3919
      %v6584 = vunpack.c.l.b16 %v3920
      %v6585 = vunpack.c.h.b16 %v3920
      %v6586 = vunpack.c.l.b16 %v3921
      %v6587 = vunpack.c.h.b16 %v3921
      %v6588 = vunpack.c.l.b16 %v3922
      %v6589 = vunpack.c.h.b16 %v3922
      %v6590 = vunpack.c.l.b16 %v3923
      %v6591 = vunpack.c.h.b16 %v3923
      %v6592 = vunpack.c.l.b16 %v3924
      %v6593 = vunpack.c.h.b16 %v3924
      %v6594 = vunpack.c.l.b16 %v3925
      %v6595 = vunpack.c.h.b16 %v3925
      %v6596 = vunpack.c.l.b16 %v3926
      %v6597 = vunpack.c.h.b16 %v3926
      %v6598 = vunpack.c.l.b16 %v3927
      %v6599 = vunpack.c.h.b16 %v3927
      %v6600 = vunpack.c.l.b16 %v3928
      %v6601 = vunpack.c.h.b16 %v3928
      %v6602 = vunpack.c.l.b16 %v3929
      %v6603 = vunpack.c.h.b16 %v3929
      %v6604 = vunpack.c.l.b16 %v3930
      %v6605 = vunpack.c.h.b16 %v3930
      %v6606 = vunpack.c.l.b16 %v3931
      %v6607 = vunpack.c.h.b16 %v3931
      %v6608 = vunpack.c.l.b16 %v3932
      %v6609 = vunpack.c.h.b16 %v3932
      %v6610 = vunpack.c.l.b16 %v3933
      %v6611 = vunpack.c.h.b16 %v3933
      %v6612 = vunpack.c.l.b16 %v3934
      %v6613 = vunpack.c.h.b16 %v3934
      %v6614 = vunpack.c.l.b16 %v3935
      %v6615 = vunpack.c.h.b16 %v3935
      %v6616 = vunpack.c.l.b16 %v3936
      %v6617 = vunpack.c.h.b16 %v3936
      %v6618 = vunpack.c.l.b16 %v3937
      %v6619 = vunpack.c.h.b16 %v3937
      %v6620 = vunpack.c.l.b16 %v3938
      %v6621 = vunpack.c.h.b16 %v3938
      %v6622 = vunpack.c.l.b16 %v3939
      %v6623 = vunpack.c.h.b16 %v3939
      %v6624 = vunpack.c.l.b16 %v3940
      %v6625 = vunpack.c.h.b16 %v3940
      %v6626 = vunpack.c.l.b16 %v3941
      %v6627 = vunpack.c.h.b16 %v3941
      %v6628 = vunpack.c.l.b16 %v3942
      %v6629 = vunpack.c.h.b16 %v3942
      %v6630 = vunpack.c.l.b16 %v3943
      %v6631 = vunpack.c.h.b16 %v3943
      %v6632 = vunpack.c.l.b16 %v3944
      %v6633 = vunpack.c.h.b16 %v3944
      %v6634 = vunpack.c.l.b16 %v3945
      %v6635 = vunpack.c.h.b16 %v3945
      %v6636 = vunpack.c.l.b16 %v3946
      %v6637 = vunpack.c.h.b16 %v3946
      %v6638 = vunpack.c.l.b16 %v3947
      %v6639 = vunpack.c.h.b16 %v3947
      %v6640 = vunpack.c.l.b16 %v3948
      %v6641 = vunpack.c.h.b16 %v3948
      %v6642 = vunpack.c.l.b16 %v3949
      %v6643 = vunpack.c.h.b16 %v3949
      %v6644 = vunpack.c.l.b16 %v3950
      %v6645 = vunpack.c.h.b16 %v3950
      %v6646 = vunpack.c.l.b16 %v3951
      %v6647 = vunpack.c.h.b16 %v3951
      %v6648 = vunpack.c.l.b16 %v3952
      %v6649 = vunpack.c.h.b16 %v3952
      %v6650 = vunpack.c.l.b16 %v3953
      %v6651 = vunpack.c.h.b16 %v3953
      %v6652 = vunpack.c.l.b16 %v3954
      %v6653 = vunpack.c.h.b16 %v3954
      %v6654 = vunpack.c.l.b16 %v3955
      %v6655 = vunpack.c.h.b16 %v3955
      %v6656 = vunpack.c.l.b16 %v3956
      %v6657 = vunpack.c.h.b16 %v3956
      %v6658 = vunpack.c.l.b16 %v3957
      %v6659 = vunpack.c.h.b16 %v3957
      %v6660 = vunpack.c.l.b16 %v3958
      %v6661 = vunpack.c.h.b16 %v3958
      %v6662 = vunpack.c.l.b16 %v3959
      %v6663 = vunpack.c.h.b16 %v3959
      %v6664 = vunpack.c.l.b16 %v3960
      %v6665 = vunpack.c.h.b16 %v3960
      %v6666 = vunpack.c.l.b16 %v3961
      %v6667 = vunpack.c.h.b16 %v3961
      %v6668 = vunpack.c.l.b16 %v3962
      %v6669 = vunpack.c.h.b16 %v3962
      %v6670 = vunpack.c.l.b16 %v3963
      %v6671 = vunpack.c.h.b16 %v3963
      %v6672 = vunpack.c.l.b16 %v3964
      %v6673 = vunpack.c.h.b16 %v3964
      %v6674 = vunpack.c.l.b16 %v3965
      %v6675 = vunpack.c.h.b16 %v3965
      %v6676 = vunpack.c.l.b16 %v3966
      %v6677 = vunpack.c.h.b16 %v3966
      %v6678 = vunpack.c.l.b16 %v3967
      %v6679 = vunpack.c.h.b16 %v3967
      %v6680 = vunpack.c.l.b16 %v3968
      %v6681 = vunpack.c.h.b16 %v3968
      %v6682 = vunpack.c.l.b16 %v3969
      %v6683 = vunpack.c.h.b16 %v3969
      %v6684 = vunpack.c.l.b16 %v3970
      %v6685 = vunpack.c.h.b16 %v3970
      %v6686 = vunpack.c.l.b16 %v3971
      %v6687 = vunpack.c.h.b16 %v3971
      %v6688 = vunpack.c.l.b16 %v3972
      %v6689 = vunpack.c.h.b16 %v3972
      %v6690 = vunpack.c.l.b16 %v3973
      %v6691 = vunpack.c.h.b16 %v3973
      %v6692 = vunpack.c.l.b16 %v3974
      %v6693 = vunpack.c.h.b16 %v3974
      %v6694 = vunpack.c.l.b16 %v3975
      %v6695 = vunpack.c.h.b16 %v3975
      %v6696 = vunpack.c.l.b16 %v3976
      %v6697 = vunpack.c.h.b16 %v3976
      %v6698 = vunpack.c.l.b16 %v3977
      %v6699 = vunpack.c.h.b16 %v3977
      %v6700 = vunpack.c.l.b16 %v3978
      %v6701 = vunpack.c.h.b16 %v3978
      %v6702 = vunpack.c.l.b16 %v3979
      %v6703 = vunpack.c.h.b16 %v3979
      %v6704 = vunpack.c.l.b16 %v3980
      %v6705 = vunpack.c.h.b16 %v3980
      %v6706 = vunpack.c.l.b16 %v3981
      %v6707 = vunpack.c.h.b16 %v3981
      %v6708 = vunpack.c.l.b16 %v3982
      %v6709 = vunpack.c.h.b16 %v3982
      %v6710 = vunpack.c.l.b16 %v3983
      %v6711 = vunpack.c.h.b16 %v3983
      %v6712 = vunpack.c.l.b16 %v3984
      %v6713 = vunpack.c.h.b16 %v3984
      %v6714 = vunpack.c.l.b16 %v3985
      %v6715 = vunpack.c.h.b16 %v3985
      %v6716 = vunpack.c.l.b16 %v3986
      %v6717 = vunpack.c.h.b16 %v3986
      %v6718 = vunpack.c.l.b16 %v3987
      %v6719 = vunpack.c.h.b16 %v3987
      %v6720 = vunpack.c.l.b16 %v3988
      %v6721 = vunpack.c.h.b16 %v3988
      %v6722 = vunpack.c.l.b16 %v3989
      %v6723 = vunpack.c.h.b16 %v3989
      %v6724 = vunpack.c.l.b16 %v3990
      %v6725 = vunpack.c.h.b16 %v3990
      %v6726 = vunpack.c.l.b16 %v3991
      %v6727 = vunpack.c.h.b16 %v3991
      %v6728 = vunpack.c.l.b16 %v3992
      %v6729 = vunpack.c.h.b16 %v3992
      %v6730 = vunpack.c.l.b16 %v3993
      %v6731 = vunpack.c.h.b16 %v3993
      %v6732 = vunpack.c.l.b16 %v3994
      %v6733 = vunpack.c.h.b16 %v3994
      %v6734 = vunpack.c.l.b16 %v3995
      %v6735 = vunpack.c.h.b16 %v3995
      %v6736 = vunpack.c.l.b16 %v3996
      %v6737 = vunpack.c.h.b16 %v3996
      %v6738 = vunpack.c.l.b16 %v3997
      %v6739 = vunpack.c.h.b16 %v3997
      %v6740 = vunpack.c.l.b16 %v3998
      %v6741 = vunpack.c.h.b16 %v3998
      %v6742 = vunpack.c.l.b16 %v3999
      %v6743 = vunpack.c.h.b16 %v3999
      %v6744 = vunpack.c.l.b16 %v4000
      %v6745 = vunpack.c.h.b16 %v4000
      %v6746 = vunpack.c.l.b16 %v4001
      %v6747 = vunpack.c.h.b16 %v4001
      %v6748 = vunpack.c.l.b16 %v4002
      %v6749 = vunpack.c.h.b16 %v4002
      %v6750 = vunpack.c.l.b16 %v4003
      %v6751 = vunpack.c.h.b16 %v4003
      %v6752 = vunpack.c.l.b16 %v4004
      %v6753 = vunpack.c.h.b16 %v4004
      %v6754 = vunpack.c.l.b16 %v4005
      %v6755 = vunpack.c.h.b16 %v4005
      %v6756 = vunpack.c.l.b16 %v4006
      %v6757 = vunpack.c.h.b16 %v4006
      %v6758 = vunpack.c.l.b16 %v4007
      %v6759 = vunpack.c.h.b16 %v4007
      %v6760 = vunpack.c.l.b16 %v4008
      %v6761 = vunpack.c.h.b16 %v4008
      %v6762 = vunpack.c.l.b16 %v4009
      %v6763 = vunpack.c.h.b16 %v4009
      %v6764 = vunpack.c.l.b16 %v4010
      %v6765 = vunpack.c.h.b16 %v4010
      %v6766 = vunpack.c.l.b16 %v4011
      %v6767 = vunpack.c.h.b16 %v4011
      %v6768 = vunpack.c.l.b16 %v4012
      %v6769 = vunpack.c.h.b16 %v4012
      %v6770 = vunpack.c.l.b16 %v4013
      %v6771 = vunpack.c.h.b16 %v4013
      %v6772 = vunpack.c.l.b16 %v4014
      %v6773 = vunpack.c.h.b16 %v4014
      %v6774 = vunpack.c.l.b16 %v4015
      %v6775 = vunpack.c.h.b16 %v4015
      %v6776 = vunpack.c.l.b16 %v4016
      %v6777 = vunpack.c.h.b16 %v4016
      %v6778 = vunpack.c.l.b16 %v4017
      %v6779 = vunpack.c.h.b16 %v4017
      %v6780 = vunpack.c.l.b16 %v4018
      %v6781 = vunpack.c.h.b16 %v4018
      %v6782 = vunpack.c.l.b16 %v4019
      %v6783 = vunpack.c.h.b16 %v4019
      %v6784 = vunpack.c.l.b16 %v4020
      %v6785 = vunpack.c.h.b16 %v4020
      %v6786 = vunpack.c.l.b16 %v4021
      %v6787 = vunpack.c.h.b16 %v4021
      %v6788 = vunpack.c.l.b16 %v4022
      %v6789 = vunpack.c.h.b16 %v4022
      %v6790 = vunpack.c.l.b16 %v4023
      %v6791 = vunpack.c.h.b16 %v4023
      %v6792 = vunpack.c.l.b16 %v4024
      %v6793 = vunpack.c.h.b16 %v4024
      %v6794 = vunpack.c.l.b16 %v4025
      %v6795 = vunpack.c.h.b16 %v4025
      %v6796 = vunpack.c.l.b16 %v4026
      %v6797 = vunpack.c.h.b16 %v4026
      %v6798 = vunpack.c.l.b16 %v4027
      %v6799 = vunpack.c.h.b16 %v4027
      %v6800 = vunpack.c.l.b16 %v4028
      %v6801 = vunpack.c.h.b16 %v4028
      %v6802 = vunpack.c.l.b16 %v4029
      %v6803 = vunpack.c.h.b16 %v4029
      %v6804 = vunpack.c.l.b16 %v4030
      %v6805 = vunpack.c.h.b16 %v4030
      %v6806 = vunpack.c.l.b16 %v4031
      %v6807 = vunpack.c.h.b16 %v4031
      %v6808 = vunpack.c.l.b16 %v4032
      %v6809 = vunpack.c.h.b16 %v4032
      %v6810 = vunpack.c.l.b16 %v4033
      %v6811 = vunpack.c.h.b16 %v4033
      %v6812 = vunpack.c.l.b16 %v4034
      %v6813 = vunpack.c.h.b16 %v4034
      %v6814 = vunpack.c.l.b16 %v4035
      %v6815 = vunpack.c.h.b16 %v4035
      %v6816 = vunpack.c.l.b16 %v4036
      %v6817 = vunpack.c.h.b16 %v4036
      %v6818 = vunpack.c.l.b16 %v4037
      %v6819 = vunpack.c.h.b16 %v4037
      %v6820 = vunpack.c.l.b16 %v4038
      %v6821 = vunpack.c.h.b16 %v4038
      %v6822 = vunpack.c.l.b16 %v4039
      %v6823 = vunpack.c.h.b16 %v4039
      %v6824 = vunpack.c.l.b16 %v4040
      %v6825 = vunpack.c.h.b16 %v4040
      %v6826 = vunpack.c.l.b16 %v4041
      %v6827 = vunpack.c.h.b16 %v4041
      %v6828 = vunpack.c.l.b16 %v4042
      %v6829 = vunpack.c.h.b16 %v4042
      %v6830 = vunpack.c.l.b16 %v4043
      %v6831 = vunpack.c.h.b16 %v4043
      %v6832 = vunpack.c.l.b16 %v4044
      %v6833 = vunpack.c.h.b16 %v4044
      %v6834 = vunpack.c.l.b16 %v4045
      %v6835 = vunpack.c.h.b16 %v4045
      %v6836 = vunpack.c.l.b16 %v4046
      %v6837 = vunpack.c.h.b16 %v4046
      %v6838 = vunpack.c.l.b16 %v4047
      %v6839 = vunpack.c.h.b16 %v4047
      %v6840 = vunpack.c.l.b16 %v4048
      %v6841 = vunpack.c.h.b16 %v4048
      %v6842 = vunpack.c.l.b16 %v4049
      %v6843 = vunpack.c.h.b16 %v4049
      %v6844 = vunpack.c.l.b16 %v4050
      %v6845 = vunpack.c.h.b16 %v4050
      %v6846 = vunpack.c.l.b16 %v4051
      %v6847 = vunpack.c.h.b16 %v4051
      %v6848 = vunpack.c.l.b16 %v4052
      %v6849 = vunpack.c.h.b16 %v4052
      %v6850 = vunpack.c.l.b16 %v4053
      %v6851 = vunpack.c.h.b16 %v4053
      %v6852 = vunpack.c.l.b16 %v4054
      %v6853 = vunpack.c.h.b16 %v4054
      %v6854 = vunpack.c.l.b16 %v4055
      %v6855 = vunpack.c.h.b16 %v4055
      %v6856 = vunpack.c.l.b16 %v4056
      %v6857 = vunpack.c.h.b16 %v4056
      %v6858 = vunpack.c.l.b16 %v4057
      %v6859 = vunpack.c.h.b16 %v4057
      %v6860 = vunpack.c.l.b16 %v4058
      %v6861 = vunpack.c.h.b16 %v4058
      %v6862 = vunpack.c.l.b16 %v4059
      %v6863 = vunpack.c.h.b16 %v4059
      %v6864 = vunpack.c.l.b16 %v4060
      %v6865 = vunpack.c.h.b16 %v4060
      %v6866 = vunpack.c.l.b16 %v4061
      %v6867 = vunpack.c.h.b16 %v4061
      %v6868 = vunpack.c.l.b16 %v4062
      %v6869 = vunpack.c.h.b16 %v4062
      %v6870 = vunpack.c.l.b16 %v4063
      %v6871 = vunpack.c.h.b16 %v4063
      %v6872 = vunpack.c.l.b16 %v4064
      %v6873 = vunpack.c.h.b16 %v4064
      %v6874 = vunpack.c.l.b16 %v4065
      %v6875 = vunpack.c.h.b16 %v4065
      %v6876 = vunpack.c.l.b16 %v4066
      %v6877 = vunpack.c.h.b16 %v4066
      %v6878 = vunpack.c.l.b16 %v4067
      %v6879 = vunpack.c.h.b16 %v4067
      %v6880 = vunpack.c.l.b16 %v4068
      %v6881 = vunpack.c.h.b16 %v4068
      %v6882 = vunpack.c.l.b16 %v4069
      %v6883 = vunpack.c.h.b16 %v4069
      %v6884 = vunpack.c.l.b16 %v4070
      %v6885 = vunpack.c.h.b16 %v4070
      %v6886 = vunpack.c.l.b16 %v4071
      %v6887 = vunpack.c.h.b16 %v4071
      %v6888 = vunpack.c.l.b16 %v4072
      %v6889 = vunpack.c.h.b16 %v4072
      %v6890 = vunpack.c.l.b16 %v4073
      %v6891 = vunpack.c.h.b16 %v4073
      %v6892 = vunpack.c.l.b16 %v4074
      %v6893 = vunpack.c.h.b16 %v4074
      %v6894 = vunpack.c.l.b16 %v4075
      %v6895 = vunpack.c.h.b16 %v4075
      %v6896 = vunpack.c.l.b16 %v4076
      %v6897 = vunpack.c.h.b16 %v4076
      %v6898 = vunpack.c.l.b16 %v4077
      %v6899 = vunpack.c.h.b16 %v4077
      %v6900 = vunpack.c.l.b16 %v4078
      %v6901 = vunpack.c.h.b16 %v4078
      %v6902 = vunpack.c.l.b16 %v4079
      %v6903 = vunpack.c.h.b16 %v4079
      %v6904 = vunpack.c.l.b16 %v4080
      %v6905 = vunpack.c.h.b16 %v4080
      %v6906 = vunpack.c.l.b16 %v4081
      %v6907 = vunpack.c.h.b16 %v4081
      %v6908 = vunpack.c.l.b16 %v4082
      %v6909 = vunpack.c.h.b16 %v4082
      %v6910 = vunpack.c.l.b16 %v4083
      %v6911 = vunpack.c.h.b16 %v4083
      %v6912 = vunpack.c.l.b16 %v4084
      %v6913 = vunpack.c.h.b16 %v4084
      %v6914 = vunpack.c.l.b16 %v4085
      %v6915 = vunpack.c.h.b16 %v4085
      %v6916 = vunpack.c.l.b16 %v4086
      %v6917 = vunpack.c.h.b16 %v4086
      %v6918 = vunpack.c.l.b16 %v4087
      %v6919 = vunpack.c.h.b16 %v4087
      %v6920 = vunpack.c.l.b16 %v4088
      %v6921 = vunpack.c.h.b16 %v4088
      %v6922 = vunpack.c.l.b16 %v4089
      %v6923 = vunpack.c.h.b16 %v4089
      %v6924 = vunpack.c.l.b16 %v4090
      %v6925 = vunpack.c.h.b16 %v4090
      %v6926 = vunpack.c.l.b16 %v4091
      %v6927 = vunpack.c.h.b16 %v4091
      %v6928 = vunpack.c.l.b16 %v4092
      %v6929 = vunpack.c.h.b16 %v4092
      %v6930 = vunpack.c.l.b16 %v4093
      %v6931 = vunpack.c.h.b16 %v4093
      %v6932 = vunpack.c.l.b16 %v4094
      %v6933 = vunpack.c.h.b16 %v4094
      %v6934 = vunpack.c.l.b16 %v4095
      %v6935 = vunpack.c.h.b16 %v4095
      %v6936 = vunpack.c.l.b16 %v4096
      %v6937 = vunpack.c.h.b16 %v4096
      %v6938 = vunpack.c.l.b16 %v4097
      %v6939 = vunpack.c.h.b16 %v4097
      %v6940 = vunpack.c.l.b16 %v4098
      %v6941 = vunpack.c.h.b16 %v4098
      %v6942 = vunpack.c.l.b16 %v4099
      %v6943 = vunpack.c.h.b16 %v4099
      %v6944 = vunpack.c.l.b16 %v4100
      %v6945 = vunpack.c.h.b16 %v4100
      %v6946 = vunpack.c.l.b16 %v4101
      %v6947 = vunpack.c.h.b16 %v4101
      %v6948 = vunpack.c.l.b16 %v4102
      %v6949 = vunpack.c.h.b16 %v4102
      %v6950 = vunpack.c.l.b16 %v4103
      %v6951 = vunpack.c.h.b16 %v4103
      %v6952 = vunpack.c.l.b16 %v4104
      %v6953 = vunpack.c.h.b16 %v4104
      %v6954 = vunpack.c.l.b16 %v4105
      %v6955 = vunpack.c.h.b16 %v4105
      %v6956 = vunpack.c.l.b16 %v4106
      %v6957 = vunpack.c.h.b16 %v4106
      %v6958 = vunpack.c.l.b16 %v4107
      %v6959 = vunpack.c.h.b16 %v4107
      %v6960 = vunpack.c.l.b16 %v4108
      %v6961 = vunpack.c.h.b16 %v4108
      %v6962 = vunpack.c.l.b16 %v4109
      %v6963 = vunpack.c.h.b16 %v4109
      %v6964 = vunpack.c.l.b16 %v4110
      %v6965 = vunpack.c.h.b16 %v4110
      %v6966 = vunpack.c.l.b16 %v4111
      %v6967 = vunpack.c.h.b16 %v4111
      %v6968 = vunpack.c.l.b16 %v4112
      %v6969 = vunpack.c.h.b16 %v4112
      %v6970 = vunpack.c.l.b16 %v4113
      %v6971 = vunpack.c.h.b16 %v4113
      %v6972 = vunpack.c.l.b16 %v4114
      %v6973 = vunpack.c.h.b16 %v4114
      %v6974 = vunpack.c.l.b16 %v4115
      %v6975 = vunpack.c.h.b16 %v4115
      %v6976 = vunpack.c.l.b16 %v4116
      %v6977 = vunpack.c.h.b16 %v4116
      %v6978 = vunpack.c.l.b16 %v4117
      %v6979 = vunpack.c.h.b16 %v4117
      %v6980 = vunpack.c.l.b16 %v4118
      %v6981 = vunpack.c.h.b16 %v4118
      %v6982 = vunpack.c.l.b16 %v4119
      %v6983 = vunpack.c.h.b16 %v4119
      %v6984 = vunpack.c.l.b16 %v4120
      %v6985 = vunpack.c.h.b16 %v4120
      %v6986 = vunpack.c.l.b16 %v4121
      %v6987 = vunpack.c.h.b16 %v4121
      %v6988 = vunpack.c.l.b16 %v4122
      %v6989 = vunpack.c.h.b16 %v4122
      %v6990 = vunpack.c.l.b16 %v4123
      %v6991 = vunpack.c.h.b16 %v4123
      %v6992 = vunpack.c.l.b16 %v4124
      %v6993 = vunpack.c.h.b16 %v4124
      %v6994 = vunpack.c.l.b16 %v4125
      %v6995 = vunpack.c.h.b16 %v4125
      %v6996 = vunpack.c.l.b16 %v4126
      %v6997 = vunpack.c.h.b16 %v4126
      %v6998 = vunpack.c.l.b16 %v4127
      %v6999 = vunpack.c.h.b16 %v4127
      %v7000 = vunpack.c.l.b16 %v4128
      %v7001 = vunpack.c.h.b16 %v4128
      %v7002 = vunpack.c.l.b16 %v4129
      %v7003 = vunpack.c.h.b16 %v4129
      %v7004 = vunpack.c.l.b16 %v4130
      %v7005 = vunpack.c.h.b16 %v4130
      %v7006 = vunpack.c.l.b16 %v4131
      %v7007 = vunpack.c.h.b16 %v4131
      %v7008 = vunpack.c.l.b16 %v4132
      %v7009 = vunpack.c.h.b16 %v4132
      %v7010 = vunpack.c.l.b16 %v4133
      %v7011 = vunpack.c.h.b16 %v4133
      %v7012 = vunpack.c.l.b16 %v4134
      %v7013 = vunpack.c.h.b16 %v4134
      %v7014 = vunpack.c.l.b16 %v4135
      %v7015 = vunpack.c.h.b16 %v4135
      %v7016 = vunpack.c.l.b16 %v4136
      %v7017 = vunpack.c.h.b16 %v4136
      %v7018 = vunpack.c.l.b16 %v4137
      %v7019 = vunpack.c.h.b16 %v4137
      %v7020 = vunpack.c.l.b16 %v4138
      %v7021 = vunpack.c.h.b16 %v4138
      %v7022 = vunpack.c.l.b16 %v4139
      %v7023 = vunpack.c.h.b16 %v4139
      %v7024 = vunpack.c.l.b16 %v4140
      %v7025 = vunpack.c.h.b16 %v4140
      %v7026 = vunpack.c.l.b16 %v4141
      %v7027 = vunpack.c.h.b16 %v4141
      %v7028 = vunpack.c.l.b16 %v4142
      %v7029 = vunpack.c.h.b16 %v4142
      %v7030 = vunpack.c.l.b16 %v4143
      %v7031 = vunpack.c.h.b16 %v4143
      %v7032 = vunpack.c.l.b16 %v4144
      %v7033 = vunpack.c.h.b16 %v4144
      %v7034 = vunpack.c.l.b16 %v4145
      %v7035 = vunpack.c.h.b16 %v4145
      %v7036 = vunpack.c.l.b16 %v4146
      %v7037 = vunpack.c.h.b16 %v4146
      %v7038 = vunpack.c.l.b16 %v4147
      %v7039 = vunpack.c.h.b16 %v4147
      %v7040 = vunpack.c.l.b16 %v4148
      %v7041 = vunpack.c.h.b16 %v4148
      %v7042 = vunpack.c.l.b16 %v4149
      %v7043 = vunpack.c.h.b16 %v4149
      %v7044 = vunpack.c.l.b16 %v4150
      %v7045 = vunpack.c.h.b16 %v4150
      %v7046 = vunpack.c.l.b16 %v4151
      %v7047 = vunpack.c.h.b16 %v4151
      %v7048 = vunpack.c.l.b16 %v4152
      %v7049 = vunpack.c.h.b16 %v4152
      %v7050 = vunpack.c.l.b16 %v4153
      %v7051 = vunpack.c.h.b16 %v4153
      %v7052 = vunpack.c.l.b16 %v4154
      %v7053 = vunpack.c.h.b16 %v4154
      %v7054 = vunpack.c.l.b16 %v4155
      %v7055 = vunpack.c.h.b16 %v4155
      %v7056 = vunpack.c.l.b16 %v4156
      %v7057 = vunpack.c.h.b16 %v4156
      %v7058 = vunpack.c.l.b16 %v4157
      %v7059 = vunpack.c.h.b16 %v4157
      %v7060 = vunpack.c.l.b16 %v4158
      %v7061 = vunpack.c.h.b16 %v4158
      %v7062 = vunpack.c.l.b16 %v4159
      %v7063 = vunpack.c.h.b16 %v4159
      %v7064 = vunpack.c.l.b16 %v4160
      %v7065 = vunpack.c.h.b16 %v4160
      %v7066 = vunpack.c.l.b16 %v4161
      %v7067 = vunpack.c.h.b16 %v4161
      %v7068 = vunpack.c.l.b16 %v4162
      %v7069 = vunpack.c.h.b16 %v4162
      %v7070 = vunpack.c.l.b16 %v4163
      %v7071 = vunpack.c.h.b16 %v4163
      %v7072 = vunpack.c.l.b16 %v4164
      %v7073 = vunpack.c.h.b16 %v4164
      %v7074 = vunpack.c.l.b16 %v4165
      %v7075 = vunpack.c.h.b16 %v4165
      %v7076 = vunpack.c.l.b16 %v4166
      %v7077 = vunpack.c.h.b16 %v4166
      %v7078 = vunpack.c.l.b16 %v4167
      %v7079 = vunpack.c.h.b16 %v4167
      %v7080 = vunpack.c.l.b16 %v4168
      %v7081 = vunpack.c.h.b16 %v4168
      %v7082 = vunpack.c.l.b16 %v4169
      %v7083 = vunpack.c.h.b16 %v4169
      %v7084 = vunpack.c.l.b16 %v4170
      %v7085 = vunpack.c.h.b16 %v4170
      %v7086 = vunpack.c.l.b16 %v4171
      %v7087 = vunpack.c.h.b16 %v4171
      %v7088 = vunpack.c.l.b16 %v4172
      %v7089 = vunpack.c.h.b16 %v4172
      %v7090 = vunpack.c.l.b16 %v4173
      %v7091 = vunpack.c.h.b16 %v4173
      %v7092 = vunpack.c.l.b16 %v4174
      %v7093 = vunpack.c.h.b16 %v4174
      %v7094 = vunpack.c.l.b16 %v4175
      %v7095 = vunpack.c.h.b16 %v4175
      %v7096 = vunpack.c.l.b16 %v4176
      %v7097 = vunpack.c.h.b16 %v4176
      %v7098 = vunpack.c.l.b16 %v4177
      %v7099 = vunpack.c.h.b16 %v4177
      %v7100 = vunpack.c.l.b16 %v4178
      %v7101 = vunpack.c.h.b16 %v4178
      %v7102 = vunpack.c.l.b16 %v4179
      %v7103 = vunpack.c.h.b16 %v4179
      %v7104 = vunpack.c.l.b16 %v4180
      %v7105 = vunpack.c.h.b16 %v4180
      %v7106 = vunpack.c.l.b16 %v4181
      %v7107 = vunpack.c.h.b16 %v4181
      %v7108 = vunpack.c.l.b16 %v4182
      %v7109 = vunpack.c.h.b16 %v4182
      %v7110 = vunpack.c.l.b16 %v4183
      %v7111 = vunpack.c.h.b16 %v4183
      %v7112 = vunpack.c.l.b16 %v4184
      %v7113 = vunpack.c.h.b16 %v4184
      %v7114 = vunpack.c.l.b16 %v4185
      %v7115 = vunpack.c.h.b16 %v4185
      %v7116 = vunpack.c.l.b16 %v4186
      %v7117 = vunpack.c.h.b16 %v4186
      %v7118 = vunpack.c.l.b16 %v4187
      %v7119 = vunpack.c.h.b16 %v4187
      %v7120 = vunpack.c.l.b16 %v4188
      %v7121 = vunpack.c.h.b16 %v4188
      %v7122 = vunpack.c.l.b16 %v4189
      %v7123 = vunpack.c.h.b16 %v4189
      %v7124 = vunpack.c.l.b16 %v4190
      %v7125 = vunpack.c.h.b16 %v4190
      %v7126 = vunpack.c.l.b16 %v4191
      %v7127 = vunpack.c.h.b16 %v4191
      %v7128 = vunpack.c.l.b16 %v4192
      %v7129 = vunpack.c.h.b16 %v4192
      %v7130 = vunpack.c.l.b16 %v4193
      %v7131 = vunpack.c.h.b16 %v4193
      %v7132 = vunpack.c.l.b16 %v4194
      %v7133 = vunpack.c.h.b16 %v4194
      %v7134 = vunpack.c.l.b16 %v4195
      %v7135 = vunpack.c.h.b16 %v4195
      %v7136 = vunpack.c.l.b16 %v4196
      %v7137 = vunpack.c.h.b16 %v4196
      %v7138 = vunpack.c.l.b16 %v4197
      %v7139 = vunpack.c.h.b16 %v4197
      %v7140 = vunpack.c.l.b16 %v4198
      %v7141 = vunpack.c.h.b16 %v4198
      %v7142 = vunpack.c.l.b16 %v4199
      %v7143 = vunpack.c.h.b16 %v4199
      %v7144 = vunpack.c.l.b16 %v4200
      %v7145 = vunpack.c.h.b16 %v4200
      %v7146 = vunpack.c.l.b16 %v4201
      %v7147 = vunpack.c.h.b16 %v4201
      %v7148 = vunpack.c.l.b16 %v4202
      %v7149 = vunpack.c.h.b16 %v4202
      %v7150 = vunpack.c.l.b16 %v4203
      %v7151 = vunpack.c.h.b16 %v4203
      %v7152 = vunpack.c.l.b16 %v4204
      %v7153 = vunpack.c.h.b16 %v4204
      %v7154 = vunpack.c.l.b16 %v4205
      %v7155 = vunpack.c.h.b16 %v4205
      %v7156 = vunpack.c.l.b16 %v4206
      %v7157 = vunpack.c.h.b16 %v4206
      %v7158 = vunpack.c.l.b16 %v4207
      %v7159 = vunpack.c.h.b16 %v4207
      %v7160 = vunpack.c.l.b16 %v4208
      %v7161 = vunpack.c.h.b16 %v4208
      %v7162 = vunpack.c.l.b16 %v4209
      %v7163 = vunpack.c.h.b16 %v4209
      %v7164 = vunpack.c.l.b16 %v4210
      %v7165 = vunpack.c.h.b16 %v4210
      %v7166 = vunpack.c.l.b16 %v4211
      %v7167 = vunpack.c.h.b16 %v4211
      %v7168 = vunpack.c.l.b16 %v4212
      %v7169 = vunpack.c.h.b16 %v4212
      %v7170 = vunpack.c.l.b16 %v4213
      %v7171 = vunpack.c.h.b16 %v4213
      %v7172 = vunpack.c.l.b16 %v4214
      %v7173 = vunpack.c.h.b16 %v4214
      %v7174 = vunpack.c.l.b16 %v4215
      %v7175 = vunpack.c.h.b16 %v4215
      %v7176 = vunpack.c.l.b16 %v4216
      %v7177 = vunpack.c.h.b16 %v4216
      %v7178 = vunpack.c.l.b16 %v4217
      %v7179 = vunpack.c.h.b16 %v4217
      %v7180 = vunpack.c.l.b16 %v4218
      %v7181 = vunpack.c.h.b16 %v4218
      %v7182 = vunpack.c.l.b16 %v4219
      %v7183 = vunpack.c.h.b16 %v4219
      %v7184 = vunpack.c.l.b16 %v4220
      %v7185 = vunpack.c.h.b16 %v4220
      %v7186 = vunpack.c.l.b16 %v4221
      %v7187 = vunpack.c.h.b16 %v4221
      %v7188 = vunpack.c.l.b16 %v4222
      %v7189 = vunpack.c.h.b16 %v4222
      %v7190 = vunpack.c.l.b16 %v4223
      %v7191 = vunpack.c.h.b16 %v4223
      %v7192 = vunpack.c.l.b16 %v4224
      %v7193 = vunpack.c.h.b16 %v4224
      %v7194 = vunpack.c.l.b16 %v4225
      %v7195 = vunpack.c.h.b16 %v4225
      %v7196 = vunpack.c.l.b16 %v4226
      %v7197 = vunpack.c.h.b16 %v4226
      %v7198 = vunpack.c.l.b16 %v4227
      %v7199 = vunpack.c.h.b16 %v4227
      %v7200 = vunpack.c.l.b16 %v4228
      %v7201 = vunpack.c.h.b16 %v4228
      %v7202 = vunpack.c.l.b16 %v4229
      %v7203 = vunpack.c.h.b16 %v4229
      %v7204 = vunpack.c.l.b16 %v4230
      %v7205 = vunpack.c.h.b16 %v4230
      %v7206 = vunpack.c.l.b16 %v4231
      %v7207 = vunpack.c.h.b16 %v4231
      %v7208 = vunpack.c.l.b16 %v4232
      %v7209 = vunpack.c.h.b16 %v4232
      %v7210 = vunpack.c.l.b16 %v4233
      %v7211 = vunpack.c.h.b16 %v4233
      %v7212 = vunpack.c.l.b16 %v4234
      %v7213 = vunpack.c.h.b16 %v4234
      %v7214 = vunpack.c.l.b16 %v4235
      %v7215 = vunpack.c.h.b16 %v4235
      %v7216 = vunpack.c.l.b16 %v4236
      %v7217 = vunpack.c.h.b16 %v4236
      %v7218 = vunpack.c.l.b16 %v4237
      %v7219 = vunpack.c.h.b16 %v4237
      %v7220 = vunpack.c.l.b16 %v4238
      %v7221 = vunpack.c.h.b16 %v4238
      %v7222 = vunpack.c.l.b16 %v4239
      %v7223 = vunpack.c.h.b16 %v4239
      %v7224 = vunpack.c.l.b16 %v4240
      %v7225 = vunpack.c.h.b16 %v4240
      %v7226 = vunpack.c.l.b16 %v4241
      %v7227 = vunpack.c.h.b16 %v4241
      %v7228 = vunpack.c.l.b16 %v4242
      %v7229 = vunpack.c.h.b16 %v4242
      %v7230 = vunpack.c.l.b16 %v4243
      %v7231 = vunpack.c.h.b16 %v4243
      %v7232 = vunpack.c.l.b16 %v4244
      %v7233 = vunpack.c.h.b16 %v4244
      %v7234 = vunpack.c.l.b16 %v4245
      %v7235 = vunpack.c.h.b16 %v4245
      %v7236 = vunpack.c.l.b16 %v4246
      %v7237 = vunpack.c.h.b16 %v4246
      %v7238 = vunpack.c.l.b16 %v4247
      %v7239 = vunpack.c.h.b16 %v4247
      %v7240 = vunpack.c.l.b16 %v4248
      %v7241 = vunpack.c.h.b16 %v4248
      %v7242 = vunpack.c.l.b16 %v4249
      %v7243 = vunpack.c.h.b16 %v4249
      %v7244 = vunpack.c.l.b16 %v4250
      %v7245 = vunpack.c.h.b16 %v4250
      %v7246 = vunpack.c.l.b16 %v4251
      %v7247 = vunpack.c.h.b16 %v4251
      %v7248 = vunpack.c.l.b16 %v4252
      %v7249 = vunpack.c.h.b16 %v4252
      %v7250 = vunpack.c.l.b16 %v4253
      %v7251 = vunpack.c.h.b16 %v4253
      %v7252 = vunpack.c.l.b16 %v4254
      %v7253 = vunpack.c.h.b16 %v4254
      %v7254 = vunpack.c.l.b16 %v4255
      %v7255 = vunpack.c.h.b16 %v4255
      %v7256 = vunpack.c.l.b16 %v4256
      %v7257 = vunpack.c.h.b16 %v4256
      %v7258 = vunpack.c.l.b16 %v4257
      %v7259 = vunpack.c.h.b16 %v4257
      %v7260 = vunpack.c.l.b16 %v4258
      %v7261 = vunpack.c.h.b16 %v4258
      %v7262 = vunpack.c.l.b16 %v4259
      %v7263 = vunpack.c.h.b16 %v4259
      %v7264 = vunpack.c.l.b16 %v4260
      %v7265 = vunpack.c.h.b16 %v4260
      %v7266 = vunpack.c.l.b16 %v4261
      %v7267 = vunpack.c.h.b16 %v4261
      %v7268 = vunpack.c.l.b16 %v4262
      %v7269 = vunpack.c.h.b16 %v4262
      %v7270 = vunpack.c.l.b16 %v4263
      %v7271 = vunpack.c.h.b16 %v4263
      %v7272 = vunpack.c.l.b16 %v4264
      %v7273 = vunpack.c.h.b16 %v4264
      %v7274 = vunpack.c.l.b16 %v4265
      %v7275 = vunpack.c.h.b16 %v4265
      %v7276 = vunpack.c.l.b16 %v4266
      %v7277 = vunpack.c.h.b16 %v4266
      %v7278 = vunpack.c.l.b16 %v4267
      %v7279 = vunpack.c.h.b16 %v4267
      %v7280 = vunpack.c.l.b16 %v4268
      %v7281 = vunpack.c.h.b16 %v4268
      %v7282 = vunpack.c.l.b16 %v4269
      %v7283 = vunpack.c.h.b16 %v4269
      %v7284 = vunpack.c.l.b16 %v4270
      %v7285 = vunpack.c.h.b16 %v4270
      %v7286 = vunpack.c.l.b16 %v4271
      %v7287 = vunpack.c.h.b16 %v4271
      %v7288 = vunpack.c.l.b16 %v4272
      %v7289 = vunpack.c.h.b16 %v4272
      %v7290 = vunpack.c.l.b16 %v4273
      %v7291 = vunpack.c.h.b16 %v4273
      %v7292 = vunpack.c.l.b16 %v4274
      %v7293 = vunpack.c.h.b16 %v4274
      %v7294 = vunpack.c.l.b16 %v4275
      %v7295 = vunpack.c.h.b16 %v4275
      %v7296 = vunpack.c.l.b16 %v4276
      %v7297 = vunpack.c.h.b16 %v4276
      %v7298 = vunpack.c.l.b16 %v4277
      %v7299 = vunpack.c.h.b16 %v4277
      %v7300 = vunpack.c.l.b16 %v4278
      %v7301 = vunpack.c.h.b16 %v4278
      %v7302 = vunpack.c.l.b16 %v4279
      %v7303 = vunpack.c.h.b16 %v4279
      %v7304 = vunpack.c.l.b16 %v4280
      %v7305 = vunpack.c.h.b16 %v4280
      %v7306 = vunpack.c.l.b16 %v4281
      %v7307 = vunpack.c.h.b16 %v4281
      %v7308 = vunpack.c.l.b16 %v4282
      %v7309 = vunpack.c.h.b16 %v4282
      %v7310 = vunpack.c.l.b16 %v4283
      %v7311 = vunpack.c.h.b16 %v4283
      %v7312 = vunpack.c.l.b16 %v4284
      %v7313 = vunpack.c.h.b16 %v4284
      %v7314 = vunpack.c.l.b16 %v4285
      %v7315 = vunpack.c.h.b16 %v4285
      %v7316 = vunpack.c.l.b16 %v4286
      %v7317 = vunpack.c.h.b16 %v4286
      %v7318 = vunpack.c.l.b16 %v4287
      %v7319 = vunpack.c.h.b16 %v4287
      %v7320 = vunpack.c.l.b16 %v4288
      %v7321 = vunpack.c.h.b16 %v4288
      %v7322 = vunpack.c.l.b16 %v4289
      %v7323 = vunpack.c.h.b16 %v4289
      %v7324 = vunpack.c.l.b16 %v4290
      %v7325 = vunpack.c.h.b16 %v4290
      %v7326 = vunpack.c.l.b16 %v4291
      %v7327 = vunpack.c.h.b16 %v4291
      %v7328 = vunpack.c.l.b16 %v4292
      %v7329 = vunpack.c.h.b16 %v4292
      %v7330 = vunpack.c.l.b16 %v4293
      %v7331 = vunpack.c.h.b16 %v4293
      %v7332 = vunpack.c.l.b16 %v4294
      %v7333 = vunpack.c.h.b16 %v4294
      %v7334 = vunpack.c.l.b16 %v4295
      %v7335 = vunpack.c.h.b16 %v4295
      %v7336 = vunpack.c.l.b16 %v4296
      %v7337 = vunpack.c.h.b16 %v4296
      %v7338 = vunpack.c.l.b16 %v4297
      %v7339 = vunpack.c.h.b16 %v4297
      %v7340 = vunpack.c.l.b16 %v4298
      %v7341 = vunpack.c.h.b16 %v4298
      %v7342 = vunpack.c.l.b16 %v4299
      %v7343 = vunpack.c.h.b16 %v4299
      %v7344 = vunpack.c.l.b16 %v4300
      %v7345 = vunpack.c.h.b16 %v4300
      %v7346 = vunpack.c.l.b16 %v4301
      %v7347 = vunpack.c.h.b16 %v4301
      %v7348 = vunpack.c.l.b16 %v4302
      %v7349 = vunpack.c.h.b16 %v4302
      %v7350 = vunpack.c.l.b16 %v4303
      %v7351 = vunpack.c.h.b16 %v4303
      %v7352 = vunpack.c.l.b16 %v4304
      %v7353 = vunpack.c.h.b16 %v4304
      %v7354 = vunpack.c.l.b16 %v4305
      %v7355 = vunpack.c.h.b16 %v4305
      %v7356 = vunpack.c.l.b16 %v4306
      %v7357 = vunpack.c.h.b16 %v4306
      %v7358 = vunpack.c.l.b16 %v4307
      %v7359 = vunpack.c.h.b16 %v4307
      %v7360 = vunpack.c.l.b16 %v4308
      %v7361 = vunpack.c.h.b16 %v4308
      %v7362 = vunpack.c.l.b16 %v4309
      %v7363 = vunpack.c.h.b16 %v4309
      %v7364 = vunpack.c.l.b16 %v4310
      %v7365 = vunpack.c.h.b16 %v4310
      %v7366 = vunpack.c.l.b16 %v4311
      %v7367 = vunpack.c.h.b16 %v4311
      %v7368 = vunpack.c.l.b16 %v4312
      %v7369 = vunpack.c.h.b16 %v4312
      %v7370 = vunpack.c.l.b16 %v4313
      %v7371 = vunpack.c.h.b16 %v4313
      %v7372 = vunpack.c.l.b16 %v4314
      %v7373 = vunpack.c.h.b16 %v4314
      %v7374 = vunpack.c.l.b16 %v4315
      %v7375 = vunpack.c.h.b16 %v4315
      %v7376 = vunpack.c.l.b16 %v4316
      %v7377 = vunpack.c.h.b16 %v4316
      %v7378 = vunpack.c.l.b16 %v4317
      %v7379 = vunpack.c.h.b16 %v4317
      %v7380 = vunpack.c.l.b16 %v4318
      %v7381 = vunpack.c.h.b16 %v4318
      %v7382 = vunpack.c.l.b16 %v4319
      %v7383 = vunpack.c.h.b16 %v4319
      %v7384 = vunpack.c.l.b16 %v4320
      %v7385 = vunpack.c.h.b16 %v4320
      %v7386 = vunpack.c.l.b16 %v4321
      %v7387 = vunpack.c.h.b16 %v4321
      %v7388 = vunpack.c.l.b16 %v4322
      %v7389 = vunpack.c.h.b16 %v4322
      %v7390 = vunpack.c.l.b16 %v4323
      %v7391 = vunpack.c.h.b16 %v4323
      %v7392 = vunpack.c.l.b16 %v4324
      %v7393 = vunpack.c.h.b16 %v4324
      %v7394 = vunpack.c.l.b16 %v4325
      %v7395 = vunpack.c.h.b16 %v4325
      %v7396 = vunpack.c.l.b16 %v4326
      %v7397 = vunpack.c.h.b16 %v4326
      %v7398 = vunpack.c.l.b16 %v4327
      %v7399 = vunpack.c.h.b16 %v4327
      %v7400 = vpack.c.b16 %v5360, %v5352
      %v7401 = vpack.c.b16 %v5361, %v5353
      %v7402 = vpack.c.b16 %v5362, %v5354
      %v7403 = vpack.c.b16 %v5363, %v5355
      %v7404 = vpack.c.b16 %v5364, %v5356
      %v7405 = vpack.c.b16 %v5365, %v5357
      %v7406 = vpack.c.b16 %v5366, %v5358
      %v7407 = vpack.c.b16 %v5367, %v5359
      %v7408 = vpack.c.b16 %v5376, %v5368
      %v7409 = vpack.c.b16 %v5377, %v5369
      %v7410 = vpack.c.b16 %v5378, %v5370
      %v7411 = vpack.c.b16 %v5379, %v5371
      %v7412 = vpack.c.b16 %v5380, %v5372
      %v7413 = vpack.c.b16 %v5381, %v5373
      %v7414 = vpack.c.b16 %v5382, %v5374
      %v7415 = vpack.c.b16 %v5383, %v5375
      %v7416 = vpack.c.b16 %v5392, %v5384
      %v7417 = vpack.c.b16 %v5393, %v5385
      %v7418 = vpack.c.b16 %v5394, %v5386
      %v7419 = vpack.c.b16 %v5395, %v5387
      %v7420 = vpack.c.b16 %v5396, %v5388
      %v7421 = vpack.c.b16 %v5397, %v5389
      %v7422 = vpack.c.b16 %v5398, %v5390
      %v7423 = vpack.c.b16 %v5399, %v5391
      %v7424 = vpack.c.b16 %v5408, %v5400
      %v7425 = vpack.c.b16 %v5409, %v5401
      %v7426 = vpack.c.b16 %v5410, %v5402
      %v7427 = vpack.c.b16 %v5411, %v5403
      %v7428 = vpack.c.b16 %v5412, %v5404
      %v7429 = vpack.c.b16 %v5413, %v5405
      %v7430 = vpack.c.b16 %v5414, %v5406
      %v7431 = vpack.c.b16 %v5415, %v5407
      %v7432 = vpack.c.b16 %v5424, %v5416
      %v7433 = vpack.c.b16 %v5425, %v5417
      %v7434 = vpack.c.b16 %v5426, %v5418
      %v7435 = vpack.c.b16 %v5427, %v5419
      %v7436 = vpack.c.b16 %v5428, %v5420
      %v7437 = vpack.c.b16 %v5429, %v5421
      %v7438 = vpack.c.b16 %v5430, %v5422
      %v7439 = vpack.c.b16 %v5431, %v5423
      %v7440 = vpack.c.b16 %v5440, %v5432
      %v7441 = vpack.c.b16 %v5441, %v5433
      %v7442 = vpack.c.b16 %v5442, %v5434
      %v7443 = vpack.c.b16 %v5443, %v5435
      %v7444 = vpack.c.b16 %v5444, %v5436
      %v7445 = vpack.c.b16 %v5445, %v5437
      %v7446 = vpack.c.b16 %v5446, %v5438
      %v7447 = vpack.c.b16 %v5447, %v5439
      %v7448 = vpack.c.b16 %v5456, %v5448
      %v7449 = vpack.c.b16 %v5457, %v5449
      %v7450 = vpack.c.b16 %v5458, %v5450
      %v7451 = vpack.c.b16 %v5459, %v5451
      %v7452 = vpack.c.b16 %v5460, %v5452
      %v7453 = vpack.c.b16 %v5461, %v5453
      %v7454 = vpack.c.b16 %v5462, %v5454
      %v7455 = vpack.c.b16 %v5463, %v5455
      %v7456 = vpack.c.b16 %v5472, %v5464
      %v7457 = vpack.c.b16 %v5473, %v5465
      %v7458 = vpack.c.b16 %v5474, %v5466
      %v7459 = vpack.c.b16 %v5475, %v5467
      %v7460 = vpack.c.b16 %v5476, %v5468
      %v7461 = vpack.c.b16 %v5477, %v5469
      %v7462 = vpack.c.b16 %v5478, %v5470
      %v7463 = vpack.c.b16 %v5479, %v5471
      %v7464 = vpack.c.b16 %v5488, %v5480
      %v7465 = vpack.c.b16 %v5489, %v5481
      %v7466 = vpack.c.b16 %v5490, %v5482
      %v7467 = vpack.c.b16 %v5491, %v5483
      %v7468 = vpack.c.b16 %v5492, %v5484
      %v7469 = vpack.c.b16 %v5493, %v5485
      %v7470 = vpack.c.b16 %v5494, %v5486
      %v7471 = vpack.c.b16 %v5495, %v5487
      %v7472 = vpack.c.b16 %v5504, %v5496
      %v7473 = vpack.c.b16 %v5505, %v5497
      %v7474 = vpack.c.b16 %v5506, %v5498
      %v7475 = vpack.c.b16 %v5507, %v5499
      %v7476 = vpack.c.b16 %v5508, %v5500
      %v7477 = vpack.c.b16 %v5509, %v5501
      %v7478 = vpack.c.b16 %v5510, %v5502
      %v7479 = vpack.c.b16 %v5511, %v5503
      %v7480 = vpack.c.b16 %v5520, %v5512
      %v7481 = vpack.c.b16 %v5521, %v5513
      %v7482 = vpack.c.b16 %v5522, %v5514
      %v7483 = vpack.c.b16 %v5523, %v5515
      %v7484 = vpack.c.b16 %v5524, %v5516
      %v7485 = vpack.c.b16 %v5525, %v5517
      %v7486 = vpack.c.b16 %v5526, %v5518
      %v7487 = vpack.c.b16 %v5527, %v5519
      %v7488 = vpack.c.b16 %v5536, %v5528
      %v7489 = vpack.c.b16 %v5537, %v5529
      %v7490 = vpack.c.b16 %v5538, %v5530
      %v7491 = vpack.c.b16 %v5539, %v5531
      %v7492 = vpack.c.b16 %v5540, %v5532
      %v7493 = vpack.c.b16 %v5541, %v5533
      %v7494 = vpack.c.b16 %v5542, %v5534
      %v7495 = vpack.c.b16 %v5543, %v5535
      %v7496 = vpack.c.b16 %v5552, %v5544
      %v7497 = vpack.c.b16 %v5553, %v5545
      %v7498 = vpack.c.b16 %v5554, %v5546
      %v7499 = vpack.c.b16 %v5555, %v5547
      %v7500 = vpack.c.b16 %v5556, %v5548
      %v7501 = vpack.c.b16 %v5557, %v5549
      %v7502 = vpack.c.b16 %v5558, %v5550
      %v7503 = vpack.c.b16 %v5559, %v5551
      %v7504 = vpack.c.b16 %v5568, %v5560
      %v7505 = vpack.c.b16 %v5569, %v5561
      %v7506 = vpack.c.b16 %v5570, %v5562
      %v7507 = vpack.c.b16 %v5571, %v5563
      %v7508 = vpack.c.b16 %v5572, %v5564
      %v7509 = vpack.c.b16 %v5573, %v5565
      %v7510 = vpack.c.b16 %v5574, %v5566
      %v7511 = vpack.c.b16 %v5575, %v5567
      %v7512 = vpack.c.b16 %v5584, %v5576
      %v7513 = vpack.c.b16 %v5585, %v5577
      %v7514 = vpack.c.b16 %v5586, %v5578
      %v7515 = vpack.c.b16 %v5587, %v5579
      %v7516 = vpack.c.b16 %v5588, %v5580
      %v7517 = vpack.c.b16 %v5589, %v5581
      %v7518 = vpack.c.b16 %v5590, %v5582
      %v7519 = vpack.c.b16 %v5591, %v5583
      %v7520 = vpack.c.b16 %v5600, %v5592
      %v7521 = vpack.c.b16 %v5601, %v5593
      %v7522 = vpack.c.b16 %v5602, %v5594
      %v7523 = vpack.c.b16 %v5603, %v5595
      %v7524 = vpack.c.b16 %v5604, %v5596
      %v7525 = vpack.c.b16 %v5605, %v5597
      %v7526 = vpack.c.b16 %v5606, %v5598
      %v7527 = vpack.c.b16 %v5607, %v5599
      %v7528 = vpack.c.b16 %v5616, %v5608
      %v7529 = vpack.c.b16 %v5617, %v5609
      %v7530 = vpack.c.b16 %v5618, %v5610
      %v7531 = vpack.c.b16 %v5619, %v5611
      %v7532 = vpack.c.b16 %v5620, %v5612
      %v7533 = vpack.c.b16 %v5621, %v5613
      %v7534 = vpack.c.b16 %v5622, %v5614
      %v7535 = vpack.c.b16 %v5623, %v5615
      %v7536 = vpack.c.b16 %v5632, %v5624
      %v7537 = vpack.c.b16 %v5633, %v5625
      %v7538 = vpack.c.b16 %v5634, %v5626
      %v7539 = vpack.c.b16 %v5635, %v5627
      %v7540 = vpack.c.b16 %v5636, %v5628
      %v7541 = vpack.c.b16 %v5637, %v5629
      %v7542 = vpack.c.b16 %v5638, %v5630
      %v7543 = vpack.c.b16 %v5639, %v5631
      %v7544 = vpack.c.b16 %v5648, %v5640
      %v7545 = vpack.c.b16 %v5649, %v5641
      %v7546 = vpack.c.b16 %v5650, %v5642
      %v7547 = vpack.c.b16 %v5651, %v5643
      %v7548 = vpack.c.b16 %v5652, %v5644
      %v7549 = vpack.c.b16 %v5653, %v5645
      %v7550 = vpack.c.b16 %v5654, %v5646
      %v7551 = vpack.c.b16 %v5655, %v5647
      %v7552 = vpack.c.b16 %v5664, %v5656
      %v7553 = vpack.c.b16 %v5665, %v5657
      %v7554 = vpack.c.b16 %v5666, %v5658
      %v7555 = vpack.c.b16 %v5667, %v5659
      %v7556 = vpack.c.b16 %v5668, %v5660
      %v7557 = vpack.c.b16 %v5669, %v5661
      %v7558 = vpack.c.b16 %v5670, %v5662
      %v7559 = vpack.c.b16 %v5671, %v5663
      %v7560 = vpack.c.b16 %v5680, %v5672
      %v7561 = vpack.c.b16 %v5681, %v5673
      %v7562 = vpack.c.b16 %v5682, %v5674
      %v7563 = vpack.c.b16 %v5683, %v5675
      %v7564 = vpack.c.b16 %v5684, %v5676
      %v7565 = vpack.c.b16 %v5685, %v5677
      %v7566 = vpack.c.b16 %v5686, %v5678
      %v7567 = vpack.c.b16 %v5687, %v5679
      %v7568 = vpack.c.b16 %v5696, %v5688
      %v7569 = vpack.c.b16 %v5697, %v5689
      %v7570 = vpack.c.b16 %v5698, %v5690
      %v7571 = vpack.c.b16 %v5699, %v5691
      %v7572 = vpack.c.b16 %v5700, %v5692
      %v7573 = vpack.c.b16 %v5701, %v5693
      %v7574 = vpack.c.b16 %v5702, %v5694
      %v7575 = vpack.c.b16 %v5703, %v5695
      %v7576 = vpack.c.b16 %v5712, %v5704
      %v7577 = vpack.c.b16 %v5713, %v5705
      %v7578 = vpack.c.b16 %v5714, %v5706
      %v7579 = vpack.c.b16 %v5715, %v5707
      %v7580 = vpack.c.b16 %v5716, %v5708
      %v7581 = vpack.c.b16 %v5717, %v5709
      %v7582 = vpack.c.b16 %v5718, %v5710
      %v7583 = vpack.c.b16 %v5719, %v5711
      %v7584 = vpack.c.b16 %v5728, %v5720
      %v7585 = vpack.c.b16 %v5729, %v5721
      %v7586 = vpack.c.b16 %v5730, %v5722
      %v7587 = vpack.c.b16 %v5731, %v5723
      %v7588 = vpack.c.b16 %v5732, %v5724
      %v7589 = vpack.c.b16 %v5733, %v5725
      %v7590 = vpack.c.b16 %v5734, %v5726
      %v7591 = vpack.c.b16 %v5735, %v5727
      %v7592 = vpack.c.b16 %v5744, %v5736
      %v7593 = vpack.c.b16 %v5745, %v5737
      %v7594 = vpack.c.b16 %v5746, %v5738
      %v7595 = vpack.c.b16 %v5747, %v5739
      %v7596 = vpack.c.b16 %v5748, %v5740
      %v7597 = vpack.c.b16 %v5749, %v5741
      %v7598 = vpack.c.b16 %v5750, %v5742
      %v7599 = vpack.c.b16 %v5751, %v5743
      %v7600 = vpack.c.b16 %v5760, %v5752
      %v7601 = vpack.c.b16 %v5761, %v5753
      %v7602 = vpack.c.b16 %v5762, %v5754
      %v7603 = vpack.c.b16 %v5763, %v5755
      %v7604 = vpack.c.b16 %v5764, %v5756
      %v7605 = vpack.c.b16 %v5765, %v5757
      %v7606 = vpack.c.b16 %v5766, %v5758
      %v7607 = vpack.c.b16 %v5767, %v5759
      %v7608 = vpack.c.b16 %v5776, %v5768
      %v7609 = vpack.c.b16 %v5777, %v5769
      %v7610 = vpack.c.b16 %v5778, %v5770
      %v7611 = vpack.c.b16 %v5779, %v5771
      %v7612 = vpack.c.b16 %v5780, %v5772
      %v7613 = vpack.c.b16 %v5781, %v5773
      %v7614 = vpack.c.b16 %v5782, %v5774
      %v7615 = vpack.c.b16 %v5783, %v5775
      %v7616 = vpack.c.b16 %v5792, %v5784
      %v7617 = vpack.c.b16 %v5793, %v5785
      %v7618 = vpack.c.b16 %v5794, %v5786
      %v7619 = vpack.c.b16 %v5795, %v5787
      %v7620 = vpack.c.b16 %v5796, %v5788
      %v7621 = vpack.c.b16 %v5797, %v5789
      %v7622 = vpack.c.b16 %v5798, %v5790
      %v7623 = vpack.c.b16 %v5799, %v5791
      %v7624 = vpack.c.b16 %v5808, %v5800
      %v7625 = vpack.c.b16 %v5809, %v5801
      %v7626 = vpack.c.b16 %v5810, %v5802
      %v7627 = vpack.c.b16 %v5811, %v5803
      %v7628 = vpack.c.b16 %v5812, %v5804
      %v7629 = vpack.c.b16 %v5813, %v5805
      %v7630 = vpack.c.b16 %v5814, %v5806
      %v7631 = vpack.c.b16 %v5815, %v5807
      %v7632 = vpack.c.b16 %v5824, %v5816
      %v7633 = vpack.c.b16 %v5825, %v5817
      %v7634 = vpack.c.b16 %v5826, %v5818
      %v7635 = vpack.c.b16 %v5827, %v5819
      %v7636 = vpack.c.b16 %v5828, %v5820
      %v7637 = vpack.c.b16 %v5829, %v5821
      %v7638 = vpack.c.b16 %v5830, %v5822
      %v7639 = vpack.c.b16 %v5831, %v5823
      %v7640 = vpack.c.b16 %v5840, %v5832
      %v7641 = vpack.c.b16 %v5841, %v5833
      %v7642 = vpack.c.b16 %v5842, %v5834
      %v7643 = vpack.c.b16 %v5843, %v5835
      %v7644 = vpack.c.b16 %v5844, %v5836
      %v7645 = vpack.c.b16 %v5845, %v5837
      %v7646 = vpack.c.b16 %v5846, %v5838
      %v7647 = vpack.c.b16 %v5847, %v5839
      %v7648 = vpack.c.b16 %v5856, %v5848
      %v7649 = vpack.c.b16 %v5857, %v5849
      %v7650 = vpack.c.b16 %v5858, %v5850
      %v7651 = vpack.c.b16 %v5859, %v5851
      %v7652 = vpack.c.b16 %v5860, %v5852
      %v7653 = vpack.c.b16 %v5861, %v5853
      %v7654 = vpack.c.b16 %v5862, %v5854
      %v7655 = vpack.c.b16 %v5863, %v5855
      %v7656 = vpack.c.b16 %v5872, %v5864
      %v7657 = vpack.c.b16 %v5873, %v5865
      %v7658 = vpack.c.b16 %v5874, %v5866
      %v7659 = vpack.c.b16 %v5875, %v5867
      %v7660 = vpack.c.b16 %v5876, %v5868
      %v7661 = vpack.c.b16 %v5877, %v5869
      %v7662 = vpack.c.b16 %v5878, %v5870
      %v7663 = vpack.c.b16 %v5879, %v5871
      %v7664 = vpack.c.b16 %v5888, %v5880
      %v7665 = vpack.c.b16 %v5889, %v5881
      %v7666 = vpack.c.b16 %v5890, %v5882
      %v7667 = vpack.c.b16 %v5891, %v5883
      %v7668 = vpack.c.b16 %v5892, %v5884
      %v7669 = vpack.c.b16 %v5893, %v5885
      %v7670 = vpack.c.b16 %v5894, %v5886
      %v7671 = vpack.c.b16 %v5895, %v5887
      %v7672 = vpack.c.b16 %v5904, %v5896
      %v7673 = vpack.c.b16 %v5905, %v5897
      %v7674 = vpack.c.b16 %v5906, %v5898
      %v7675 = vpack.c.b16 %v5907, %v5899
      %v7676 = vpack.c.b16 %v5908, %v5900
      %v7677 = vpack.c.b16 %v5909, %v5901
      %v7678 = vpack.c.b16 %v5910, %v5902
      %v7679 = vpack.c.b16 %v5911, %v5903
      %v7680 = vpack.c.b16 %v5920, %v5912
      %v7681 = vpack.c.b16 %v5921, %v5913
      %v7682 = vpack.c.b16 %v5922, %v5914
      %v7683 = vpack.c.b16 %v5923, %v5915
      %v7684 = vpack.c.b16 %v5924, %v5916
      %v7685 = vpack.c.b16 %v5925, %v5917
      %v7686 = vpack.c.b16 %v5926, %v5918
      %v7687 = vpack.c.b16 %v5927, %v5919
      %v7688 = vpack.c.b16 %v5936, %v5928
      %v7689 = vpack.c.b16 %v5937, %v5929
      %v7690 = vpack.c.b16 %v5938, %v5930
      %v7691 = vpack.c.b16 %v5939, %v5931
      %v7692 = vpack.c.b16 %v5940, %v5932
      %v7693 = vpack.c.b16 %v5941, %v5933
      %v7694 = vpack.c.b16 %v5942, %v5934
      %v7695 = vpack.c.b16 %v5943, %v5935
      %v7696 = vpack.c.b16 %v5952, %v5944
      %v7697 = vpack.c.b16 %v5953, %v5945
      %v7698 = vpack.c.b16 %v5954, %v5946
      %v7699 = vpack.c.b16 %v5955, %v5947
      %v7700 = vpack.c.b16 %v5956, %v5948
      %v7701 = vpack.c.b16 %v5957, %v5949
      %v7702 = vpack.c.b16 %v5958, %v5950
      %v7703 = vpack.c.b16 %v5959, %v5951
      %v7704 = vpack.c.b16 %v5968, %v5960
      %v7705 = vpack.c.b16 %v5969, %v5961
      %v7706 = vpack.c.b16 %v5970, %v5962
      %v7707 = vpack.c.b16 %v5971, %v5963
      %v7708 = vpack.c.b16 %v5972, %v5964
      %v7709 = vpack.c.b16 %v5973, %v5965
      %v7710 = vpack.c.b16 %v5974, %v5966
      %v7711 = vpack.c.b16 %v5975, %v5967
      %v7712 = vpack.c.b16 %v5984, %v5976
      %v7713 = vpack.c.b16 %v5985, %v5977
      %v7714 = vpack.c.b16 %v5986, %v5978
      %v7715 = vpack.c.b16 %v5987, %v5979
      %v7716 = vpack.c.b16 %v5988, %v5980
      %v7717 = vpack.c.b16 %v5989, %v5981
      %v7718 = vpack.c.b16 %v5990, %v5982
      %v7719 = vpack.c.b16 %v5991, %v5983
      %v7720 = vpack.c.b16 %v6000, %v5992
      %v7721 = vpack.c.b16 %v6001, %v5993
      %v7722 = vpack.c.b16 %v6002, %v5994
      %v7723 = vpack.c.b16 %v6003, %v5995
      %v7724 = vpack.c.b16 %v6004, %v5996
      %v7725 = vpack.c.b16 %v6005, %v5997
      %v7726 = vpack.c.b16 %v6006, %v5998
      %v7727 = vpack.c.b16 %v6007, %v5999
      %v7728 = vpack.c.b16 %v6016, %v6008
      %v7729 = vpack.c.b16 %v6017, %v6009
      %v7730 = vpack.c.b16 %v6018, %v6010
      %v7731 = vpack.c.b16 %v6019, %v6011
      %v7732 = vpack.c.b16 %v6020, %v6012
      %v7733 = vpack.c.b16 %v6021, %v6013
      %v7734 = vpack.c.b16 %v6022, %v6014
      %v7735 = vpack.c.b16 %v6023, %v6015
      %v7736 = vpack.c.b16 %v6032, %v6024
      %v7737 = vpack.c.b16 %v6033, %v6025
      %v7738 = vpack.c.b16 %v6034, %v6026
      %v7739 = vpack.c.b16 %v6035, %v6027
      %v7740 = vpack.c.b16 %v6036, %v6028
      %v7741 = vpack.c.b16 %v6037, %v6029
      %v7742 = vpack.c.b16 %v6038, %v6030
      %v7743 = vpack.c.b16 %v6039, %v6031
      %v7744 = vpack.c.b16 %v6048, %v6040
      %v7745 = vpack.c.b16 %v6049, %v6041
      %v7746 = vpack.c.b16 %v6050, %v6042
      %v7747 = vpack.c.b16 %v6051, %v6043
      %v7748 = vpack.c.b16 %v6052, %v6044
      %v7749 = vpack.c.b16 %v6053, %v6045
      %v7750 = vpack.c.b16 %v6054, %v6046
      %v7751 = vpack.c.b16 %v6055, %v6047
      %v7752 = vpack.c.b16 %v6064, %v6056
      %v7753 = vpack.c.b16 %v6065, %v6057
      %v7754 = vpack.c.b16 %v6066, %v6058
      %v7755 = vpack.c.b16 %v6067, %v6059
      %v7756 = vpack.c.b16 %v6068, %v6060
      %v7757 = vpack.c.b16 %v6069, %v6061
      %v7758 = vpack.c.b16 %v6070, %v6062
      %v7759 = vpack.c.b16 %v6071, %v6063
      %v7760 = vpack.c.b16 %v6080, %v6072
      %v7761 = vpack.c.b16 %v6081, %v6073
      %v7762 = vpack.c.b16 %v6082, %v6074
      %v7763 = vpack.c.b16 %v6083, %v6075
      %v7764 = vpack.c.b16 %v6084, %v6076
      %v7765 = vpack.c.b16 %v6085, %v6077
      %v7766 = vpack.c.b16 %v6086, %v6078
      %v7767 = vpack.c.b16 %v6087, %v6079
      %v7768 = vpack.c.b16 %v6096, %v6088
      %v7769 = vpack.c.b16 %v6097, %v6089
      %v7770 = vpack.c.b16 %v6098, %v6090
      %v7771 = vpack.c.b16 %v6099, %v6091
      %v7772 = vpack.c.b16 %v6100, %v6092
      %v7773 = vpack.c.b16 %v6101, %v6093
      %v7774 = vpack.c.b16 %v6102, %v6094
      %v7775 = vpack.c.b16 %v6103, %v6095
      %v7776 = vpack.c.b16 %v6112, %v6104
      %v7777 = vpack.c.b16 %v6113, %v6105
      %v7778 = vpack.c.b16 %v6114, %v6106
      %v7779 = vpack.c.b16 %v6115, %v6107
      %v7780 = vpack.c.b16 %v6116, %v6108
      %v7781 = vpack.c.b16 %v6117, %v6109
      %v7782 = vpack.c.b16 %v6118, %v6110
      %v7783 = vpack.c.b16 %v6119, %v6111
      %v7784 = vpack.c.b16 %v6128, %v6120
      %v7785 = vpack.c.b16 %v6129, %v6121
      %v7786 = vpack.c.b16 %v6130, %v6122
      %v7787 = vpack.c.b16 %v6131, %v6123
      %v7788 = vpack.c.b16 %v6132, %v6124
      %v7789 = vpack.c.b16 %v6133, %v6125
      %v7790 = vpack.c.b16 %v6134, %v6126
      %v7791 = vpack.c.b16 %v6135, %v6127
      %v7792 = vpack.c.b16 %v6144, %v6136
      %v7793 = vpack.c.b16 %v6145, %v6137
      %v7794 = vpack.c.b16 %v6146, %v6138
      %v7795 = vpack.c.b16 %v6147, %v6139
      %v7796 = vpack.c.b16 %v6148, %v6140
      %v7797 = vpack.c.b16 %v6149, %v6141
      %v7798 = vpack.c.b16 %v6150, %v6142
      %v7799 = vpack.c.b16 %v6151, %v6143
      %v7800 = vpack.c.b16 %v6160, %v6152
      %v7801 = vpack.c.b16 %v6161, %v6153
      %v7802 = vpack.c.b16 %v6162, %v6154
      %v7803 = vpack.c.b16 %v6163, %v6155
      %v7804 = vpack.c.b16 %v6164, %v6156
      %v7805 = vpack.c.b16 %v6165, %v6157
      %v7806 = vpack.c.b16 %v6166, %v6158
      %v7807 = vpack.c.b16 %v6167, %v6159
      %v7808 = vpack.c.b16 %v6176, %v6168
      %v7809 = vpack.c.b16 %v6177, %v6169
      %v7810 = vpack.c.b16 %v6178, %v6170
      %v7811 = vpack.c.b16 %v6179, %v6171
      %v7812 = vpack.c.b16 %v6180, %v6172
      %v7813 = vpack.c.b16 %v6181, %v6173
      %v7814 = vpack.c.b16 %v6182, %v6174
      %v7815 = vpack.c.b16 %v6183, %v6175
      %v7816 = vpack.c.b16 %v6192, %v6184
      %v7817 = vpack.c.b16 %v6193, %v6185
      %v7818 = vpack.c.b16 %v6194, %v6186
      %v7819 = vpack.c.b16 %v6195, %v6187
      %v7820 = vpack.c.b16 %v6196, %v6188
      %v7821 = vpack.c.b16 %v6197, %v6189
      %v7822 = vpack.c.b16 %v6198, %v6190
      %v7823 = vpack.c.b16 %v6199, %v6191
      %v7824 = vpack.c.b16 %v6208, %v6200
      %v7825 = vpack.c.b16 %v6209, %v6201
      %v7826 = vpack.c.b16 %v6210, %v6202
      %v7827 = vpack.c.b16 %v6211, %v6203
      %v7828 = vpack.c.b16 %v6212, %v6204
      %v7829 = vpack.c.b16 %v6213, %v6205
      %v7830 = vpack.c.b16 %v6214, %v6206
      %v7831 = vpack.c.b16 %v6215, %v6207
      %v7832 = vpack.c.b16 %v6224, %v6216
      %v7833 = vpack.c.b16 %v6225, %v6217
      %v7834 = vpack.c.b16 %v6226, %v6218
      %v7835 = vpack.c.b16 %v6227, %v6219
      %v7836 = vpack.c.b16 %v6228, %v6220
      %v7837 = vpack.c.b16 %v6229, %v6221
      %v7838 = vpack.c.b16 %v6230, %v6222
      %v7839 = vpack.c.b16 %v6231, %v6223
      %v7840 = vpack.c.b16 %v6240, %v6232
      %v7841 = vpack.c.b16 %v6241, %v6233
      %v7842 = vpack.c.b16 %v6242, %v6234
      %v7843 = vpack.c.b16 %v6243, %v6235
      %v7844 = vpack.c.b16 %v6244, %v6236
      %v7845 = vpack.c.b16 %v6245, %v6237
      %v7846 = vpack.c.b16 %v6246, %v6238
      %v7847 = vpack.c.b16 %v6247, %v6239
      %v7848 = vpack.c.b16 %v6256, %v6248
      %v7849 = vpack.c.b16 %v6257, %v6249
      %v7850 = vpack.c.b16 %v6258, %v6250
      %v7851 = vpack.c.b16 %v6259, %v6251
      %v7852 = vpack.c.b16 %v6260, %v6252
      %v7853 = vpack.c.b16 %v6261, %v6253
      %v7854 = vpack.c.b16 %v6262, %v6254
      %v7855 = vpack.c.b16 %v6263, %v6255
      %v7856 = vpack.c.b16 %v6272, %v6264
      %v7857 = vpack.c.b16 %v6273, %v6265
      %v7858 = vpack.c.b16 %v6274, %v6266
      %v7859 = vpack.c.b16 %v6275, %v6267
      %v7860 = vpack.c.b16 %v6276, %v6268
      %v7861 = vpack.c.b16 %v6277, %v6269
      %v7862 = vpack.c.b16 %v6278, %v6270
      %v7863 = vpack.c.b16 %v6279, %v6271
      %v7864 = vpack.c.b16 %v6288, %v6280
      %v7865 = vpack.c.b16 %v6289, %v6281
      %v7866 = vpack.c.b16 %v6290, %v6282
      %v7867 = vpack.c.b16 %v6291, %v6283
      %v7868 = vpack.c.b16 %v6292, %v6284
      %v7869 = vpack.c.b16 %v6293, %v6285
      %v7870 = vpack.c.b16 %v6294, %v6286
      %v7871 = vpack.c.b16 %v6295, %v6287
      %v7872 = vpack.c.b16 %v6304, %v6296
      %v7873 = vpack.c.b16 %v6305, %v6297
      %v7874 = vpack.c.b16 %v6306, %v6298
      %v7875 = vpack.c.b16 %v6307, %v6299
      %v7876 = vpack.c.b16 %v6308, %v6300
      %v7877 = vpack.c.b16 %v6309, %v6301
      %v7878 = vpack.c.b16 %v6310, %v6302
      %v7879 = vpack.c.b16 %v6311, %v6303
      %v7880 = vpack.c.b16 %v6320, %v6312
      %v7881 = vpack.c.b16 %v6321, %v6313
      %v7882 = vpack.c.b16 %v6322, %v6314
      %v7883 = vpack.c.b16 %v6323, %v6315
      %v7884 = vpack.c.b16 %v6324, %v6316
      %v7885 = vpack.c.b16 %v6325, %v6317
      %v7886 = vpack.c.b16 %v6326, %v6318
      %v7887 = vpack.c.b16 %v6327, %v6319
      %v7888 = vpack.c.b16 %v6336, %v6328
      %v7889 = vpack.c.b16 %v6337, %v6329
      %v7890 = vpack.c.b16 %v6338, %v6330
      %v7891 = vpack.c.b16 %v6339, %v6331
      %v7892 = vpack.c.b16 %v6340, %v6332
      %v7893 = vpack.c.b16 %v6341, %v6333
      %v7894 = vpack.c.b16 %v6342, %v6334
      %v7895 = vpack.c.b16 %v6343, %v6335
      %v7896 = vpack.c.b16 %v6352, %v6344
      %v7897 = vpack.c.b16 %v6353, %v6345
      %v7898 = vpack.c.b16 %v6354, %v6346
      %v7899 = vpack.c.b16 %v6355, %v6347
      %v7900 = vpack.c.b16 %v6356, %v6348
      %v7901 = vpack.c.b16 %v6357, %v6349
      %v7902 = vpack.c.b16 %v6358, %v6350
      %v7903 = vpack.c.b16 %v6359, %v6351
      %v7904 = vpack.c.b16 %v6368, %v6360
      %v7905 = vpack.c.b16 %v6369, %v6361
      %v7906 = vpack.c.b16 %v6370, %v6362
      %v7907 = vpack.c.b16 %v6371, %v6363
      %v7908 = vpack.c.b16 %v6372, %v6364
      %v7909 = vpack.c.b16 %v6373, %v6365
      %v7910 = vpack.c.b16 %v6374, %v6366
      %v7911 = vpack.c.b16 %v6375, %v6367
      %v7912 = vpack.c.b16 %v6384, %v6376
      %v7913 = vpack.c.b16 %v6385, %v6377
      %v7914 = vpack.c.b16 %v6386, %v6378
      %v7915 = vpack.c.b16 %v6387, %v6379
      %v7916 = vpack.c.b16 %v6388, %v6380
      %v7917 = vpack.c.b16 %v6389, %v6381
      %v7918 = vpack.c.b16 %v6390, %v6382
      %v7919 = vpack.c.b16 %v6391, %v6383
      %v7920 = vpack.c.b16 %v6400, %v6392
      %v7921 = vpack.c.b16 %v6401, %v6393
      %v7922 = vpack.c.b16 %v6402, %v6394
      %v7923 = vpack.c.b16 %v6403, %v6395
      %v7924 = vpack.c.b16 %v6404, %v6396
      %v7925 = vpack.c.b16 %v6405, %v6397
      %v7926 = vpack.c.b16 %v6406, %v6398
      %v7927 = vpack.c.b16 %v6407, %v6399
      %v7928 = vpack.c.b16 %v6416, %v6408
      %v7929 = vpack.c.b16 %v6417, %v6409
      %v7930 = vpack.c.b16 %v6418, %v6410
      %v7931 = vpack.c.b16 %v6419, %v6411
      %v7932 = vpack.c.b16 %v6420, %v6412
      %v7933 = vpack.c.b16 %v6421, %v6413
      %v7934 = vpack.c.b16 %v6422, %v6414
      %v7935 = vpack.c.b16 %v6423, %v6415
      %v7936 = vpack.c.b16 %v6432, %v6424
      %v7937 = vpack.c.b16 %v6433, %v6425
      %v7938 = vpack.c.b16 %v6434, %v6426
      %v7939 = vpack.c.b16 %v6435, %v6427
      %v7940 = vpack.c.b16 %v6436, %v6428
      %v7941 = vpack.c.b16 %v6437, %v6429
      %v7942 = vpack.c.b16 %v6438, %v6430
      %v7943 = vpack.c.b16 %v6439, %v6431
      %v7944 = vpack.c.b16 %v6448, %v6440
      %v7945 = vpack.c.b16 %v6449, %v6441
      %v7946 = vpack.c.b16 %v6450, %v6442
      %v7947 = vpack.c.b16 %v6451, %v6443
      %v7948 = vpack.c.b16 %v6452, %v6444
      %v7949 = vpack.c.b16 %v6453, %v6445
      %v7950 = vpack.c.b16 %v6454, %v6446
      %v7951 = vpack.c.b16 %v6455, %v6447
      %v7952 = vpack.c.b16 %v6464, %v6456
      %v7953 = vpack.c.b16 %v6465, %v6457
      %v7954 = vpack.c.b16 %v6466, %v6458
      %v7955 = vpack.c.b16 %v6467, %v6459
      %v7956 = vpack.c.b16 %v6468, %v6460
      %v7957 = vpack.c.b16 %v6469, %v6461
      %v7958 = vpack.c.b16 %v6470, %v6462
      %v7959 = vpack.c.b16 %v6471, %v6463
      %v7960 = vpack.c.b16 %v6480, %v6472
      %v7961 = vpack.c.b16 %v6481, %v6473
      %v7962 = vpack.c.b16 %v6482, %v6474
      %v7963 = vpack.c.b16 %v6483, %v6475
      %v7964 = vpack.c.b16 %v6484, %v6476
      %v7965 = vpack.c.b16 %v6485, %v6477
      %v7966 = vpack.c.b16 %v6486, %v6478
      %v7967 = vpack.c.b16 %v6487, %v6479
      %v7968 = vpack.c.b16 %v6496, %v6488
      %v7969 = vpack.c.b16 %v6497, %v6489
      %v7970 = vpack.c.b16 %v6498, %v6490
      %v7971 = vpack.c.b16 %v6499, %v6491
      %v7972 = vpack.c.b16 %v6500, %v6492
      %v7973 = vpack.c.b16 %v6501, %v6493
      %v7974 = vpack.c.b16 %v6502, %v6494
      %v7975 = vpack.c.b16 %v6503, %v6495
      %v7976 = vpack.c.b16 %v6512, %v6504
      %v7977 = vpack.c.b16 %v6513, %v6505
      %v7978 = vpack.c.b16 %v6514, %v6506
      %v7979 = vpack.c.b16 %v6515, %v6507
      %v7980 = vpack.c.b16 %v6516, %v6508
      %v7981 = vpack.c.b16 %v6517, %v6509
      %v7982 = vpack.c.b16 %v6518, %v6510
      %v7983 = vpack.c.b16 %v6519, %v6511
      %v7984 = vpack.c.b16 %v6528, %v6520
      %v7985 = vpack.c.b16 %v6529, %v6521
      %v7986 = vpack.c.b16 %v6530, %v6522
      %v7987 = vpack.c.b16 %v6531, %v6523
      %v7988 = vpack.c.b16 %v6532, %v6524
      %v7989 = vpack.c.b16 %v6533, %v6525
      %v7990 = vpack.c.b16 %v6534, %v6526
      %v7991 = vpack.c.b16 %v6535, %v6527
      %v7992 = vpack.c.b16 %v6544, %v6536
      %v7993 = vpack.c.b16 %v6545, %v6537
      %v7994 = vpack.c.b16 %v6546, %v6538
      %v7995 = vpack.c.b16 %v6547, %v6539
      %v7996 = vpack.c.b16 %v6548, %v6540
      %v7997 = vpack.c.b16 %v6549, %v6541
      %v7998 = vpack.c.b16 %v6550, %v6542
      %v7999 = vpack.c.b16 %v6551, %v6543
      %v8000 = vpack.c.b16 %v6560, %v6552
      %v8001 = vpack.c.b16 %v6561, %v6553
      %v8002 = vpack.c.b16 %v6562, %v6554
      %v8003 = vpack.c.b16 %v6563, %v6555
      %v8004 = vpack.c.b16 %v6564, %v6556
      %v8005 = vpack.c.b16 %v6565, %v6557
      %v8006 = vpack.c.b16 %v6566, %v6558
      %v8007 = vpack.c.b16 %v6567, %v6559
      %v8008 = vpack.c.b16 %v6576, %v6568
      %v8009 = vpack.c.b16 %v6577, %v6569
      %v8010 = vpack.c.b16 %v6578, %v6570
      %v8011 = vpack.c.b16 %v6579, %v6571
      %v8012 = vpack.c.b16 %v6580, %v6572
      %v8013 = vpack.c.b16 %v6581, %v6573
      %v8014 = vpack.c.b16 %v6582, %v6574
      %v8015 = vpack.c.b16 %v6583, %v6575
      %v8016 = vpack.c.b16 %v6592, %v6584
      %v8017 = vpack.c.b16 %v6593, %v6585
      %v8018 = vpack.c.b16 %v6594, %v6586
      %v8019 = vpack.c.b16 %v6595, %v6587
      %v8020 = vpack.c.b16 %v6596, %v6588
      %v8021 = vpack.c.b16 %v6597, %v6589
      %v8022 = vpack.c.b16 %v6598, %v6590
      %v8023 = vpack.c.b16 %v6599, %v6591
      %v8024 = vpack.c.b16 %v6608, %v6600
      %v8025 = vpack.c.b16 %v6609, %v6601
      %v8026 = vpack.c.b16 %v6610, %v6602
      %v8027 = vpack.c.b16 %v6611, %v6603
      %v8028 = vpack.c.b16 %v6612, %v6604
      %v8029 = vpack.c.b16 %v6613, %v6605
      %v8030 = vpack.c.b16 %v6614, %v6606
      %v8031 = vpack.c.b16 %v6615, %v6607
      %v8032 = vpack.c.b16 %v6624, %v6616
      %v8033 = vpack.c.b16 %v6625, %v6617
      %v8034 = vpack.c.b16 %v6626, %v6618
      %v8035 = vpack.c.b16 %v6627, %v6619
      %v8036 = vpack.c.b16 %v6628, %v6620
      %v8037 = vpack.c.b16 %v6629, %v6621
      %v8038 = vpack.c.b16 %v6630, %v6622
      %v8039 = vpack.c.b16 %v6631, %v6623
      %v8040 = vpack.c.b16 %v6640, %v6632
      %v8041 = vpack.c.b16 %v6641, %v6633
      %v8042 = vpack.c.b16 %v6642, %v6634
      %v8043 = vpack.c.b16 %v6643, %v6635
      %v8044 = vpack.c.b16 %v6644, %v6636
      %v8045 = vpack.c.b16 %v6645, %v6637
      %v8046 = vpack.c.b16 %v6646, %v6638
      %v8047 = vpack.c.b16 %v6647, %v6639
      %v8048 = vpack.c.b16 %v6656, %v6648
      %v8049 = vpack.c.b16 %v6657, %v6649
      %v8050 = vpack.c.b16 %v6658, %v6650
      %v8051 = vpack.c.b16 %v6659, %v6651
      %v8052 = vpack.c.b16 %v6660, %v6652
      %v8053 = vpack.c.b16 %v6661, %v6653
      %v8054 = vpack.c.b16 %v6662, %v6654
      %v8055 = vpack.c.b16 %v6663, %v6655
      %v8056 = vpack.c.b16 %v6672, %v6664
      %v8057 = vpack.c.b16 %v6673, %v6665
      %v8058 = vpack.c.b16 %v6674, %v6666
      %v8059 = vpack.c.b16 %v6675, %v6667
      %v8060 = vpack.c.b16 %v6676, %v6668
      %v8061 = vpack.c.b16 %v6677, %v6669
      %v8062 = vpack.c.b16 %v6678, %v6670
      %v8063 = vpack.c.b16 %v6679, %v6671
      %v8064 = vpack.c.b16 %v6688, %v6680
      %v8065 = vpack.c.b16 %v6689, %v6681
      %v8066 = vpack.c.b16 %v6690, %v6682
      %v8067 = vpack.c.b16 %v6691, %v6683
      %v8068 = vpack.c.b16 %v6692, %v6684
      %v8069 = vpack.c.b16 %v6693, %v6685
      %v8070 = vpack.c.b16 %v6694, %v6686
      %v8071 = vpack.c.b16 %v6695, %v6687
      %v8072 = vpack.c.b16 %v6704, %v6696
      %v8073 = vpack.c.b16 %v6705, %v6697
      %v8074 = vpack.c.b16 %v6706, %v6698
      %v8075 = vpack.c.b16 %v6707, %v6699
      %v8076 = vpack.c.b16 %v6708, %v6700
      %v8077 = vpack.c.b16 %v6709, %v6701
      %v8078 = vpack.c.b16 %v6710, %v6702
      %v8079 = vpack.c.b16 %v6711, %v6703
      %v8080 = vpack.c.b16 %v6720, %v6712
      %v8081 = vpack.c.b16 %v6721, %v6713
      %v8082 = vpack.c.b16 %v6722, %v6714
      %v8083 = vpack.c.b16 %v6723, %v6715
      %v8084 = vpack.c.b16 %v6724, %v6716
      %v8085 = vpack.c.b16 %v6725, %v6717
      %v8086 = vpack.c.b16 %v6726, %v6718
      %v8087 = vpack.c.b16 %v6727, %v6719
      %v8088 = vpack.c.b16 %v6736, %v6728
      %v8089 = vpack.c.b16 %v6737, %v6729
      %v8090 = vpack.c.b16 %v6738, %v6730
      %v8091 = vpack.c.b16 %v6739, %v6731
      %v8092 = vpack.c.b16 %v6740, %v6732
      %v8093 = vpack.c.b16 %v6741, %v6733
      %v8094 = vpack.c.b16 %v6742, %v6734
      %v8095 = vpack.c.b16 %v6743, %v6735
      %v8096 = vpack.c.b16 %v6752, %v6744
      %v8097 = vpack.c.b16 %v6753, %v6745
      %v8098 = vpack.c.b16 %v6754, %v6746
      %v8099 = vpack.c.b16 %v6755, %v6747
      %v8100 = vpack.c.b16 %v6756, %v6748
      %v8101 = vpack.c.b16 %v6757, %v6749
      %v8102 = vpack.c.b16 %v6758, %v6750
      %v8103 = vpack.c.b16 %v6759, %v6751
      %v8104 = vpack.c.b16 %v6768, %v6760
      %v8105 = vpack.c.b16 %v6769, %v6761
      %v8106 = vpack.c.b16 %v6770, %v6762
      %v8107 = vpack.c.b16 %v6771, %v6763
      %v8108 = vpack.c.b16 %v6772, %v6764
      %v8109 = vpack.c.b16 %v6773, %v6765
      %v8110 = vpack.c.b16 %v6774, %v6766
      %v8111 = vpack.c.b16 %v6775, %v6767
      %v8112 = vpack.c.b16 %v6784, %v6776
      %v8113 = vpack.c.b16 %v6785, %v6777
      %v8114 = vpack.c.b16 %v6786, %v6778
      %v8115 = vpack.c.b16 %v6787, %v6779
      %v8116 = vpack.c.b16 %v6788, %v6780
      %v8117 = vpack.c.b16 %v6789, %v6781
      %v8118 = vpack.c.b16 %v6790, %v6782
      %v8119 = vpack.c.b16 %v6791, %v6783
      %v8120 = vpack.c.b16 %v6800, %v6792
      %v8121 = vpack.c.b16 %v6801, %v6793
      %v8122 = vpack.c.b16 %v6802, %v6794
      %v8123 = vpack.c.b16 %v6803, %v6795
      %v8124 = vpack.c.b16 %v6804, %v6796
      %v8125 = vpack.c.b16 %v6805, %v6797
      %v8126 = vpack.c.b16 %v6806, %v6798
      %v8127 = vpack.c.b16 %v6807, %v6799
      %v8128 = vpack.c.b16 %v6816, %v6808
      %v8129 = vpack.c.b16 %v6817, %v6809
      %v8130 = vpack.c.b16 %v6818, %v6810
      %v8131 = vpack.c.b16 %v6819, %v6811
      %v8132 = vpack.c.b16 %v6820, %v6812
      %v8133 = vpack.c.b16 %v6821, %v6813
      %v8134 = vpack.c.b16 %v6822, %v6814
      %v8135 = vpack.c.b16 %v6823, %v6815
      %v8136 = vpack.c.b16 %v6832, %v6824
      %v8137 = vpack.c.b16 %v6833, %v6825
      %v8138 = vpack.c.b16 %v6834, %v6826
      %v8139 = vpack.c.b16 %v6835, %v6827
      %v8140 = vpack.c.b16 %v6836, %v6828
      %v8141 = vpack.c.b16 %v6837, %v6829
      %v8142 = vpack.c.b16 %v6838, %v6830
      %v8143 = vpack.c.b16 %v6839, %v6831
      %v8144 = vpack.c.b16 %v6848, %v6840
      %v8145 = vpack.c.b16 %v6849, %v6841
      %v8146 = vpack.c.b16 %v6850, %v6842
      %v8147 = vpack.c.b16 %v6851, %v6843
      %v8148 = vpack.c.b16 %v6852, %v6844
      %v8149 = vpack.c.b16 %v6853, %v6845
      %v8150 = vpack.c.b16 %v6854, %v6846
      %v8151 = vpack.c.b16 %v6855, %v6847
      %v8152 = vpack.c.b16 %v6864, %v6856
      %v8153 = vpack.c.b16 %v6865, %v6857
      %v8154 = vpack.c.b16 %v6866, %v6858
      %v8155 = vpack.c.b16 %v6867, %v6859
      %v8156 = vpack.c.b16 %v6868, %v6860
      %v8157 = vpack.c.b16 %v6869, %v6861
      %v8158 = vpack.c.b16 %v6870, %v6862
      %v8159 = vpack.c.b16 %v6871, %v6863
      %v8160 = vpack.c.b16 %v6880, %v6872
      %v8161 = vpack.c.b16 %v6881, %v6873
      %v8162 = vpack.c.b16 %v6882, %v6874
      %v8163 = vpack.c.b16 %v6883, %v6875
      %v8164 = vpack.c.b16 %v6884, %v6876
      %v8165 = vpack.c.b16 %v6885, %v6877
      %v8166 = vpack.c.b16 %v6886, %v6878
      %v8167 = vpack.c.b16 %v6887, %v6879
      %v8168 = vpack.c.b16 %v6896, %v6888
      %v8169 = vpack.c.b16 %v6897, %v6889
      %v8170 = vpack.c.b16 %v6898, %v6890
      %v8171 = vpack.c.b16 %v6899, %v6891
      %v8172 = vpack.c.b16 %v6900, %v6892
      %v8173 = vpack.c.b16 %v6901, %v6893
      %v8174 = vpack.c.b16 %v6902, %v6894
      %v8175 = vpack.c.b16 %v6903, %v6895
      %v8176 = vpack.c.b16 %v6912, %v6904
      %v8177 = vpack.c.b16 %v6913, %v6905
      %v8178 = vpack.c.b16 %v6914, %v6906
      %v8179 = vpack.c.b16 %v6915, %v6907
      %v8180 = vpack.c.b16 %v6916, %v6908
      %v8181 = vpack.c.b16 %v6917, %v6909
      %v8182 = vpack.c.b16 %v6918, %v6910
      %v8183 = vpack.c.b16 %v6919, %v6911
      %v8184 = vpack.c.b16 %v6928, %v6920
      %v8185 = vpack.c.b16 %v6929, %v6921
      %v8186 = vpack.c.b16 %v6930, %v6922
      %v8187 = vpack.c.b16 %v6931, %v6923
      %v8188 = vpack.c.b16 %v6932, %v6924
      %v8189 = vpack.c.b16 %v6933, %v6925
      %v8190 = vpack.c.b16 %v6934, %v6926
      %v8191 = vpack.c.b16 %v6935, %v6927
      %v8192 = vpack.c.b16 %v6944, %v6936
      %v8193 = vpack.c.b16 %v6945, %v6937
      %v8194 = vpack.c.b16 %v6946, %v6938
      %v8195 = vpack.c.b16 %v6947, %v6939
      %v8196 = vpack.c.b16 %v6948, %v6940
      %v8197 = vpack.c.b16 %v6949, %v6941
      %v8198 = vpack.c.b16 %v6950, %v6942
      %v8199 = vpack.c.b16 %v6951, %v6943
      %v8200 = vpack.c.b16 %v6960, %v6952
      %v8201 = vpack.c.b16 %v6961, %v6953
      %v8202 = vpack.c.b16 %v6962, %v6954
      %v8203 = vpack.c.b16 %v6963, %v6955
      %v8204 = vpack.c.b16 %v6964, %v6956
      %v8205 = vpack.c.b16 %v6965, %v6957
      %v8206 = vpack.c.b16 %v6966, %v6958
      %v8207 = vpack.c.b16 %v6967, %v6959
      %v8208 = vpack.c.b16 %v6976, %v6968
      %v8209 = vpack.c.b16 %v6977, %v6969
      %v8210 = vpack.c.b16 %v6978, %v6970
      %v8211 = vpack.c.b16 %v6979, %v6971
      %v8212 = vpack.c.b16 %v6980, %v6972
      %v8213 = vpack.c.b16 %v6981, %v6973
      %v8214 = vpack.c.b16 %v6982, %v6974
      %v8215 = vpack.c.b16 %v6983, %v6975
      %v8216 = vpack.c.b16 %v6992, %v6984
      %v8217 = vpack.c.b16 %v6993, %v6985
      %v8218 = vpack.c.b16 %v6994, %v6986
      %v8219 = vpack.c.b16 %v6995, %v6987
      %v8220 = vpack.c.b16 %v6996, %v6988
      %v8221 = vpack.c.b16 %v6997, %v6989
      %v8222 = vpack.c.b16 %v6998, %v6990
      %v8223 = vpack.c.b16 %v6999, %v6991
      %v8224 = vpack.c.b16 %v7008, %v7000
      %v8225 = vpack.c.b16 %v7009, %v7001
      %v8226 = vpack.c.b16 %v7010, %v7002
      %v8227 = vpack.c.b16 %v7011, %v7003
      %v8228 = vpack.c.b16 %v7012, %v7004
      %v8229 = vpack.c.b16 %v7013, %v7005
      %v8230 = vpack.c.b16 %v7014, %v7006
      %v8231 = vpack.c.b16 %v7015, %v7007
      %v8232 = vpack.c.b16 %v7024, %v7016
      %v8233 = vpack.c.b16 %v7025, %v7017
      %v8234 = vpack.c.b16 %v7026, %v7018
      %v8235 = vpack.c.b16 %v7027, %v7019
      %v8236 = vpack.c.b16 %v7028, %v7020
      %v8237 = vpack.c.b16 %v7029, %v7021
      %v8238 = vpack.c.b16 %v7030, %v7022
      %v8239 = vpack.c.b16 %v7031, %v7023
      %v8240 = vpack.c.b16 %v7040, %v7032
      %v8241 = vpack.c.b16 %v7041, %v7033
      %v8242 = vpack.c.b16 %v7042, %v7034
      %v8243 = vpack.c.b16 %v7043, %v7035
      %v8244 = vpack.c.b16 %v7044, %v7036
      %v8245 = vpack.c.b16 %v7045, %v7037
      %v8246 = vpack.c.b16 %v7046, %v7038
      %v8247 = vpack.c.b16 %v7047, %v7039
      %v8248 = vpack.c.b16 %v7056, %v7048
      %v8249 = vpack.c.b16 %v7057, %v7049
      %v8250 = vpack.c.b16 %v7058, %v7050
      %v8251 = vpack.c.b16 %v7059, %v7051
      %v8252 = vpack.c.b16 %v7060, %v7052
      %v8253 = vpack.c.b16 %v7061, %v7053
      %v8254 = vpack.c.b16 %v7062, %v7054
      %v8255 = vpack.c.b16 %v7063, %v7055
      %v8256 = vpack.c.b16 %v7072, %v7064
      %v8257 = vpack.c.b16 %v7073, %v7065
      %v8258 = vpack.c.b16 %v7074, %v7066
      %v8259 = vpack.c.b16 %v7075, %v7067
      %v8260 = vpack.c.b16 %v7076, %v7068
      %v8261 = vpack.c.b16 %v7077, %v7069
      %v8262 = vpack.c.b16 %v7078, %v7070
      %v8263 = vpack.c.b16 %v7079, %v7071
      %v8264 = vpack.c.b16 %v7088, %v7080
      %v8265 = vpack.c.b16 %v7089, %v7081
      %v8266 = vpack.c.b16 %v7090, %v7082
      %v8267 = vpack.c.b16 %v7091, %v7083
      %v8268 = vpack.c.b16 %v7092, %v7084
      %v8269 = vpack.c.b16 %v7093, %v7085
      %v8270 = vpack.c.b16 %v7094, %v7086
      %v8271 = vpack.c.b16 %v7095, %v7087
      %v8272 = vpack.c.b16 %v7104, %v7096
      %v8273 = vpack.c.b16 %v7105, %v7097
      %v8274 = vpack.c.b16 %v7106, %v7098
      %v8275 = vpack.c.b16 %v7107, %v7099
      %v8276 = vpack.c.b16 %v7108, %v7100
      %v8277 = vpack.c.b16 %v7109, %v7101
      %v8278 = vpack.c.b16 %v7110, %v7102
      %v8279 = vpack.c.b16 %v7111, %v7103
      %v8280 = vpack.c.b16 %v7120, %v7112
      %v8281 = vpack.c.b16 %v7121, %v7113
      %v8282 = vpack.c.b16 %v7122, %v7114
      %v8283 = vpack.c.b16 %v7123, %v7115
      %v8284 = vpack.c.b16 %v7124, %v7116
      %v8285 = vpack.c.b16 %v7125, %v7117
      %v8286 = vpack.c.b16 %v7126, %v7118
      %v8287 = vpack.c.b16 %v7127, %v7119
      %v8288 = vpack.c.b16 %v7136, %v7128
      %v8289 = vpack.c.b16 %v7137, %v7129
      %v8290 = vpack.c.b16 %v7138, %v7130
      %v8291 = vpack.c.b16 %v7139, %v7131
      %v8292 = vpack.c.b16 %v7140, %v7132
      %v8293 = vpack.c.b16 %v7141, %v7133
      %v8294 = vpack.c.b16 %v7142, %v7134
      %v8295 = vpack.c.b16 %v7143, %v7135
      %v8296 = vpack.c.b16 %v7152, %v7144
      %v8297 = vpack.c.b16 %v7153, %v7145
      %v8298 = vpack.c.b16 %v7154, %v7146
      %v8299 = vpack.c.b16 %v7155, %v7147
      %v8300 = vpack.c.b16 %v7156, %v7148
      %v8301 = vpack.c.b16 %v7157, %v7149
      %v8302 = vpack.c.b16 %v7158, %v7150
      %v8303 = vpack.c.b16 %v7159, %v7151
      %v8304 = vpack.c.b16 %v7168, %v7160
      %v8305 = vpack.c.b16 %v7169, %v7161
      %v8306 = vpack.c.b16 %v7170, %v7162
      %v8307 = vpack.c.b16 %v7171, %v7163
      %v8308 = vpack.c.b16 %v7172, %v7164
      %v8309 = vpack.c.b16 %v7173, %v7165
      %v8310 = vpack.c.b16 %v7174, %v7166
      %v8311 = vpack.c.b16 %v7175, %v7167
      %v8312 = vpack.c.b16 %v7184, %v7176
      %v8313 = vpack.c.b16 %v7185, %v7177
      %v8314 = vpack.c.b16 %v7186, %v7178
      %v8315 = vpack.c.b16 %v7187, %v7179
      %v8316 = vpack.c.b16 %v7188, %v7180
      %v8317 = vpack.c.b16 %v7189, %v7181
      %v8318 = vpack.c.b16 %v7190, %v7182
      %v8319 = vpack.c.b16 %v7191, %v7183
      %v8320 = vpack.c.b16 %v7200, %v7192
      %v8321 = vpack.c.b16 %v7201, %v7193
      %v8322 = vpack.c.b16 %v7202, %v7194
      %v8323 = vpack.c.b16 %v7203, %v7195
      %v8324 = vpack.c.b16 %v7204, %v7196
      %v8325 = vpack.c.b16 %v7205, %v7197
      %v8326 = vpack.c.b16 %v7206, %v7198
      %v8327 = vpack.c.b16 %v7207, %v7199
      %v8328 = vpack.c.b16 %v7216, %v7208
      %v8329 = vpack.c.b16 %v7217, %v7209
      %v8330 = vpack.c.b16 %v7218, %v7210
      %v8331 = vpack.c.b16 %v7219, %v7211
      %v8332 = vpack.c.b16 %v7220, %v7212
      %v8333 = vpack.c.b16 %v7221, %v7213
      %v8334 = vpack.c.b16 %v7222, %v7214
      %v8335 = vpack.c.b16 %v7223, %v7215
      %v8336 = vpack.c.b16 %v7232, %v7224
      %v8337 = vpack.c.b16 %v7233, %v7225
      %v8338 = vpack.c.b16 %v7234, %v7226
      %v8339 = vpack.c.b16 %v7235, %v7227
      %v8340 = vpack.c.b16 %v7236, %v7228
      %v8341 = vpack.c.b16 %v7237, %v7229
      %v8342 = vpack.c.b16 %v7238, %v7230
      %v8343 = vpack.c.b16 %v7239, %v7231
      %v8344 = vpack.c.b16 %v7248, %v7240
      %v8345 = vpack.c.b16 %v7249, %v7241
      %v8346 = vpack.c.b16 %v7250, %v7242
      %v8347 = vpack.c.b16 %v7251, %v7243
      %v8348 = vpack.c.b16 %v7252, %v7244
      %v8349 = vpack.c.b16 %v7253, %v7245
      %v8350 = vpack.c.b16 %v7254, %v7246
      %v8351 = vpack.c.b16 %v7255, %v7247
      %v8352 = vpack.c.b16 %v7264, %v7256
      %v8353 = vpack.c.b16 %v7265, %v7257
      %v8354 = vpack.c.b16 %v7266, %v7258
      %v8355 = vpack.c.b16 %v7267, %v7259
      %v8356 = vpack.c.b16 %v7268, %v7260
      %v8357 = vpack.c.b16 %v7269, %v7261
      %v8358 = vpack.c.b16 %v7270, %v7262
      %v8359 = vpack.c.b16 %v7271, %v7263
      %v8360 = vpack.c.b16 %v7280, %v7272
      %v8361 = vpack.c.b16 %v7281, %v7273
      %v8362 = vpack.c.b16 %v7282, %v7274
      %v8363 = vpack.c.b16 %v7283, %v7275
      %v8364 = vpack.c.b16 %v7284, %v7276
      %v8365 = vpack.c.b16 %v7285, %v7277
      %v8366 = vpack.c.b16 %v7286, %v7278
      %v8367 = vpack.c.b16 %v7287, %v7279
      %v8368 = vpack.c.b16 %v7296, %v7288
      %v8369 = vpack.c.b16 %v7297, %v7289
      %v8370 = vpack.c.b16 %v7298, %v7290
      %v8371 = vpack.c.b16 %v7299, %v7291
      %v8372 = vpack.c.b16 %v7300, %v7292
      %v8373 = vpack.c.b16 %v7301, %v7293
      %v8374 = vpack.c.b16 %v7302, %v7294
      %v8375 = vpack.c.b16 %v7303, %v7295
      %v8376 = vpack.c.b16 %v7312, %v7304
      %v8377 = vpack.c.b16 %v7313, %v7305
      %v8378 = vpack.c.b16 %v7314, %v7306
      %v8379 = vpack.c.b16 %v7315, %v7307
      %v8380 = vpack.c.b16 %v7316, %v7308
      %v8381 = vpack.c.b16 %v7317, %v7309
      %v8382 = vpack.c.b16 %v7318, %v7310
      %v8383 = vpack.c.b16 %v7319, %v7311
      %v8384 = vpack.c.b16 %v7328, %v7320
      %v8385 = vpack.c.b16 %v7329, %v7321
      %v8386 = vpack.c.b16 %v7330, %v7322
      %v8387 = vpack.c.b16 %v7331, %v7323
      %v8388 = vpack.c.b16 %v7332, %v7324
      %v8389 = vpack.c.b16 %v7333, %v7325
      %v8390 = vpack.c.b16 %v7334, %v7326
      %v8391 = vpack.c.b16 %v7335, %v7327
      %v8392 = vpack.c.b16 %v7344, %v7336
      %v8393 = vpack.c.b16 %v7345, %v7337
      %v8394 = vpack.c.b16 %v7346, %v7338
      %v8395 = vpack.c.b16 %v7347, %v7339
      %v8396 = vpack.c.b16 %v7348, %v7340
      %v8397 = vpack.c.b16 %v7349, %v7341
      %v8398 = vpack.c.b16 %v7350, %v7342
      %v8399 = vpack.c.b16 %v7351, %v7343
      %v8400 = vpack.c.b16 %v7360, %v7352
      %v8401 = vpack.c.b16 %v7361, %v7353
      %v8402 = vpack.c.b16 %v7362, %v7354
      %v8403 = vpack.c.b16 %v7363, %v7355
      %v8404 = vpack.c.b16 %v7364, %v7356
      %v8405 = vpack.c.b16 %v7365, %v7357
      %v8406 = vpack.c.b16 %v7366, %v7358
      %v8407 = vpack.c.b16 %v7367, %v7359
      %v8408 = vpack.c.b16 %v7376, %v7368
      %v8409 = vpack.c.b16 %v7377, %v7369
      %v8410 = vpack.c.b16 %v7378, %v7370
      %v8411 = vpack.c.b16 %v7379, %v7371
      %v8412 = vpack.c.b16 %v7380, %v7372
      %v8413 = vpack.c.b16 %v7381, %v7373
      %v8414 = vpack.c.b16 %v7382, %v7374
      %v8415 = vpack.c.b16 %v7383, %v7375
      %v8416 = vpack.c.b16 %v7392, %v7384
      %v8417 = vpack.c.b16 %v7393, %v7385
      %v8418 = vpack.c.b16 %v7394, %v7386
      %v8419 = vpack.c.b16 %v7395, %v7387
      %v8420 = vpack.c.b16 %v7396, %v7388
      %v8421 = vpack.c.b16 %v7397, %v7389
      %v8422 = vpack.c.b16 %v7398, %v7390
      %v8423 = vpack.c.b16 %v7399, %v7391
      %9448 = vmatprep.subr.bf16.mxu0 %v7457
      %9449 = vmatpush1.bf16.msra.mxu0 %v7456
      %9450 = vmatprep.subr.bf16.mxu0 %v7449
      %9451 = vmatpush1.bf16.msra.mxu0 %v7448
      %9452 = vmatprep.subr.bf16.mxu0 %v7441
      %9453 = vmatpush1.bf16.msra.mxu0 %v7440
      %9454 = vmatprep.subr.bf16.mxu0 %v7433
      %9455 = vmatpush1.bf16.msra.mxu0 %v7432
      %9456 = vmatprep.subr.bf16.mxu0 %v7425
      %9457 = vmatpush1.bf16.msra.mxu0 %v7424
      %9458 = vmatprep.subr.bf16.mxu0 %v7417
      %9459 = vmatpush1.bf16.msra.mxu0 %v7416
      %9460 = vmatprep.subr.bf16.mxu0 %v7409
      %9461 = vmatpush1.bf16.msra.mxu0 %v7408
      %9462 = vmatprep.subr.bf16.mxu0 %v7401
      %9463 = vmatpush1.bf16.msra.mxu0 %v7400
      %9464 = vmatprep.subr.bf16.mxu0 %v7521
      %9465 = vmatpush2.bf16.msra.mxu0 %v7520
      %9466 = vmatprep.subr.bf16.mxu0 %v7513
      %9467 = vmatpush2.bf16.msra.mxu0 %v7512
      %9468 = vmatprep.subr.bf16.mxu0 %v7505
      %9469 = vmatpush2.bf16.msra.mxu0 %v7504
      %9470 = vmatprep.subr.bf16.mxu0 %v7497
      %9471 = vmatpush2.bf16.msra.mxu0 %v7496
      %9472 = vmatprep.subr.bf16.mxu0 %v7489
      %9473 = vmatpush2.bf16.msra.mxu0 %v7488
      %9474 = vmatprep.subr.bf16.mxu0 %v7481
      %9475 = vmatpush2.bf16.msra.mxu0 %v7480
      %9476 = vmatprep.subr.bf16.mxu0 %v7473
      %9477 = vmatpush2.bf16.msra.mxu0 %v7472
      %9478 = vmatprep.subr.bf16.mxu0 %v7465
      %9479 = vmatpush2.bf16.msra.mxu0 %v7464
      %9480 = vmatprep.mubr.bf16.mxu0 %v3289
      %9481 = vmatmul.mubr.bf16.gmra.mxu0 %v3288
      %v9482 = vpop.f32.mrf.mxu0
      %v9483 = vadd.f32 0.0, %v9482
      %v9484 = vpop.f32.mrf.mxu0
      %v9485 = vadd.f32 0.0, %v9484
      %v9486 = vpop.f32.mrf.mxu0
      %v9487 = vadd.f32 0.0, %v9486
      %v9488 = vpop.f32.mrf.mxu0
      %v9489 = vadd.f32 0.0, %v9488
      %9490 = vdwg.mxu0
      %9491 = vmatprep.subr.bf16.mxu0 %v7585
      %9492 = vmatpush1.bf16.msra.mxu0 %v7584
      %9493 = vmatprep.subr.bf16.mxu0 %v7577
      %9494 = vmatpush1.bf16.msra.mxu0 %v7576
      %9495 = vmatprep.subr.bf16.mxu0 %v7569
      %9496 = vmatpush1.bf16.msra.mxu0 %v7568
      %9497 = vmatprep.subr.bf16.mxu0 %v7561
      %9498 = vmatpush1.bf16.msra.mxu0 %v7560
      %9499 = vmatprep.subr.bf16.mxu0 %v7553
      %9500 = vmatpush1.bf16.msra.mxu0 %v7552
      %9501 = vmatprep.subr.bf16.mxu0 %v7545
      %9502 = vmatpush1.bf16.msra.mxu0 %v7544
      %9503 = vmatprep.subr.bf16.mxu0 %v7537
      %9504 = vmatpush1.bf16.msra.mxu0 %v7536
      %9505 = vmatprep.subr.bf16.mxu0 %v7529
      %9506 = vmatpush1.bf16.msra.mxu0 %v7528
      %9507 = vmatprep.subr.bf16.mxu0 %v7649
      %9508 = vmatpush2.bf16.msra.mxu0 %v7648
      %9509 = vmatprep.subr.bf16.mxu0 %v7641
      %9510 = vmatpush2.bf16.msra.mxu0 %v7640
      %9511 = vmatprep.subr.bf16.mxu0 %v7633
      %9512 = vmatpush2.bf16.msra.mxu0 %v7632
      %9513 = vmatprep.subr.bf16.mxu0 %v7625
      %9514 = vmatpush2.bf16.msra.mxu0 %v7624
      %9515 = vmatprep.subr.bf16.mxu0 %v7617
      %9516 = vmatpush2.bf16.msra.mxu0 %v7616
      %9517 = vmatprep.subr.bf16.mxu0 %v7609
      %9518 = vmatpush2.bf16.msra.mxu0 %v7608
      %9519 = vmatprep.subr.bf16.mxu0 %v7601
      %9520 = vmatpush2.bf16.msra.mxu0 %v7600
      %9521 = vmatprep.subr.bf16.mxu0 %v7593
      %9522 = vmatpush2.bf16.msra.mxu0 %v7592
      %9523 = vmatprep.mubr.bf16.mxu0 %v3291
      %9524 = vmatmul.mubr.bf16.gmra.mxu0 %v3290
      %v9525 = vpop.f32.mrf.mxu0
      %v9526 = vadd.f32 %v9483, %v9525
      %v9527 = vpop.f32.mrf.mxu0
      %v9528 = vadd.f32 %v9485, %v9527
      %v9529 = vpop.f32.mrf.mxu0
      %v9530 = vadd.f32 %v9487, %v9529
      %v9531 = vpop.f32.mrf.mxu0
      %v9532 = vadd.f32 %v9489, %v9531
      %9533 = vdwg.mxu0
      %9534 = vmatprep.subr.bf16.mxu0 %v7713
      %9535 = vmatpush1.bf16.msra.mxu0 %v7712
      %9536 = vmatprep.subr.bf16.mxu0 %v7705
      %9537 = vmatpush1.bf16.msra.mxu0 %v7704
      %9538 = vmatprep.subr.bf16.mxu0 %v7697
      %9539 = vmatpush1.bf16.msra.mxu0 %v7696
      %9540 = vmatprep.subr.bf16.mxu0 %v7689
      %9541 = vmatpush1.bf16.msra.mxu0 %v7688
      %9542 = vmatprep.subr.bf16.mxu0 %v7681
      %9543 = vmatpush1.bf16.msra.mxu0 %v7680
      %9544 = vmatprep.subr.bf16.mxu0 %v7673
      %9545 = vmatpush1.bf16.msra.mxu0 %v7672
      %9546 = vmatprep.subr.bf16.mxu0 %v7665
      %9547 = vmatpush1.bf16.msra.mxu0 %v7664
      %9548 = vmatprep.subr.bf16.mxu0 %v7657
      %9549 = vmatpush1.bf16.msra.mxu0 %v7656
      %9550 = vmatprep.subr.bf16.mxu0 %v7777
      %9551 = vmatpush2.bf16.msra.mxu0 %v7776
      %9552 = vmatprep.subr.bf16.mxu0 %v7769
      %9553 = vmatpush2.bf16.msra.mxu0 %v7768
      %9554 = vmatprep.subr.bf16.mxu0 %v7761
      %9555 = vmatpush2.bf16.msra.mxu0 %v7760
      %9556 = vmatprep.subr.bf16.mxu0 %v7753
      %9557 = vmatpush2.bf16.msra.mxu0 %v7752
      %9558 = vmatprep.subr.bf16.mxu0 %v7745
      %9559 = vmatpush2.bf16.msra.mxu0 %v7744
      %9560 = vmatprep.subr.bf16.mxu0 %v7737
      %9561 = vmatpush2.bf16.msra.mxu0 %v7736
      %9562 = vmatprep.subr.bf16.mxu0 %v7729
      %9563 = vmatpush2.bf16.msra.mxu0 %v7728
      %9564 = vmatprep.subr.bf16.mxu0 %v7721
      %9565 = vmatpush2.bf16.msra.mxu0 %v7720
      %9566 = vmatprep.mubr.bf16.mxu0 %v3293
      %9567 = vmatmul.mubr.bf16.gmra.mxu0 %v3292
      %v9568 = vpop.f32.mrf.mxu0
      %v9569 = vadd.f32 %v9526, %v9568
      %v9570 = vpop.f32.mrf.mxu0
      %v9571 = vadd.f32 %v9528, %v9570
      %v9572 = vpop.f32.mrf.mxu0
      %v9573 = vadd.f32 %v9530, %v9572
      %v9574 = vpop.f32.mrf.mxu0
      %v9575 = vadd.f32 %v9532, %v9574
      %9576 = vdwg.mxu0
      %9577 = vmatprep.subr.bf16.mxu0 %v7841
      %9578 = vmatpush1.bf16.msra.mxu0 %v7840
      %9579 = vmatprep.subr.bf16.mxu0 %v7833
      %9580 = vmatpush1.bf16.msra.mxu0 %v7832
      %9581 = vmatprep.subr.bf16.mxu0 %v7825
      %9582 = vmatpush1.bf16.msra.mxu0 %v7824
      %9583 = vmatprep.subr.bf16.mxu0 %v7817
      %9584 = vmatpush1.bf16.msra.mxu0 %v7816
      %9585 = vmatprep.subr.bf16.mxu0 %v7809
      %9586 = vmatpush1.bf16.msra.mxu0 %v7808
      %9587 = vmatprep.subr.bf16.mxu0 %v7801
      %9588 = vmatpush1.bf16.msra.mxu0 %v7800
      %9589 = vmatprep.subr.bf16.mxu0 %v7793
      %9590 = vmatpush1.bf16.msra.mxu0 %v7792
      %9591 = vmatprep.subr.bf16.mxu0 %v7785
      %9592 = vmatpush1.bf16.msra.mxu0 %v7784
      %9593 = vmatprep.subr.bf16.mxu0 %v7905
      %9594 = vmatpush2.bf16.msra.mxu0 %v7904
      %9595 = vmatprep.subr.bf16.mxu0 %v7897
      %9596 = vmatpush2.bf16.msra.mxu0 %v7896
      %9597 = vmatprep.subr.bf16.mxu0 %v7889
      %9598 = vmatpush2.bf16.msra.mxu0 %v7888
      %9599 = vmatprep.subr.bf16.mxu0 %v7881
      %9600 = vmatpush2.bf16.msra.mxu0 %v7880
      %9601 = vmatprep.subr.bf16.mxu0 %v7873
      %9602 = vmatpush2.bf16.msra.mxu0 %v7872
      %9603 = vmatprep.subr.bf16.mxu0 %v7865
      %9604 = vmatpush2.bf16.msra.mxu0 %v7864
      %9605 = vmatprep.subr.bf16.mxu0 %v7857
      %9606 = vmatpush2.bf16.msra.mxu0 %v7856
      %9607 = vmatprep.subr.bf16.mxu0 %v7849
      %9608 = vmatpush2.bf16.msra.mxu0 %v7848
      %9609 = vmatprep.mubr.bf16.mxu0 %v3295
      %9610 = vmatmul.mubr.bf16.gmra.mxu0 %v3294
      %v9611 = vpop.f32.mrf.mxu0
      %v9612 = vadd.f32 %v9569, %v9611
      %v9613 = vpop.f32.mrf.mxu0
      %v9614 = vadd.f32 %v9571, %v9613
      %v9615 = vpop.f32.mrf.mxu0
      %v9616 = vadd.f32 %v9573, %v9615
      %v9617 = vpop.f32.mrf.mxu0
      %v9618 = vadd.f32 %v9575, %v9617
      %9619 = vdwg.mxu0
      %9620 = vmatprep.subr.bf16.mxu0 %v7969
      %9621 = vmatpush1.bf16.msra.mxu0 %v7968
      %9622 = vmatprep.subr.bf16.mxu0 %v7961
      %9623 = vmatpush1.bf16.msra.mxu0 %v7960
      %9624 = vmatprep.subr.bf16.mxu0 %v7953
      %9625 = vmatpush1.bf16.msra.mxu0 %v7952
      %9626 = vmatprep.subr.bf16.mxu0 %v7945
      %9627 = vmatpush1.bf16.msra.mxu0 %v7944
      %9628 = vmatprep.subr.bf16.mxu0 %v7937
      %9629 = vmatpush1.bf16.msra.mxu0 %v7936
      %9630 = vmatprep.subr.bf16.mxu0 %v7929
      %9631 = vmatpush1.bf16.msra.mxu0 %v7928
      %9632 = vmatprep.subr.bf16.mxu0 %v7921
      %9633 = vmatpush1.bf16.msra.mxu0 %v7920
      %9634 = vmatprep.subr.bf16.mxu0 %v7913
      %9635 = vmatpush1.bf16.msra.mxu0 %v7912
      %9636 = vmatprep.subr.bf16.mxu0 %v8033
      %9637 = vmatpush2.bf16.msra.mxu0 %v8032
      %9638 = vmatprep.subr.bf16.mxu0 %v8025
      %9639 = vmatpush2.bf16.msra.mxu0 %v8024
      %9640 = vmatprep.subr.bf16.mxu0 %v8017
      %9641 = vmatpush2.bf16.msra.mxu0 %v8016
      %9642 = vmatprep.subr.bf16.mxu0 %v8009
      %9643 = vmatpush2.bf16.msra.mxu0 %v8008
      %9644 = vmatprep.subr.bf16.mxu0 %v8001
      %9645 = vmatpush2.bf16.msra.mxu0 %v8000
      %9646 = vmatprep.subr.bf16.mxu0 %v7993
      %9647 = vmatpush2.bf16.msra.mxu0 %v7992
      %9648 = vmatprep.subr.bf16.mxu0 %v7985
      %9649 = vmatpush2.bf16.msra.mxu0 %v7984
      %9650 = vmatprep.subr.bf16.mxu0 %v7977
      %9651 = vmatpush2.bf16.msra.mxu0 %v7976
      %9652 = vmatprep.mubr.bf16.mxu0 %v3297
      %9653 = vmatmul.mubr.bf16.gmra.mxu0 %v3296
      %v9654 = vpop.f32.mrf.mxu0
      %v9655 = vadd.f32 %v9612, %v9654
      %v9656 = vpop.f32.mrf.mxu0
      %v9657 = vadd.f32 %v9614, %v9656
      %v9658 = vpop.f32.mrf.mxu0
      %v9659 = vadd.f32 %v9616, %v9658
      %v9660 = vpop.f32.mrf.mxu0
      %v9661 = vadd.f32 %v9618, %v9660
      %9662 = vdwg.mxu0
      %9663 = vmatprep.subr.bf16.mxu0 %v8097
      %9664 = vmatpush1.bf16.msra.mxu0 %v8096
      %9665 = vmatprep.subr.bf16.mxu0 %v8089
      %9666 = vmatpush1.bf16.msra.mxu0 %v8088
      %9667 = vmatprep.subr.bf16.mxu0 %v8081
      %9668 = vmatpush1.bf16.msra.mxu0 %v8080
      %9669 = vmatprep.subr.bf16.mxu0 %v8073
      %9670 = vmatpush1.bf16.msra.mxu0 %v8072
      %9671 = vmatprep.subr.bf16.mxu0 %v8065
      %9672 = vmatpush1.bf16.msra.mxu0 %v8064
      %9673 = vmatprep.subr.bf16.mxu0 %v8057
      %9674 = vmatpush1.bf16.msra.mxu0 %v8056
      %9675 = vmatprep.subr.bf16.mxu0 %v8049
      %9676 = vmatpush1.bf16.msra.mxu0 %v8048
      %9677 = vmatprep.subr.bf16.mxu0 %v8041
      %9678 = vmatpush1.bf16.msra.mxu0 %v8040
      %9679 = vmatprep.subr.bf16.mxu0 %v8161
      %9680 = vmatpush2.bf16.msra.mxu0 %v8160
      %9681 = vmatprep.subr.bf16.mxu0 %v8153
      %9682 = vmatpush2.bf16.msra.mxu0 %v8152
      %9683 = vmatprep.subr.bf16.mxu0 %v8145
      %9684 = vmatpush2.bf16.msra.mxu0 %v8144
      %9685 = vmatprep.subr.bf16.mxu0 %v8137
      %9686 = vmatpush2.bf16.msra.mxu0 %v8136
      %9687 = vmatprep.subr.bf16.mxu0 %v8129
      %9688 = vmatpush2.bf16.msra.mxu0 %v8128
      %9689 = vmatprep.subr.bf16.mxu0 %v8121
      %9690 = vmatpush2.bf16.msra.mxu0 %v8120
      %9691 = vmatprep.subr.bf16.mxu0 %v8113
      %9692 = vmatpush2.bf16.msra.mxu0 %v8112
      %9693 = vmatprep.subr.bf16.mxu0 %v8105
      %9694 = vmatpush2.bf16.msra.mxu0 %v8104
      %9695 = vmatprep.mubr.bf16.mxu0 %v3299
      %9696 = vmatmul.mubr.bf16.gmra.mxu0 %v3298
      %v9697 = vpop.f32.mrf.mxu0
      %v9698 = vadd.f32 %v9655, %v9697
      %v9699 = vpop.f32.mrf.mxu0
      %v9700 = vadd.f32 %v9657, %v9699
      %v9701 = vpop.f32.mrf.mxu0
      %v9702 = vadd.f32 %v9659, %v9701
      %v9703 = vpop.f32.mrf.mxu0
      %v9704 = vadd.f32 %v9661, %v9703
      %9705 = vdwg.mxu0
      %9706 = vmatprep.subr.bf16.mxu0 %v8225
      %9707 = vmatpush1.bf16.msra.mxu0 %v8224
      %9708 = vmatprep.subr.bf16.mxu0 %v8217
      %9709 = vmatpush1.bf16.msra.mxu0 %v8216
      %9710 = vmatprep.subr.bf16.mxu0 %v8209
      %9711 = vmatpush1.bf16.msra.mxu0 %v8208
      %9712 = vmatprep.subr.bf16.mxu0 %v8201
      %9713 = vmatpush1.bf16.msra.mxu0 %v8200
      %9714 = vmatprep.subr.bf16.mxu0 %v8193
      %9715 = vmatpush1.bf16.msra.mxu0 %v8192
      %9716 = vmatprep.subr.bf16.mxu0 %v8185
      %9717 = vmatpush1.bf16.msra.mxu0 %v8184
      %9718 = vmatprep.subr.bf16.mxu0 %v8177
      %9719 = vmatpush1.bf16.msra.mxu0 %v8176
      %9720 = vmatprep.subr.bf16.mxu0 %v8169
      %9721 = vmatpush1.bf16.msra.mxu0 %v8168
      %9722 = vmatprep.subr.bf16.mxu0 %v8289
      %9723 = vmatpush2.bf16.msra.mxu0 %v8288
      %9724 = vmatprep.subr.bf16.mxu0 %v8281
      %9725 = vmatpush2.bf16.msra.mxu0 %v8280
      %9726 = vmatprep.subr.bf16.mxu0 %v8273
      %9727 = vmatpush2.bf16.msra.mxu0 %v8272
      %9728 = vmatprep.subr.bf16.mxu0 %v8265
      %9729 = vmatpush2.bf16.msra.mxu0 %v8264
      %9730 = vmatprep.subr.bf16.mxu0 %v8257
      %9731 = vmatpush2.bf16.msra.mxu0 %v8256
      %9732 = vmatprep.subr.bf16.mxu0 %v8249
      %9733 = vmatpush2.bf16.msra.mxu0 %v8248
      %9734 = vmatprep.subr.bf16.mxu0 %v8241
      %9735 = vmatpush2.bf16.msra.mxu0 %v8240
      %9736 = vmatprep.subr.bf16.mxu0 %v8233
      %9737 = vmatpush2.bf16.msra.mxu0 %v8232
      %9738 = vmatprep.mubr.bf16.mxu0 %v3301
      %9739 = vmatmul.mubr.bf16.gmra.mxu0 %v3300
      %v9740 = vpop.f32.mrf.mxu0
      %v9741 = vadd.f32 %v9698, %v9740
      %v9742 = vpop.f32.mrf.mxu0
      %v9743 = vadd.f32 %v9700, %v9742
      %v9744 = vpop.f32.mrf.mxu0
      %v9745 = vadd.f32 %v9702, %v9744
      %v9746 = vpop.f32.mrf.mxu0
      %v9747 = vadd.f32 %v9704, %v9746
      %9748 = vdwg.mxu0
      %9749 = vmatprep.subr.bf16.mxu0 %v8353
      %9750 = vmatpush1.bf16.msra.mxu0 %v8352
      %9751 = vmatprep.subr.bf16.mxu0 %v8345
      %9752 = vmatpush1.bf16.msra.mxu0 %v8344
      %9753 = vmatprep.subr.bf16.mxu0 %v8337
      %9754 = vmatpush1.bf16.msra.mxu0 %v8336
      %9755 = vmatprep.subr.bf16.mxu0 %v8329
      %9756 = vmatpush1.bf16.msra.mxu0 %v8328
      %9757 = vmatprep.subr.bf16.mxu0 %v8321
      %9758 = vmatpush1.bf16.msra.mxu0 %v8320
      %9759 = vmatprep.subr.bf16.mxu0 %v8313
      %9760 = vmatpush1.bf16.msra.mxu0 %v8312
      %9761 = vmatprep.subr.bf16.mxu0 %v8305
      %9762 = vmatpush1.bf16.msra.mxu0 %v8304
      %9763 = vmatprep.subr.bf16.mxu0 %v8297
      %9764 = vmatpush1.bf16.msra.mxu0 %v8296
      %9765 = vmatprep.subr.bf16.mxu0 %v8417
      %9766 = vmatpush2.bf16.msra.mxu0 %v8416
      %9767 = vmatprep.subr.bf16.mxu0 %v8409
      %9768 = vmatpush2.bf16.msra.mxu0 %v8408
      %9769 = vmatprep.subr.bf16.mxu0 %v8401
      %9770 = vmatpush2.bf16.msra.mxu0 %v8400
      %9771 = vmatprep.subr.bf16.mxu0 %v8393
      %9772 = vmatpush2.bf16.msra.mxu0 %v8392
      %9773 = vmatprep.subr.bf16.mxu0 %v8385
      %9774 = vmatpush2.bf16.msra.mxu0 %v8384
      %9775 = vmatprep.subr.bf16.mxu0 %v8377
      %9776 = vmatpush2.bf16.msra.mxu0 %v8376
      %9777 = vmatprep.subr.bf16.mxu0 %v8369
      %9778 = vmatpush2.bf16.msra.mxu0 %v8368
      %9779 = vmatprep.subr.bf16.mxu0 %v8361
      %9780 = vmatpush2.bf16.msra.mxu0 %v8360
      %9781 = vmatprep.mubr.bf16.mxu0 %v3303
      %9782 = vmatmul.mubr.bf16.gmra.mxu0 %v3302
      %v9783 = vpop.f32.mrf.mxu0
      %v9784 = vadd.f32 %v9741, %v9783
      %v9785 = vpop.f32.mrf.mxu0
      %v9786 = vadd.f32 %v9743, %v9785
      %v9787 = vpop.f32.mrf.mxu0
      %v9788 = vadd.f32 %v9745, %v9787
      %v9789 = vpop.f32.mrf.mxu0
      %v9790 = vadd.f32 %v9747, %v9789
      %9791 = vdwg.mxu0
      %9792 = vmatprep.subr.bf16.mxu0 %v7459
      %9793 = vmatpush1.bf16.msra.mxu0 %v7458
      %9794 = vmatprep.subr.bf16.mxu0 %v7451
      %9795 = vmatpush1.bf16.msra.mxu0 %v7450
      %9796 = vmatprep.subr.bf16.mxu0 %v7443
      %9797 = vmatpush1.bf16.msra.mxu0 %v7442
      %9798 = vmatprep.subr.bf16.mxu0 %v7435
      %9799 = vmatpush1.bf16.msra.mxu0 %v7434
      %9800 = vmatprep.subr.bf16.mxu0 %v7427
      %9801 = vmatpush1.bf16.msra.mxu0 %v7426
      %9802 = vmatprep.subr.bf16.mxu0 %v7419
      %9803 = vmatpush1.bf16.msra.mxu0 %v7418
      %9804 = vmatprep.subr.bf16.mxu0 %v7411
      %9805 = vmatpush1.bf16.msra.mxu0 %v7410
      %9806 = vmatprep.subr.bf16.mxu0 %v7403
      %9807 = vmatpush1.bf16.msra.mxu0 %v7402
      %9808 = vmatprep.subr.bf16.mxu0 %v7523
      %9809 = vmatpush2.bf16.msra.mxu0 %v7522
      %9810 = vmatprep.subr.bf16.mxu0 %v7515
      %9811 = vmatpush2.bf16.msra.mxu0 %v7514
      %9812 = vmatprep.subr.bf16.mxu0 %v7507
      %9813 = vmatpush2.bf16.msra.mxu0 %v7506
      %9814 = vmatprep.subr.bf16.mxu0 %v7499
      %9815 = vmatpush2.bf16.msra.mxu0 %v7498
      %9816 = vmatprep.subr.bf16.mxu0 %v7491
      %9817 = vmatpush2.bf16.msra.mxu0 %v7490
      %9818 = vmatprep.subr.bf16.mxu0 %v7483
      %9819 = vmatpush2.bf16.msra.mxu0 %v7482
      %9820 = vmatprep.subr.bf16.mxu0 %v7475
      %9821 = vmatpush2.bf16.msra.mxu0 %v7474
      %9822 = vmatprep.subr.bf16.mxu0 %v7467
      %9823 = vmatpush2.bf16.msra.mxu0 %v7466
      %9824 = vmatprep.mubr.bf16.mxu0 %v3289
      %9825 = vmatmul.mubr.bf16.gmra.mxu0 %v3288
      %v9826 = vpop.f32.mrf.mxu0
      %v9827 = vadd.f32 0.0, %v9826
      %v9828 = vpop.f32.mrf.mxu0
      %v9829 = vadd.f32 0.0, %v9828
      %v9830 = vpop.f32.mrf.mxu0
      %v9831 = vadd.f32 0.0, %v9830
      %v9832 = vpop.f32.mrf.mxu0
      %v9833 = vadd.f32 0.0, %v9832
      %9834 = vdwg.mxu0
      %9835 = vmatprep.subr.bf16.mxu0 %v7587
      %9836 = vmatpush1.bf16.msra.mxu0 %v7586
      %9837 = vmatprep.subr.bf16.mxu0 %v7579
      %9838 = vmatpush1.bf16.msra.mxu0 %v7578
      %9839 = vmatprep.subr.bf16.mxu0 %v7571
      %9840 = vmatpush1.bf16.msra.mxu0 %v7570
      %9841 = vmatprep.subr.bf16.mxu0 %v7563
      %9842 = vmatpush1.bf16.msra.mxu0 %v7562
      %9843 = vmatprep.subr.bf16.mxu0 %v7555
      %9844 = vmatpush1.bf16.msra.mxu0 %v7554
      %9845 = vmatprep.subr.bf16.mxu0 %v7547
      %9846 = vmatpush1.bf16.msra.mxu0 %v7546
      %9847 = vmatprep.subr.bf16.mxu0 %v7539
      %9848 = vmatpush1.bf16.msra.mxu0 %v7538
      %9849 = vmatprep.subr.bf16.mxu0 %v7531
      %9850 = vmatpush1.bf16.msra.mxu0 %v7530
      %9851 = vmatprep.subr.bf16.mxu0 %v7651
      %9852 = vmatpush2.bf16.msra.mxu0 %v7650
      %9853 = vmatprep.subr.bf16.mxu0 %v7643
      %9854 = vmatpush2.bf16.msra.mxu0 %v7642
      %9855 = vmatprep.subr.bf16.mxu0 %v7635
      %9856 = vmatpush2.bf16.msra.mxu0 %v7634
      %9857 = vmatprep.subr.bf16.mxu0 %v7627
      %9858 = vmatpush2.bf16.msra.mxu0 %v7626
      %9859 = vmatprep.subr.bf16.mxu0 %v7619
      %9860 = vmatpush2.bf16.msra.mxu0 %v7618
      %9861 = vmatprep.subr.bf16.mxu0 %v7611
      %9862 = vmatpush2.bf16.msra.mxu0 %v7610
      %9863 = vmatprep.subr.bf16.mxu0 %v7603
      %9864 = vmatpush2.bf16.msra.mxu0 %v7602
      %9865 = vmatprep.subr.bf16.mxu0 %v7595
      %9866 = vmatpush2.bf16.msra.mxu0 %v7594
      %9867 = vmatprep.mubr.bf16.mxu0 %v3291
      %9868 = vmatmul.mubr.bf16.gmra.mxu0 %v3290
      %v9869 = vpop.f32.mrf.mxu0
      %v9870 = vadd.f32 %v9827, %v9869
      %v9871 = vpop.f32.mrf.mxu0
      %v9872 = vadd.f32 %v9829, %v9871
      %v9873 = vpop.f32.mrf.mxu0
      %v9874 = vadd.f32 %v9831, %v9873
      %v9875 = vpop.f32.mrf.mxu0
      %v9876 = vadd.f32 %v9833, %v9875
      %9877 = vdwg.mxu0
      %9878 = vmatprep.subr.bf16.mxu0 %v7715
      %9879 = vmatpush1.bf16.msra.mxu0 %v7714
      %9880 = vmatprep.subr.bf16.mxu0 %v7707
      %9881 = vmatpush1.bf16.msra.mxu0 %v7706
      %9882 = vmatprep.subr.bf16.mxu0 %v7699
      %9883 = vmatpush1.bf16.msra.mxu0 %v7698
      %9884 = vmatprep.subr.bf16.mxu0 %v7691
      %9885 = vmatpush1.bf16.msra.mxu0 %v7690
      %9886 = vmatprep.subr.bf16.mxu0 %v7683
      %9887 = vmatpush1.bf16.msra.mxu0 %v7682
      %9888 = vmatprep.subr.bf16.mxu0 %v7675
      %9889 = vmatpush1.bf16.msra.mxu0 %v7674
      %9890 = vmatprep.subr.bf16.mxu0 %v7667
      %9891 = vmatpush1.bf16.msra.mxu0 %v7666
      %9892 = vmatprep.subr.bf16.mxu0 %v7659
      %9893 = vmatpush1.bf16.msra.mxu0 %v7658
      %9894 = vmatprep.subr.bf16.mxu0 %v7779
      %9895 = vmatpush2.bf16.msra.mxu0 %v7778
      %9896 = vmatprep.subr.bf16.mxu0 %v7771
      %9897 = vmatpush2.bf16.msra.mxu0 %v7770
      %9898 = vmatprep.subr.bf16.mxu0 %v7763
      %9899 = vmatpush2.bf16.msra.mxu0 %v7762
      %9900 = vmatprep.subr.bf16.mxu0 %v7755
      %9901 = vmatpush2.bf16.msra.mxu0 %v7754
      %9902 = vmatprep.subr.bf16.mxu0 %v7747
      %9903 = vmatpush2.bf16.msra.mxu0 %v7746
      %9904 = vmatprep.subr.bf16.mxu0 %v7739
      %9905 = vmatpush2.bf16.msra.mxu0 %v7738
      %9906 = vmatprep.subr.bf16.mxu0 %v7731
      %9907 = vmatpush2.bf16.msra.mxu0 %v7730
      %9908 = vmatprep.subr.bf16.mxu0 %v7723
      %9909 = vmatpush2.bf16.msra.mxu0 %v7722
      %9910 = vmatprep.mubr.bf16.mxu0 %v3293
      %9911 = vmatmul.mubr.bf16.gmra.mxu0 %v3292
      %v9912 = vpop.f32.mrf.mxu0
      %v9913 = vadd.f32 %v9870, %v9912
      %v9914 = vpop.f32.mrf.mxu0
      %v9915 = vadd.f32 %v9872, %v9914
      %v9916 = vpop.f32.mrf.mxu0
      %v9917 = vadd.f32 %v9874, %v9916
      %v9918 = vpop.f32.mrf.mxu0
      %v9919 = vadd.f32 %v9876, %v9918
      %9920 = vdwg.mxu0
      %9921 = vmatprep.subr.bf16.mxu0 %v7843
      %9922 = vmatpush1.bf16.msra.mxu0 %v7842
      %9923 = vmatprep.subr.bf16.mxu0 %v7835
      %9924 = vmatpush1.bf16.msra.mxu0 %v7834
      %9925 = vmatprep.subr.bf16.mxu0 %v7827
      %9926 = vmatpush1.bf16.msra.mxu0 %v7826
      %9927 = vmatprep.subr.bf16.mxu0 %v7819
      %9928 = vmatpush1.bf16.msra.mxu0 %v7818
      %9929 = vmatprep.subr.bf16.mxu0 %v7811
      %9930 = vmatpush1.bf16.msra.mxu0 %v7810
      %9931 = vmatprep.subr.bf16.mxu0 %v7803
      %9932 = vmatpush1.bf16.msra.mxu0 %v7802
      %9933 = vmatprep.subr.bf16.mxu0 %v7795
      %9934 = vmatpush1.bf16.msra.mxu0 %v7794
      %9935 = vmatprep.subr.bf16.mxu0 %v7787
      %9936 = vmatpush1.bf16.msra.mxu0 %v7786
      %9937 = vmatprep.subr.bf16.mxu0 %v7907
      %9938 = vmatpush2.bf16.msra.mxu0 %v7906
      %9939 = vmatprep.subr.bf16.mxu0 %v7899
      %9940 = vmatpush2.bf16.msra.mxu0 %v7898
      %9941 = vmatprep.subr.bf16.mxu0 %v7891
      %9942 = vmatpush2.bf16.msra.mxu0 %v7890
      %9943 = vmatprep.subr.bf16.mxu0 %v7883
      %9944 = vmatpush2.bf16.msra.mxu0 %v7882
      %9945 = vmatprep.subr.bf16.mxu0 %v7875
      %9946 = vmatpush2.bf16.msra.mxu0 %v7874
      %9947 = vmatprep.subr.bf16.mxu0 %v7867
      %9948 = vmatpush2.bf16.msra.mxu0 %v7866
      %9949 = vmatprep.subr.bf16.mxu0 %v7859
      %9950 = vmatpush2.bf16.msra.mxu0 %v7858
      %9951 = vmatprep.subr.bf16.mxu0 %v7851
      %9952 = vmatpush2.bf16.msra.mxu0 %v7850
      %9953 = vmatprep.mubr.bf16.mxu0 %v3295
      %9954 = vmatmul.mubr.bf16.gmra.mxu0 %v3294
      %v9955 = vpop.f32.mrf.mxu0
      %v9956 = vadd.f32 %v9913, %v9955
      %v9957 = vpop.f32.mrf.mxu0
      %v9958 = vadd.f32 %v9915, %v9957
      %v9959 = vpop.f32.mrf.mxu0
      %v9960 = vadd.f32 %v9917, %v9959
      %v9961 = vpop.f32.mrf.mxu0
      %v9962 = vadd.f32 %v9919, %v9961
      %9963 = vdwg.mxu0
      %9964 = vmatprep.subr.bf16.mxu0 %v7971
      %9965 = vmatpush1.bf16.msra.mxu0 %v7970
      %9966 = vmatprep.subr.bf16.mxu0 %v7963
      %9967 = vmatpush1.bf16.msra.mxu0 %v7962
      %9968 = vmatprep.subr.bf16.mxu0 %v7955
      %9969 = vmatpush1.bf16.msra.mxu0 %v7954
      %9970 = vmatprep.subr.bf16.mxu0 %v7947
      %9971 = vmatpush1.bf16.msra.mxu0 %v7946
      %9972 = vmatprep.subr.bf16.mxu0 %v7939
      %9973 = vmatpush1.bf16.msra.mxu0 %v7938
      %9974 = vmatprep.subr.bf16.mxu0 %v7931
      %9975 = vmatpush1.bf16.msra.mxu0 %v7930
      %9976 = vmatprep.subr.bf16.mxu0 %v7923
      %9977 = vmatpush1.bf16.msra.mxu0 %v7922
      %9978 = vmatprep.subr.bf16.mxu0 %v7915
      %9979 = vmatpush1.bf16.msra.mxu0 %v7914
      %9980 = vmatprep.subr.bf16.mxu0 %v8035
      %9981 = vmatpush2.bf16.msra.mxu0 %v8034
      %9982 = vmatprep.subr.bf16.mxu0 %v8027
      %9983 = vmatpush2.bf16.msra.mxu0 %v8026
      %9984 = vmatprep.subr.bf16.mxu0 %v8019
      %9985 = vmatpush2.bf16.msra.mxu0 %v8018
      %9986 = vmatprep.subr.bf16.mxu0 %v8011
      %9987 = vmatpush2.bf16.msra.mxu0 %v8010
      %9988 = vmatprep.subr.bf16.mxu0 %v8003
      %9989 = vmatpush2.bf16.msra.mxu0 %v8002
      %9990 = vmatprep.subr.bf16.mxu0 %v7995
      %9991 = vmatpush2.bf16.msra.mxu0 %v7994
      %9992 = vmatprep.subr.bf16.mxu0 %v7987
      %9993 = vmatpush2.bf16.msra.mxu0 %v7986
      %9994 = vmatprep.subr.bf16.mxu0 %v7979
      %9995 = vmatpush2.bf16.msra.mxu0 %v7978
      %9996 = vmatprep.mubr.bf16.mxu0 %v3297
      %9997 = vmatmul.mubr.bf16.gmra.mxu0 %v3296
      %v9998 = vpop.f32.mrf.mxu0
      %v9999 = vadd.f32 %v9956, %v9998
      %v10000 = vpop.f32.mrf.mxu0
      %v10001 = vadd.f32 %v9958, %v10000
      %v10002 = vpop.f32.mrf.mxu0
      %v10003 = vadd.f32 %v9960, %v10002
      %v10004 = vpop.f32.mrf.mxu0
      %v10005 = vadd.f32 %v9962, %v10004
      %10006 = vdwg.mxu0
      %10007 = vmatprep.subr.bf16.mxu0 %v8099
      %10008 = vmatpush1.bf16.msra.mxu0 %v8098
      %10009 = vmatprep.subr.bf16.mxu0 %v8091
      %10010 = vmatpush1.bf16.msra.mxu0 %v8090
      %10011 = vmatprep.subr.bf16.mxu0 %v8083
      %10012 = vmatpush1.bf16.msra.mxu0 %v8082
      %10013 = vmatprep.subr.bf16.mxu0 %v8075
      %10014 = vmatpush1.bf16.msra.mxu0 %v8074
      %10015 = vmatprep.subr.bf16.mxu0 %v8067
      %10016 = vmatpush1.bf16.msra.mxu0 %v8066
      %10017 = vmatprep.subr.bf16.mxu0 %v8059
      %10018 = vmatpush1.bf16.msra.mxu0 %v8058
      %10019 = vmatprep.subr.bf16.mxu0 %v8051
      %10020 = vmatpush1.bf16.msra.mxu0 %v8050
      %10021 = vmatprep.subr.bf16.mxu0 %v8043
      %10022 = vmatpush1.bf16.msra.mxu0 %v8042
      %10023 = vmatprep.subr.bf16.mxu0 %v8163
      %10024 = vmatpush2.bf16.msra.mxu0 %v8162
      %10025 = vmatprep.subr.bf16.mxu0 %v8155
      %10026 = vmatpush2.bf16.msra.mxu0 %v8154
      %10027 = vmatprep.subr.bf16.mxu0 %v8147
      %10028 = vmatpush2.bf16.msra.mxu0 %v8146
      %10029 = vmatprep.subr.bf16.mxu0 %v8139
      %10030 = vmatpush2.bf16.msra.mxu0 %v8138
      %10031 = vmatprep.subr.bf16.mxu0 %v8131
      %10032 = vmatpush2.bf16.msra.mxu0 %v8130
      %10033 = vmatprep.subr.bf16.mxu0 %v8123
      %10034 = vmatpush2.bf16.msra.mxu0 %v8122
      %10035 = vmatprep.subr.bf16.mxu0 %v8115
      %10036 = vmatpush2.bf16.msra.mxu0 %v8114
      %10037 = vmatprep.subr.bf16.mxu0 %v8107
      %10038 = vmatpush2.bf16.msra.mxu0 %v8106
      %10039 = vmatprep.mubr.bf16.mxu0 %v3299
      %10040 = vmatmul.mubr.bf16.gmra.mxu0 %v3298
      %v10041 = vpop.f32.mrf.mxu0
      %v10042 = vadd.f32 %v9999, %v10041
      %v10043 = vpop.f32.mrf.mxu0
      %v10044 = vadd.f32 %v10001, %v10043
      %v10045 = vpop.f32.mrf.mxu0
      %v10046 = vadd.f32 %v10003, %v10045
      %v10047 = vpop.f32.mrf.mxu0
      %v10048 = vadd.f32 %v10005, %v10047
      %10049 = vdwg.mxu0
      %10050 = vmatprep.subr.bf16.mxu0 %v8227
      %10051 = vmatpush1.bf16.msra.mxu0 %v8226
      %10052 = vmatprep.subr.bf16.mxu0 %v8219
      %10053 = vmatpush1.bf16.msra.mxu0 %v8218
      %10054 = vmatprep.subr.bf16.mxu0 %v8211
      %10055 = vmatpush1.bf16.msra.mxu0 %v8210
      %10056 = vmatprep.subr.bf16.mxu0 %v8203
      %10057 = vmatpush1.bf16.msra.mxu0 %v8202
      %10058 = vmatprep.subr.bf16.mxu0 %v8195
      %10059 = vmatpush1.bf16.msra.mxu0 %v8194
      %10060 = vmatprep.subr.bf16.mxu0 %v8187
      %10061 = vmatpush1.bf16.msra.mxu0 %v8186
      %10062 = vmatprep.subr.bf16.mxu0 %v8179
      %10063 = vmatpush1.bf16.msra.mxu0 %v8178
      %10064 = vmatprep.subr.bf16.mxu0 %v8171
      %10065 = vmatpush1.bf16.msra.mxu0 %v8170
      %10066 = vmatprep.subr.bf16.mxu0 %v8291
      %10067 = vmatpush2.bf16.msra.mxu0 %v8290
      %10068 = vmatprep.subr.bf16.mxu0 %v8283
      %10069 = vmatpush2.bf16.msra.mxu0 %v8282
      %10070 = vmatprep.subr.bf16.mxu0 %v8275
      %10071 = vmatpush2.bf16.msra.mxu0 %v8274
      %10072 = vmatprep.subr.bf16.mxu0 %v8267
      %10073 = vmatpush2.bf16.msra.mxu0 %v8266
      %10074 = vmatprep.subr.bf16.mxu0 %v8259
      %10075 = vmatpush2.bf16.msra.mxu0 %v8258
      %10076 = vmatprep.subr.bf16.mxu0 %v8251
      %10077 = vmatpush2.bf16.msra.mxu0 %v8250
      %10078 = vmatprep.subr.bf16.mxu0 %v8243
      %10079 = vmatpush2.bf16.msra.mxu0 %v8242
      %10080 = vmatprep.subr.bf16.mxu0 %v8235
      %10081 = vmatpush2.bf16.msra.mxu0 %v8234
      %10082 = vmatprep.mubr.bf16.mxu0 %v3301
      %10083 = vmatmul.mubr.bf16.gmra.mxu0 %v3300
      %v10084 = vpop.f32.mrf.mxu0
      %v10085 = vadd.f32 %v10042, %v10084
      %v10086 = vpop.f32.mrf.mxu0
      %v10087 = vadd.f32 %v10044, %v10086
      %v10088 = vpop.f32.mrf.mxu0
      %v10089 = vadd.f32 %v10046, %v10088
      %v10090 = vpop.f32.mrf.mxu0
      %v10091 = vadd.f32 %v10048, %v10090
      %10092 = vdwg.mxu0
      %10093 = vmatprep.subr.bf16.mxu0 %v8355
      %10094 = vmatpush1.bf16.msra.mxu0 %v8354
      %10095 = vmatprep.subr.bf16.mxu0 %v8347
      %10096 = vmatpush1.bf16.msra.mxu0 %v8346
      %10097 = vmatprep.subr.bf16.mxu0 %v8339
      %10098 = vmatpush1.bf16.msra.mxu0 %v8338
      %10099 = vmatprep.subr.bf16.mxu0 %v8331
      %10100 = vmatpush1.bf16.msra.mxu0 %v8330
      %10101 = vmatprep.subr.bf16.mxu0 %v8323
      %10102 = vmatpush1.bf16.msra.mxu0 %v8322
      %10103 = vmatprep.subr.bf16.mxu0 %v8315
      %10104 = vmatpush1.bf16.msra.mxu0 %v8314
      %10105 = vmatprep.subr.bf16.mxu0 %v8307
      %10106 = vmatpush1.bf16.msra.mxu0 %v8306
      %10107 = vmatprep.subr.bf16.mxu0 %v8299
      %10108 = vmatpush1.bf16.msra.mxu0 %v8298
      %10109 = vmatprep.subr.bf16.mxu0 %v8419
      %10110 = vmatpush2.bf16.msra.mxu0 %v8418
      %10111 = vmatprep.subr.bf16.mxu0 %v8411
      %10112 = vmatpush2.bf16.msra.mxu0 %v8410
      %10113 = vmatprep.subr.bf16.mxu0 %v8403
      %10114 = vmatpush2.bf16.msra.mxu0 %v8402
      %10115 = vmatprep.subr.bf16.mxu0 %v8395
      %10116 = vmatpush2.bf16.msra.mxu0 %v8394
      %10117 = vmatprep.subr.bf16.mxu0 %v8387
      %10118 = vmatpush2.bf16.msra.mxu0 %v8386
      %10119 = vmatprep.subr.bf16.mxu0 %v8379
      %10120 = vmatpush2.bf16.msra.mxu0 %v8378
      %10121 = vmatprep.subr.bf16.mxu0 %v8371
      %10122 = vmatpush2.bf16.msra.mxu0 %v8370
      %10123 = vmatprep.subr.bf16.mxu0 %v8363
      %10124 = vmatpush2.bf16.msra.mxu0 %v8362
      %10125 = vmatprep.mubr.bf16.mxu0 %v3303
      %10126 = vmatmul.mubr.bf16.gmra.mxu0 %v3302
      %v10127 = vpop.f32.mrf.mxu0
      %v10128 = vadd.f32 %v10085, %v10127
      %v10129 = vpop.f32.mrf.mxu0
      %v10130 = vadd.f32 %v10087, %v10129
      %v10131 = vpop.f32.mrf.mxu0
      %v10132 = vadd.f32 %v10089, %v10131
      %v10133 = vpop.f32.mrf.mxu0
      %v10134 = vadd.f32 %v10091, %v10133
      %10135 = vdwg.mxu0
      %10136 = vmatprep.subr.bf16.mxu0 %v7461
      %10137 = vmatpush1.bf16.msra.mxu0 %v7460
      %10138 = vmatprep.subr.bf16.mxu0 %v7453
      %10139 = vmatpush1.bf16.msra.mxu0 %v7452
      %10140 = vmatprep.subr.bf16.mxu0 %v7445
      %10141 = vmatpush1.bf16.msra.mxu0 %v7444
      %10142 = vmatprep.subr.bf16.mxu0 %v7437
      %10143 = vmatpush1.bf16.msra.mxu0 %v7436
      %10144 = vmatprep.subr.bf16.mxu0 %v7429
      %10145 = vmatpush1.bf16.msra.mxu0 %v7428
      %10146 = vmatprep.subr.bf16.mxu0 %v7421
      %10147 = vmatpush1.bf16.msra.mxu0 %v7420
      %10148 = vmatprep.subr.bf16.mxu0 %v7413
      %10149 = vmatpush1.bf16.msra.mxu0 %v7412
      %10150 = vmatprep.subr.bf16.mxu0 %v7405
      %10151 = vmatpush1.bf16.msra.mxu0 %v7404
      %10152 = vmatprep.subr.bf16.mxu0 %v7525
      %10153 = vmatpush2.bf16.msra.mxu0 %v7524
      %10154 = vmatprep.subr.bf16.mxu0 %v7517
      %10155 = vmatpush2.bf16.msra.mxu0 %v7516
      %10156 = vmatprep.subr.bf16.mxu0 %v7509
      %10157 = vmatpush2.bf16.msra.mxu0 %v7508
      %10158 = vmatprep.subr.bf16.mxu0 %v7501
      %10159 = vmatpush2.bf16.msra.mxu0 %v7500
      %10160 = vmatprep.subr.bf16.mxu0 %v7493
      %10161 = vmatpush2.bf16.msra.mxu0 %v7492
      %10162 = vmatprep.subr.bf16.mxu0 %v7485
      %10163 = vmatpush2.bf16.msra.mxu0 %v7484
      %10164 = vmatprep.subr.bf16.mxu0 %v7477
      %10165 = vmatpush2.bf16.msra.mxu0 %v7476
      %10166 = vmatprep.subr.bf16.mxu0 %v7469
      %10167 = vmatpush2.bf16.msra.mxu0 %v7468
      %10168 = vmatprep.mubr.bf16.mxu0 %v3289
      %10169 = vmatmul.mubr.bf16.gmra.mxu0 %v3288
      %v10170 = vpop.f32.mrf.mxu0
      %v10171 = vadd.f32 0.0, %v10170
      %v10172 = vpop.f32.mrf.mxu0
      %v10173 = vadd.f32 0.0, %v10172
      %v10174 = vpop.f32.mrf.mxu0
      %v10175 = vadd.f32 0.0, %v10174
      %v10176 = vpop.f32.mrf.mxu0
      %v10177 = vadd.f32 0.0, %v10176
      %10178 = vdwg.mxu0
      %10179 = vmatprep.subr.bf16.mxu0 %v7589
      %10180 = vmatpush1.bf16.msra.mxu0 %v7588
      %10181 = vmatprep.subr.bf16.mxu0 %v7581
      %10182 = vmatpush1.bf16.msra.mxu0 %v7580
      %10183 = vmatprep.subr.bf16.mxu0 %v7573
      %10184 = vmatpush1.bf16.msra.mxu0 %v7572
      %10185 = vmatprep.subr.bf16.mxu0 %v7565
      %10186 = vmatpush1.bf16.msra.mxu0 %v7564
      %10187 = vmatprep.subr.bf16.mxu0 %v7557
      %10188 = vmatpush1.bf16.msra.mxu0 %v7556
      %10189 = vmatprep.subr.bf16.mxu0 %v7549
      %10190 = vmatpush1.bf16.msra.mxu0 %v7548
      %10191 = vmatprep.subr.bf16.mxu0 %v7541
      %10192 = vmatpush1.bf16.msra.mxu0 %v7540
      %10193 = vmatprep.subr.bf16.mxu0 %v7533
      %10194 = vmatpush1.bf16.msra.mxu0 %v7532
      %10195 = vmatprep.subr.bf16.mxu0 %v7653
      %10196 = vmatpush2.bf16.msra.mxu0 %v7652
      %10197 = vmatprep.subr.bf16.mxu0 %v7645
      %10198 = vmatpush2.bf16.msra.mxu0 %v7644
      %10199 = vmatprep.subr.bf16.mxu0 %v7637
      %10200 = vmatpush2.bf16.msra.mxu0 %v7636
      %10201 = vmatprep.subr.bf16.mxu0 %v7629
      %10202 = vmatpush2.bf16.msra.mxu0 %v7628
      %10203 = vmatprep.subr.bf16.mxu0 %v7621
      %10204 = vmatpush2.bf16.msra.mxu0 %v7620
      %10205 = vmatprep.subr.bf16.mxu0 %v7613
      %10206 = vmatpush2.bf16.msra.mxu0 %v7612
      %10207 = vmatprep.subr.bf16.mxu0 %v7605
      %10208 = vmatpush2.bf16.msra.mxu0 %v7604
      %10209 = vmatprep.subr.bf16.mxu0 %v7597
      %10210 = vmatpush2.bf16.msra.mxu0 %v7596
      %10211 = vmatprep.mubr.bf16.mxu0 %v3291
      %10212 = vmatmul.mubr.bf16.gmra.mxu0 %v3290
      %v10213 = vpop.f32.mrf.mxu0
      %v10214 = vadd.f32 %v10171, %v10213
      %v10215 = vpop.f32.mrf.mxu0
      %v10216 = vadd.f32 %v10173, %v10215
      %v10217 = vpop.f32.mrf.mxu0
      %v10218 = vadd.f32 %v10175, %v10217
      %v10219 = vpop.f32.mrf.mxu0
      %v10220 = vadd.f32 %v10177, %v10219
      %10221 = vdwg.mxu0
      %10222 = vmatprep.subr.bf16.mxu0 %v7717
      %10223 = vmatpush1.bf16.msra.mxu0 %v7716
      %10224 = vmatprep.subr.bf16.mxu0 %v7709
      %10225 = vmatpush1.bf16.msra.mxu0 %v7708
      %10226 = vmatprep.subr.bf16.mxu0 %v7701
      %10227 = vmatpush1.bf16.msra.mxu0 %v7700
      %10228 = vmatprep.subr.bf16.mxu0 %v7693
      %10229 = vmatpush1.bf16.msra.mxu0 %v7692
      %10230 = vmatprep.subr.bf16.mxu0 %v7685
      %10231 = vmatpush1.bf16.msra.mxu0 %v7684
      %10232 = vmatprep.subr.bf16.mxu0 %v7677
      %10233 = vmatpush1.bf16.msra.mxu0 %v7676
      %10234 = vmatprep.subr.bf16.mxu0 %v7669
      %10235 = vmatpush1.bf16.msra.mxu0 %v7668
      %10236 = vmatprep.subr.bf16.mxu0 %v7661
      %10237 = vmatpush1.bf16.msra.mxu0 %v7660
      %10238 = vmatprep.subr.bf16.mxu0 %v7781
      %10239 = vmatpush2.bf16.msra.mxu0 %v7780
      %10240 = vmatprep.subr.bf16.mxu0 %v7773
      %10241 = vmatpush2.bf16.msra.mxu0 %v7772
      %10242 = vmatprep.subr.bf16.mxu0 %v7765
      %10243 = vmatpush2.bf16.msra.mxu0 %v7764
      %10244 = vmatprep.subr.bf16.mxu0 %v7757
      %10245 = vmatpush2.bf16.msra.mxu0 %v7756
      %10246 = vmatprep.subr.bf16.mxu0 %v7749
      %10247 = vmatpush2.bf16.msra.mxu0 %v7748
      %10248 = vmatprep.subr.bf16.mxu0 %v7741
      %10249 = vmatpush2.bf16.msra.mxu0 %v7740
      %10250 = vmatprep.subr.bf16.mxu0 %v7733
      %10251 = vmatpush2.bf16.msra.mxu0 %v7732
      %10252 = vmatprep.subr.bf16.mxu0 %v7725
      %10253 = vmatpush2.bf16.msra.mxu0 %v7724
      %10254 = vmatprep.mubr.bf16.mxu0 %v3293
      %10255 = vmatmul.mubr.bf16.gmra.mxu0 %v3292
      %v10256 = vpop.f32.mrf.mxu0
      %v10257 = vadd.f32 %v10214, %v10256
      %v10258 = vpop.f32.mrf.mxu0
      %v10259 = vadd.f32 %v10216, %v10258
      %v10260 = vpop.f32.mrf.mxu0
      %v10261 = vadd.f32 %v10218, %v10260
      %v10262 = vpop.f32.mrf.mxu0
      %v10263 = vadd.f32 %v10220, %v10262
      %10264 = vdwg.mxu0
      %10265 = vmatprep.subr.bf16.mxu0 %v7845
      %10266 = vmatpush1.bf16.msra.mxu0 %v7844
      %10267 = vmatprep.subr.bf16.mxu0 %v7837
      %10268 = vmatpush1.bf16.msra.mxu0 %v7836
      %10269 = vmatprep.subr.bf16.mxu0 %v7829
      %10270 = vmatpush1.bf16.msra.mxu0 %v7828
      %10271 = vmatprep.subr.bf16.mxu0 %v7821
      %10272 = vmatpush1.bf16.msra.mxu0 %v7820
      %10273 = vmatprep.subr.bf16.mxu0 %v7813
      %10274 = vmatpush1.bf16.msra.mxu0 %v7812
      %10275 = vmatprep.subr.bf16.mxu0 %v7805
      %10276 = vmatpush1.bf16.msra.mxu0 %v7804
      %10277 = vmatprep.subr.bf16.mxu0 %v7797
      %10278 = vmatpush1.bf16.msra.mxu0 %v7796
      %10279 = vmatprep.subr.bf16.mxu0 %v7789
      %10280 = vmatpush1.bf16.msra.mxu0 %v7788
      %10281 = vmatprep.subr.bf16.mxu0 %v7909
      %10282 = vmatpush2.bf16.msra.mxu0 %v7908
      %10283 = vmatprep.subr.bf16.mxu0 %v7901
      %10284 = vmatpush2.bf16.msra.mxu0 %v7900
      %10285 = vmatprep.subr.bf16.mxu0 %v7893
      %10286 = vmatpush2.bf16.msra.mxu0 %v7892
      %10287 = vmatprep.subr.bf16.mxu0 %v7885
      %10288 = vmatpush2.bf16.msra.mxu0 %v7884
      %10289 = vmatprep.subr.bf16.mxu0 %v7877
      %10290 = vmatpush2.bf16.msra.mxu0 %v7876
      %10291 = vmatprep.subr.bf16.mxu0 %v7869
      %10292 = vmatpush2.bf16.msra.mxu0 %v7868
      %10293 = vmatprep.subr.bf16.mxu0 %v7861
      %10294 = vmatpush2.bf16.msra.mxu0 %v7860
      %10295 = vmatprep.subr.bf16.mxu0 %v7853
      %10296 = vmatpush2.bf16.msra.mxu0 %v7852
      %10297 = vmatprep.mubr.bf16.mxu0 %v3295
      %10298 = vmatmul.mubr.bf16.gmra.mxu0 %v3294
      %v10299 = vpop.f32.mrf.mxu0
      %v10300 = vadd.f32 %v10257, %v10299
      %v10301 = vpop.f32.mrf.mxu0
      %v10302 = vadd.f32 %v10259, %v10301
      %v10303 = vpop.f32.mrf.mxu0
      %v10304 = vadd.f32 %v10261, %v10303
      %v10305 = vpop.f32.mrf.mxu0
      %v10306 = vadd.f32 %v10263, %v10305
      %10307 = vdwg.mxu0
      %10308 = vmatprep.subr.bf16.mxu0 %v7973
      %10309 = vmatpush1.bf16.msra.mxu0 %v7972
      %10310 = vmatprep.subr.bf16.mxu0 %v7965
      %10311 = vmatpush1.bf16.msra.mxu0 %v7964
      %10312 = vmatprep.subr.bf16.mxu0 %v7957
      %10313 = vmatpush1.bf16.msra.mxu0 %v7956
      %10314 = vmatprep.subr.bf16.mxu0 %v7949
      %10315 = vmatpush1.bf16.msra.mxu0 %v7948
      %10316 = vmatprep.subr.bf16.mxu0 %v7941
      %10317 = vmatpush1.bf16.msra.mxu0 %v7940
      %10318 = vmatprep.subr.bf16.mxu0 %v7933
      %10319 = vmatpush1.bf16.msra.mxu0 %v7932
      %10320 = vmatprep.subr.bf16.mxu0 %v7925
      %10321 = vmatpush1.bf16.msra.mxu0 %v7924
      %10322 = vmatprep.subr.bf16.mxu0 %v7917
      %10323 = vmatpush1.bf16.msra.mxu0 %v7916
      %10324 = vmatprep.subr.bf16.mxu0 %v8037
      %10325 = vmatpush2.bf16.msra.mxu0 %v8036
      %10326 = vmatprep.subr.bf16.mxu0 %v8029
      %10327 = vmatpush2.bf16.msra.mxu0 %v8028
      %10328 = vmatprep.subr.bf16.mxu0 %v8021
      %10329 = vmatpush2.bf16.msra.mxu0 %v8020
      %10330 = vmatprep.subr.bf16.mxu0 %v8013
      %10331 = vmatpush2.bf16.msra.mxu0 %v8012
      %10332 = vmatprep.subr.bf16.mxu0 %v8005
      %10333 = vmatpush2.bf16.msra.mxu0 %v8004
      %10334 = vmatprep.subr.bf16.mxu0 %v7997
      %10335 = vmatpush2.bf16.msra.mxu0 %v7996
      %10336 = vmatprep.subr.bf16.mxu0 %v7989
      %10337 = vmatpush2.bf16.msra.mxu0 %v7988
      %10338 = vmatprep.subr.bf16.mxu0 %v7981
      %10339 = vmatpush2.bf16.msra.mxu0 %v7980
      %10340 = vmatprep.mubr.bf16.mxu0 %v3297
      %10341 = vmatmul.mubr.bf16.gmra.mxu0 %v3296
      %v10342 = vpop.f32.mrf.mxu0
      %v10343 = vadd.f32 %v10300, %v10342
      %v10344 = vpop.f32.mrf.mxu0
      %v10345 = vadd.f32 %v10302, %v10344
      %v10346 = vpop.f32.mrf.mxu0
      %v10347 = vadd.f32 %v10304, %v10346
      %v10348 = vpop.f32.mrf.mxu0
      %v10349 = vadd.f32 %v10306, %v10348
      %10350 = vdwg.mxu0
      %10351 = vmatprep.subr.bf16.mxu0 %v8101
      %10352 = vmatpush1.bf16.msra.mxu0 %v8100
      %10353 = vmatprep.subr.bf16.mxu0 %v8093
      %10354 = vmatpush1.bf16.msra.mxu0 %v8092
      %10355 = vmatprep.subr.bf16.mxu0 %v8085
      %10356 = vmatpush1.bf16.msra.mxu0 %v8084
      %10357 = vmatprep.subr.bf16.mxu0 %v8077
      %10358 = vmatpush1.bf16.msra.mxu0 %v8076
      %10359 = vmatprep.subr.bf16.mxu0 %v8069
      %10360 = vmatpush1.bf16.msra.mxu0 %v8068
      %10361 = vmatprep.subr.bf16.mxu0 %v8061
      %10362 = vmatpush1.bf16.msra.mxu0 %v8060
      %10363 = vmatprep.subr.bf16.mxu0 %v8053
      %10364 = vmatpush1.bf16.msra.mxu0 %v8052
      %10365 = vmatprep.subr.bf16.mxu0 %v8045
      %10366 = vmatpush1.bf16.msra.mxu0 %v8044
      %10367 = vmatprep.subr.bf16.mxu0 %v8165
      %10368 = vmatpush2.bf16.msra.mxu0 %v8164
      %10369 = vmatprep.subr.bf16.mxu0 %v8157
      %10370 = vmatpush2.bf16.msra.mxu0 %v8156
      %10371 = vmatprep.subr.bf16.mxu0 %v8149
      %10372 = vmatpush2.bf16.msra.mxu0 %v8148
      %10373 = vmatprep.subr.bf16.mxu0 %v8141
      %10374 = vmatpush2.bf16.msra.mxu0 %v8140
      %10375 = vmatprep.subr.bf16.mxu0 %v8133
      %10376 = vmatpush2.bf16.msra.mxu0 %v8132
      %10377 = vmatprep.subr.bf16.mxu0 %v8125
      %10378 = vmatpush2.bf16.msra.mxu0 %v8124
      %10379 = vmatprep.subr.bf16.mxu0 %v8117
      %10380 = vmatpush2.bf16.msra.mxu0 %v8116
      %10381 = vmatprep.subr.bf16.mxu0 %v8109
      %10382 = vmatpush2.bf16.msra.mxu0 %v8108
      %10383 = vmatprep.mubr.bf16.mxu0 %v3299
      %10384 = vmatmul.mubr.bf16.gmra.mxu0 %v3298
      %v10385 = vpop.f32.mrf.mxu0
      %v10386 = vadd.f32 %v10343, %v10385
      %v10387 = vpop.f32.mrf.mxu0
      %v10388 = vadd.f32 %v10345, %v10387
      %v10389 = vpop.f32.mrf.mxu0
      %v10390 = vadd.f32 %v10347, %v10389
      %v10391 = vpop.f32.mrf.mxu0
      %v10392 = vadd.f32 %v10349, %v10391
      %10393 = vdwg.mxu0
      %10394 = vmatprep.subr.bf16.mxu0 %v8229
      %10395 = vmatpush1.bf16.msra.mxu0 %v8228
      %10396 = vmatprep.subr.bf16.mxu0 %v8221
      %10397 = vmatpush1.bf16.msra.mxu0 %v8220
      %10398 = vmatprep.subr.bf16.mxu0 %v8213
      %10399 = vmatpush1.bf16.msra.mxu0 %v8212
      %10400 = vmatprep.subr.bf16.mxu0 %v8205
      %10401 = vmatpush1.bf16.msra.mxu0 %v8204
      %10402 = vmatprep.subr.bf16.mxu0 %v8197
      %10403 = vmatpush1.bf16.msra.mxu0 %v8196
      %10404 = vmatprep.subr.bf16.mxu0 %v8189
      %10405 = vmatpush1.bf16.msra.mxu0 %v8188
      %10406 = vmatprep.subr.bf16.mxu0 %v8181
      %10407 = vmatpush1.bf16.msra.mxu0 %v8180
      %10408 = vmatprep.subr.bf16.mxu0 %v8173
      %10409 = vmatpush1.bf16.msra.mxu0 %v8172
      %10410 = vmatprep.subr.bf16.mxu0 %v8293
      %10411 = vmatpush2.bf16.msra.mxu0 %v8292
      %10412 = vmatprep.subr.bf16.mxu0 %v8285
      %10413 = vmatpush2.bf16.msra.mxu0 %v8284
      %10414 = vmatprep.subr.bf16.mxu0 %v8277
      %10415 = vmatpush2.bf16.msra.mxu0 %v8276
      %10416 = vmatprep.subr.bf16.mxu0 %v8269
      %10417 = vmatpush2.bf16.msra.mxu0 %v8268
      %10418 = vmatprep.subr.bf16.mxu0 %v8261
      %10419 = vmatpush2.bf16.msra.mxu0 %v8260
      %10420 = vmatprep.subr.bf16.mxu0 %v8253
      %10421 = vmatpush2.bf16.msra.mxu0 %v8252
      %10422 = vmatprep.subr.bf16.mxu0 %v8245
      %10423 = vmatpush2.bf16.msra.mxu0 %v8244
      %10424 = vmatprep.subr.bf16.mxu0 %v8237
      %10425 = vmatpush2.bf16.msra.mxu0 %v8236
      %10426 = vmatprep.mubr.bf16.mxu0 %v3301
      %10427 = vmatmul.mubr.bf16.gmra.mxu0 %v3300
      %v10428 = vpop.f32.mrf.mxu0
      %v10429 = vadd.f32 %v10386, %v10428
      %v10430 = vpop.f32.mrf.mxu0
      %v10431 = vadd.f32 %v10388, %v10430
      %v10432 = vpop.f32.mrf.mxu0
      %v10433 = vadd.f32 %v10390, %v10432
      %v10434 = vpop.f32.mrf.mxu0
      %v10435 = vadd.f32 %v10392, %v10434
      %10436 = vdwg.mxu0
      %10437 = vmatprep.subr.bf16.mxu0 %v8357
      %10438 = vmatpush1.bf16.msra.mxu0 %v8356
      %10439 = vmatprep.subr.bf16.mxu0 %v8349
      %10440 = vmatpush1.bf16.msra.mxu0 %v8348
      %10441 = vmatprep.subr.bf16.mxu0 %v8341
      %10442 = vmatpush1.bf16.msra.mxu0 %v8340
      %10443 = vmatprep.subr.bf16.mxu0 %v8333
      %10444 = vmatpush1.bf16.msra.mxu0 %v8332
      %10445 = vmatprep.subr.bf16.mxu0 %v8325
      %10446 = vmatpush1.bf16.msra.mxu0 %v8324
      %10447 = vmatprep.subr.bf16.mxu0 %v8317
      %10448 = vmatpush1.bf16.msra.mxu0 %v8316
      %10449 = vmatprep.subr.bf16.mxu0 %v8309
      %10450 = vmatpush1.bf16.msra.mxu0 %v8308
      %10451 = vmatprep.subr.bf16.mxu0 %v8301
      %10452 = vmatpush1.bf16.msra.mxu0 %v8300
      %10453 = vmatprep.subr.bf16.mxu0 %v8421
      %10454 = vmatpush2.bf16.msra.mxu0 %v8420
      %10455 = vmatprep.subr.bf16.mxu0 %v8413
      %10456 = vmatpush2.bf16.msra.mxu0 %v8412
      %10457 = vmatprep.subr.bf16.mxu0 %v8405
      %10458 = vmatpush2.bf16.msra.mxu0 %v8404
      %10459 = vmatprep.subr.bf16.mxu0 %v8397
      %10460 = vmatpush2.bf16.msra.mxu0 %v8396
      %10461 = vmatprep.subr.bf16.mxu0 %v8389
      %10462 = vmatpush2.bf16.msra.mxu0 %v8388
      %10463 = vmatprep.subr.bf16.mxu0 %v8381
      %10464 = vmatpush2.bf16.msra.mxu0 %v8380
      %10465 = vmatprep.subr.bf16.mxu0 %v8373
      %10466 = vmatpush2.bf16.msra.mxu0 %v8372
      %10467 = vmatprep.subr.bf16.mxu0 %v8365
      %10468 = vmatpush2.bf16.msra.mxu0 %v8364
      %10469 = vmatprep.mubr.bf16.mxu0 %v3303
      %10470 = vmatmul.mubr.bf16.gmra.mxu0 %v3302
      %v10471 = vpop.f32.mrf.mxu0
      %v10472 = vadd.f32 %v10429, %v10471
      %v10473 = vpop.f32.mrf.mxu0
      %v10474 = vadd.f32 %v10431, %v10473
      %v10475 = vpop.f32.mrf.mxu0
      %v10476 = vadd.f32 %v10433, %v10475
      %v10477 = vpop.f32.mrf.mxu0
      %v10478 = vadd.f32 %v10435, %v10477
      %10479 = vdwg.mxu0
      %10480 = vmatprep.subr.bf16.mxu0 %v7463
      %10481 = vmatpush1.bf16.msra.mxu0 %v7462
      %10482 = vmatprep.subr.bf16.mxu0 %v7455
      %10483 = vmatpush1.bf16.msra.mxu0 %v7454
      %10484 = vmatprep.subr.bf16.mxu0 %v7447
      %10485 = vmatpush1.bf16.msra.mxu0 %v7446
      %10486 = vmatprep.subr.bf16.mxu0 %v7439
      %10487 = vmatpush1.bf16.msra.mxu0 %v7438
      %10488 = vmatprep.subr.bf16.mxu0 %v7431
      %10489 = vmatpush1.bf16.msra.mxu0 %v7430
      %10490 = vmatprep.subr.bf16.mxu0 %v7423
      %10491 = vmatpush1.bf16.msra.mxu0 %v7422
      %10492 = vmatprep.subr.bf16.mxu0 %v7415
      %10493 = vmatpush1.bf16.msra.mxu0 %v7414
      %10494 = vmatprep.subr.bf16.mxu0 %v7407
      %10495 = vmatpush1.bf16.msra.mxu0 %v7406
      %10496 = vmatprep.subr.bf16.mxu0 %v7527
      %10497 = vmatpush2.bf16.msra.mxu0 %v7526
      %10498 = vmatprep.subr.bf16.mxu0 %v7519
      %10499 = vmatpush2.bf16.msra.mxu0 %v7518
      %10500 = vmatprep.subr.bf16.mxu0 %v7511
      %10501 = vmatpush2.bf16.msra.mxu0 %v7510
      %10502 = vmatprep.subr.bf16.mxu0 %v7503
      %10503 = vmatpush2.bf16.msra.mxu0 %v7502
      %10504 = vmatprep.subr.bf16.mxu0 %v7495
      %10505 = vmatpush2.bf16.msra.mxu0 %v7494
      %10506 = vmatprep.subr.bf16.mxu0 %v7487
      %10507 = vmatpush2.bf16.msra.mxu0 %v7486
      %10508 = vmatprep.subr.bf16.mxu0 %v7479
      %10509 = vmatpush2.bf16.msra.mxu0 %v7478
      %10510 = vmatprep.subr.bf16.mxu0 %v7471
      %10511 = vmatpush2.bf16.msra.mxu0 %v7470
      %10512 = vmatprep.mubr.bf16.mxu0 %v3289
      %10513 = vmatmul.mubr.bf16.gmra.mxu0 %v3288
      %v10514 = vpop.f32.mrf.mxu0
      %v10515 = vadd.f32 0.0, %v10514
      %v10516 = vpop.f32.mrf.mxu0
      %v10517 = vadd.f32 0.0, %v10516
      %v10518 = vpop.f32.mrf.mxu0
      %v10519 = vadd.f32 0.0, %v10518
      %v10520 = vpop.f32.mrf.mxu0
      %v10521 = vadd.f32 0.0, %v10520
      %10522 = vdwg.mxu0
      %10523 = vmatprep.subr.bf16.mxu0 %v7591
      %10524 = vmatpush1.bf16.msra.mxu0 %v7590
      %10525 = vmatprep.subr.bf16.mxu0 %v7583
      %10526 = vmatpush1.bf16.msra.mxu0 %v7582
      %10527 = vmatprep.subr.bf16.mxu0 %v7575
      %10528 = vmatpush1.bf16.msra.mxu0 %v7574
      %10529 = vmatprep.subr.bf16.mxu0 %v7567
      %10530 = vmatpush1.bf16.msra.mxu0 %v7566
      %10531 = vmatprep.subr.bf16.mxu0 %v7559
      %10532 = vmatpush1.bf16.msra.mxu0 %v7558
      %10533 = vmatprep.subr.bf16.mxu0 %v7551
      %10534 = vmatpush1.bf16.msra.mxu0 %v7550
      %10535 = vmatprep.subr.bf16.mxu0 %v7543
      %10536 = vmatpush1.bf16.msra.mxu0 %v7542
      %10537 = vmatprep.subr.bf16.mxu0 %v7535
      %10538 = vmatpush1.bf16.msra.mxu0 %v7534
      %10539 = vmatprep.subr.bf16.mxu0 %v7655
      %10540 = vmatpush2.bf16.msra.mxu0 %v7654
      %10541 = vmatprep.subr.bf16.mxu0 %v7647
      %10542 = vmatpush2.bf16.msra.mxu0 %v7646
      %10543 = vmatprep.subr.bf16.mxu0 %v7639
      %10544 = vmatpush2.bf16.msra.mxu0 %v7638
      %10545 = vmatprep.subr.bf16.mxu0 %v7631
      %10546 = vmatpush2.bf16.msra.mxu0 %v7630
      %10547 = vmatprep.subr.bf16.mxu0 %v7623
      %10548 = vmatpush2.bf16.msra.mxu0 %v7622
      %10549 = vmatprep.subr.bf16.mxu0 %v7615
      %10550 = vmatpush2.bf16.msra.mxu0 %v7614
      %10551 = vmatprep.subr.bf16.mxu0 %v7607
      %10552 = vmatpush2.bf16.msra.mxu0 %v7606
      %10553 = vmatprep.subr.bf16.mxu0 %v7599
      %10554 = vmatpush2.bf16.msra.mxu0 %v7598
      %10555 = vmatprep.mubr.bf16.mxu0 %v3291
      %10556 = vmatmul.mubr.bf16.gmra.mxu0 %v3290
      %v10557 = vpop.f32.mrf.mxu0
      %v10558 = vadd.f32 %v10515, %v10557
      %v10559 = vpop.f32.mrf.mxu0
      %v10560 = vadd.f32 %v10517, %v10559
      %v10561 = vpop.f32.mrf.mxu0
      %v10562 = vadd.f32 %v10519, %v10561
      %v10563 = vpop.f32.mrf.mxu0
      %v10564 = vadd.f32 %v10521, %v10563
      %10565 = vdwg.mxu0
      %10566 = vmatprep.subr.bf16.mxu0 %v7719
      %10567 = vmatpush1.bf16.msra.mxu0 %v7718
      %10568 = vmatprep.subr.bf16.mxu0 %v7711
      %10569 = vmatpush1.bf16.msra.mxu0 %v7710
      %10570 = vmatprep.subr.bf16.mxu0 %v7703
      %10571 = vmatpush1.bf16.msra.mxu0 %v7702
      %10572 = vmatprep.subr.bf16.mxu0 %v7695
      %10573 = vmatpush1.bf16.msra.mxu0 %v7694
      %10574 = vmatprep.subr.bf16.mxu0 %v7687
      %10575 = vmatpush1.bf16.msra.mxu0 %v7686
      %10576 = vmatprep.subr.bf16.mxu0 %v7679
      %10577 = vmatpush1.bf16.msra.mxu0 %v7678
      %10578 = vmatprep.subr.bf16.mxu0 %v7671
      %10579 = vmatpush1.bf16.msra.mxu0 %v7670
      %10580 = vmatprep.subr.bf16.mxu0 %v7663
      %10581 = vmatpush1.bf16.msra.mxu0 %v7662
      %10582 = vmatprep.subr.bf16.mxu0 %v7783
      %10583 = vmatpush2.bf16.msra.mxu0 %v7782
      %10584 = vmatprep.subr.bf16.mxu0 %v7775
      %10585 = vmatpush2.bf16.msra.mxu0 %v7774
      %10586 = vmatprep.subr.bf16.mxu0 %v7767
      %10587 = vmatpush2.bf16.msra.mxu0 %v7766
      %10588 = vmatprep.subr.bf16.mxu0 %v7759
      %10589 = vmatpush2.bf16.msra.mxu0 %v7758
      %10590 = vmatprep.subr.bf16.mxu0 %v7751
      %10591 = vmatpush2.bf16.msra.mxu0 %v7750
      %10592 = vmatprep.subr.bf16.mxu0 %v7743
      %10593 = vmatpush2.bf16.msra.mxu0 %v7742
      %10594 = vmatprep.subr.bf16.mxu0 %v7735
      %10595 = vmatpush2.bf16.msra.mxu0 %v7734
      %10596 = vmatprep.subr.bf16.mxu0 %v7727
      %10597 = vmatpush2.bf16.msra.mxu0 %v7726
      %10598 = vmatprep.mubr.bf16.mxu0 %v3293
      %10599 = vmatmul.mubr.bf16.gmra.mxu0 %v3292
      %v10600 = vpop.f32.mrf.mxu0
      %v10601 = vadd.f32 %v10558, %v10600
      %v10602 = vpop.f32.mrf.mxu0
      %v10603 = vadd.f32 %v10560, %v10602
      %v10604 = vpop.f32.mrf.mxu0
      %v10605 = vadd.f32 %v10562, %v10604
      %v10606 = vpop.f32.mrf.mxu0
      %v10607 = vadd.f32 %v10564, %v10606
      %10608 = vdwg.mxu0
      %10609 = vmatprep.subr.bf16.mxu0 %v7847
      %10610 = vmatpush1.bf16.msra.mxu0 %v7846
      %10611 = vmatprep.subr.bf16.mxu0 %v7839
      %10612 = vmatpush1.bf16.msra.mxu0 %v7838
      %10613 = vmatprep.subr.bf16.mxu0 %v7831
      %10614 = vmatpush1.bf16.msra.mxu0 %v7830
      %10615 = vmatprep.subr.bf16.mxu0 %v7823
      %10616 = vmatpush1.bf16.msra.mxu0 %v7822
      %10617 = vmatprep.subr.bf16.mxu0 %v7815
      %10618 = vmatpush1.bf16.msra.mxu0 %v7814
      %10619 = vmatprep.subr.bf16.mxu0 %v7807
      %10620 = vmatpush1.bf16.msra.mxu0 %v7806
      %10621 = vmatprep.subr.bf16.mxu0 %v7799
      %10622 = vmatpush1.bf16.msra.mxu0 %v7798
      %10623 = vmatprep.subr.bf16.mxu0 %v7791
      %10624 = vmatpush1.bf16.msra.mxu0 %v7790
      %10625 = vmatprep.subr.bf16.mxu0 %v7911
      %10626 = vmatpush2.bf16.msra.mxu0 %v7910
      %10627 = vmatprep.subr.bf16.mxu0 %v7903
      %10628 = vmatpush2.bf16.msra.mxu0 %v7902
      %10629 = vmatprep.subr.bf16.mxu0 %v7895
      %10630 = vmatpush2.bf16.msra.mxu0 %v7894
      %10631 = vmatprep.subr.bf16.mxu0 %v7887
      %10632 = vmatpush2.bf16.msra.mxu0 %v7886
      %10633 = vmatprep.subr.bf16.mxu0 %v7879
      %10634 = vmatpush2.bf16.msra.mxu0 %v7878
      %10635 = vmatprep.subr.bf16.mxu0 %v7871
      %10636 = vmatpush2.bf16.msra.mxu0 %v7870
      %10637 = vmatprep.subr.bf16.mxu0 %v7863
      %10638 = vmatpush2.bf16.msra.mxu0 %v7862
      %10639 = vmatprep.subr.bf16.mxu0 %v7855
      %10640 = vmatpush2.bf16.msra.mxu0 %v7854
      %10641 = vmatprep.mubr.bf16.mxu0 %v3295
      %10642 = vmatmul.mubr.bf16.gmra.mxu0 %v3294
      %v10643 = vpop.f32.mrf.mxu0
      %v10644 = vadd.f32 %v10601, %v10643
      %v10645 = vpop.f32.mrf.mxu0
      %v10646 = vadd.f32 %v10603, %v10645
      %v10647 = vpop.f32.mrf.mxu0
      %v10648 = vadd.f32 %v10605, %v10647
      %v10649 = vpop.f32.mrf.mxu0
      %v10650 = vadd.f32 %v10607, %v10649
      %10651 = vdwg.mxu0
      %10652 = vmatprep.subr.bf16.mxu0 %v7975
      %10653 = vmatpush1.bf16.msra.mxu0 %v7974
      %10654 = vmatprep.subr.bf16.mxu0 %v7967
      %10655 = vmatpush1.bf16.msra.mxu0 %v7966
      %10656 = vmatprep.subr.bf16.mxu0 %v7959
      %10657 = vmatpush1.bf16.msra.mxu0 %v7958
      %10658 = vmatprep.subr.bf16.mxu0 %v7951
      %10659 = vmatpush1.bf16.msra.mxu0 %v7950
      %10660 = vmatprep.subr.bf16.mxu0 %v7943
      %10661 = vmatpush1.bf16.msra.mxu0 %v7942
      %10662 = vmatprep.subr.bf16.mxu0 %v7935
      %10663 = vmatpush1.bf16.msra.mxu0 %v7934
      %10664 = vmatprep.subr.bf16.mxu0 %v7927
      %10665 = vmatpush1.bf16.msra.mxu0 %v7926
      %10666 = vmatprep.subr.bf16.mxu0 %v7919
      %10667 = vmatpush1.bf16.msra.mxu0 %v7918
      %10668 = vmatprep.subr.bf16.mxu0 %v8039
      %10669 = vmatpush2.bf16.msra.mxu0 %v8038
      %10670 = vmatprep.subr.bf16.mxu0 %v8031
      %10671 = vmatpush2.bf16.msra.mxu0 %v8030
      %10672 = vmatprep.subr.bf16.mxu0 %v8023
      %10673 = vmatpush2.bf16.msra.mxu0 %v8022
      %10674 = vmatprep.subr.bf16.mxu0 %v8015
      %10675 = vmatpush2.bf16.msra.mxu0 %v8014
      %10676 = vmatprep.subr.bf16.mxu0 %v8007
      %10677 = vmatpush2.bf16.msra.mxu0 %v8006
      %10678 = vmatprep.subr.bf16.mxu0 %v7999
      %10679 = vmatpush2.bf16.msra.mxu0 %v7998
      %10680 = vmatprep.subr.bf16.mxu0 %v7991
      %10681 = vmatpush2.bf16.msra.mxu0 %v7990
      %10682 = vmatprep.subr.bf16.mxu0 %v7983
      %10683 = vmatpush2.bf16.msra.mxu0 %v7982
      %10684 = vmatprep.mubr.bf16.mxu0 %v3297
      %10685 = vmatmul.mubr.bf16.gmra.mxu0 %v3296
      %v10686 = vpop.f32.mrf.mxu0
      %v10687 = vadd.f32 %v10644, %v10686
      %v10688 = vpop.f32.mrf.mxu0
      %v10689 = vadd.f32 %v10646, %v10688
      %v10690 = vpop.f32.mrf.mxu0
      %v10691 = vadd.f32 %v10648, %v10690
      %v10692 = vpop.f32.mrf.mxu0
      %v10693 = vadd.f32 %v10650, %v10692
      %10694 = vdwg.mxu0
      %10695 = vmatprep.subr.bf16.mxu0 %v8103
      %10696 = vmatpush1.bf16.msra.mxu0 %v8102
      %10697 = vmatprep.subr.bf16.mxu0 %v8095
      %10698 = vmatpush1.bf16.msra.mxu0 %v8094
      %10699 = vmatprep.subr.bf16.mxu0 %v8087
      %10700 = vmatpush1.bf16.msra.mxu0 %v8086
      %10701 = vmatprep.subr.bf16.mxu0 %v8079
      %10702 = vmatpush1.bf16.msra.mxu0 %v8078
      %10703 = vmatprep.subr.bf16.mxu0 %v8071
      %10704 = vmatpush1.bf16.msra.mxu0 %v8070
      %10705 = vmatprep.subr.bf16.mxu0 %v8063
      %10706 = vmatpush1.bf16.msra.mxu0 %v8062
      %10707 = vmatprep.subr.bf16.mxu0 %v8055
      %10708 = vmatpush1.bf16.msra.mxu0 %v8054
      %10709 = vmatprep.subr.bf16.mxu0 %v8047
      %10710 = vmatpush1.bf16.msra.mxu0 %v8046
      %10711 = vmatprep.subr.bf16.mxu0 %v8167
      %10712 = vmatpush2.bf16.msra.mxu0 %v8166
      %10713 = vmatprep.subr.bf16.mxu0 %v8159
      %10714 = vmatpush2.bf16.msra.mxu0 %v8158
      %10715 = vmatprep.subr.bf16.mxu0 %v8151
      %10716 = vmatpush2.bf16.msra.mxu0 %v8150
      %10717 = vmatprep.subr.bf16.mxu0 %v8143
      %10718 = vmatpush2.bf16.msra.mxu0 %v8142
      %10719 = vmatprep.subr.bf16.mxu0 %v8135
      %10720 = vmatpush2.bf16.msra.mxu0 %v8134
      %10721 = vmatprep.subr.bf16.mxu0 %v8127
      %10722 = vmatpush2.bf16.msra.mxu0 %v8126
      %10723 = vmatprep.subr.bf16.mxu0 %v8119
      %10724 = vmatpush2.bf16.msra.mxu0 %v8118
      %10725 = vmatprep.subr.bf16.mxu0 %v8111
      %10726 = vmatpush2.bf16.msra.mxu0 %v8110
      %10727 = vmatprep.mubr.bf16.mxu0 %v3299
      %10728 = vmatmul.mubr.bf16.gmra.mxu0 %v3298
      %v10729 = vpop.f32.mrf.mxu0
      %v10730 = vadd.f32 %v10687, %v10729
      %v10731 = vpop.f32.mrf.mxu0
      %v10732 = vadd.f32 %v10689, %v10731
      %v10733 = vpop.f32.mrf.mxu0
      %v10734 = vadd.f32 %v10691, %v10733
      %v10735 = vpop.f32.mrf.mxu0
      %v10736 = vadd.f32 %v10693, %v10735
      %10737 = vdwg.mxu0
      %10738 = vmatprep.subr.bf16.mxu0 %v8231
      %10739 = vmatpush1.bf16.msra.mxu0 %v8230
      %10740 = vmatprep.subr.bf16.mxu0 %v8223
      %10741 = vmatpush1.bf16.msra.mxu0 %v8222
      %10742 = vmatprep.subr.bf16.mxu0 %v8215
      %10743 = vmatpush1.bf16.msra.mxu0 %v8214
      %10744 = vmatprep.subr.bf16.mxu0 %v8207
      %10745 = vmatpush1.bf16.msra.mxu0 %v8206
      %10746 = vmatprep.subr.bf16.mxu0 %v8199
      %10747 = vmatpush1.bf16.msra.mxu0 %v8198
      %10748 = vmatprep.subr.bf16.mxu0 %v8191
      %10749 = vmatpush1.bf16.msra.mxu0 %v8190
      %10750 = vmatprep.subr.bf16.mxu0 %v8183
      %10751 = vmatpush1.bf16.msra.mxu0 %v8182
      %10752 = vmatprep.subr.bf16.mxu0 %v8175
      %10753 = vmatpush1.bf16.msra.mxu0 %v8174
      %10754 = vmatprep.subr.bf16.mxu0 %v8295
      %10755 = vmatpush2.bf16.msra.mxu0 %v8294
      %10756 = vmatprep.subr.bf16.mxu0 %v8287
      %10757 = vmatpush2.bf16.msra.mxu0 %v8286
      %10758 = vmatprep.subr.bf16.mxu0 %v8279
      %10759 = vmatpush2.bf16.msra.mxu0 %v8278
      %10760 = vmatprep.subr.bf16.mxu0 %v8271
      %10761 = vmatpush2.bf16.msra.mxu0 %v8270
      %10762 = vmatprep.subr.bf16.mxu0 %v8263
      %10763 = vmatpush2.bf16.msra.mxu0 %v8262
      %10764 = vmatprep.subr.bf16.mxu0 %v8255
      %10765 = vmatpush2.bf16.msra.mxu0 %v8254
      %10766 = vmatprep.subr.bf16.mxu0 %v8247
      %10767 = vmatpush2.bf16.msra.mxu0 %v8246
      %10768 = vmatprep.subr.bf16.mxu0 %v8239
      %10769 = vmatpush2.bf16.msra.mxu0 %v8238
      %10770 = vmatprep.mubr.bf16.mxu0 %v3301
      %10771 = vmatmul.mubr.bf16.gmra.mxu0 %v3300
      %v10772 = vpop.f32.mrf.mxu0
      %v10773 = vadd.f32 %v10730, %v10772
      %v10774 = vpop.f32.mrf.mxu0
      %v10775 = vadd.f32 %v10732, %v10774
      %v10776 = vpop.f32.mrf.mxu0
      %v10777 = vadd.f32 %v10734, %v10776
      %v10778 = vpop.f32.mrf.mxu0
      %v10779 = vadd.f32 %v10736, %v10778
      %10780 = vdwg.mxu0
      %10781 = vmatprep.subr.bf16.mxu0 %v8359
      %10782 = vmatpush1.bf16.msra.mxu0 %v8358
      %10783 = vmatprep.subr.bf16.mxu0 %v8351
      %10784 = vmatpush1.bf16.msra.mxu0 %v8350
      %10785 = vmatprep.subr.bf16.mxu0 %v8343
      %10786 = vmatpush1.bf16.msra.mxu0 %v8342
      %10787 = vmatprep.subr.bf16.mxu0 %v8335
      %10788 = vmatpush1.bf16.msra.mxu0 %v8334
      %10789 = vmatprep.subr.bf16.mxu0 %v8327
      %10790 = vmatpush1.bf16.msra.mxu0 %v8326
      %10791 = vmatprep.subr.bf16.mxu0 %v8319
      %10792 = vmatpush1.bf16.msra.mxu0 %v8318
      %10793 = vmatprep.subr.bf16.mxu0 %v8311
      %10794 = vmatpush1.bf16.msra.mxu0 %v8310
      %10795 = vmatprep.subr.bf16.mxu0 %v8303
      %10796 = vmatpush1.bf16.msra.mxu0 %v8302
      %10797 = vmatprep.subr.bf16.mxu0 %v8423
      %10798 = vmatpush2.bf16.msra.mxu0 %v8422
      %10799 = vmatprep.subr.bf16.mxu0 %v8415
      %10800 = vmatpush2.bf16.msra.mxu0 %v8414
      %10801 = vmatprep.subr.bf16.mxu0 %v8407
      %10802 = vmatpush2.bf16.msra.mxu0 %v8406
      %10803 = vmatprep.subr.bf16.mxu0 %v8399
      %10804 = vmatpush2.bf16.msra.mxu0 %v8398
      %10805 = vmatprep.subr.bf16.mxu0 %v8391
      %10806 = vmatpush2.bf16.msra.mxu0 %v8390
      %10807 = vmatprep.subr.bf16.mxu0 %v8383
      %10808 = vmatpush2.bf16.msra.mxu0 %v8382
      %10809 = vmatprep.subr.bf16.mxu0 %v8375
      %10810 = vmatpush2.bf16.msra.mxu0 %v8374
      %10811 = vmatprep.subr.bf16.mxu0 %v8367
      %10812 = vmatpush2.bf16.msra.mxu0 %v8366
      %10813 = vmatprep.mubr.bf16.mxu0 %v3303
      %10814 = vmatmul.mubr.bf16.gmra.mxu0 %v3302
      %v10815 = vpop.f32.mrf.mxu0
      %v10816 = vadd.f32 %v10773, %v10815
      %v10817 = vpop.f32.mrf.mxu0
      %v10818 = vadd.f32 %v10775, %v10817
      %v10819 = vpop.f32.mrf.mxu0
      %v10820 = vadd.f32 %v10777, %v10819
      %v10821 = vpop.f32.mrf.mxu0
      %v10822 = vadd.f32 %v10779, %v10821
      %10823 = vdwg.mxu0
      %v10824 = vld [vmem:[%s7] sm:$0xff]
      %v10826 = vlaneseq
      %v10827 = vshrl.u32 %v10826, 7
      %v10828 = vsub.s32 0, %v10827
      %v10829 = vrot.slane %v10824, %v10828
      %v10830 = vlaneseq
      %v10831 = vshrl.u32 %v10830, 7
      %v10832 = vsub.s32 1, %v10831
      %v10833 = vrot.slane %v10824, %v10832
      %v10834 = vlaneseq
      %v10835 = vshrl.u32 %v10834, 7
      %v10836 = vsub.s32 2, %v10835
      %v10837 = vrot.slane %v10824, %v10836
      %v10838 = vlaneseq
      %v10839 = vshrl.u32 %v10838, 7
      %v10840 = vsub.s32 3, %v10839
      %v10841 = vrot.slane %v10824, %v10840
      %v10842 = vlaneseq
      %v10843 = vshrl.u32 %v10842, 7
      %v10844 = vsub.s32 4, %v10843
      %v10845 = vrot.slane %v10824, %v10844
      %v10846 = vlaneseq
      %v10847 = vshrl.u32 %v10846, 7
      %v10848 = vsub.s32 5, %v10847
      %v10849 = vrot.slane %v10824, %v10848
      %v10850 = vlaneseq
      %v10851 = vshrl.u32 %v10850, 7
      %v10852 = vsub.s32 6, %v10851
      %v10853 = vrot.slane %v10824, %v10852
      %v10854 = vlaneseq
      %v10855 = vshrl.u32 %v10854, 7
      %v10856 = vsub.s32 7, %v10855
      %v10857 = vrot.slane %v10824, %v10856
      %v10866 = vmul.f32 %v9784, %v10829
      %v10867 = vmul.f32 %v9786, %v10833
      %v10868 = vmul.f32 %v10128, %v10837
      %v10869 = vmul.f32 %v10130, %v10841
      %v10870 = vmul.f32 %v10472, %v10845
      %v10871 = vmul.f32 %v10474, %v10849
      %v10872 = vmul.f32 %v10816, %v10853
      %v10873 = vmul.f32 %v10818, %v10857
      %v10874 = vmul.f32 %v9788, %v10829
      %v10875 = vmul.f32 %v9790, %v10833
      %v10876 = vmul.f32 %v10132, %v10837
      %v10877 = vmul.f32 %v10134, %v10841
      %v10878 = vmul.f32 %v10476, %v10845
      %v10879 = vmul.f32 %v10478, %v10849
      %v10880 = vmul.f32 %v10820, %v10853
      %v10881 = vmul.f32 %v10822, %v10857
      %v10882 = vld [vmem:[%s8] sm:$0xff]
      %v10884 = vlaneseq
      %v10885 = vshrl.u32 %v10884, 7
      %v10886 = vsub.s32 0, %v10885
      %v10887 = vrot.slane %v10882, %v10886
      %v10888 = vlaneseq
      %v10889 = vshrl.u32 %v10888, 7
      %v10890 = vsub.s32 1, %v10889
      %v10891 = vrot.slane %v10882, %v10890
      %v10892 = vlaneseq
      %v10893 = vshrl.u32 %v10892, 7
      %v10894 = vsub.s32 2, %v10893
      %v10895 = vrot.slane %v10882, %v10894
      %v10896 = vlaneseq
      %v10897 = vshrl.u32 %v10896, 7
      %v10898 = vsub.s32 3, %v10897
      %v10899 = vrot.slane %v10882, %v10898
      %v10900 = vlaneseq
      %v10901 = vshrl.u32 %v10900, 7
      %v10902 = vsub.s32 4, %v10901
      %v10903 = vrot.slane %v10882, %v10902
      %v10904 = vlaneseq
      %v10905 = vshrl.u32 %v10904, 7
      %v10906 = vsub.s32 5, %v10905
      %v10907 = vrot.slane %v10882, %v10906
      %v10908 = vlaneseq
      %v10909 = vshrl.u32 %v10908, 7
      %v10910 = vsub.s32 6, %v10909
      %v10911 = vrot.slane %v10882, %v10910
      %v10912 = vlaneseq
      %v10913 = vshrl.u32 %v10912, 7
      %v10914 = vsub.s32 7, %v10913
      %v10915 = vrot.slane %v10882, %v10914
      %v10924 = vadd.f32 %v10866, %v10887
      %v10925 = vadd.f32 %v10867, %v10891
      %v10926 = vadd.f32 %v10868, %v10895
      %v10927 = vadd.f32 %v10869, %v10899
      %v10928 = vadd.f32 %v10870, %v10903
      %v10929 = vadd.f32 %v10871, %v10907
      %v10930 = vadd.f32 %v10872, %v10911
      %v10931 = vadd.f32 %v10873, %v10915
      %v10932 = vadd.f32 %v10874, %v10887
      %v10933 = vadd.f32 %v10875, %v10891
      %v10934 = vadd.f32 %v10876, %v10895
      %v10935 = vadd.f32 %v10877, %v10899
      %v10936 = vadd.f32 %v10878, %v10903
      %v10937 = vadd.f32 %v10879, %v10907
      %v10938 = vadd.f32 %v10880, %v10911
      %v10939 = vadd.f32 %v10881, %v10915
      %v10940 = vmax.f32 %v10924, 0.0
      %v10941 = vmax.f32 %v10925, 0.0
      %v10942 = vmax.f32 %v10926, 0.0
      %v10943 = vmax.f32 %v10927, 0.0
      %v10944 = vmax.f32 %v10928, 0.0
      %v10945 = vmax.f32 %v10929, 0.0
      %v10946 = vmax.f32 %v10930, 0.0
      %v10947 = vmax.f32 %v10931, 0.0
      %v10948 = vmax.f32 %v10932, 0.0
      %v10949 = vmax.f32 %v10933, 0.0
      %v10950 = vmax.f32 %v10934, 0.0
      %v10951 = vmax.f32 %v10935, 0.0
      %v10952 = vmax.f32 %v10936, 0.0
      %v10953 = vmax.f32 %v10937, 0.0
      %v10954 = vmax.f32 %v10938, 0.0
      %v10955 = vmax.f32 %v10939, 0.0
      %v10956 = vmax.f32 %v10940, %v10942
      %v10957 = vmax.f32 %v10941, %v10943
      %v10958 = vmax.f32 %v10948, %v10950
      %v10959 = vmax.f32 %v10949, %v10951
      %v10960 = vmax.f32 %v10944, %v10946
      %v10961 = vmax.f32 %v10945, %v10947
      %v10962 = vmax.f32 %v10952, %v10954
      %v10963 = vmax.f32 %v10953, %v10955
      %v10964 = vmax.f32 %v10956, %v10960
      %v10965 = vmax.f32 %v10957, %v10961
      %v10966 = vmax.f32 %v10958, %v10962
      %v10967 = vmax.f32 %v10959, %v10963
      %v10968 = vpack.c.bf16 %v10966, %v10964
      %v10969 = vpack.c.bf16 %v10967, %v10965
      %v10970 = vld [vmem:[%s3] sm:$0xff]
      %v10971 = vld [vmem:[%s3 + $0x8] sm:$0xff]
      %v10972 = vld [vmem:[%s3 + $0x10] sm:$0xff]
      %v10973 = vld [vmem:[%s3 + $0x18] sm:$0xff]
      %v10974 = vld [vmem:[%s3 + $0x20] sm:$0xff]
      %v10975 = vld [vmem:[%s3 + $0x28] sm:$0xff]
      %v10976 = vld [vmem:[%s3 + $0x30] sm:$0xff]
      %v10977 = vld [vmem:[%s3 + $0x38] sm:$0xff]
      %v10978 = vld [vmem:[%s3 + $0x40] sm:$0xff]
      %v10979 = vld [vmem:[%s3 + $0x48] sm:$0xff]
      %v10980 = vld [vmem:[%s3 + $0x50] sm:$0xff]
      %v10981 = vld [vmem:[%s3 + $0x58] sm:$0xff]
      %v10982 = vld [vmem:[%s3 + $0x60] sm:$0xff]
      %v10983 = vld [vmem:[%s3 + $0x68] sm:$0xff]
      %v10984 = vld [vmem:[%s3 + $0x70] sm:$0xff]
      %v10985 = vld [vmem:[%s3 + $0x78] sm:$0xff]
      %v10986 = vld [vmem:[%s3 + $0x80] sm:$0xff]
      %v10987 = vld [vmem:[%s3 + $0x88] sm:$0xff]
      %v10988 = vld [vmem:[%s3 + $0x90] sm:$0xff]
      %v10989 = vld [vmem:[%s3 + $0x98] sm:$0xff]
      %v10990 = vld [vmem:[%s3 + $0xa0] sm:$0xff]
      %v10991 = vld [vmem:[%s3 + $0xa8] sm:$0xff]
      %v10992 = vld [vmem:[%s3 + $0xb0] sm:$0xff]
      %v10993 = vld [vmem:[%s3 + $0xb8] sm:$0xff]
      %v10994 = vld [vmem:[%s3 + $0xc0] sm:$0xff]
      %v10995 = vld [vmem:[%s3 + $0xc8] sm:$0xff]
      %v10996 = vld [vmem:[%s3 + $0xd0] sm:$0xff]
      %v10997 = vld [vmem:[%s3 + $0xd8] sm:$0xff]
      %v10998 = vld [vmem:[%s3 + $0xe0] sm:$0xff]
      %v10999 = vld [vmem:[%s3 + $0xe8] sm:$0xff]
      %v11000 = vld [vmem:[%s3 + $0xf0] sm:$0xff]
      %v11001 = vld [vmem:[%s3 + $0xf8] sm:$0xff]
      %v11002 = vld [vmem:[%s3 + $0x100] sm:$0xff]
      %v11003 = vld [vmem:[%s3 + $0x108] sm:$0xff]
      %v11004 = vld [vmem:[%s3 + $0x110] sm:$0xff]
      %v11005 = vld [vmem:[%s3 + $0x118] sm:$0xff]
      %v11006 = vld [vmem:[%s3 + $0x120] sm:$0xff]
      %v11007 = vld [vmem:[%s3 + $0x128] sm:$0xff]
      %v11008 = vld [vmem:[%s3 + $0x130] sm:$0xff]
      %v11009 = vld [vmem:[%s3 + $0x138] sm:$0xff]
      %v11010 = vld [vmem:[%s3 + $0x140] sm:$0xff]
      %v11011 = vld [vmem:[%s3 + $0x148] sm:$0xff]
      %v11012 = vld [vmem:[%s3 + $0x150] sm:$0xff]
      %v11013 = vld [vmem:[%s3 + $0x158] sm:$0xff]
      %v11014 = vld [vmem:[%s3 + $0x160] sm:$0xff]
      %v11015 = vld [vmem:[%s3 + $0x168] sm:$0xff]
      %v11016 = vld [vmem:[%s3 + $0x170] sm:$0xff]
      %v11017 = vld [vmem:[%s3 + $0x178] sm:$0xff]
      %v11018 = vld [vmem:[%s3 + $0x180] sm:$0xff]
      %v11019 = vld [vmem:[%s3 + $0x188] sm:$0xff]
      %v11020 = vld [vmem:[%s3 + $0x190] sm:$0xff]
      %v11021 = vld [vmem:[%s3 + $0x198] sm:$0xff]
      %v11022 = vld [vmem:[%s3 + $0x1a0] sm:$0xff]
      %v11023 = vld [vmem:[%s3 + $0x1a8] sm:$0xff]
      %v11024 = vld [vmem:[%s3 + $0x1b0] sm:$0xff]
      %v11025 = vld [vmem:[%s3 + $0x1b8] sm:$0xff]
      %v11026 = vld [vmem:[%s3 + $0x1c0] sm:$0xff]
      %v11027 = vld [vmem:[%s3 + $0x1c8] sm:$0xff]
      %v11028 = vld [vmem:[%s3 + $0x1d0] sm:$0xff]
      %v11029 = vld [vmem:[%s3 + $0x1d8] sm:$0xff]
      %v11030 = vld [vmem:[%s3 + $0x1e0] sm:$0xff]
      %v11031 = vld [vmem:[%s3 + $0x1e8] sm:$0xff]
      %v11032 = vld [vmem:[%s3 + $0x1f0] sm:$0xff]
      %v11033 = vld [vmem:[%s3 + $0x1f8] sm:$0xff]
      %v11098 = vunpack.c.l.b16 %v10970
      %v11099 = vunpack.c.h.b16 %v10970
      %v11100 = vunpack.c.l.b16 %v10971
      %v11101 = vunpack.c.h.b16 %v10971
      %v11102 = vunpack.c.l.b16 %v10972
      %v11103 = vunpack.c.h.b16 %v10972
      %v11104 = vunpack.c.l.b16 %v10973
      %v11105 = vunpack.c.h.b16 %v10973
      %v11106 = vunpack.c.l.b16 %v10974
      %v11107 = vunpack.c.h.b16 %v10974
      %v11108 = vunpack.c.l.b16 %v10975
      %v11109 = vunpack.c.h.b16 %v10975
      %v11110 = vunpack.c.l.b16 %v10976
      %v11111 = vunpack.c.h.b16 %v10976
      %v11112 = vunpack.c.l.b16 %v10977
      %v11113 = vunpack.c.h.b16 %v10977
      %v11114 = vunpack.c.l.b16 %v10978
      %v11115 = vunpack.c.h.b16 %v10978
      %v11116 = vunpack.c.l.b16 %v10979
      %v11117 = vunpack.c.h.b16 %v10979
      %v11118 = vunpack.c.l.b16 %v10980
      %v11119 = vunpack.c.h.b16 %v10980
      %v11120 = vunpack.c.l.b16 %v10981
      %v11121 = vunpack.c.h.b16 %v10981
      %v11122 = vunpack.c.l.b16 %v10982
      %v11123 = vunpack.c.h.b16 %v10982
      %v11124 = vunpack.c.l.b16 %v10983
      %v11125 = vunpack.c.h.b16 %v10983
      %v11126 = vunpack.c.l.b16 %v10984
      %v11127 = vunpack.c.h.b16 %v10984
      %v11128 = vunpack.c.l.b16 %v10985
      %v11129 = vunpack.c.h.b16 %v10985
      %v11130 = vunpack.c.l.b16 %v10986
      %v11131 = vunpack.c.h.b16 %v10986
      %v11132 = vunpack.c.l.b16 %v10987
      %v11133 = vunpack.c.h.b16 %v10987
      %v11134 = vunpack.c.l.b16 %v10988
      %v11135 = vunpack.c.h.b16 %v10988
      %v11136 = vunpack.c.l.b16 %v10989
      %v11137 = vunpack.c.h.b16 %v10989
      %v11138 = vunpack.c.l.b16 %v10990
      %v11139 = vunpack.c.h.b16 %v10990
      %v11140 = vunpack.c.l.b16 %v10991
      %v11141 = vunpack.c.h.b16 %v10991
      %v11142 = vunpack.c.l.b16 %v10992
      %v11143 = vunpack.c.h.b16 %v10992
      %v11144 = vunpack.c.l.b16 %v10993
      %v11145 = vunpack.c.h.b16 %v10993
      %v11146 = vunpack.c.l.b16 %v10994
      %v11147 = vunpack.c.h.b16 %v10994
      %v11148 = vunpack.c.l.b16 %v10995
      %v11149 = vunpack.c.h.b16 %v10995
      %v11150 = vunpack.c.l.b16 %v10996
      %v11151 = vunpack.c.h.b16 %v10996
      %v11152 = vunpack.c.l.b16 %v10997
      %v11153 = vunpack.c.h.b16 %v10997
      %v11154 = vunpack.c.l.b16 %v10998
      %v11155 = vunpack.c.h.b16 %v10998
      %v11156 = vunpack.c.l.b16 %v10999
      %v11157 = vunpack.c.h.b16 %v10999
      %v11158 = vunpack.c.l.b16 %v11000
      %v11159 = vunpack.c.h.b16 %v11000
      %v11160 = vunpack.c.l.b16 %v11001
      %v11161 = vunpack.c.h.b16 %v11001
      %v11162 = vunpack.c.l.b16 %v11002
      %v11163 = vunpack.c.h.b16 %v11002
      %v11164 = vunpack.c.l.b16 %v11003
      %v11165 = vunpack.c.h.b16 %v11003
      %v11166 = vunpack.c.l.b16 %v11004
      %v11167 = vunpack.c.h.b16 %v11004
      %v11168 = vunpack.c.l.b16 %v11005
      %v11169 = vunpack.c.h.b16 %v11005
      %v11170 = vunpack.c.l.b16 %v11006
      %v11171 = vunpack.c.h.b16 %v11006
      %v11172 = vunpack.c.l.b16 %v11007
      %v11173 = vunpack.c.h.b16 %v11007
      %v11174 = vunpack.c.l.b16 %v11008
      %v11175 = vunpack.c.h.b16 %v11008
      %v11176 = vunpack.c.l.b16 %v11009
      %v11177 = vunpack.c.h.b16 %v11009
      %v11178 = vunpack.c.l.b16 %v11010
      %v11179 = vunpack.c.h.b16 %v11010
      %v11180 = vunpack.c.l.b16 %v11011
      %v11181 = vunpack.c.h.b16 %v11011
      %v11182 = vunpack.c.l.b16 %v11012
      %v11183 = vunpack.c.h.b16 %v11012
      %v11184 = vunpack.c.l.b16 %v11013
      %v11185 = vunpack.c.h.b16 %v11013
      %v11186 = vunpack.c.l.b16 %v11014
      %v11187 = vunpack.c.h.b16 %v11014
      %v11188 = vunpack.c.l.b16 %v11015
      %v11189 = vunpack.c.h.b16 %v11015
      %v11190 = vunpack.c.l.b16 %v11016
      %v11191 = vunpack.c.h.b16 %v11016
      %v11192 = vunpack.c.l.b16 %v11017
      %v11193 = vunpack.c.h.b16 %v11017
      %v11194 = vunpack.c.l.b16 %v11018
      %v11195 = vunpack.c.h.b16 %v11018
      %v11196 = vunpack.c.l.b16 %v11019
      %v11197 = vunpack.c.h.b16 %v11019
      %v11198 = vunpack.c.l.b16 %v11020
      %v11199 = vunpack.c.h.b16 %v11020
      %v11200 = vunpack.c.l.b16 %v11021
      %v11201 = vunpack.c.h.b16 %v11021
      %v11202 = vunpack.c.l.b16 %v11022
      %v11203 = vunpack.c.h.b16 %v11022
      %v11204 = vunpack.c.l.b16 %v11023
      %v11205 = vunpack.c.h.b16 %v11023
      %v11206 = vunpack.c.l.b16 %v11024
      %v11207 = vunpack.c.h.b16 %v11024
      %v11208 = vunpack.c.l.b16 %v11025
      %v11209 = vunpack.c.h.b16 %v11025
      %v11210 = vunpack.c.l.b16 %v11026
      %v11211 = vunpack.c.h.b16 %v11026
      %v11212 = vunpack.c.l.b16 %v11027
      %v11213 = vunpack.c.h.b16 %v11027
      %v11214 = vunpack.c.l.b16 %v11028
      %v11215 = vunpack.c.h.b16 %v11028
      %v11216 = vunpack.c.l.b16 %v11029
      %v11217 = vunpack.c.h.b16 %v11029
      %v11218 = vunpack.c.l.b16 %v11030
      %v11219 = vunpack.c.h.b16 %v11030
      %v11220 = vunpack.c.l.b16 %v11031
      %v11221 = vunpack.c.h.b16 %v11031
      %v11222 = vunpack.c.l.b16 %v11032
      %v11223 = vunpack.c.h.b16 %v11032
      %v11224 = vunpack.c.l.b16 %v11033
      %v11225 = vunpack.c.h.b16 %v11033
      %v11226 = vpack.c.b16 %v11102, %v11098
      %v11227 = vpack.c.b16 %v11103, %v11099
      %v11228 = vpack.c.b16 %v11104, %v11100
      %v11229 = vpack.c.b16 %v11105, %v11101
      %v11230 = vpack.c.b16 %v11110, %v11106
      %v11231 = vpack.c.b16 %v11111, %v11107
      %v11232 = vpack.c.b16 %v11112, %v11108
      %v11233 = vpack.c.b16 %v11113, %v11109
      %v11234 = vpack.c.b16 %v11118, %v11114
      %v11235 = vpack.c.b16 %v11119, %v11115
      %v11236 = vpack.c.b16 %v11120, %v11116
      %v11237 = vpack.c.b16 %v11121, %v11117
      %v11238 = vpack.c.b16 %v11126, %v11122
      %v11239 = vpack.c.b16 %v11127, %v11123
      %v11240 = vpack.c.b16 %v11128, %v11124
      %v11241 = vpack.c.b16 %v11129, %v11125
      %v11242 = vpack.c.b16 %v11134, %v11130
      %v11243 = vpack.c.b16 %v11135, %v11131
      %v11244 = vpack.c.b16 %v11136, %v11132
      %v11245 = vpack.c.b16 %v11137, %v11133
      %v11246 = vpack.c.b16 %v11142, %v11138
      %v11247 = vpack.c.b16 %v11143, %v11139
      %v11248 = vpack.c.b16 %v11144, %v11140
      %v11249 = vpack.c.b16 %v11145, %v11141
      %v11250 = vpack.c.b16 %v11150, %v11146
      %v11251 = vpack.c.b16 %v11151, %v11147
      %v11252 = vpack.c.b16 %v11152, %v11148
      %v11253 = vpack.c.b16 %v11153, %v11149
      %v11254 = vpack.c.b16 %v11158, %v11154
      %v11255 = vpack.c.b16 %v11159, %v11155
      %v11256 = vpack.c.b16 %v11160, %v11156
      %v11257 = vpack.c.b16 %v11161, %v11157
      %v11258 = vpack.c.b16 %v11166, %v11162
      %v11259 = vpack.c.b16 %v11167, %v11163
      %v11260 = vpack.c.b16 %v11168, %v11164
      %v11261 = vpack.c.b16 %v11169, %v11165
      %v11262 = vpack.c.b16 %v11174, %v11170
      %v11263 = vpack.c.b16 %v11175, %v11171
      %v11264 = vpack.c.b16 %v11176, %v11172
      %v11265 = vpack.c.b16 %v11177, %v11173
      %v11266 = vpack.c.b16 %v11182, %v11178
      %v11267 = vpack.c.b16 %v11183, %v11179
      %v11268 = vpack.c.b16 %v11184, %v11180
      %v11269 = vpack.c.b16 %v11185, %v11181
      %v11270 = vpack.c.b16 %v11190, %v11186
      %v11271 = vpack.c.b16 %v11191, %v11187
      %v11272 = vpack.c.b16 %v11192, %v11188
      %v11273 = vpack.c.b16 %v11193, %v11189
      %v11274 = vpack.c.b16 %v11198, %v11194
      %v11275 = vpack.c.b16 %v11199, %v11195
      %v11276 = vpack.c.b16 %v11200, %v11196
      %v11277 = vpack.c.b16 %v11201, %v11197
      %v11278 = vpack.c.b16 %v11206, %v11202
      %v11279 = vpack.c.b16 %v11207, %v11203
      %v11280 = vpack.c.b16 %v11208, %v11204
      %v11281 = vpack.c.b16 %v11209, %v11205
      %v11282 = vpack.c.b16 %v11214, %v11210
      %v11283 = vpack.c.b16 %v11215, %v11211
      %v11284 = vpack.c.b16 %v11216, %v11212
      %v11285 = vpack.c.b16 %v11217, %v11213
      %v11286 = vpack.c.b16 %v11222, %v11218
      %v11287 = vpack.c.b16 %v11223, %v11219
      %v11288 = vpack.c.b16 %v11224, %v11220
      %v11289 = vpack.c.b16 %v11225, %v11221
      %11354 = vmatprep.subr.bf16.mxu0 %v11255
      %11355 = vmatpush1.bf16.msra.mxu0 %v11254
      %11356 = vmatprep.subr.bf16.mxu0 %v11251
      %11357 = vmatpush1.bf16.msra.mxu0 %v11250
      %11358 = vmatprep.subr.bf16.mxu0 %v11247
      %11359 = vmatpush1.bf16.msra.mxu0 %v11246
      %11360 = vmatprep.subr.bf16.mxu0 %v11243
      %11361 = vmatpush1.bf16.msra.mxu0 %v11242
      %11362 = vmatprep.subr.bf16.mxu0 %v11239
      %11363 = vmatpush1.bf16.msra.mxu0 %v11238
      %11364 = vmatprep.subr.bf16.mxu0 %v11235
      %11365 = vmatpush1.bf16.msra.mxu0 %v11234
      %11366 = vmatprep.subr.bf16.mxu0 %v11231
      %11367 = vmatpush1.bf16.msra.mxu0 %v11230
      %11368 = vmatprep.subr.bf16.mxu0 %v11227
      %11369 = vmatpush1.bf16.msra.mxu0 %v11226
      %11370 = vmatprep.subr.bf16.mxu0 %v11287
      %11371 = vmatpush2.bf16.msra.mxu0 %v11286
      %11372 = vmatprep.subr.bf16.mxu0 %v11283
      %11373 = vmatpush2.bf16.msra.mxu0 %v11282
      %11374 = vmatprep.subr.bf16.mxu0 %v11279
      %11375 = vmatpush2.bf16.msra.mxu0 %v11278
      %11376 = vmatprep.subr.bf16.mxu0 %v11275
      %11377 = vmatpush2.bf16.msra.mxu0 %v11274
      %11378 = vmatprep.subr.bf16.mxu0 %v11271
      %11379 = vmatpush2.bf16.msra.mxu0 %v11270
      %11380 = vmatprep.subr.bf16.mxu0 %v11267
      %11381 = vmatpush2.bf16.msra.mxu0 %v11266
      %11382 = vmatprep.subr.bf16.mxu0 %v11263
      %11383 = vmatpush2.bf16.msra.mxu0 %v11262
      %11384 = vmatprep.subr.bf16.mxu0 %v11259
      %11385 = vmatpush2.bf16.msra.mxu0 %v11258
      %11386 = vmatprep.mubr.bf16.mxu0 %v10969
      %11387 = vmatmul.mubr.bf16.gmra.mxu0 %v10968
      %v11388 = vpop.f32.mrf.mxu0
      %v11389 = vadd.f32 0.0, %v11388
      %v11390 = vpop.f32.mrf.mxu0
      %v11391 = vadd.f32 0.0, %v11390
      %v11392 = vpop.f32.mrf.mxu0
      %v11393 = vadd.f32 0.0, %v11392
      %v11394 = vpop.f32.mrf.mxu0
      %v11395 = vadd.f32 0.0, %v11394
      %11396 = vdwg.mxu0
      %11397 = vmatprep.subr.bf16.mxu0 %v11257
      %11398 = vmatpush1.bf16.msra.mxu0 %v11256
      %11399 = vmatprep.subr.bf16.mxu0 %v11253
      %11400 = vmatpush1.bf16.msra.mxu0 %v11252
      %11401 = vmatprep.subr.bf16.mxu0 %v11249
      %11402 = vmatpush1.bf16.msra.mxu0 %v11248
      %11403 = vmatprep.subr.bf16.mxu0 %v11245
      %11404 = vmatpush1.bf16.msra.mxu0 %v11244
      %11405 = vmatprep.subr.bf16.mxu0 %v11241
      %11406 = vmatpush1.bf16.msra.mxu0 %v11240
      %11407 = vmatprep.subr.bf16.mxu0 %v11237
      %11408 = vmatpush1.bf16.msra.mxu0 %v11236
      %11409 = vmatprep.subr.bf16.mxu0 %v11233
      %11410 = vmatpush1.bf16.msra.mxu0 %v11232
      %11411 = vmatprep.subr.bf16.mxu0 %v11229
      %11412 = vmatpush1.bf16.msra.mxu0 %v11228
      %11413 = vmatprep.subr.bf16.mxu0 %v11289
      %11414 = vmatpush2.bf16.msra.mxu0 %v11288
      %11415 = vmatprep.subr.bf16.mxu0 %v11285
      %11416 = vmatpush2.bf16.msra.mxu0 %v11284
      %11417 = vmatprep.subr.bf16.mxu0 %v11281
      %11418 = vmatpush2.bf16.msra.mxu0 %v11280
      %11419 = vmatprep.subr.bf16.mxu0 %v11277
      %11420 = vmatpush2.bf16.msra.mxu0 %v11276
      %11421 = vmatprep.subr.bf16.mxu0 %v11273
      %11422 = vmatpush2.bf16.msra.mxu0 %v11272
      %11423 = vmatprep.subr.bf16.mxu0 %v11269
      %11424 = vmatpush2.bf16.msra.mxu0 %v11268
      %11425 = vmatprep.subr.bf16.mxu0 %v11265
      %11426 = vmatpush2.bf16.msra.mxu0 %v11264
      %11427 = vmatprep.subr.bf16.mxu0 %v11261
      %11428 = vmatpush2.bf16.msra.mxu0 %v11260
      %11429 = vmatprep.mubr.bf16.mxu0 %v10969
      %11430 = vmatmul.mubr.bf16.gmra.mxu0 %v10968
      %v11431 = vpop.f32.mrf.mxu0
      %v11432 = vadd.f32 0.0, %v11431
      %v11433 = vpop.f32.mrf.mxu0
      %v11434 = vadd.f32 0.0, %v11433
      %v11435 = vpop.f32.mrf.mxu0
      %v11436 = vadd.f32 0.0, %v11435
      %v11437 = vpop.f32.mrf.mxu0
      %v11438 = vadd.f32 0.0, %v11437
      %11439 = vdwg.mxu0
      %v11440 = vld [vmem:[%s9] sm:$0xf]
      %v11442 = vlaneseq
      %v11443 = vshrl.u32 %v11442, 7
      %v11444 = vsub.s32 0, %v11443
      %v11445 = vrot.slane %v11440, %v11444
      %v11446 = vlaneseq
      %v11447 = vshrl.u32 %v11446, 7
      %v11448 = vsub.s32 1, %v11447
      %v11449 = vrot.slane %v11440, %v11448
      %v11450 = vlaneseq
      %v11451 = vshrl.u32 %v11450, 7
      %v11452 = vsub.s32 2, %v11451
      %v11453 = vrot.slane %v11440, %v11452
      %v11454 = vlaneseq
      %v11455 = vshrl.u32 %v11454, 7
      %v11456 = vsub.s32 3, %v11455
      %v11457 = vrot.slane %v11440, %v11456
      %v11462 = vmul.f32 %v11389, %v11445
      %v11463 = vmul.f32 %v11391, %v11449
      %v11464 = vmul.f32 %v11432, %v11453
      %v11465 = vmul.f32 %v11434, %v11457
      %v11466 = vmul.f32 %v11393, %v11445
      %v11467 = vmul.f32 %v11395, %v11449
      %v11468 = vmul.f32 %v11436, %v11453
      %v11469 = vmul.f32 %v11438, %v11457
      %v11470 = vld [vmem:[%s10] sm:$0xf]
      %v11472 = vlaneseq
      %v11473 = vshrl.u32 %v11472, 7
      %v11474 = vsub.s32 0, %v11473
      %v11475 = vrot.slane %v11470, %v11474
      %v11476 = vlaneseq
      %v11477 = vshrl.u32 %v11476, 7
      %v11478 = vsub.s32 1, %v11477
      %v11479 = vrot.slane %v11470, %v11478
      %v11480 = vlaneseq
      %v11481 = vshrl.u32 %v11480, 7
      %v11482 = vsub.s32 2, %v11481
      %v11483 = vrot.slane %v11470, %v11482
      %v11484 = vlaneseq
      %v11485 = vshrl.u32 %v11484, 7
      %v11486 = vsub.s32 3, %v11485
      %v11487 = vrot.slane %v11470, %v11486
      %v11492 = vadd.f32 %v11462, %v11475
      %v11493 = vadd.f32 %v11463, %v11479
      %v11494 = vadd.f32 %v11464, %v11483
      %v11495 = vadd.f32 %v11465, %v11487
      %v11496 = vadd.f32 %v11466, %v11475
      %v11497 = vadd.f32 %v11467, %v11479
      %v11498 = vadd.f32 %v11468, %v11483
      %v11499 = vadd.f32 %v11469, %v11487
      %v11500 = vmax.f32 %v11492, 0.0
      %v11501 = vmax.f32 %v11493, 0.0
      %v11502 = vmax.f32 %v11494, 0.0
      %v11503 = vmax.f32 %v11495, 0.0
      %v11504 = vmax.f32 %v11496, 0.0
      %v11505 = vmax.f32 %v11497, 0.0
      %v11506 = vmax.f32 %v11498, 0.0
      %v11507 = vmax.f32 %v11499, 0.0
      %v11508 = vpack.c.bf16 %v11504, %v11500
      %v11509 = vpack.c.bf16 %v11505, %v11501
      %v11510 = vpack.c.bf16 %v11506, %v11502
      %v11511 = vpack.c.bf16 %v11507, %v11503
      %v11512 = vld [vmem:[%s4] sm:$0xf]
      %v11513 = vld [vmem:[%s4 + $0x4] sm:$0xf]
      %v11514 = vld [vmem:[%s4 + $0x8] sm:$0xf]
      %v11515 = vld [vmem:[%s4 + $0xc] sm:$0xf]
      %v11516 = vld [vmem:[%s4 + $0x10] sm:$0xf]
      %v11517 = vld [vmem:[%s4 + $0x14] sm:$0xf]
      %v11518 = vld [vmem:[%s4 + $0x18] sm:$0xf]
      %v11519 = vld [vmem:[%s4 + $0x1c] sm:$0xf]
      %v11520 = vld [vmem:[%s4 + $0x20] sm:$0xf]
      %v11521 = vld [vmem:[%s4 + $0x24] sm:$0xf]
      %v11522 = vld [vmem:[%s4 + $0x28] sm:$0xf]
      %v11523 = vld [vmem:[%s4 + $0x2c] sm:$0xf]
      %v11524 = vld [vmem:[%s4 + $0x30] sm:$0xf]
      %v11525 = vld [vmem:[%s4 + $0x34] sm:$0xf]
      %v11526 = vld [vmem:[%s4 + $0x38] sm:$0xf]
      %v11527 = vld [vmem:[%s4 + $0x3c] sm:$0xf]
      %v11528 = vld [vmem:[%s4 + $0x40] sm:$0xf]
      %v11529 = vld [vmem:[%s4 + $0x44] sm:$0xf]
      %v11530 = vld [vmem:[%s4 + $0x48] sm:$0xf]
      %v11531 = vld [vmem:[%s4 + $0x4c] sm:$0xf]
      %v11532 = vld [vmem:[%s4 + $0x50] sm:$0xf]
      %v11533 = vld [vmem:[%s4 + $0x54] sm:$0xf]
      %v11534 = vld [vmem:[%s4 + $0x58] sm:$0xf]
      %v11535 = vld [vmem:[%s4 + $0x5c] sm:$0xf]
      %v11536 = vld [vmem:[%s4 + $0x60] sm:$0xf]
      %v11537 = vld [vmem:[%s4 + $0x64] sm:$0xf]
      %v11538 = vld [vmem:[%s4 + $0x68] sm:$0xf]
      %v11539 = vld [vmem:[%s4 + $0x6c] sm:$0xf]
      %v11540 = vld [vmem:[%s4 + $0x70] sm:$0xf]
      %v11541 = vld [vmem:[%s4 + $0x74] sm:$0xf]
      %v11542 = vld [vmem:[%s4 + $0x78] sm:$0xf]
      %v11543 = vld [vmem:[%s4 + $0x7c] sm:$0xf]
      %v11544 = vld [vmem:[%s4 + $0x80] sm:$0xf]
      %v11545 = vld [vmem:[%s4 + $0x84] sm:$0xf]
      %v11546 = vld [vmem:[%s4 + $0x88] sm:$0xf]
      %v11547 = vld [vmem:[%s4 + $0x8c] sm:$0xf]
      %v11548 = vld [vmem:[%s4 + $0x90] sm:$0xf]
      %v11549 = vld [vmem:[%s4 + $0x94] sm:$0xf]
      %v11550 = vld [vmem:[%s4 + $0x98] sm:$0xf]
      %v11551 = vld [vmem:[%s4 + $0x9c] sm:$0xf]
      %v11552 = vld [vmem:[%s4 + $0xa0] sm:$0xf]
      %v11553 = vld [vmem:[%s4 + $0xa4] sm:$0xf]
      %v11554 = vld [vmem:[%s4 + $0xa8] sm:$0xf]
      %v11555 = vld [vmem:[%s4 + $0xac] sm:$0xf]
      %v11556 = vld [vmem:[%s4 + $0xb0] sm:$0xf]
      %v11557 = vld [vmem:[%s4 + $0xb4] sm:$0xf]
      %v11558 = vld [vmem:[%s4 + $0xb8] sm:$0xf]
      %v11559 = vld [vmem:[%s4 + $0xbc] sm:$0xf]
      %v11560 = vld [vmem:[%s4 + $0xc0] sm:$0xf]
      %v11561 = vld [vmem:[%s4 + $0xc4] sm:$0xf]
      %v11562 = vld [vmem:[%s4 + $0xc8] sm:$0xf]
      %v11563 = vld [vmem:[%s4 + $0xcc] sm:$0xf]
      %v11564 = vld [vmem:[%s4 + $0xd0] sm:$0xf]
      %v11565 = vld [vmem:[%s4 + $0xd4] sm:$0xf]
      %v11566 = vld [vmem:[%s4 + $0xd8] sm:$0xf]
      %v11567 = vld [vmem:[%s4 + $0xdc] sm:$0xf]
      %v11568 = vld [vmem:[%s4 + $0xe0] sm:$0xf]
      %v11569 = vld [vmem:[%s4 + $0xe4] sm:$0xf]
      %v11570 = vld [vmem:[%s4 + $0xe8] sm:$0xf]
      %v11571 = vld [vmem:[%s4 + $0xec] sm:$0xf]
      %v11572 = vld [vmem:[%s4 + $0xf0] sm:$0xf]
      %v11573 = vld [vmem:[%s4 + $0xf4] sm:$0xf]
      %v11574 = vld [vmem:[%s4 + $0xf8] sm:$0xf]
      %v11575 = vld [vmem:[%s4 + $0xfc] sm:$0xf]
      %v11576 = vld [vmem:[%s11] sm:$0x1]
      %v11578 = vlaneseq
      %v11579 = vshrl.u32 %v11578, 7
      %v11580 = vsub.s32 0, %v11579
      %v11581 = vrot.slane %v11576, %v11580
      %v11647 = vunpack.c.l.b16 %v11512
      %v11648 = vunpack.c.l.b16 %v11513
      %v11649 = vunpack.c.l.b16 %v11514
      %v11650 = vunpack.c.l.b16 %v11515
      %v11651 = vunpack.c.l.b16 %v11516
      %v11652 = vunpack.c.l.b16 %v11517
      %v11653 = vunpack.c.l.b16 %v11518
      %v11654 = vunpack.c.l.b16 %v11519
      %v11655 = vunpack.c.l.b16 %v11520
      %v11656 = vunpack.c.l.b16 %v11521
      %v11657 = vunpack.c.l.b16 %v11522
      %v11658 = vunpack.c.l.b16 %v11523
      %v11659 = vunpack.c.l.b16 %v11524
      %v11660 = vunpack.c.l.b16 %v11525
      %v11661 = vunpack.c.l.b16 %v11526
      %v11662 = vunpack.c.l.b16 %v11527
      %v11663 = vunpack.c.l.b16 %v11528
      %v11664 = vunpack.c.l.b16 %v11529
      %v11665 = vunpack.c.l.b16 %v11530
      %v11666 = vunpack.c.l.b16 %v11531
      %v11667 = vunpack.c.l.b16 %v11532
      %v11668 = vunpack.c.l.b16 %v11533
      %v11669 = vunpack.c.l.b16 %v11534
      %v11670 = vunpack.c.l.b16 %v11535
      %v11671 = vunpack.c.l.b16 %v11536
      %v11672 = vunpack.c.l.b16 %v11537
      %v11673 = vunpack.c.l.b16 %v11538
      %v11674 = vunpack.c.l.b16 %v11539
      %v11675 = vunpack.c.l.b16 %v11540
      %v11676 = vunpack.c.l.b16 %v11541
      %v11677 = vunpack.c.l.b16 %v11542
      %v11678 = vunpack.c.l.b16 %v11543
      %v11679 = vunpack.c.l.b16 %v11544
      %v11680 = vunpack.c.l.b16 %v11545
      %v11681 = vunpack.c.l.b16 %v11546
      %v11682 = vunpack.c.l.b16 %v11547
      %v11683 = vunpack.c.l.b16 %v11548
      %v11684 = vunpack.c.l.b16 %v11549
      %v11685 = vunpack.c.l.b16 %v11550
      %v11686 = vunpack.c.l.b16 %v11551
      %v11687 = vunpack.c.l.b16 %v11552
      %v11688 = vunpack.c.l.b16 %v11553
      %v11689 = vunpack.c.l.b16 %v11554
      %v11690 = vunpack.c.l.b16 %v11555
      %v11691 = vunpack.c.l.b16 %v11556
      %v11692 = vunpack.c.l.b16 %v11557
      %v11693 = vunpack.c.l.b16 %v11558
      %v11694 = vunpack.c.l.b16 %v11559
      %v11695 = vunpack.c.l.b16 %v11560
      %v11696 = vunpack.c.l.b16 %v11561
      %v11697 = vunpack.c.l.b16 %v11562
      %v11698 = vunpack.c.l.b16 %v11563
      %v11699 = vunpack.c.l.b16 %v11564
      %v11700 = vunpack.c.l.b16 %v11565
      %v11701 = vunpack.c.l.b16 %v11566
      %v11702 = vunpack.c.l.b16 %v11567
      %v11703 = vunpack.c.l.b16 %v11568
      %v11704 = vunpack.c.l.b16 %v11569
      %v11705 = vunpack.c.l.b16 %v11570
      %v11706 = vunpack.c.l.b16 %v11571
      %v11707 = vunpack.c.l.b16 %v11572
      %v11708 = vunpack.c.l.b16 %v11573
      %v11709 = vunpack.c.l.b16 %v11574
      %v11710 = vunpack.c.l.b16 %v11575
      %v11711 = vpack.c.b16 %v11648, %v11647
      %v11712 = vpack.c.b16 %v11650, %v11649
      %v11713 = vpack.c.b16 %v11652, %v11651
      %v11714 = vpack.c.b16 %v11654, %v11653
      %v11715 = vpack.c.b16 %v11656, %v11655
      %v11716 = vpack.c.b16 %v11658, %v11657
      %v11717 = vpack.c.b16 %v11660, %v11659
      %v11718 = vpack.c.b16 %v11662, %v11661
      %v11719 = vpack.c.b16 %v11664, %v11663
      %v11720 = vpack.c.b16 %v11666, %v11665
      %v11721 = vpack.c.b16 %v11668, %v11667
      %v11722 = vpack.c.b16 %v11670, %v11669
      %v11723 = vpack.c.b16 %v11672, %v11671
      %v11724 = vpack.c.b16 %v11674, %v11673
      %v11725 = vpack.c.b16 %v11676, %v11675
      %v11726 = vpack.c.b16 %v11678, %v11677
      %v11727 = vpack.c.b16 %v11680, %v11679
      %v11728 = vpack.c.b16 %v11682, %v11681
      %v11729 = vpack.c.b16 %v11684, %v11683
      %v11730 = vpack.c.b16 %v11686, %v11685
      %v11731 = vpack.c.b16 %v11688, %v11687
      %v11732 = vpack.c.b16 %v11690, %v11689
      %v11733 = vpack.c.b16 %v11692, %v11691
      %v11734 = vpack.c.b16 %v11694, %v11693
      %v11735 = vpack.c.b16 %v11696, %v11695
      %v11736 = vpack.c.b16 %v11698, %v11697
      %v11737 = vpack.c.b16 %v11700, %v11699
      %v11738 = vpack.c.b16 %v11702, %v11701
      %v11739 = vpack.c.b16 %v11704, %v11703
      %v11740 = vpack.c.b16 %v11706, %v11705
      %v11741 = vpack.c.b16 %v11708, %v11707
      %v11742 = vpack.c.b16 %v11710, %v11709
      %11775 = vmatprep.subr.bf16.mxu0 0
      %11776 = vmatpush1.bf16.msra.mxu0 %v11718
      %11777 = vmatprep.subr.bf16.mxu0 0
      %11778 = vmatpush1.bf16.msra.mxu0 %v11717
      %11779 = vmatprep.subr.bf16.mxu0 0
      %11780 = vmatpush1.bf16.msra.mxu0 %v11716
      %11781 = vmatprep.subr.bf16.mxu0 0
      %11782 = vmatpush1.bf16.msra.mxu0 %v11715
      %11783 = vmatprep.subr.bf16.mxu0 0
      %11784 = vmatpush1.bf16.msra.mxu0 %v11714
      %11785 = vmatprep.subr.bf16.mxu0 0
      %11786 = vmatpush1.bf16.msra.mxu0 %v11713
      %11787 = vmatprep.subr.bf16.mxu0 0
      %11788 = vmatpush1.bf16.msra.mxu0 %v11712
      %11789 = vmatprep.subr.bf16.mxu0 0
      %11790 = vmatpush1.bf16.msra.mxu0 %v11711
      %11791 = vmatprep.subr.bf16.mxu0 0
      %11792 = vmatpush2.bf16.msra.mxu0 %v11726
      %11793 = vmatprep.subr.bf16.mxu0 0
      %11794 = vmatpush2.bf16.msra.mxu0 %v11725
      %11795 = vmatprep.subr.bf16.mxu0 0
      %11796 = vmatpush2.bf16.msra.mxu0 %v11724
      %11797 = vmatprep.subr.bf16.mxu0 0
      %11798 = vmatpush2.bf16.msra.mxu0 %v11723
      %11799 = vmatprep.subr.bf16.mxu0 0
      %11800 = vmatpush2.bf16.msra.mxu0 %v11722
      %11801 = vmatprep.subr.bf16.mxu0 0
      %11802 = vmatpush2.bf16.msra.mxu0 %v11721
      %11803 = vmatprep.subr.bf16.mxu0 0
      %11804 = vmatpush2.bf16.msra.mxu0 %v11720
      %11805 = vmatprep.subr.bf16.mxu0 0
      %11806 = vmatpush2.bf16.msra.mxu0 %v11719
      %11807 = vmatprep.mubr.bf16.mxu0 %v11509
      %11808 = vmatmul.mubr.bf16.gmra.mxu0 %v11508
      %v11809 = vpop.f32.mrf.mxu0
      %v11810 = vadd.f32 %v11581, %v11809
      %v11811 = vpop.f32.mrf.mxu0
      %v11812 = vpop.f32.mrf.mxu0
      %v11813 = vadd.f32 %v11581, %v11812
      %v11814 = vpop.f32.mrf.mxu0
      %11815 = vdwg.mxu0
      %11816 = vmatprep.subr.bf16.mxu0 0
      %11817 = vmatpush1.bf16.msra.mxu0 %v11734
      %11818 = vmatprep.subr.bf16.mxu0 0
      %11819 = vmatpush1.bf16.msra.mxu0 %v11733
      %11820 = vmatprep.subr.bf16.mxu0 0
      %11821 = vmatpush1.bf16.msra.mxu0 %v11732
      %11822 = vmatprep.subr.bf16.mxu0 0
      %11823 = vmatpush1.bf16.msra.mxu0 %v11731
      %11824 = vmatprep.subr.bf16.mxu0 0
      %11825 = vmatpush1.bf16.msra.mxu0 %v11730
      %11826 = vmatprep.subr.bf16.mxu0 0
      %11827 = vmatpush1.bf16.msra.mxu0 %v11729
      %11828 = vmatprep.subr.bf16.mxu0 0
      %11829 = vmatpush1.bf16.msra.mxu0 %v11728
      %11830 = vmatprep.subr.bf16.mxu0 0
      %11831 = vmatpush1.bf16.msra.mxu0 %v11727
      %11832 = vmatprep.subr.bf16.mxu0 0
      %11833 = vmatpush2.bf16.msra.mxu0 %v11742
      %11834 = vmatprep.subr.bf16.mxu0 0
      %11835 = vmatpush2.bf16.msra.mxu0 %v11741
      %11836 = vmatprep.subr.bf16.mxu0 0
      %11837 = vmatpush2.bf16.msra.mxu0 %v11740
      %11838 = vmatprep.subr.bf16.mxu0 0
      %11839 = vmatpush2.bf16.msra.mxu0 %v11739
      %11840 = vmatprep.subr.bf16.mxu0 0
      %11841 = vmatpush2.bf16.msra.mxu0 %v11738
      %11842 = vmatprep.subr.bf16.mxu0 0
      %11843 = vmatpush2.bf16.msra.mxu0 %v11737
      %11844 = vmatprep.subr.bf16.mxu0 0
      %11845 = vmatpush2.bf16.msra.mxu0 %v11736
      %11846 = vmatprep.subr.bf16.mxu0 0
      %11847 = vmatpush2.bf16.msra.mxu0 %v11735
      %11848 = vmatprep.mubr.bf16.mxu0 %v11511
      %11849 = vmatmul.mubr.bf16.gmra.mxu0 %v11510
      %v11850 = vpop.f32.mrf.mxu0
      %v11851 = vadd.f32 %v11810, %v11850
      %v11852 = vpop.f32.mrf.mxu0
      %v11853 = vpop.f32.mrf.mxu0
      %v11854 = vadd.f32 %v11813, %v11853
      %v11855 = vpop.f32.mrf.mxu0
      %11856 = vdwg.mxu0
      %11857 = vst [vmem:[%s418] sm:$0xff] %v11851
      %11858 = vst [vmem:[%s418 + $0x8] sm:$0xff] %v11854
      %s11859 = smul.u32 2, %s23
      %p11860 = scmp.lt.s32.totalorder %s11859, 3
      %s11861 = scalar_select %p11860, %s11859, 3
      %s11862 = smul.addr %s11861, 8
      %s11863 = scalar_lea.vmem %s12, %s11862
      // Predicated region
      $region69: #{_lambda_.1} parent=67 // pred_check
        %p11864 = pneg %p298
      $region70: #{_lambda_.1} parent=67 // pred_check_branch
        %11866 = sbr.rel (%p11864) target = $region72
      $region71: #{_lambda_.1} parent=67 // pred_region
        %s11867 = smul.u32 2, %s23
      $region72: #{_lambda_.1} parent=67 // pred_fallthru
        _
    $region68: #{_lambda_.1} parent=5 // pred_fallthru
      _
    %p11868 = scmp.le.s32.totalorder 2, %s18
    // Predicated region
    $region73: #{_lambda_.1} parent=5 // pred_check
      %p11869 = pneg %p11868
    $region74: #{_lambda_.1} parent=5 // pred_check_branch
      %11871 = sbr.rel (%p11869) target = $region76
    $region75: #{_lambda_.1} parent=5 // pred_region
      %s11872 = ssub.s32 %s18, 2
      // Predicated region
      $region77: #{_lambda_.1} parent=75 // pred_check
        %p11873 = pneg %p304
      $region78: #{_lambda_.1} parent=75 // pred_check_branch
        %11875 = sbr.rel (%p11873) target = $region80
      $region79: #{_lambda_.1} parent=75 // pred_region
        %s11876 = smul.u32 2, %s24
        %p11877 = scmp.lt.s32.totalorder %s11876, 3
        %s11878 = scalar_select %p11877, %s11876, 3
        %s11879 = smul.addr %s11878, 8
        %s11880 = scalar_lea.vmem %s12, %s11879
      $region80: #{_lambda_.1} parent=75 // pred_fallthru
        _
    $region76: #{_lambda_.1} parent=5 // pred_fallthru
      _
  $region6: #{_lambda_.1} parent=0 // loop_footer
    %s22 = sadd.s32 1, %s18
  $region7: #{_lambda_.1} parent=0 // loop_footer_branch
    %17 = sbr.rel target = $region3
  $region8: #{_lambda_.1} parent=0 // loop_exit
    _

</llo_original>
